<compile_context>
chip_gen: v5e
topology: v5e:2x2
jax: 0.10.0
libtpu: 0.0.40
codegen_flags: <defaults>
</compile_context>

<pallas_src>
import functools

import jax
import jax.numpy as jnp
from jax import lax
from jax.experimental import pallas as pl
from jax.experimental.pallas import tpu as pltpu

_KCH = 32      # every conv layer has 32 output channels
_CHUNK = 128   # M-chunk for vreg accumulation (keeps acc + tap + weight < ~40 vregs)


# ------------------------------ Pallas kernel --------------------------------
def _encoder_kernel(x_ref, w1_ref, b1_ref, w2_ref, b2_ref, w3_ref, b3_ref,
                    w4_ref, b4_ref, o_ref, act_a, act_b,
                    *, s, pp_pad, m_dims):
    """Fused 4-layer conv+ReLU encoder for one image.

    x_ref : (1, 4*pp_pad, Cin) f32 -- normalized pixels, the four stride-2 phase
            images each row-flattened with row stride `s` and padded to pp_pad rows.
    wK_ref: (9, Cin_k, 32) f32 -- conv weights, index t = 3*i + j (kernel row i, col j).
    bK_ref: (1, 32) f32.
    o_ref : (1, m_dims[3], 32) f32 -- layer-4 output, rows flattened as r*s + c.
    act_a, act_b : f32 VMEM ping/pong activation scratch.
    """
    m1, m2, m3, m4 = m_dims

    # Zero the slack rows that shifted taps may read but no layer ever writes.
    # (They only feed garbage columns that the wrapper strips; zeroing keeps the
    #  math finite and is ~2 tiny stores per step.)
    act_a[m1:, :] = jnp.zeros((act_a.shape[0] - m1, _KCH), jnp.float32)
    act_b[m2:, :] = jnp.zeros((act_b.shape[0] - m2, _KCH), jnp.float32)

    # Tap offsets in the row-flattened (row stride = s) layout.
    # Layer 1: stride-2 conv expressed over the 4 phase images -> stride-1 shifts.
    l1_off = [(2 * (i % 2) + (j % 2)) * pp_pad + (i // 2) * s + (j // 2)
              for i in range(3) for j in range(3)]
    # Layers 2..4: plain 3x3 stride-1 shifts.
    l_off = [i * s + j for i in range(3) for j in range(3)]

    def conv_relu(load_tap, store_out, w_ref, b_ref, m, offsets):
        # out[start:start+sz] = relu( sum_t tap_t @ w[t] + b ), accumulated in vregs,
        # one store per chunk.
        bias = b_ref[...]                                   # (1, 32), hoisted
        for start in range(0, m, _CHUNK):
            sz = min(_CHUNK, m - start)
            acc = jnp.dot(load_tap(offsets[0] + start, sz), w_ref[0],
                          preferred_element_type=jnp.float32)
            for t in range(1, 9):
                acc = acc + jnp.dot(load_tap(offsets[t] + start, sz), w_ref[t],
                                    preferred_element_type=jnp.float32)
            store_out(start, sz, jnp.maximum(acc + bias, 0.0))

    def x_tap(off, sz):                       # layer-1 taps: straight from input block
        return x_ref[0, off:off + sz, :]

    def tap_of(ref):
        return lambda off, sz: ref[off:off + sz, :]

    def store_of(ref):
        def _st(start, sz, val):
            ref[start:start + sz, :] = val
        return _st

    def o_store(start, sz, val):              # last layer writes output block directly
        o_ref[0, start:start + sz, :] = val

    conv_relu(x_tap,         store_of(act_a), w1_ref, b1_ref, m1, l1_off)
    conv_relu(tap_of(act_a), store_of(act_b), w2_ref, b2_ref, m2, l_off)
    conv_relu(tap_of(act_b), store_of(act_a), w3_ref, b3_ref, m3, l_off)
    conv_relu(tap_of(act_a), o_store,         w4_ref, b4_ref, m4, l_off)


# ------------------------------ JAX wrapper -----------------------------------
@jax.jit
def encoder_forward(obs_nchw, params):
    """obs_nchw: (N, C, H, W) uint8 pixels in [0, 255]."""
    n, c, h, w = obs_nchw.shape
    assert h % 2 == 0 and w % 2 == 0, "even spatial dims expected"
    ph, pw = h // 2, w // 2
    s = pw                               # shared row stride for every layer
    oh1, ow1 = ph - 1, pw - 1            # == (h-3)//2 + 1, (w-3)//2 + 1
    oh = [oh1, oh1 - 2, oh1 - 4, oh1 - 6]
    ow4 = ow1 - 6
    m_dims = tuple(o * s for o in oh)
    pp = ph * pw
    pp_pad = pp + s                      # slack so shifted reads never leave the buffer
    rows = 4 * pp_pad
    m4 = m_dims[3]

    # Normalize + NCHW -> NHWC, split into the 4 stride-2 phases, flatten + pad.
    # The cast/normalize fuses into this single XLA data-movement pass, so the
    # kernel has no dequant pass and no dequant scratch.
    x = obs_nchw.astype(jnp.float32) * (1.0 / 255.0) - 0.5                     # (N,C,H,W)
    x = jnp.transpose(x, (0, 2, 3, 1))                                         # (N,H,W,C)
    phases = jnp.stack([x[:, di::2, dj::2, :] for di in (0, 1) for dj in (0, 1)],
                       axis=1)                                                 # (N,4,PH,PW,C)
    phases = phases.reshape(n, 4, pp, c)
    phases = jnp.pad(phases, ((0, 0), (0, 0), (0, pp_pad - pp), (0, 0)))
    phases = phases.reshape(n, rows, c)                                        # (N,R,C) f32

    (w1, b1), (w2, b2), (w3, b3), (w4, b4) = params

    kernel = functools.partial(_encoder_kernel, s=s, pp_pad=pp_pad, m_dims=m_dims)

    out = pl.pallas_call(
        kernel,
        out_shape=jax.ShapeDtypeStruct((n, m4, _KCH), jnp.float32),
        grid_spec=pltpu.PrefetchScalarGridSpec(
            num_scalar_prefetch=0,
            grid=(n,),
            in_specs=[
                pl.BlockSpec((1, rows, c), lambda i: (i, 0, 0)),
                pl.BlockSpec(w1.shape, lambda i: (0, 0, 0)),
                pl.BlockSpec(b1.shape, lambda i: (0, 0)),
                pl.BlockSpec(w2.shape, lambda i: (0, 0, 0)),
                pl.BlockSpec(b2.shape, lambda i: (0, 0)),
                pl.BlockSpec(w3.shape, lambda i: (0, 0, 0)),
                pl.BlockSpec(b3.shape, lambda i: (0, 0)),
                pl.BlockSpec(w4.shape, lambda i: (0, 0, 0)),
                pl.BlockSpec(b4.shape, lambda i: (0, 0)),
            ],
            out_specs=pl.BlockSpec((1, m4, _KCH), lambda i: (i, 0, 0)),
            scratch_shapes=[
                pltpu.VMEM((m_dims[0] + 8, _KCH), jnp.float32),   # ping (layers 1 & 3)
                pltpu.VMEM((m_dims[1] + 8, _KCH), jnp.float32),   # pong (layer 2)
            ],
        ),
        compiler_params=pltpu.CompilerParams(dimension_semantics=("parallel",)),
    )(phases, w1, b1, w2, b2, w3, b3, w4, b4)

    # Strip the width-stride garbage columns, then torch's channel-major flatten.
    out = out.reshape(n, oh[3], s, _KCH)[:, :, :ow4, :]       # (N, OH4, OW4, 32)
    out = jnp.transpose(out, (0, 3, 1, 2)).reshape(n, -1)     # == h.view(N, -1) on NCHW
    return out


# ------------------------------ params / reference ----------------------------
def init_encoder_params(key, in_channels):
    """Weights pre-packed as (9, Cin, Cout) with index t = 3*i + j; bias (1, Cout)."""
    chans = [in_channels, 32, 32, 32, 32]
    params = []
    for li in range(4):
        key, k1, k2 = jax.random.split(key, 3)
        cin, cout = chans[li], chans[li + 1]
        w = jax.random.normal(k1, (9, cin, cout), jnp.float32) / jnp.sqrt(cin * 9.0)
        b = 0.1 * jax.random.normal(k2, (1, cout), jnp.float32)
        params.append((w, b))
    return params


def _packed_to_oihw(w_pack):
    k2, cin, cout = w_pack.shape
    return jnp.transpose(w_pack.reshape(3, 3, cin, cout), (3, 2, 0, 1))


def encoder_reference(obs_nchw, params):
    x = obs_nchw.astype(jnp.float32) / 255.0 - 0.5
    strides = [2, 1, 1, 1]
    for (w, b), st in zip(params, strides):
        w_oihw = _packed_to_oihw(w)
        x = lax.conv_general_dilated(
            x, w_oihw, (st, st), "VALID",
            dimension_numbers=("NCHW", "OIHW", "NCHW"),
            precision=lax.Precision.HIGHEST)
        x = jnp.maximum(x + b.reshape(1, -1, 1, 1), 0.0)
    return x.reshape(x.shape[0], -1)


if __name__ == "__main__":
    key = jax.random.PRNGKey(0)
    kp, kx = jax.random.split(key)

    obs_shape = (4, 32, 32)      # (C, H, W) -- small synthetic shape
    batch = 2

    params = init_encoder_params(kp, obs_shape[0])
    obs = jax.random.randint(kx, (batch,) + obs_shape, 0, 256,
                             dtype=jnp.int32).astype(jnp.uint8)

    out = jax.block_until_ready(encoder_forward(obs, params))

    # spatial: 32 -> 15 -> 13 -> 11 -> 9, so repr_dim = 32*9*9
    assert out.shape == (batch, 32 * 9 * 9), out.shape

    ref = encoder_reference(obs, params)
    err = float(jnp.max(jnp.abs(out - ref)))
    assert jnp.allclose(out, ref, atol=1e-3, rtol=1e-3), err

    print("KERNEL_OK")
</pallas_src>

<mosaic_0001>
module attributes {stable_mosaic.version = 11 : i64} {
  func.func @_encoder_kernel(%arg0: i32, %arg1: memref<1x1088x4xf32, #tpu.memory_space<vmem>>, %arg2: memref<9x4x32xf32, #tpu.memory_space<vmem>>, %arg3: memref<1x32xf32, #tpu.memory_space<vmem>>, %arg4: memref<9x32x32xf32, #tpu.memory_space<vmem>>, %arg5: memref<1x32xf32, #tpu.memory_space<vmem>>, %arg6: memref<9x32x32xf32, #tpu.memory_space<vmem>>, %arg7: memref<1x32xf32, #tpu.memory_space<vmem>>, %arg8: memref<9x32x32xf32, #tpu.memory_space<vmem>>, %arg9: memref<1x32xf32, #tpu.memory_space<vmem>>, %arg10: memref<1x144x32xf32, #tpu.memory_space<vmem>>, %arg11: memref<248x32xf32, #tpu.memory_space<vmem>>, %arg12: memref<216x32xf32, #tpu.memory_space<vmem>>) attributes {dimension_semantics = [#tpu.dimension_semantics<parallel>], iteration_bounds = array<i64: 2>, scalar_prefetch = 0 : i64, scratch_operands = 2 : i64, tpu.core_type = #tpu.core_type<tc>, window_params = [{transform_indices = @transform_0, window_bounds = array<i64: 1, 1088, 4>}, {pipeline_mode = #tpu.pipeline_mode<synchronous>, transform_indices = @transform_1, window_bounds = array<i64: 9, 4, 32>}, {pipeline_mode = #tpu.pipeline_mode<synchronous>, transform_indices = @transform_2, window_bounds = array<i64: 1, 32>}, {pipeline_mode = #tpu.pipeline_mode<synchronous>, transform_indices = @transform_3, window_bounds = array<i64: 9, 32, 32>}, {pipeline_mode = #tpu.pipeline_mode<synchronous>, transform_indices = @transform_4, window_bounds = array<i64: 1, 32>}, {pipeline_mode = #tpu.pipeline_mode<synchronous>, transform_indices = @transform_5, window_bounds = array<i64: 9, 32, 32>}, {pipeline_mode = #tpu.pipeline_mode<synchronous>, transform_indices = @transform_6, window_bounds = array<i64: 1, 32>}, {pipeline_mode = #tpu.pipeline_mode<synchronous>, transform_indices = @transform_7, window_bounds = array<i64: 9, 32, 32>}, {pipeline_mode = #tpu.pipeline_mode<synchronous>, transform_indices = @transform_8, window_bounds = array<i64: 1, 32>}, {transform_indices = @transform_9, window_bounds = array<i64: 1, 144, 32>}]} {
    %cst = arith.constant 0.000000e+00 : f32
    %0 = vector.broadcast %cst : f32 to vector<8x32xf32>
    %c240 = arith.constant 240 : index
    %c0 = arith.constant 0 : index
    %1 = vector.load %arg11[%c240, %c0] : memref<248x32xf32, #tpu.memory_space<vmem>>, vector<8x32xf32>
    tpu.vector_store %arg11[%c240, %c0], %0 {strides = array<i32>} : memref<248x32xf32, #tpu.memory_space<vmem>>, vector<8x32xf32>,
    %cst_0 = arith.constant 0.000000e+00 : f32
    %2 = vector.broadcast %cst_0 : f32 to vector<8x32xf32>
    %c208 = arith.constant 208 : index
    %c0_1 = arith.constant 0 : index
    %3 = vector.load %arg12[%c208, %c0_1] : memref<216x32xf32, #tpu.memory_space<vmem>>, vector<8x32xf32>
    tpu.vector_store %arg12[%c208, %c0_1], %2 {strides = array<i32>} : memref<216x32xf32, #tpu.memory_space<vmem>>, vector<8x32xf32>,
    %c0_2 = arith.constant 0 : index
    %c0_3 = arith.constant 0 : index
    %4 = vector.load %arg3[%c0_2, %c0_3] : memref<1x32xf32, #tpu.memory_space<vmem>>, vector<1x32xf32>
    %c0_4 = arith.constant 0 : index
    %c0_5 = arith.constant 0 : index
    %c0_6 = arith.constant 0 : index
    %5 = vector.load %arg1[%c0_4, %c0_5, %c0_6] : memref<1x1088x4xf32, #tpu.memory_space<vmem>>, vector<1x128x4xf32>
    %6 = vector.shape_cast %5 : vector<1x128x4xf32> to vector<128x4xf32>
    %c0_7 = arith.constant 0 : index
    %c0_8 = arith.constant 0 : index
    %c0_9 = arith.constant 0 : index
    %7 = vector.load %arg2[%c0_7, %c0_8, %c0_9] : memref<9x4x32xf32, #tpu.memory_space<vmem>>, vector<1x4x32xf32>
    %8 = vector.shape_cast %7 : vector<1x4x32xf32> to vector<4x32xf32>
    %cst_10 = arith.constant dense<0.000000e+00> : vector<128x32xf32>
    %9 = tpu.matmul %6, %8, %cst_10 {dimension_numbers = #tpu.dot_dimension_numbers<[1], [0], [0], [1], [0, 0, 1, 1], [], []>} : vector<128x4xf32>, vector<4x32xf32>, vector<128x32xf32> -> vector<128x32xf32>
    %c0_11 = arith.constant 0 : index
    %c272 = arith.constant 272 : index
    %c0_12 = arith.constant 0 : index
    %10 = vector.load %arg1[%c0_11, %c272, %c0_12] : memref<1x1088x4xf32, #tpu.memory_space<vmem>>, vector<1x128x4xf32>
    %11 = vector.shape_cast %10 : vector<1x128x4xf32> to vector<128x4xf32>
    %c1 = arith.constant 1 : index
    %c0_13 = arith.constant 0 : index
    %c0_14 = arith.constant 0 : index
    %12 = vector.load %arg2[%c1, %c0_13, %c0_14] : memref<9x4x32xf32, #tpu.memory_space<vmem>>, vector<1x4x32xf32>
    %13 = vector.shape_cast %12 : vector<1x4x32xf32> to vector<4x32xf32>
    %cst_15 = arith.constant dense<0.000000e+00> : vector<128x32xf32>
    %14 = tpu.matmul %11, %13, %cst_15 {dimension_numbers = #tpu.dot_dimension_numbers<[1], [0], [0], [1], [0, 0, 1, 1], [], []>} : vector<128x4xf32>, vector<4x32xf32>, vector<128x32xf32> -> vector<128x32xf32>
    %15 = arith.addf %9, %14 : vector<128x32xf32>
    %c0_16 = arith.constant 0 : index
    %c1_17 = arith.constant 1 : index
    %c0_18 = arith.constant 0 : index
    %16 = vector.load %arg1[%c0_16, %c1_17, %c0_18] : memref<1x1088x4xf32, #tpu.memory_space<vmem>>, vector<1x128x4xf32>
    %17 = vector.shape_cast %16 : vector<1x128x4xf32> to vector<128x4xf32>
    %c2 = arith.constant 2 : index
    %c0_19 = arith.constant 0 : index
    %c0_20 = arith.constant 0 : index
    %18 = vector.load %arg2[%c2, %c0_19, %c0_20] : memref<9x4x32xf32, #tpu.memory_space<vmem>>, vector<1x4x32xf32>
    %19 = vector.shape_cast %18 : vector<1x4x32xf32> to vector<4x32xf32>
    %cst_21 = arith.constant dense<0.000000e+00> : vector<128x32xf32>
    %20 = tpu.matmul %17, %19, %cst_21 {dimension_numbers = #tpu.dot_dimension_numbers<[1], [0], [0], [1], [0, 0, 1, 1], [], []>} : vector<128x4xf32>, vector<4x32xf32>, vector<128x32xf32> -> vector<128x32xf32>
    %21 = arith.addf %15, %20 : vector<128x32xf32>
    %c0_22 = arith.constant 0 : index
    %c544 = arith.constant 544 : index
    %c0_23 = arith.constant 0 : index
    %22 = vector.load %arg1[%c0_22, %c544, %c0_23] : memref<1x1088x4xf32, #tpu.memory_space<vmem>>, vector<1x128x4xf32>
    %23 = vector.shape_cast %22 : vector<1x128x4xf32> to vector<128x4xf32>
    %c3 = arith.constant 3 : index
    %c0_24 = arith.constant 0 : index
    %c0_25 = arith.constant 0 : index
    %24 = vector.load %arg2[%c3, %c0_24, %c0_25] : memref<9x4x32xf32, #tpu.memory_space<vmem>>, vector<1x4x32xf32>
    %25 = vector.shape_cast %24 : vector<1x4x32xf32> to vector<4x32xf32>
    %cst_26 = arith.constant dense<0.000000e+00> : vector<128x32xf32>
    %26 = tpu.matmul %23, %25, %cst_26 {dimension_numbers = #tpu.dot_dimension_numbers<[1], [0], [0], [1], [0, 0, 1, 1], [], []>} : vector<128x4xf32>, vector<4x32xf32>, vector<128x32xf32> -> vector<128x32xf32>
    %27 = arith.addf %21, %26 : vector<128x32xf32>
    %c0_27 = arith.constant 0 : index
    %c816 = arith.constant 816 : index
    %c0_28 = arith.constant 0 : index
    %28 = vector.load %arg1[%c0_27, %c816, %c0_28] : memref<1x1088x4xf32, #tpu.memory_space<vmem>>, vector<1x128x4xf32>
    %29 = vector.shape_cast %28 : vector<1x128x4xf32> to vector<128x4xf32>
    %c4 = arith.constant 4 : index
    %c0_29 = arith.constant 0 : index
    %c0_30 = arith.constant 0 : index
    %30 = vector.load %arg2[%c4, %c0_29, %c0_30] : memref<9x4x32xf32, #tpu.memory_space<vmem>>, vector<1x4x32xf32>
    %31 = vector.shape_cast %30 : vector<1x4x32xf32> to vector<4x32xf32>
    %cst_31 = arith.constant dense<0.000000e+00> : vector<128x32xf32>
    %32 = tpu.matmul %29, %31, %cst_31 {dimension_numbers = #tpu.dot_dimension_numbers<[1], [0], [0], [1], [0, 0, 1, 1], [], []>} : vector<128x4xf32>, vector<4x32xf32>, vector<128x32xf32> -> vector<128x32xf32>
    %33 = arith.addf %27, %32 : vector<128x32xf32>
    %c0_32 = arith.constant 0 : index
    %c545 = arith.constant 545 : index
    %c0_33 = arith.constant 0 : index
    %34 = vector.load %arg1[%c0_32, %c545, %c0_33] : memref<1x1088x4xf32, #tpu.memory_space<vmem>>, vector<1x128x4xf32>
    %35 = vector.shape_cast %34 : vector<1x128x4xf32> to vector<128x4xf32>
    %c5 = arith.constant 5 : index
    %c0_34 = arith.constant 0 : index
    %c0_35 = arith.constant 0 : index
    %36 = vector.load %arg2[%c5, %c0_34, %c0_35] : memref<9x4x32xf32, #tpu.memory_space<vmem>>, vector<1x4x32xf32>
    %37 = vector.shape_cast %36 : vector<1x4x32xf32> to vector<4x32xf32>
    %cst_36 = arith.constant dense<0.000000e+00> : vector<128x32xf32>
    %38 = tpu.matmul %35, %37, %cst_36 {dimension_numbers = #tpu.dot_dimension_numbers<[1], [0], [0], [1], [0, 0, 1, 1], [], []>} : vector<128x4xf32>, vector<4x32xf32>, vector<128x32xf32> -> vector<128x32xf32>
    %39 = arith.addf %33, %38 : vector<128x32xf32>
    %c0_37 = arith.constant 0 : index
    %c16 = arith.constant 16 : index
    %c0_38 = arith.constant 0 : index
    %40 = vector.load %arg1[%c0_37, %c16, %c0_38] : memref<1x1088x4xf32, #tpu.memory_space<vmem>>, vector<1x128x4xf32>
    %41 = vector.shape_cast %40 : vector<1x128x4xf32> to vector<128x4xf32>
    %c6 = arith.constant 6 : index
    %c0_39 = arith.constant 0 : index
    %c0_40 = arith.constant 0 : index
    %42 = vector.load %arg2[%c6, %c0_39, %c0_40] : memref<9x4x32xf32, #tpu.memory_space<vmem>>, vector<1x4x32xf32>
    %43 = vector.shape_cast %42 : vector<1x4x32xf32> to vector<4x32xf32>
    %cst_41 = arith.constant dense<0.000000e+00> : vector<128x32xf32>
    %44 = tpu.matmul %41, %43, %cst_41 {dimension_numbers = #tpu.dot_dimension_numbers<[1], [0], [0], [1], [0, 0, 1, 1], [], []>} : vector<128x4xf32>, vector<4x32xf32>, vector<128x32xf32> -> vector<128x32xf32>
    %45 = arith.addf %39, %44 : vector<128x32xf32>
    %c0_42 = arith.constant 0 : index
    %c288 = arith.constant 288 : index
    %c0_43 = arith.constant 0 : index
    %46 = vector.load %arg1[%c0_42, %c288, %c0_43] : memref<1x1088x4xf32, #tpu.memory_space<vmem>>, vector<1x128x4xf32>
    %47 = vector.shape_cast %46 : vector<1x128x4xf32> to vector<128x4xf32>
    %c7 = arith.constant 7 : index
    %c0_44 = arith.constant 0 : index
    %c0_45 = arith.constant 0 : index
    %48 = vector.load %arg2[%c7, %c0_44, %c0_45] : memref<9x4x32xf32, #tpu.memory_space<vmem>>, vector<1x4x32xf32>
    %49 = vector.shape_cast %48 : vector<1x4x32xf32> to vector<4x32xf32>
    %cst_46 = arith.constant dense<0.000000e+00> : vector<128x32xf32>
    %50 = tpu.matmul %47, %49, %cst_46 {dimension_numbers = #tpu.dot_dimension_numbers<[1], [0], [0], [1], [0, 0, 1, 1], [], []>} : vector<128x4xf32>, vector<4x32xf32>, vector<128x32xf32> -> vector<128x32xf32>
    %51 = arith.addf %45, %50 : vector<128x32xf32>
    %c0_47 = arith.constant 0 : index
    %c17 = arith.constant 17 : index
    %c0_48 = arith.constant 0 : index
    %52 = vector.load %arg1[%c0_47, %c17, %c0_48] : memref<1x1088x4xf32, #tpu.memory_space<vmem>>, vector<1x128x4xf32>
    %53 = vector.shape_cast %52 : vector<1x128x4xf32> to vector<128x4xf32>
    %c8 = arith.constant 8 : index
    %c0_49 = arith.constant 0 : index
    %c0_50 = arith.constant 0 : index
    %54 = vector.load %arg2[%c8, %c0_49, %c0_50] : memref<9x4x32xf32, #tpu.memory_space<vmem>>, vector<1x4x32xf32>
    %55 = vector.shape_cast %54 : vector<1x4x32xf32> to vector<4x32xf32>
    %cst_51 = arith.constant dense<0.000000e+00> : vector<128x32xf32>
    %56 = tpu.matmul %53, %55, %cst_51 {dimension_numbers = #tpu.dot_dimension_numbers<[1], [0], [0], [1], [0, 0, 1, 1], [], []>} : vector<128x4xf32>, vector<4x32xf32>, vector<128x32xf32> -> vector<128x32xf32>
    %57 = arith.addf %51, %56 : vector<128x32xf32>
    %58 = vector.broadcast %4 : vector<1x32xf32> to vector<128x32xf32>
    %59 = arith.addf %57, %58 : vector<128x32xf32>
    %cst_52 = arith.constant 0.000000e+00 : f32
    %60 = vector.broadcast %cst_52 : f32 to vector<128x32xf32>
    %61 = arith.maximumf %59, %60 : vector<128x32xf32>
    %c0_53 = arith.constant 0 : index
    %c0_54 = arith.constant 0 : index
    %62 = vector.load %arg11[%c0_53, %c0_54] : memref<248x32xf32, #tpu.memory_space<vmem>>, vector<128x32xf32>
    tpu.vector_store %arg11[%c0_53, %c0_54], %61 {strides = array<i32>} : memref<248x32xf32, #tpu.memory_space<vmem>>, vector<128x32xf32>,
    %c0_55 = arith.constant 0 : index
    %c128 = arith.constant 128 : index
    %c0_56 = arith.constant 0 : index
    %63 = vector.load %arg1[%c0_55, %c128, %c0_56] : memref<1x1088x4xf32, #tpu.memory_space<vmem>>, vector<1x112x4xf32>
    %64 = vector.shape_cast %63 : vector<1x112x4xf32> to vector<112x4xf32>
    %c0_57 = arith.constant 0 : index
    %c0_58 = arith.constant 0 : index
    %c0_59 = arith.constant 0 : index
    %65 = vector.load %arg2[%c0_57, %c0_58, %c0_59] : memref<9x4x32xf32, #tpu.memory_space<vmem>>, vector<1x4x32xf32>
    %66 = vector.shape_cast %65 : vector<1x4x32xf32> to vector<4x32xf32>
    %cst_60 = arith.constant dense<0.000000e+00> : vector<112x32xf32>
    %67 = tpu.matmul %64, %66, %cst_60 {dimension_numbers = #tpu.dot_dimension_numbers<[1], [0], [0], [1], [0, 0, 1, 1], [], []>} : vector<112x4xf32>, vector<4x32xf32>, vector<112x32xf32> -> vector<112x32xf32>
    %c0_61 = arith.constant 0 : index
    %c400 = arith.constant 400 : index
    %c0_62 = arith.constant 0 : index
    %68 = vector.load %arg1[%c0_61, %c400, %c0_62] : memref<1x1088x4xf32, #tpu.memory_space<vmem>>, vector<1x112x4xf32>
    %69 = vector.shape_cast %68 : vector<1x112x4xf32> to vector<112x4xf32>
    %c1_63 = arith.constant 1 : index
    %c0_64 = arith.constant 0 : index
    %c0_65 = arith.constant 0 : index
    %70 = vector.load %arg2[%c1_63, %c0_64, %c0_65] : memref<9x4x32xf32, #tpu.memory_space<vmem>>, vector<1x4x32xf32>
    %71 = vector.shape_cast %70 : vector<1x4x32xf32> to vector<4x32xf32>
    %cst_66 = arith.constant dense<0.000000e+00> : vector<112x32xf32>
    %72 = tpu.matmul %69, %71, %cst_66 {dimension_numbers = #tpu.dot_dimension_numbers<[1], [0], [0], [1], [0, 0, 1, 1], [], []>} : vector<112x4xf32>, vector<4x32xf32>, vector<112x32xf32> -> vector<112x32xf32>
    %73 = arith.addf %67, %72 : vector<112x32xf32>
    %c0_67 = arith.constant 0 : index
    %c129 = arith.constant 129 : index
    %c0_68 = arith.constant 0 : index
    %74 = vector.load %arg1[%c0_67, %c129, %c0_68] : memref<1x1088x4xf32, #tpu.memory_space<vmem>>, vector<1x112x4xf32>
    %75 = vector.shape_cast %74 : vector<1x112x4xf32> to vector<112x4xf32>
    %c2_69 = arith.constant 2 : index
    %c0_70 = arith.constant 0 : index
    %c0_71 = arith.constant 0 : index
    %76 = vector.load %arg2[%c2_69, %c0_70, %c0_71] : memref<9x4x32xf32, #tpu.memory_space<vmem>>, vector<1x4x32xf32>
    %77 = vector.shape_cast %76 : vector<1x4x32xf32> to vector<4x32xf32>
    %cst_72 = arith.constant dense<0.000000e+00> : vector<112x32xf32>
    %78 = tpu.matmul %75, %77, %cst_72 {dimension_numbers = #tpu.dot_dimension_numbers<[1], [0], [0], [1], [0, 0, 1, 1], [], []>} : vector<112x4xf32>, vector<4x32xf32>, vector<112x32xf32> -> vector<112x32xf32>
    %79 = arith.addf %73, %78 : vector<112x32xf32>
    %c0_73 = arith.constant 0 : index
    %c672 = arith.constant 672 : index
    %c0_74 = arith.constant 0 : index
    %80 = vector.load %arg1[%c0_73, %c672, %c0_74] : memref<1x1088x4xf32, #tpu.memory_space<vmem>>, vector<1x112x4xf32>
    %81 = vector.shape_cast %80 : vector<1x112x4xf32> to vector<112x4xf32>
    %c3_75 = arith.constant 3 : index
    %c0_76 = arith.constant 0 : index
    %c0_77 = arith.constant 0 : index
    %82 = vector.load %arg2[%c3_75, %c0_76, %c0_77] : memref<9x4x32xf32, #tpu.memory_space<vmem>>, vector<1x4x32xf32>
    %83 = vector.shape_cast %82 : vector<1x4x32xf32> to vector<4x32xf32>
    %cst_78 = arith.constant dense<0.000000e+00> : vector<112x32xf32>
    %84 = tpu.matmul %81, %83, %cst_78 {dimension_numbers = #tpu.dot_dimension_numbers<[1], [0], [0], [1], [0, 0, 1, 1], [], []>} : vector<112x4xf32>, vector<4x32xf32>, vector<112x32xf32> -> vector<112x32xf32>
    %85 = arith.addf %79, %84 : vector<112x32xf32>
    %c0_79 = arith.constant 0 : index
    %c944 = arith.constant 944 : index
    %c0_80 = arith.constant 0 : index
    %86 = vector.load %arg1[%c0_79, %c944, %c0_80] : memref<1x1088x4xf32, #tpu.memory_space<vmem>>, vector<1x112x4xf32>
    %87 = vector.shape_cast %86 : vector<1x112x4xf32> to vector<112x4xf32>
    %c4_81 = arith.constant 4 : index
    %c0_82 = arith.constant 0 : index
    %c0_83 = arith.constant 0 : index
    %88 = vector.load %arg2[%c4_81, %c0_82, %c0_83] : memref<9x4x32xf32, #tpu.memory_space<vmem>>, vector<1x4x32xf32>
    %89 = vector.shape_cast %88 : vector<1x4x32xf32> to vector<4x32xf32>
    %cst_84 = arith.constant dense<0.000000e+00> : vector<112x32xf32>
    %90 = tpu.matmul %87, %89, %cst_84 {dimension_numbers = #tpu.dot_dimension_numbers<[1], [0], [0], [1], [0, 0, 1, 1], [], []>} : vector<112x4xf32>, vector<4x32xf32>, vector<112x32xf32> -> vector<112x32xf32>
    %91 = arith.addf %85, %90 : vector<112x32xf32>
    %c0_85 = arith.constant 0 : index
    %c673 = arith.constant 673 : index
    %c0_86 = arith.constant 0 : index
    %92 = vector.load %arg1[%c0_85, %c673, %c0_86] : memref<1x1088x4xf32, #tpu.memory_space<vmem>>, vector<1x112x4xf32>
    %93 = vector.shape_cast %92 : vector<1x112x4xf32> to vector<112x4xf32>
    %c5_87 = arith.constant 5 : index
    %c0_88 = arith.constant 0 : index
    %c0_89 = arith.constant 0 : index
    %94 = vector.load %arg2[%c5_87, %c0_88, %c0_89] : memref<9x4x32xf32, #tpu.memory_space<vmem>>, vector<1x4x32xf32>
    %95 = vector.shape_cast %94 : vector<1x4x32xf32> to vector<4x32xf32>
    %cst_90 = arith.constant dense<0.000000e+00> : vector<112x32xf32>
    %96 = tpu.matmul %93, %95, %cst_90 {dimension_numbers = #tpu.dot_dimension_numbers<[1], [0], [0], [1], [0, 0, 1, 1], [], []>} : vector<112x4xf32>, vector<4x32xf32>, vector<112x32xf32> -> vector<112x32xf32>
    %97 = arith.addf %91, %96 : vector<112x32xf32>
    %c0_91 = arith.constant 0 : index
    %c144 = arith.constant 144 : index
    %c0_92 = arith.constant 0 : index
    %98 = vector.load %arg1[%c0_91, %c144, %c0_92] : memref<1x1088x4xf32, #tpu.memory_space<vmem>>, vector<1x112x4xf32>
    %99 = vector.shape_cast %98 : vector<1x112x4xf32> to vector<112x4xf32>
    %c6_93 = arith.constant 6 : index
    %c0_94 = arith.constant 0 : index
    %c0_95 = arith.constant 0 : index
    %100 = vector.load %arg2[%c6_93, %c0_94, %c0_95] : memref<9x4x32xf32, #tpu.memory_space<vmem>>, vector<1x4x32xf32>
    %101 = vector.shape_cast %100 : vector<1x4x32xf32> to vector<4x32xf32>
    %cst_96 = arith.constant dense<0.000000e+00> : vector<112x32xf32>
    %102 = tpu.matmul %99, %101, %cst_96 {dimension_numbers = #tpu.dot_dimension_numbers<[1], [0], [0], [1], [0, 0, 1, 1], [], []>} : vector<112x4xf32>, vector<4x32xf32>, vector<112x32xf32> -> vector<112x32xf32>
    %103 = arith.addf %97, %102 : vector<112x32xf32>
    %c0_97 = arith.constant 0 : index
    %c416 = arith.constant 416 : index
    %c0_98 = arith.constant 0 : index
    %104 = vector.load %arg1[%c0_97, %c416, %c0_98] : memref<1x1088x4xf32, #tpu.memory_space<vmem>>, vector<1x112x4xf32>
    %105 = vector.shape_cast %104 : vector<1x112x4xf32> to vector<112x4xf32>
    %c7_99 = arith.constant 7 : index
    %c0_100 = arith.constant 0 : index
    %c0_101 = arith.constant 0 : index
    %106 = vector.load %arg2[%c7_99, %c0_100, %c0_101] : memref<9x4x32xf32, #tpu.memory_space<vmem>>, vector<1x4x32xf32>
    %107 = vector.shape_cast %106 : vector<1x4x32xf32> to vector<4x32xf32>
    %cst_102 = arith.constant dense<0.000000e+00> : vector<112x32xf32>
    %108 = tpu.matmul %105, %107, %cst_102 {dimension_numbers = #tpu.dot_dimension_numbers<[1], [0], [0], [1], [0, 0, 1, 1], [], []>} : vector<112x4xf32>, vector<4x32xf32>, vector<112x32xf32> -> vector<112x32xf32>
    %109 = arith.addf %103, %108 : vector<112x32xf32>
    %c0_103 = arith.constant 0 : index
    %c145 = arith.constant 145 : index
    %c0_104 = arith.constant 0 : index
    %110 = vector.load %arg1[%c0_103, %c145, %c0_104] : memref<1x1088x4xf32, #tpu.memory_space<vmem>>, vector<1x112x4xf32>
    %111 = vector.shape_cast %110 : vector<1x112x4xf32> to vector<112x4xf32>
    %c8_105 = arith.constant 8 : index
    %c0_106 = arith.constant 0 : index
    %c0_107 = arith.constant 0 : index
    %112 = vector.load %arg2[%c8_105, %c0_106, %c0_107] : memref<9x4x32xf32, #tpu.memory_space<vmem>>, vector<1x4x32xf32>
    %113 = vector.shape_cast %112 : vector<1x4x32xf32> to vector<4x32xf32>
    %cst_108 = arith.constant dense<0.000000e+00> : vector<112x32xf32>
    %114 = tpu.matmul %111, %113, %cst_108 {dimension_numbers = #tpu.dot_dimension_numbers<[1], [0], [0], [1], [0, 0, 1, 1], [], []>} : vector<112x4xf32>, vector<4x32xf32>, vector<112x32xf32> -> vector<112x32xf32>
    %115 = arith.addf %109, %114 : vector<112x32xf32>
    %116 = vector.broadcast %4 : vector<1x32xf32> to vector<112x32xf32>
    %117 = arith.addf %115, %116 : vector<112x32xf32>
    %cst_109 = arith.constant 0.000000e+00 : f32
    %118 = vector.broadcast %cst_109 : f32 to vector<112x32xf32>
    %119 = arith.maximumf %117, %118 : vector<112x32xf32>
    %c128_110 = arith.constant 128 : index
    %c0_111 = arith.constant 0 : index
    %120 = vector.load %arg11[%c128_110, %c0_111] : memref<248x32xf32, #tpu.memory_space<vmem>>, vector<112x32xf32>
    tpu.vector_store %arg11[%c128_110, %c0_111], %119 {strides = array<i32>} : memref<248x32xf32, #tpu.memory_space<vmem>>, vector<112x32xf32>,
    %c0_112 = arith.constant 0 : index
    %c0_113 = arith.constant 0 : index
    %121 = vector.load %arg5[%c0_112, %c0_113] : memref<1x32xf32, #tpu.memory_space<vmem>>, vector<1x32xf32>
    %c0_114 = arith.constant 0 : index
    %c0_115 = arith.constant 0 : index
    %122 = vector.load %arg11[%c0_114, %c0_115] : memref<248x32xf32, #tpu.memory_space<vmem>>, vector<128x32xf32>
    %c0_116 = arith.constant 0 : index
    %c0_117 = arith.constant 0 : index
    %c0_118 = arith.constant 0 : index
    %123 = vector.load %arg4[%c0_116, %c0_117, %c0_118] : memref<9x32x32xf32, #tpu.memory_space<vmem>>, vector<1x32x32xf32>
    %124 = vector.shape_cast %123 : vector<1x32x32xf32> to vector<32x32xf32>
    %cst_119 = arith.constant dense<0.000000e+00> : vector<128x32xf32>
    %125 = tpu.matmul %122, %124, %cst_119 {dimension_numbers = #tpu.dot_dimension_numbers<[1], [0], [0], [1], [0, 0, 1, 1], [], []>} : vector<128x32xf32>, vector<32x32xf32>, vector<128x32xf32> -> vector<128x32xf32>
    %c1_120 = arith.constant 1 : index
    %c0_121 = arith.constant 0 : index
    %126 = vector.load %arg11[%c1_120, %c0_121] : memref<248x32xf32, #tpu.memory_space<vmem>>, vector<128x32xf32>
    %c1_122 = arith.constant 1 : index
    %c0_123 = arith.constant 0 : index
    %c0_124 = arith.constant 0 : index
    %127 = vector.load %arg4[%c1_122, %c0_123, %c0_124] : memref<9x32x32xf32, #tpu.memory_space<vmem>>, vector<1x32x32xf32>
    %128 = vector.shape_cast %127 : vector<1x32x32xf32> to vector<32x32xf32>
    %cst_125 = arith.constant dense<0.000000e+00> : vector<128x32xf32>
    %129 = tpu.matmul %126, %128, %cst_125 {dimension_numbers = #tpu.dot_dimension_numbers<[1], [0], [0], [1], [0, 0, 1, 1], [], []>} : vector<128x32xf32>, vector<32x32xf32>, vector<128x32xf32> -> vector<128x32xf32>
    %130 = arith.addf %125, %129 : vector<128x32xf32>
    %c2_126 = arith.constant 2 : index
    %c0_127 = arith.constant 0 : index
    %131 = vector.load %arg11[%c2_126, %c0_127] : memref<248x32xf32, #tpu.memory_space<vmem>>, vector<128x32xf32>
    %c2_128 = arith.constant 2 : index
    %c0_129 = arith.constant 0 : index
    %c0_130 = arith.constant 0 : index
    %132 = vector.load %arg4[%c2_128, %c0_129, %c0_130] : memref<9x32x32xf32, #tpu.memory_space<vmem>>, vector<1x32x32xf32>
    %133 = vector.shape_cast %132 : vector<1x32x32xf32> to vector<32x32xf32>
    %cst_131 = arith.constant dense<0.000000e+00> : vector<128x32xf32>
    %134 = tpu.matmul %131, %133, %cst_131 {dimension_numbers = #tpu.dot_dimension_numbers<[1], [0], [0], [1], [0, 0, 1, 1], [], []>} : vector<128x32xf32>, vector<32x32xf32>, vector<128x32xf32> -> vector<128x32xf32>
    %135 = arith.addf %130, %134 : vector<128x32xf32>
    %c16_132 = arith.constant 16 : index
    %c0_133 = arith.constant 0 : index
    %136 = vector.load %arg11[%c16_132, %c0_133] : memref<248x32xf32, #tpu.memory_space<vmem>>, vector<128x32xf32>
    %c3_134 = arith.constant 3 : index
    %c0_135 = arith.constant 0 : index
    %c0_136 = arith.constant 0 : index
    %137 = vector.load %arg4[%c3_134, %c0_135, %c0_136] : memref<9x32x32xf32, #tpu.memory_space<vmem>>, vector<1x32x32xf32>
    %138 = vector.shape_cast %137 : vector<1x32x32xf32> to vector<32x32xf32>
    %cst_137 = arith.constant dense<0.000000e+00> : vector<128x32xf32>
    %139 = tpu.matmul %136, %138, %cst_137 {dimension_numbers = #tpu.dot_dimension_numbers<[1], [0], [0], [1], [0, 0, 1, 1], [], []>} : vector<128x32xf32>, vector<32x32xf32>, vector<128x32xf32> -> vector<128x32xf32>
    %140 = arith.addf %135, %139 : vector<128x32xf32>
    %c17_138 = arith.constant 17 : index
    %c0_139 = arith.constant 0 : index
    %141 = vector.load %arg11[%c17_138, %c0_139] : memref<248x32xf32, #tpu.memory_space<vmem>>, vector<128x32xf32>
    %c4_140 = arith.constant 4 : index
    %c0_141 = arith.constant 0 : index
    %c0_142 = arith.constant 0 : index
    %142 = vector.load %arg4[%c4_140, %c0_141, %c0_142] : memref<9x32x32xf32, #tpu.memory_space<vmem>>, vector<1x32x32xf32>
    %143 = vector.shape_cast %142 : vector<1x32x32xf32> to vector<32x32xf32>
    %cst_143 = arith.constant dense<0.000000e+00> : vector<128x32xf32>
    %144 = tpu.matmul %141, %143, %cst_143 {dimension_numbers = #tpu.dot_dimension_numbers<[1], [0], [0], [1], [0, 0, 1, 1], [], []>} : vector<128x32xf32>, vector<32x32xf32>, vector<128x32xf32> -> vector<128x32xf32>
    %145 = arith.addf %140, %144 : vector<128x32xf32>
    %c18 = arith.constant 18 : index
    %c0_144 = arith.constant 0 : index
    %146 = vector.load %arg11[%c18, %c0_144] : memref<248x32xf32, #tpu.memory_space<vmem>>, vector<128x32xf32>
    %c5_145 = arith.constant 5 : index
    %c0_146 = arith.constant 0 : index
    %c0_147 = arith.constant 0 : index
    %147 = vector.load %arg4[%c5_145, %c0_146, %c0_147] : memref<9x32x32xf32, #tpu.memory_space<vmem>>, vector<1x32x32xf32>
    %148 = vector.shape_cast %147 : vector<1x32x32xf32> to vector<32x32xf32>
    %cst_148 = arith.constant dense<0.000000e+00> : vector<128x32xf32>
    %149 = tpu.matmul %146, %148, %cst_148 {dimension_numbers = #tpu.dot_dimension_numbers<[1], [0], [0], [1], [0, 0, 1, 1], [], []>} : vector<128x32xf32>, vector<32x32xf32>, vector<128x32xf32> -> vector<128x32xf32>
    %150 = arith.addf %145, %149 : vector<128x32xf32>
    %c32 = arith.constant 32 : index
    %c0_149 = arith.constant 0 : index
    %151 = vector.load %arg11[%c32, %c0_149] : memref<248x32xf32, #tpu.memory_space<vmem>>, vector<128x32xf32>
    %c6_150 = arith.constant 6 : index
    %c0_151 = arith.constant 0 : index
    %c0_152 = arith.constant 0 : index
    %152 = vector.load %arg4[%c6_150, %c0_151, %c0_152] : memref<9x32x32xf32, #tpu.memory_space<vmem>>, vector<1x32x32xf32>
    %153 = vector.shape_cast %152 : vector<1x32x32xf32> to vector<32x32xf32>
    %cst_153 = arith.constant dense<0.000000e+00> : vector<128x32xf32>
    %154 = tpu.matmul %151, %153, %cst_153 {dimension_numbers = #tpu.dot_dimension_numbers<[1], [0], [0], [1], [0, 0, 1, 1], [], []>} : vector<128x32xf32>, vector<32x32xf32>, vector<128x32xf32> -> vector<128x32xf32>
    %155 = arith.addf %150, %154 : vector<128x32xf32>
    %c33 = arith.constant 33 : index
    %c0_154 = arith.constant 0 : index
    %156 = vector.load %arg11[%c33, %c0_154] : memref<248x32xf32, #tpu.memory_space<vmem>>, vector<128x32xf32>
    %c7_155 = arith.constant 7 : index
    %c0_156 = arith.constant 0 : index
    %c0_157 = arith.constant 0 : index
    %157 = vector.load %arg4[%c7_155, %c0_156, %c0_157] : memref<9x32x32xf32, #tpu.memory_space<vmem>>, vector<1x32x32xf32>
    %158 = vector.shape_cast %157 : vector<1x32x32xf32> to vector<32x32xf32>
    %cst_158 = arith.constant dense<0.000000e+00> : vector<128x32xf32>
    %159 = tpu.matmul %156, %158, %cst_158 {dimension_numbers = #tpu.dot_dimension_numbers<[1], [0], [0], [1], [0, 0, 1, 1], [], []>} : vector<128x32xf32>, vector<32x32xf32>, vector<128x32xf32> -> vector<128x32xf32>
    %160 = arith.addf %155, %159 : vector<128x32xf32>
    %c34 = arith.constant 34 : index
    %c0_159 = arith.constant 0 : index
    %161 = vector.load %arg11[%c34, %c0_159] : memref<248x32xf32, #tpu.memory_space<vmem>>, vector<128x32xf32>
    %c8_160 = arith.constant 8 : index
    %c0_161 = arith.constant 0 : index
    %c0_162 = arith.constant 0 : index
    %162 = vector.load %arg4[%c8_160, %c0_161, %c0_162] : memref<9x32x32xf32, #tpu.memory_space<vmem>>, vector<1x32x32xf32>
    %163 = vector.shape_cast %162 : vector<1x32x32xf32> to vector<32x32xf32>
    %cst_163 = arith.constant dense<0.000000e+00> : vector<128x32xf32>
    %164 = tpu.matmul %161, %163, %cst_163 {dimension_numbers = #tpu.dot_dimension_numbers<[1], [0], [0], [1], [0, 0, 1, 1], [], []>} : vector<128x32xf32>, vector<32x32xf32>, vector<128x32xf32> -> vector<128x32xf32>
    %165 = arith.addf %160, %164 : vector<128x32xf32>
    %166 = vector.broadcast %121 : vector<1x32xf32> to vector<128x32xf32>
    %167 = arith.addf %165, %166 : vector<128x32xf32>
    %cst_164 = arith.constant 0.000000e+00 : f32
    %168 = vector.broadcast %cst_164 : f32 to vector<128x32xf32>
    %169 = arith.maximumf %167, %168 : vector<128x32xf32>
    %c0_165 = arith.constant 0 : index
    %c0_166 = arith.constant 0 : index
    %170 = vector.load %arg12[%c0_165, %c0_166] : memref<216x32xf32, #tpu.memory_space<vmem>>, vector<128x32xf32>
    tpu.vector_store %arg12[%c0_165, %c0_166], %169 {strides = array<i32>} : memref<216x32xf32, #tpu.memory_space<vmem>>, vector<128x32xf32>,
    %c128_167 = arith.constant 128 : index
    %c0_168 = arith.constant 0 : index
    %171 = vector.load %arg11[%c128_167, %c0_168] : memref<248x32xf32, #tpu.memory_space<vmem>>, vector<80x32xf32>
    %c0_169 = arith.constant 0 : index
    %c0_170 = arith.constant 0 : index
    %c0_171 = arith.constant 0 : index
    %172 = vector.load %arg4[%c0_169, %c0_170, %c0_171] : memref<9x32x32xf32, #tpu.memory_space<vmem>>, vector<1x32x32xf32>
    %173 = vector.shape_cast %172 : vector<1x32x32xf32> to vector<32x32xf32>
    %cst_172 = arith.constant dense<0.000000e+00> : vector<80x32xf32>
    %174 = tpu.matmul %171, %173, %cst_172 {dimension_numbers = #tpu.dot_dimension_numbers<[1], [0], [0], [1], [0, 0, 1, 1], [], []>} : vector<80x32xf32>, vector<32x32xf32>, vector<80x32xf32> -> vector<80x32xf32>
    %c129_173 = arith.constant 129 : index
    %c0_174 = arith.constant 0 : index
    %175 = vector.load %arg11[%c129_173, %c0_174] : memref<248x32xf32, #tpu.memory_space<vmem>>, vector<80x32xf32>
    %c1_175 = arith.constant 1 : index
    %c0_176 = arith.constant 0 : index
    %c0_177 = arith.constant 0 : index
    %176 = vector.load %arg4[%c1_175, %c0_176, %c0_177] : memref<9x32x32xf32, #tpu.memory_space<vmem>>, vector<1x32x32xf32>
    %177 = vector.shape_cast %176 : vector<1x32x32xf32> to vector<32x32xf32>
    %cst_178 = arith.constant dense<0.000000e+00> : vector<80x32xf32>
    %178 = tpu.matmul %175, %177, %cst_178 {dimension_numbers = #tpu.dot_dimension_numbers<[1], [0], [0], [1], [0, 0, 1, 1], [], []>} : vector<80x32xf32>, vector<32x32xf32>, vector<80x32xf32> -> vector<80x32xf32>
    %179 = arith.addf %174, %178 : vector<80x32xf32>
    %c130 = arith.constant 130 : index
    %c0_179 = arith.constant 0 : index
    %180 = vector.load %arg11[%c130, %c0_179] : memref<248x32xf32, #tpu.memory_space<vmem>>, vector<80x32xf32>
    %c2_180 = arith.constant 2 : index
    %c0_181 = arith.constant 0 : index
    %c0_182 = arith.constant 0 : index
    %181 = vector.load %arg4[%c2_180, %c0_181, %c0_182] : memref<9x32x32xf32, #tpu.memory_space<vmem>>, vector<1x32x32xf32>
    %182 = vector.shape_cast %181 : vector<1x32x32xf32> to vector<32x32xf32>
    %cst_183 = arith.constant dense<0.000000e+00> : vector<80x32xf32>
    %183 = tpu.matmul %180, %182, %cst_183 {dimension_numbers = #tpu.dot_dimension_numbers<[1], [0], [0], [1], [0, 0, 1, 1], [], []>} : vector<80x32xf32>, vector<32x32xf32>, vector<80x32xf32> -> vector<80x32xf32>
    %184 = arith.addf %179, %183 : vector<80x32xf32>
    %c144_184 = arith.constant 144 : index
    %c0_185 = arith.constant 0 : index
    %185 = vector.load %arg11[%c144_184, %c0_185] : memref<248x32xf32, #tpu.memory_space<vmem>>, vector<80x32xf32>
    %c3_186 = arith.constant 3 : index
    %c0_187 = arith.constant 0 : index
    %c0_188 = arith.constant 0 : index
    %186 = vector.load %arg4[%c3_186, %c0_187, %c0_188] : memref<9x32x32xf32, #tpu.memory_space<vmem>>, vector<1x32x32xf32>
    %187 = vector.shape_cast %186 : vector<1x32x32xf32> to vector<32x32xf32>
    %cst_189 = arith.constant dense<0.000000e+00> : vector<80x32xf32>
    %188 = tpu.matmul %185, %187, %cst_189 {dimension_numbers = #tpu.dot_dimension_numbers<[1], [0], [0], [1], [0, 0, 1, 1], [], []>} : vector<80x32xf32>, vector<32x32xf32>, vector<80x32xf32> -> vector<80x32xf32>
    %189 = arith.addf %184, %188 : vector<80x32xf32>
    %c145_190 = arith.constant 145 : index
    %c0_191 = arith.constant 0 : index
    %190 = vector.load %arg11[%c145_190, %c0_191] : memref<248x32xf32, #tpu.memory_space<vmem>>, vector<80x32xf32>
    %c4_192 = arith.constant 4 : index
    %c0_193 = arith.constant 0 : index
    %c0_194 = arith.constant 0 : index
    %191 = vector.load %arg4[%c4_192, %c0_193, %c0_194] : memref<9x32x32xf32, #tpu.memory_space<vmem>>, vector<1x32x32xf32>
    %192 = vector.shape_cast %191 : vector<1x32x32xf32> to vector<32x32xf32>
    %cst_195 = arith.constant dense<0.000000e+00> : vector<80x32xf32>
    %193 = tpu.matmul %190, %192, %cst_195 {dimension_numbers = #tpu.dot_dimension_numbers<[1], [0], [0], [1], [0, 0, 1, 1], [], []>} : vector<80x32xf32>, vector<32x32xf32>, vector<80x32xf32> -> vector<80x32xf32>
    %194 = arith.addf %189, %193 : vector<80x32xf32>
    %c146 = arith.constant 146 : index
    %c0_196 = arith.constant 0 : index
    %195 = vector.load %arg11[%c146, %c0_196] : memref<248x32xf32, #tpu.memory_space<vmem>>, vector<80x32xf32>
    %c5_197 = arith.constant 5 : index
    %c0_198 = arith.constant 0 : index
    %c0_199 = arith.constant 0 : index
    %196 = vector.load %arg4[%c5_197, %c0_198, %c0_199] : memref<9x32x32xf32, #tpu.memory_space<vmem>>, vector<1x32x32xf32>
    %197 = vector.shape_cast %196 : vector<1x32x32xf32> to vector<32x32xf32>
    %cst_200 = arith.constant dense<0.000000e+00> : vector<80x32xf32>
    %198 = tpu.matmul %195, %197, %cst_200 {dimension_numbers = #tpu.dot_dimension_numbers<[1], [0], [0], [1], [0, 0, 1, 1], [], []>} : vector<80x32xf32>, vector<32x32xf32>, vector<80x32xf32> -> vector<80x32xf32>
    %199 = arith.addf %194, %198 : vector<80x32xf32>
    %c160 = arith.constant 160 : index
    %c0_201 = arith.constant 0 : index
    %200 = vector.load %arg11[%c160, %c0_201] : memref<248x32xf32, #tpu.memory_space<vmem>>, vector<80x32xf32>
    %c6_202 = arith.constant 6 : index
    %c0_203 = arith.constant 0 : index
    %c0_204 = arith.constant 0 : index
    %201 = vector.load %arg4[%c6_202, %c0_203, %c0_204] : memref<9x32x32xf32, #tpu.memory_space<vmem>>, vector<1x32x32xf32>
    %202 = vector.shape_cast %201 : vector<1x32x32xf32> to vector<32x32xf32>
    %cst_205 = arith.constant dense<0.000000e+00> : vector<80x32xf32>
    %203 = tpu.matmul %200, %202, %cst_205 {dimension_numbers = #tpu.dot_dimension_numbers<[1], [0], [0], [1], [0, 0, 1, 1], [], []>} : vector<80x32xf32>, vector<32x32xf32>, vector<80x32xf32> -> vector<80x32xf32>
    %204 = arith.addf %199, %203 : vector<80x32xf32>
    %c161 = arith.constant 161 : index
    %c0_206 = arith.constant 0 : index
    %205 = vector.load %arg11[%c161, %c0_206] : memref<248x32xf32, #tpu.memory_space<vmem>>, vector<80x32xf32>
    %c7_207 = arith.constant 7 : index
    %c0_208 = arith.constant 0 : index
    %c0_209 = arith.constant 0 : index
    %206 = vector.load %arg4[%c7_207, %c0_208, %c0_209] : memref<9x32x32xf32, #tpu.memory_space<vmem>>, vector<1x32x32xf32>
    %207 = vector.shape_cast %206 : vector<1x32x32xf32> to vector<32x32xf32>
    %cst_210 = arith.constant dense<0.000000e+00> : vector<80x32xf32>
    %208 = tpu.matmul %205, %207, %cst_210 {dimension_numbers = #tpu.dot_dimension_numbers<[1], [0], [0], [1], [0, 0, 1, 1], [], []>} : vector<80x32xf32>, vector<32x32xf32>, vector<80x32xf32> -> vector<80x32xf32>
    %209 = arith.addf %204, %208 : vector<80x32xf32>
    %c162 = arith.constant 162 : index
    %c0_211 = arith.constant 0 : index
    %210 = vector.load %arg11[%c162, %c0_211] : memref<248x32xf32, #tpu.memory_space<vmem>>, vector<80x32xf32>
    %c8_212 = arith.constant 8 : index
    %c0_213 = arith.constant 0 : index
    %c0_214 = arith.constant 0 : index
    %211 = vector.load %arg4[%c8_212, %c0_213, %c0_214] : memref<9x32x32xf32, #tpu.memory_space<vmem>>, vector<1x32x32xf32>
    %212 = vector.shape_cast %211 : vector<1x32x32xf32> to vector<32x32xf32>
    %cst_215 = arith.constant dense<0.000000e+00> : vector<80x32xf32>
    %213 = tpu.matmul %210, %212, %cst_215 {dimension_numbers = #tpu.dot_dimension_numbers<[1], [0], [0], [1], [0, 0, 1, 1], [], []>} : vector<80x32xf32>, vector<32x32xf32>, vector<80x32xf32> -> vector<80x32xf32>
    %214 = arith.addf %209, %213 : vector<80x32xf32>
    %215 = vector.broadcast %121 : vector<1x32xf32> to vector<80x32xf32>
    %216 = arith.addf %214, %215 : vector<80x32xf32>
    %cst_216 = arith.constant 0.000000e+00 : f32
    %217 = vector.broadcast %cst_216 : f32 to vector<80x32xf32>
    %218 = arith.maximumf %216, %217 : vector<80x32xf32>
    %c128_217 = arith.constant 128 : index
    %c0_218 = arith.constant 0 : index
    %219 = vector.load %arg12[%c128_217, %c0_218] : memref<216x32xf32, #tpu.memory_space<vmem>>, vector<80x32xf32>
    tpu.vector_store %arg12[%c128_217, %c0_218], %218 {strides = array<i32>} : memref<216x32xf32, #tpu.memory_space<vmem>>, vector<80x32xf32>,
    %c0_219 = arith.constant 0 : index
    %c0_220 = arith.constant 0 : index
    %220 = vector.load %arg7[%c0_219, %c0_220] : memref<1x32xf32, #tpu.memory_space<vmem>>, vector<1x32xf32>
    %c0_221 = arith.constant 0 : index
    %c0_222 = arith.constant 0 : index
    %221 = vector.load %arg12[%c0_221, %c0_222] : memref<216x32xf32, #tpu.memory_space<vmem>>, vector<128x32xf32>
    %c0_223 = arith.constant 0 : index
    %c0_224 = arith.constant 0 : index
    %c0_225 = arith.constant 0 : index
    %222 = vector.load %arg6[%c0_223, %c0_224, %c0_225] : memref<9x32x32xf32, #tpu.memory_space<vmem>>, vector<1x32x32xf32>
    %223 = vector.shape_cast %222 : vector<1x32x32xf32> to vector<32x32xf32>
    %cst_226 = arith.constant dense<0.000000e+00> : vector<128x32xf32>
    %224 = tpu.matmul %221, %223, %cst_226 {dimension_numbers = #tpu.dot_dimension_numbers<[1], [0], [0], [1], [0, 0, 1, 1], [], []>} : vector<128x32xf32>, vector<32x32xf32>, vector<128x32xf32> -> vector<128x32xf32>
    %c1_227 = arith.constant 1 : index
    %c0_228 = arith.constant 0 : index
    %225 = vector.load %arg12[%c1_227, %c0_228] : memref<216x32xf32, #tpu.memory_space<vmem>>, vector<128x32xf32>
    %c1_229 = arith.constant 1 : index
    %c0_230 = arith.constant 0 : index
    %c0_231 = arith.constant 0 : index
    %226 = vector.load %arg6[%c1_229, %c0_230, %c0_231] : memref<9x32x32xf32, #tpu.memory_space<vmem>>, vector<1x32x32xf32>
    %227 = vector.shape_cast %226 : vector<1x32x32xf32> to vector<32x32xf32>
    %cst_232 = arith.constant dense<0.000000e+00> : vector<128x32xf32>
    %228 = tpu.matmul %225, %227, %cst_232 {dimension_numbers = #tpu.dot_dimension_numbers<[1], [0], [0], [1], [0, 0, 1, 1], [], []>} : vector<128x32xf32>, vector<32x32xf32>, vector<128x32xf32> -> vector<128x32xf32>
    %229 = arith.addf %224, %228 : vector<128x32xf32>
    %c2_233 = arith.constant 2 : index
    %c0_234 = arith.constant 0 : index
    %230 = vector.load %arg12[%c2_233, %c0_234] : memref<216x32xf32, #tpu.memory_space<vmem>>, vector<128x32xf32>
    %c2_235 = arith.constant 2 : index
    %c0_236 = arith.constant 0 : index
    %c0_237 = arith.constant 0 : index
    %231 = vector.load %arg6[%c2_235, %c0_236, %c0_237] : memref<9x32x32xf32, #tpu.memory_space<vmem>>, vector<1x32x32xf32>
    %232 = vector.shape_cast %231 : vector<1x32x32xf32> to vector<32x32xf32>
    %cst_238 = arith.constant dense<0.000000e+00> : vector<128x32xf32>
    %233 = tpu.matmul %230, %232, %cst_238 {dimension_numbers = #tpu.dot_dimension_numbers<[1], [0], [0], [1], [0, 0, 1, 1], [], []>} : vector<128x32xf32>, vector<32x32xf32>, vector<128x32xf32> -> vector<128x32xf32>
    %234 = arith.addf %229, %233 : vector<128x32xf32>
    %c16_239 = arith.constant 16 : index
    %c0_240 = arith.constant 0 : index
    %235 = vector.load %arg12[%c16_239, %c0_240] : memref<216x32xf32, #tpu.memory_space<vmem>>, vector<128x32xf32>
    %c3_241 = arith.constant 3 : index
    %c0_242 = arith.constant 0 : index
    %c0_243 = arith.constant 0 : index
    %236 = vector.load %arg6[%c3_241, %c0_242, %c0_243] : memref<9x32x32xf32, #tpu.memory_space<vmem>>, vector<1x32x32xf32>
    %237 = vector.shape_cast %236 : vector<1x32x32xf32> to vector<32x32xf32>
    %cst_244 = arith.constant dense<0.000000e+00> : vector<128x32xf32>
    %238 = tpu.matmul %235, %237, %cst_244 {dimension_numbers = #tpu.dot_dimension_numbers<[1], [0], [0], [1], [0, 0, 1, 1], [], []>} : vector<128x32xf32>, vector<32x32xf32>, vector<128x32xf32> -> vector<128x32xf32>
    %239 = arith.addf %234, %238 : vector<128x32xf32>
    %c17_245 = arith.constant 17 : index
    %c0_246 = arith.constant 0 : index
    %240 = vector.load %arg12[%c17_245, %c0_246] : memref<216x32xf32, #tpu.memory_space<vmem>>, vector<128x32xf32>
    %c4_247 = arith.constant 4 : index
    %c0_248 = arith.constant 0 : index
    %c0_249 = arith.constant 0 : index
    %241 = vector.load %arg6[%c4_247, %c0_248, %c0_249] : memref<9x32x32xf32, #tpu.memory_space<vmem>>, vector<1x32x32xf32>
    %242 = vector.shape_cast %241 : vector<1x32x32xf32> to vector<32x32xf32>
    %cst_250 = arith.constant dense<0.000000e+00> : vector<128x32xf32>
    %243 = tpu.matmul %240, %242, %cst_250 {dimension_numbers = #tpu.dot_dimension_numbers<[1], [0], [0], [1], [0, 0, 1, 1], [], []>} : vector<128x32xf32>, vector<32x32xf32>, vector<128x32xf32> -> vector<128x32xf32>
    %244 = arith.addf %239, %243 : vector<128x32xf32>
    %c18_251 = arith.constant 18 : index
    %c0_252 = arith.constant 0 : index
    %245 = vector.load %arg12[%c18_251, %c0_252] : memref<216x32xf32, #tpu.memory_space<vmem>>, vector<128x32xf32>
    %c5_253 = arith.constant 5 : index
    %c0_254 = arith.constant 0 : index
    %c0_255 = arith.constant 0 : index
    %246 = vector.load %arg6[%c5_253, %c0_254, %c0_255] : memref<9x32x32xf32, #tpu.memory_space<vmem>>, vector<1x32x32xf32>
    %247 = vector.shape_cast %246 : vector<1x32x32xf32> to vector<32x32xf32>
    %cst_256 = arith.constant dense<0.000000e+00> : vector<128x32xf32>
    %248 = tpu.matmul %245, %247, %cst_256 {dimension_numbers = #tpu.dot_dimension_numbers<[1], [0], [0], [1], [0, 0, 1, 1], [], []>} : vector<128x32xf32>, vector<32x32xf32>, vector<128x32xf32> -> vector<128x32xf32>
    %249 = arith.addf %244, %248 : vector<128x32xf32>
    %c32_257 = arith.constant 32 : index
    %c0_258 = arith.constant 0 : index
    %250 = vector.load %arg12[%c32_257, %c0_258] : memref<216x32xf32, #tpu.memory_space<vmem>>, vector<128x32xf32>
    %c6_259 = arith.constant 6 : index
    %c0_260 = arith.constant 0 : index
    %c0_261 = arith.constant 0 : index
    %251 = vector.load %arg6[%c6_259, %c0_260, %c0_261] : memref<9x32x32xf32, #tpu.memory_space<vmem>>, vector<1x32x32xf32>
    %252 = vector.shape_cast %251 : vector<1x32x32xf32> to vector<32x32xf32>
    %cst_262 = arith.constant dense<0.000000e+00> : vector<128x32xf32>
    %253 = tpu.matmul %250, %252, %cst_262 {dimension_numbers = #tpu.dot_dimension_numbers<[1], [0], [0], [1], [0, 0, 1, 1], [], []>} : vector<128x32xf32>, vector<32x32xf32>, vector<128x32xf32> -> vector<128x32xf32>
    %254 = arith.addf %249, %253 : vector<128x32xf32>
    %c33_263 = arith.constant 33 : index
    %c0_264 = arith.constant 0 : index
    %255 = vector.load %arg12[%c33_263, %c0_264] : memref<216x32xf32, #tpu.memory_space<vmem>>, vector<128x32xf32>
    %c7_265 = arith.constant 7 : index
    %c0_266 = arith.constant 0 : index
    %c0_267 = arith.constant 0 : index
    %256 = vector.load %arg6[%c7_265, %c0_266, %c0_267] : memref<9x32x32xf32, #tpu.memory_space<vmem>>, vector<1x32x32xf32>
    %257 = vector.shape_cast %256 : vector<1x32x32xf32> to vector<32x32xf32>
    %cst_268 = arith.constant dense<0.000000e+00> : vector<128x32xf32>
    %258 = tpu.matmul %255, %257, %cst_268 {dimension_numbers = #tpu.dot_dimension_numbers<[1], [0], [0], [1], [0, 0, 1, 1], [], []>} : vector<128x32xf32>, vector<32x32xf32>, vector<128x32xf32> -> vector<128x32xf32>
    %259 = arith.addf %254, %258 : vector<128x32xf32>
    %c34_269 = arith.constant 34 : index
    %c0_270 = arith.constant 0 : index
    %260 = vector.load %arg12[%c34_269, %c0_270] : memref<216x32xf32, #tpu.memory_space<vmem>>, vector<128x32xf32>
    %c8_271 = arith.constant 8 : index
    %c0_272 = arith.constant 0 : index
    %c0_273 = arith.constant 0 : index
    %261 = vector.load %arg6[%c8_271, %c0_272, %c0_273] : memref<9x32x32xf32, #tpu.memory_space<vmem>>, vector<1x32x32xf32>
    %262 = vector.shape_cast %261 : vector<1x32x32xf32> to vector<32x32xf32>
    %cst_274 = arith.constant dense<0.000000e+00> : vector<128x32xf32>
    %263 = tpu.matmul %260, %262, %cst_274 {dimension_numbers = #tpu.dot_dimension_numbers<[1], [0], [0], [1], [0, 0, 1, 1], [], []>} : vector<128x32xf32>, vector<32x32xf32>, vector<128x32xf32> -> vector<128x32xf32>
    %264 = arith.addf %259, %263 : vector<128x32xf32>
    %265 = vector.broadcast %220 : vector<1x32xf32> to vector<128x32xf32>
    %266 = arith.addf %264, %265 : vector<128x32xf32>
    %cst_275 = arith.constant 0.000000e+00 : f32
    %267 = vector.broadcast %cst_275 : f32 to vector<128x32xf32>
    %268 = arith.maximumf %266, %267 : vector<128x32xf32>
    %c0_276 = arith.constant 0 : index
    %c0_277 = arith.constant 0 : index
    %269 = vector.load %arg11[%c0_276, %c0_277] : memref<248x32xf32, #tpu.memory_space<vmem>>, vector<128x32xf32>
    tpu.vector_store %arg11[%c0_276, %c0_277], %268 {strides = array<i32>} : memref<248x32xf32, #tpu.memory_space<vmem>>, vector<128x32xf32>,
    %c128_278 = arith.constant 128 : index
    %c0_279 = arith.constant 0 : index
    %270 = vector.load %arg12[%c128_278, %c0_279] : memref<216x32xf32, #tpu.memory_space<vmem>>, vector<48x32xf32>
    %c0_280 = arith.constant 0 : index
    %c0_281 = arith.constant 0 : index
    %c0_282 = arith.constant 0 : index
    %271 = vector.load %arg6[%c0_280, %c0_281, %c0_282] : memref<9x32x32xf32, #tpu.memory_space<vmem>>, vector<1x32x32xf32>
    %272 = vector.shape_cast %271 : vector<1x32x32xf32> to vector<32x32xf32>
    %cst_283 = arith.constant dense<0.000000e+00> : vector<48x32xf32>
    %273 = tpu.matmul %270, %272, %cst_283 {dimension_numbers = #tpu.dot_dimension_numbers<[1], [0], [0], [1], [0, 0, 1, 1], [], []>} : vector<48x32xf32>, vector<32x32xf32>, vector<48x32xf32> -> vector<48x32xf32>
    %c129_284 = arith.constant 129 : index
    %c0_285 = arith.constant 0 : index
    %274 = vector.load %arg12[%c129_284, %c0_285] : memref<216x32xf32, #tpu.memory_space<vmem>>, vector<48x32xf32>
    %c1_286 = arith.constant 1 : index
    %c0_287 = arith.constant 0 : index
    %c0_288 = arith.constant 0 : index
    %275 = vector.load %arg6[%c1_286, %c0_287, %c0_288] : memref<9x32x32xf32, #tpu.memory_space<vmem>>, vector<1x32x32xf32>
    %276 = vector.shape_cast %275 : vector<1x32x32xf32> to vector<32x32xf32>
    %cst_289 = arith.constant dense<0.000000e+00> : vector<48x32xf32>
    %277 = tpu.matmul %274, %276, %cst_289 {dimension_numbers = #tpu.dot_dimension_numbers<[1], [0], [0], [1], [0, 0, 1, 1], [], []>} : vector<48x32xf32>, vector<32x32xf32>, vector<48x32xf32> -> vector<48x32xf32>
    %278 = arith.addf %273, %277 : vector<48x32xf32>
    %c130_290 = arith.constant 130 : index
    %c0_291 = arith.constant 0 : index
    %279 = vector.load %arg12[%c130_290, %c0_291] : memref<216x32xf32, #tpu.memory_space<vmem>>, vector<48x32xf32>
    %c2_292 = arith.constant 2 : index
    %c0_293 = arith.constant 0 : index
    %c0_294 = arith.constant 0 : index
    %280 = vector.load %arg6[%c2_292, %c0_293, %c0_294] : memref<9x32x32xf32, #tpu.memory_space<vmem>>, vector<1x32x32xf32>
    %281 = vector.shape_cast %280 : vector<1x32x32xf32> to vector<32x32xf32>
    %cst_295 = arith.constant dense<0.000000e+00> : vector<48x32xf32>
    %282 = tpu.matmul %279, %281, %cst_295 {dimension_numbers = #tpu.dot_dimension_numbers<[1], [0], [0], [1], [0, 0, 1, 1], [], []>} : vector<48x32xf32>, vector<32x32xf32>, vector<48x32xf32> -> vector<48x32xf32>
    %283 = arith.addf %278, %282 : vector<48x32xf32>
    %c144_296 = arith.constant 144 : index
    %c0_297 = arith.constant 0 : index
    %284 = vector.load %arg12[%c144_296, %c0_297] : memref<216x32xf32, #tpu.memory_space<vmem>>, vector<48x32xf32>
    %c3_298 = arith.constant 3 : index
    %c0_299 = arith.constant 0 : index
    %c0_300 = arith.constant 0 : index
    %285 = vector.load %arg6[%c3_298, %c0_299, %c0_300] : memref<9x32x32xf32, #tpu.memory_space<vmem>>, vector<1x32x32xf32>
    %286 = vector.shape_cast %285 : vector<1x32x32xf32> to vector<32x32xf32>
    %cst_301 = arith.constant dense<0.000000e+00> : vector<48x32xf32>
    %287 = tpu.matmul %284, %286, %cst_301 {dimension_numbers = #tpu.dot_dimension_numbers<[1], [0], [0], [1], [0, 0, 1, 1], [], []>} : vector<48x32xf32>, vector<32x32xf32>, vector<48x32xf32> -> vector<48x32xf32>
    %288 = arith.addf %283, %287 : vector<48x32xf32>
    %c145_302 = arith.constant 145 : index
    %c0_303 = arith.constant 0 : index
    %289 = vector.load %arg12[%c145_302, %c0_303] : memref<216x32xf32, #tpu.memory_space<vmem>>, vector<48x32xf32>
    %c4_304 = arith.constant 4 : index
    %c0_305 = arith.constant 0 : index
    %c0_306 = arith.constant 0 : index
    %290 = vector.load %arg6[%c4_304, %c0_305, %c0_306] : memref<9x32x32xf32, #tpu.memory_space<vmem>>, vector<1x32x32xf32>
    %291 = vector.shape_cast %290 : vector<1x32x32xf32> to vector<32x32xf32>
    %cst_307 = arith.constant dense<0.000000e+00> : vector<48x32xf32>
    %292 = tpu.matmul %289, %291, %cst_307 {dimension_numbers = #tpu.dot_dimension_numbers<[1], [0], [0], [1], [0, 0, 1, 1], [], []>} : vector<48x32xf32>, vector<32x32xf32>, vector<48x32xf32> -> vector<48x32xf32>
    %293 = arith.addf %288, %292 : vector<48x32xf32>
    %c146_308 = arith.constant 146 : index
    %c0_309 = arith.constant 0 : index
    %294 = vector.load %arg12[%c146_308, %c0_309] : memref<216x32xf32, #tpu.memory_space<vmem>>, vector<48x32xf32>
    %c5_310 = arith.constant 5 : index
    %c0_311 = arith.constant 0 : index
    %c0_312 = arith.constant 0 : index
    %295 = vector.load %arg6[%c5_310, %c0_311, %c0_312] : memref<9x32x32xf32, #tpu.memory_space<vmem>>, vector<1x32x32xf32>
    %296 = vector.shape_cast %295 : vector<1x32x32xf32> to vector<32x32xf32>
    %cst_313 = arith.constant dense<0.000000e+00> : vector<48x32xf32>
    %297 = tpu.matmul %294, %296, %cst_313 {dimension_numbers = #tpu.dot_dimension_numbers<[1], [0], [0], [1], [0, 0, 1, 1], [], []>} : vector<48x32xf32>, vector<32x32xf32>, vector<48x32xf32> -> vector<48x32xf32>
    %298 = arith.addf %293, %297 : vector<48x32xf32>
    %c160_314 = arith.constant 160 : index
    %c0_315 = arith.constant 0 : index
    %299 = vector.load %arg12[%c160_314, %c0_315] : memref<216x32xf32, #tpu.memory_space<vmem>>, vector<48x32xf32>
    %c6_316 = arith.constant 6 : index
    %c0_317 = arith.constant 0 : index
    %c0_318 = arith.constant 0 : index
    %300 = vector.load %arg6[%c6_316, %c0_317, %c0_318] : memref<9x32x32xf32, #tpu.memory_space<vmem>>, vector<1x32x32xf32>
    %301 = vector.shape_cast %300 : vector<1x32x32xf32> to vector<32x32xf32>
    %cst_319 = arith.constant dense<0.000000e+00> : vector<48x32xf32>
    %302 = tpu.matmul %299, %301, %cst_319 {dimension_numbers = #tpu.dot_dimension_numbers<[1], [0], [0], [1], [0, 0, 1, 1], [], []>} : vector<48x32xf32>, vector<32x32xf32>, vector<48x32xf32> -> vector<48x32xf32>
    %303 = arith.addf %298, %302 : vector<48x32xf32>
    %c161_320 = arith.constant 161 : index
    %c0_321 = arith.constant 0 : index
    %304 = vector.load %arg12[%c161_320, %c0_321] : memref<216x32xf32, #tpu.memory_space<vmem>>, vector<48x32xf32>
    %c7_322 = arith.constant 7 : index
    %c0_323 = arith.constant 0 : index
    %c0_324 = arith.constant 0 : index
    %305 = vector.load %arg6[%c7_322, %c0_323, %c0_324] : memref<9x32x32xf32, #tpu.memory_space<vmem>>, vector<1x32x32xf32>
    %306 = vector.shape_cast %305 : vector<1x32x32xf32> to vector<32x32xf32>
    %cst_325 = arith.constant dense<0.000000e+00> : vector<48x32xf32>
    %307 = tpu.matmul %304, %306, %cst_325 {dimension_numbers = #tpu.dot_dimension_numbers<[1], [0], [0], [1], [0, 0, 1, 1], [], []>} : vector<48x32xf32>, vector<32x32xf32>, vector<48x32xf32> -> vector<48x32xf32>
    %308 = arith.addf %303, %307 : vector<48x32xf32>
    %c162_326 = arith.constant 162 : index
    %c0_327 = arith.constant 0 : index
    %309 = vector.load %arg12[%c162_326, %c0_327] : memref<216x32xf32, #tpu.memory_space<vmem>>, vector<48x32xf32>
    %c8_328 = arith.constant 8 : index
    %c0_329 = arith.constant 0 : index
    %c0_330 = arith.constant 0 : index
    %310 = vector.load %arg6[%c8_328, %c0_329, %c0_330] : memref<9x32x32xf32, #tpu.memory_space<vmem>>, vector<1x32x32xf32>
    %311 = vector.shape_cast %310 : vector<1x32x32xf32> to vector<32x32xf32>
    %cst_331 = arith.constant dense<0.000000e+00> : vector<48x32xf32>
    %312 = tpu.matmul %309, %311, %cst_331 {dimension_numbers = #tpu.dot_dimension_numbers<[1], [0], [0], [1], [0, 0, 1, 1], [], []>} : vector<48x32xf32>, vector<32x32xf32>, vector<48x32xf32> -> vector<48x32xf32>
    %313 = arith.addf %308, %312 : vector<48x32xf32>
    %314 = vector.broadcast %220 : vector<1x32xf32> to vector<48x32xf32>
    %315 = arith.addf %313, %314 : vector<48x32xf32>
    %cst_332 = arith.constant 0.000000e+00 : f32
    %316 = vector.broadcast %cst_332 : f32 to vector<48x32xf32>
    %317 = arith.maximumf %315, %316 : vector<48x32xf32>
    %c128_333 = arith.constant 128 : index
    %c0_334 = arith.constant 0 : index
    %318 = vector.load %arg11[%c128_333, %c0_334] : memref<248x32xf32, #tpu.memory_space<vmem>>, vector<48x32xf32>
    tpu.vector_store %arg11[%c128_333, %c0_334], %317 {strides = array<i32>} : memref<248x32xf32, #tpu.memory_space<vmem>>, vector<48x32xf32>,
    %c0_335 = arith.constant 0 : index
    %c0_336 = arith.constant 0 : index
    %319 = vector.load %arg9[%c0_335, %c0_336] : memref<1x32xf32, #tpu.memory_space<vmem>>, vector<1x32xf32>
    %c0_337 = arith.constant 0 : index
    %c0_338 = arith.constant 0 : index
    %320 = vector.load %arg11[%c0_337, %c0_338] : memref<248x32xf32, #tpu.memory_space<vmem>>, vector<128x32xf32>
    %c0_339 = arith.constant 0 : index
    %c0_340 = arith.constant 0 : index
    %c0_341 = arith.constant 0 : index
    %321 = vector.load %arg8[%c0_339, %c0_340, %c0_341] : memref<9x32x32xf32, #tpu.memory_space<vmem>>, vector<1x32x32xf32>
    %322 = vector.shape_cast %321 : vector<1x32x32xf32> to vector<32x32xf32>
    %cst_342 = arith.constant dense<0.000000e+00> : vector<128x32xf32>
    %323 = tpu.matmul %320, %322, %cst_342 {dimension_numbers = #tpu.dot_dimension_numbers<[1], [0], [0], [1], [0, 0, 1, 1], [], []>} : vector<128x32xf32>, vector<32x32xf32>, vector<128x32xf32> -> vector<128x32xf32>
    %c1_343 = arith.constant 1 : index
    %c0_344 = arith.constant 0 : index
    %324 = vector.load %arg11[%c1_343, %c0_344] : memref<248x32xf32, #tpu.memory_space<vmem>>, vector<128x32xf32>
    %c1_345 = arith.constant 1 : index
    %c0_346 = arith.constant 0 : index
    %c0_347 = arith.constant 0 : index
    %325 = vector.load %arg8[%c1_345, %c0_346, %c0_347] : memref<9x32x32xf32, #tpu.memory_space<vmem>>, vector<1x32x32xf32>
    %326 = vector.shape_cast %325 : vector<1x32x32xf32> to vector<32x32xf32>
    %cst_348 = arith.constant dense<0.000000e+00> : vector<128x32xf32>
    %327 = tpu.matmul %324, %326, %cst_348 {dimension_numbers = #tpu.dot_dimension_numbers<[1], [0], [0], [1], [0, 0, 1, 1], [], []>} : vector<128x32xf32>, vector<32x32xf32>, vector<128x32xf32> -> vector<128x32xf32>
    %328 = arith.addf %323, %327 : vector<128x32xf32>
    %c2_349 = arith.constant 2 : index
    %c0_350 = arith.constant 0 : index
    %329 = vector.load %arg11[%c2_349, %c0_350] : memref<248x32xf32, #tpu.memory_space<vmem>>, vector<128x32xf32>
    %c2_351 = arith.constant 2 : index
    %c0_352 = arith.constant 0 : index
    %c0_353 = arith.constant 0 : index
    %330 = vector.load %arg8[%c2_351, %c0_352, %c0_353] : memref<9x32x32xf32, #tpu.memory_space<vmem>>, vector<1x32x32xf32>
    %331 = vector.shape_cast %330 : vector<1x32x32xf32> to vector<32x32xf32>
    %cst_354 = arith.constant dense<0.000000e+00> : vector<128x32xf32>
    %332 = tpu.matmul %329, %331, %cst_354 {dimension_numbers = #tpu.dot_dimension_numbers<[1], [0], [0], [1], [0, 0, 1, 1], [], []>} : vector<128x32xf32>, vector<32x32xf32>, vector<128x32xf32> -> vector<128x32xf32>
    %333 = arith.addf %328, %332 : vector<128x32xf32>
    %c16_355 = arith.constant 16 : index
    %c0_356 = arith.constant 0 : index
    %334 = vector.load %arg11[%c16_355, %c0_356] : memref<248x32xf32, #tpu.memory_space<vmem>>, vector<128x32xf32>
    %c3_357 = arith.constant 3 : index
    %c0_358 = arith.constant 0 : index
    %c0_359 = arith.constant 0 : index
    %335 = vector.load %arg8[%c3_357, %c0_358, %c0_359] : memref<9x32x32xf32, #tpu.memory_space<vmem>>, vector<1x32x32xf32>
    %336 = vector.shape_cast %335 : vector<1x32x32xf32> to vector<32x32xf32>
    %cst_360 = arith.constant dense<0.000000e+00> : vector<128x32xf32>
    %337 = tpu.matmul %334, %336, %cst_360 {dimension_numbers = #tpu.dot_dimension_numbers<[1], [0], [0], [1], [0, 0, 1, 1], [], []>} : vector<128x32xf32>, vector<32x32xf32>, vector<128x32xf32> -> vector<128x32xf32>
    %338 = arith.addf %333, %337 : vector<128x32xf32>
    %c17_361 = arith.constant 17 : index
    %c0_362 = arith.constant 0 : index
    %339 = vector.load %arg11[%c17_361, %c0_362] : memref<248x32xf32, #tpu.memory_space<vmem>>, vector<128x32xf32>
    %c4_363 = arith.constant 4 : index
    %c0_364 = arith.constant 0 : index
    %c0_365 = arith.constant 0 : index
    %340 = vector.load %arg8[%c4_363, %c0_364, %c0_365] : memref<9x32x32xf32, #tpu.memory_space<vmem>>, vector<1x32x32xf32>
    %341 = vector.shape_cast %340 : vector<1x32x32xf32> to vector<32x32xf32>
    %cst_366 = arith.constant dense<0.000000e+00> : vector<128x32xf32>
    %342 = tpu.matmul %339, %341, %cst_366 {dimension_numbers = #tpu.dot_dimension_numbers<[1], [0], [0], [1], [0, 0, 1, 1], [], []>} : vector<128x32xf32>, vector<32x32xf32>, vector<128x32xf32> -> vector<128x32xf32>
    %343 = arith.addf %338, %342 : vector<128x32xf32>
    %c18_367 = arith.constant 18 : index
    %c0_368 = arith.constant 0 : index
    %344 = vector.load %arg11[%c18_367, %c0_368] : memref<248x32xf32, #tpu.memory_space<vmem>>, vector<128x32xf32>
    %c5_369 = arith.constant 5 : index
    %c0_370 = arith.constant 0 : index
    %c0_371 = arith.constant 0 : index
    %345 = vector.load %arg8[%c5_369, %c0_370, %c0_371] : memref<9x32x32xf32, #tpu.memory_space<vmem>>, vector<1x32x32xf32>
    %346 = vector.shape_cast %345 : vector<1x32x32xf32> to vector<32x32xf32>
    %cst_372 = arith.constant dense<0.000000e+00> : vector<128x32xf32>
    %347 = tpu.matmul %344, %346, %cst_372 {dimension_numbers = #tpu.dot_dimension_numbers<[1], [0], [0], [1], [0, 0, 1, 1], [], []>} : vector<128x32xf32>, vector<32x32xf32>, vector<128x32xf32> -> vector<128x32xf32>
    %348 = arith.addf %343, %347 : vector<128x32xf32>
    %c32_373 = arith.constant 32 : index
    %c0_374 = arith.constant 0 : index
    %349 = vector.load %arg11[%c32_373, %c0_374] : memref<248x32xf32, #tpu.memory_space<vmem>>, vector<128x32xf32>
    %c6_375 = arith.constant 6 : index
    %c0_376 = arith.constant 0 : index
    %c0_377 = arith.constant 0 : index
    %350 = vector.load %arg8[%c6_375, %c0_376, %c0_377] : memref<9x32x32xf32, #tpu.memory_space<vmem>>, vector<1x32x32xf32>
    %351 = vector.shape_cast %350 : vector<1x32x32xf32> to vector<32x32xf32>
    %cst_378 = arith.constant dense<0.000000e+00> : vector<128x32xf32>
    %352 = tpu.matmul %349, %351, %cst_378 {dimension_numbers = #tpu.dot_dimension_numbers<[1], [0], [0], [1], [0, 0, 1, 1], [], []>} : vector<128x32xf32>, vector<32x32xf32>, vector<128x32xf32> -> vector<128x32xf32>
    %353 = arith.addf %348, %352 : vector<128x32xf32>
    %c33_379 = arith.constant 33 : index
    %c0_380 = arith.constant 0 : index
    %354 = vector.load %arg11[%c33_379, %c0_380] : memref<248x32xf32, #tpu.memory_space<vmem>>, vector<128x32xf32>
    %c7_381 = arith.constant 7 : index
    %c0_382 = arith.constant 0 : index
    %c0_383 = arith.constant 0 : index
    %355 = vector.load %arg8[%c7_381, %c0_382, %c0_383] : memref<9x32x32xf32, #tpu.memory_space<vmem>>, vector<1x32x32xf32>
    %356 = vector.shape_cast %355 : vector<1x32x32xf32> to vector<32x32xf32>
    %cst_384 = arith.constant dense<0.000000e+00> : vector<128x32xf32>
    %357 = tpu.matmul %354, %356, %cst_384 {dimension_numbers = #tpu.dot_dimension_numbers<[1], [0], [0], [1], [0, 0, 1, 1], [], []>} : vector<128x32xf32>, vector<32x32xf32>, vector<128x32xf32> -> vector<128x32xf32>
    %358 = arith.addf %353, %357 : vector<128x32xf32>
    %c34_385 = arith.constant 34 : index
    %c0_386 = arith.constant 0 : index
    %359 = vector.load %arg11[%c34_385, %c0_386] : memref<248x32xf32, #tpu.memory_space<vmem>>, vector<128x32xf32>
    %c8_387 = arith.constant 8 : index
    %c0_388 = arith.constant 0 : index
    %c0_389 = arith.constant 0 : index
    %360 = vector.load %arg8[%c8_387, %c0_388, %c0_389] : memref<9x32x32xf32, #tpu.memory_space<vmem>>, vector<1x32x32xf32>
    %361 = vector.shape_cast %360 : vector<1x32x32xf32> to vector<32x32xf32>
    %cst_390 = arith.constant dense<0.000000e+00> : vector<128x32xf32>
    %362 = tpu.matmul %359, %361, %cst_390 {dimension_numbers = #tpu.dot_dimension_numbers<[1], [0], [0], [1], [0, 0, 1, 1], [], []>} : vector<128x32xf32>, vector<32x32xf32>, vector<128x32xf32> -> vector<128x32xf32>
    %363 = arith.addf %358, %362 : vector<128x32xf32>
    %364 = vector.broadcast %319 : vector<1x32xf32> to vector<128x32xf32>
    %365 = arith.addf %363, %364 : vector<128x32xf32>
    %cst_391 = arith.constant 0.000000e+00 : f32
    %366 = vector.broadcast %cst_391 : f32 to vector<128x32xf32>
    %367 = arith.maximumf %365, %366 : vector<128x32xf32>
    %c0_392 = arith.constant 0 : index
    %c0_393 = arith.constant 0 : index
    %c0_394 = arith.constant 0 : index
    %368 = vector.load %arg10[%c0_392, %c0_393, %c0_394] : memref<1x144x32xf32, #tpu.memory_space<vmem>>, vector<1x128x32xf32>
    %369 = vector.shape_cast %368 : vector<1x128x32xf32> to vector<128x32xf32>
    %370 = vector.shape_cast %367 : vector<128x32xf32> to vector<1x128x32xf32>
    tpu.vector_store %arg10[%c0_392, %c0_393, %c0_394], %370 {strides = array<i32>} : memref<1x144x32xf32, #tpu.memory_space<vmem>>, vector<1x128x32xf32>,
    %c128_395 = arith.constant 128 : index
    %c0_396 = arith.constant 0 : index
    %371 = vector.load %arg11[%c128_395, %c0_396] : memref<248x32xf32, #tpu.memory_space<vmem>>, vector<16x32xf32>
    %c0_397 = arith.constant 0 : index
    %c0_398 = arith.constant 0 : index
    %c0_399 = arith.constant 0 : index
    %372 = vector.load %arg8[%c0_397, %c0_398, %c0_399] : memref<9x32x32xf32, #tpu.memory_space<vmem>>, vector<1x32x32xf32>
    %373 = vector.shape_cast %372 : vector<1x32x32xf32> to vector<32x32xf32>
    %cst_400 = arith.constant dense<0.000000e+00> : vector<16x32xf32>
    %374 = tpu.matmul %371, %373, %cst_400 {dimension_numbers = #tpu.dot_dimension_numbers<[1], [0], [0], [1], [0, 0, 1, 1], [], []>} : vector<16x32xf32>, vector<32x32xf32>, vector<16x32xf32> -> vector<16x32xf32>
    %c129_401 = arith.constant 129 : index
    %c0_402 = arith.constant 0 : index
    %375 = vector.load %arg11[%c129_401, %c0_402] : memref<248x32xf32, #tpu.memory_space<vmem>>, vector<16x32xf32>
    %c1_403 = arith.constant 1 : index
    %c0_404 = arith.constant 0 : index
    %c0_405 = arith.constant 0 : index
    %376 = vector.load %arg8[%c1_403, %c0_404, %c0_405] : memref<9x32x32xf32, #tpu.memory_space<vmem>>, vector<1x32x32xf32>
    %377 = vector.shape_cast %376 : vector<1x32x32xf32> to vector<32x32xf32>
    %cst_406 = arith.constant dense<0.000000e+00> : vector<16x32xf32>
    %378 = tpu.matmul %375, %377, %cst_406 {dimension_numbers = #tpu.dot_dimension_numbers<[1], [0], [0], [1], [0, 0, 1, 1], [], []>} : vector<16x32xf32>, vector<32x32xf32>, vector<16x32xf32> -> vector<16x32xf32>
    %379 = arith.addf %374, %378 : vector<16x32xf32>
    %c130_407 = arith.constant 130 : index
    %c0_408 = arith.constant 0 : index
    %380 = vector.load %arg11[%c130_407, %c0_408] : memref<248x32xf32, #tpu.memory_space<vmem>>, vector<16x32xf32>
    %c2_409 = arith.constant 2 : index
    %c0_410 = arith.constant 0 : index
    %c0_411 = arith.constant 0 : index
    %381 = vector.load %arg8[%c2_409, %c0_410, %c0_411] : memref<9x32x32xf32, #tpu.memory_space<vmem>>, vector<1x32x32xf32>
    %382 = vector.shape_cast %381 : vector<1x32x32xf32> to vector<32x32xf32>
    %cst_412 = arith.constant dense<0.000000e+00> : vector<16x32xf32>
    %383 = tpu.matmul %380, %382, %cst_412 {dimension_numbers = #tpu.dot_dimension_numbers<[1], [0], [0], [1], [0, 0, 1, 1], [], []>} : vector<16x32xf32>, vector<32x32xf32>, vector<16x32xf32> -> vector<16x32xf32>
    %384 = arith.addf %379, %383 : vector<16x32xf32>
    %c144_413 = arith.constant 144 : index
    %c0_414 = arith.constant 0 : index
    %385 = vector.load %arg11[%c144_413, %c0_414] : memref<248x32xf32, #tpu.memory_space<vmem>>, vector<16x32xf32>
    %c3_415 = arith.constant 3 : index
    %c0_416 = arith.constant 0 : index
    %c0_417 = arith.constant 0 : index
    %386 = vector.load %arg8[%c3_415, %c0_416, %c0_417] : memref<9x32x32xf32, #tpu.memory_space<vmem>>, vector<1x32x32xf32>
    %387 = vector.shape_cast %386 : vector<1x32x32xf32> to vector<32x32xf32>
    %cst_418 = arith.constant dense<0.000000e+00> : vector<16x32xf32>
    %388 = tpu.matmul %385, %387, %cst_418 {dimension_numbers = #tpu.dot_dimension_numbers<[1], [0], [0], [1], [0, 0, 1, 1], [], []>} : vector<16x32xf32>, vector<32x32xf32>, vector<16x32xf32> -> vector<16x32xf32>
    %389 = arith.addf %384, %388 : vector<16x32xf32>
    %c145_419 = arith.constant 145 : index
    %c0_420 = arith.constant 0 : index
    %390 = vector.load %arg11[%c145_419, %c0_420] : memref<248x32xf32, #tpu.memory_space<vmem>>, vector<16x32xf32>
    %c4_421 = arith.constant 4 : index
    %c0_422 = arith.constant 0 : index
    %c0_423 = arith.constant 0 : index
    %391 = vector.load %arg8[%c4_421, %c0_422, %c0_423] : memref<9x32x32xf32, #tpu.memory_space<vmem>>, vector<1x32x32xf32>
    %392 = vector.shape_cast %391 : vector<1x32x32xf32> to vector<32x32xf32>
    %cst_424 = arith.constant dense<0.000000e+00> : vector<16x32xf32>
    %393 = tpu.matmul %390, %392, %cst_424 {dimension_numbers = #tpu.dot_dimension_numbers<[1], [0], [0], [1], [0, 0, 1, 1], [], []>} : vector<16x32xf32>, vector<32x32xf32>, vector<16x32xf32> -> vector<16x32xf32>
    %394 = arith.addf %389, %393 : vector<16x32xf32>
    %c146_425 = arith.constant 146 : index
    %c0_426 = arith.constant 0 : index
    %395 = vector.load %arg11[%c146_425, %c0_426] : memref<248x32xf32, #tpu.memory_space<vmem>>, vector<16x32xf32>
    %c5_427 = arith.constant 5 : index
    %c0_428 = arith.constant 0 : index
    %c0_429 = arith.constant 0 : index
    %396 = vector.load %arg8[%c5_427, %c0_428, %c0_429] : memref<9x32x32xf32, #tpu.memory_space<vmem>>, vector<1x32x32xf32>
    %397 = vector.shape_cast %396 : vector<1x32x32xf32> to vector<32x32xf32>
    %cst_430 = arith.constant dense<0.000000e+00> : vector<16x32xf32>
    %398 = tpu.matmul %395, %397, %cst_430 {dimension_numbers = #tpu.dot_dimension_numbers<[1], [0], [0], [1], [0, 0, 1, 1], [], []>} : vector<16x32xf32>, vector<32x32xf32>, vector<16x32xf32> -> vector<16x32xf32>
    %399 = arith.addf %394, %398 : vector<16x32xf32>
    %c160_431 = arith.constant 160 : index
    %c0_432 = arith.constant 0 : index
    %400 = vector.load %arg11[%c160_431, %c0_432] : memref<248x32xf32, #tpu.memory_space<vmem>>, vector<16x32xf32>
    %c6_433 = arith.constant 6 : index
    %c0_434 = arith.constant 0 : index
    %c0_435 = arith.constant 0 : index
    %401 = vector.load %arg8[%c6_433, %c0_434, %c0_435] : memref<9x32x32xf32, #tpu.memory_space<vmem>>, vector<1x32x32xf32>
    %402 = vector.shape_cast %401 : vector<1x32x32xf32> to vector<32x32xf32>
    %cst_436 = arith.constant dense<0.000000e+00> : vector<16x32xf32>
    %403 = tpu.matmul %400, %402, %cst_436 {dimension_numbers = #tpu.dot_dimension_numbers<[1], [0], [0], [1], [0, 0, 1, 1], [], []>} : vector<16x32xf32>, vector<32x32xf32>, vector<16x32xf32> -> vector<16x32xf32>
    %404 = arith.addf %399, %403 : vector<16x32xf32>
    %c161_437 = arith.constant 161 : index
    %c0_438 = arith.constant 0 : index
    %405 = vector.load %arg11[%c161_437, %c0_438] : memref<248x32xf32, #tpu.memory_space<vmem>>, vector<16x32xf32>
    %c7_439 = arith.constant 7 : index
    %c0_440 = arith.constant 0 : index
    %c0_441 = arith.constant 0 : index
    %406 = vector.load %arg8[%c7_439, %c0_440, %c0_441] : memref<9x32x32xf32, #tpu.memory_space<vmem>>, vector<1x32x32xf32>
    %407 = vector.shape_cast %406 : vector<1x32x32xf32> to vector<32x32xf32>
    %cst_442 = arith.constant dense<0.000000e+00> : vector<16x32xf32>
    %408 = tpu.matmul %405, %407, %cst_442 {dimension_numbers = #tpu.dot_dimension_numbers<[1], [0], [0], [1], [0, 0, 1, 1], [], []>} : vector<16x32xf32>, vector<32x32xf32>, vector<16x32xf32> -> vector<16x32xf32>
    %409 = arith.addf %404, %408 : vector<16x32xf32>
    %c162_443 = arith.constant 162 : index
    %c0_444 = arith.constant 0 : index
    %410 = vector.load %arg11[%c162_443, %c0_444] : memref<248x32xf32, #tpu.memory_space<vmem>>, vector<16x32xf32>
    %c8_445 = arith.constant 8 : index
    %c0_446 = arith.constant 0 : index
    %c0_447 = arith.constant 0 : index
    %411 = vector.load %arg8[%c8_445, %c0_446, %c0_447] : memref<9x32x32xf32, #tpu.memory_space<vmem>>, vector<1x32x32xf32>
    %412 = vector.shape_cast %411 : vector<1x32x32xf32> to vector<32x32xf32>
    %cst_448 = arith.constant dense<0.000000e+00> : vector<16x32xf32>
    %413 = tpu.matmul %410, %412, %cst_448 {dimension_numbers = #tpu.dot_dimension_numbers<[1], [0], [0], [1], [0, 0, 1, 1], [], []>} : vector<16x32xf32>, vector<32x32xf32>, vector<16x32xf32> -> vector<16x32xf32>
    %414 = arith.addf %409, %413 : vector<16x32xf32>
    %415 = vector.broadcast %319 : vector<1x32xf32> to vector<16x32xf32>
    %416 = arith.addf %414, %415 : vector<16x32xf32>
    %cst_449 = arith.constant 0.000000e+00 : f32
    %417 = vector.broadcast %cst_449 : f32 to vector<16x32xf32>
    %418 = arith.maximumf %416, %417 : vector<16x32xf32>
    %c0_450 = arith.constant 0 : index
    %c128_451 = arith.constant 128 : index
    %c0_452 = arith.constant 0 : index
    %419 = vector.load %arg10[%c0_450, %c128_451, %c0_452] : memref<1x144x32xf32, #tpu.memory_space<vmem>>, vector<1x16x32xf32>
    %420 = vector.shape_cast %419 : vector<1x16x32xf32> to vector<16x32xf32>
    %421 = vector.shape_cast %418 : vector<16x32xf32> to vector<1x16x32xf32>
    tpu.vector_store %arg10[%c0_450, %c128_451, %c0_452], %421 {strides = array<i32>} : memref<1x144x32xf32, #tpu.memory_space<vmem>>, vector<1x16x32xf32>,
    return
  }
  func.func @transform_0(%arg0: i32) -> (i32, i32, i32) {
    %c0_i32 = arith.constant 0 : i32
    %c0_i32_0 = arith.constant 0 : i32
    %c0_i32_1 = arith.constant 0 : i32
    return %arg0, %c0_i32, %c0_i32_0 : i32, i32, i32
  }
  func.func @transform_1(%arg0: i32) -> (i32, i32, i32) {
    %c0_i32 = arith.constant 0 : i32
    %c0_i32_0 = arith.constant 0 : i32
    %c0_i32_1 = arith.constant 0 : i32
    %c0_i32_2 = arith.constant 0 : i32
    return %c0_i32, %c0_i32_0, %c0_i32_1 : i32, i32, i32
  }
  func.func @transform_2(%arg0: i32) -> (i32, i32) {
    %c0_i32 = arith.constant 0 : i32
    %c0_i32_0 = arith.constant 0 : i32
    %c0_i32_1 = arith.constant 0 : i32
    return %c0_i32, %c0_i32_0 : i32, i32
  }
  func.func @transform_3(%arg0: i32) -> (i32, i32, i32) {
    %c0_i32 = arith.constant 0 : i32
    %c0_i32_0 = arith.constant 0 : i32
    %c0_i32_1 = arith.constant 0 : i32
    %c0_i32_2 = arith.constant 0 : i32
    return %c0_i32, %c0_i32_0, %c0_i32_1 : i32, i32, i32
  }
  func.func @transform_4(%arg0: i32) -> (i32, i32) {
    %c0_i32 = arith.constant 0 : i32
    %c0_i32_0 = arith.constant 0 : i32
    %c0_i32_1 = arith.constant 0 : i32
    return %c0_i32, %c0_i32_0 : i32, i32
  }
  func.func @transform_5(%arg0: i32) -> (i32, i32, i32) {
    %c0_i32 = arith.constant 0 : i32
    %c0_i32_0 = arith.constant 0 : i32
    %c0_i32_1 = arith.constant 0 : i32
    %c0_i32_2 = arith.constant 0 : i32
    return %c0_i32, %c0_i32_0, %c0_i32_1 : i32, i32, i32
  }
  func.func @transform_6(%arg0: i32) -> (i32, i32) {
    %c0_i32 = arith.constant 0 : i32
    %c0_i32_0 = arith.constant 0 : i32
    %c0_i32_1 = arith.constant 0 : i32
    return %c0_i32, %c0_i32_0 : i32, i32
  }
  func.func @transform_7(%arg0: i32) -> (i32, i32, i32) {
    %c0_i32 = arith.constant 0 : i32
    %c0_i32_0 = arith.constant 0 : i32
    %c0_i32_1 = arith.constant 0 : i32
    %c0_i32_2 = arith.constant 0 : i32
    return %c0_i32, %c0_i32_0, %c0_i32_1 : i32, i32, i32
  }
  func.func @transform_8(%arg0: i32) -> (i32, i32) {
    %c0_i32 = arith.constant 0 : i32
    %c0_i32_0 = arith.constant 0 : i32
    %c0_i32_1 = arith.constant 0 : i32
    return %c0_i32, %c0_i32_0 : i32, i32
  }
  func.func @transform_9(%arg0: i32) -> (i32, i32, i32) {
    %c0_i32 = arith.constant 0 : i32
    %c0_i32_0 = arith.constant 0 : i32
    %c0_i32_1 = arith.constant 0 : i32
    return %arg0, %c0_i32, %c0_i32_0 : i32, i32, i32
  }
}

</mosaic_0001>

<llo_original>
// kernel: encoder_forward.1
$region0: #{encoder_forward.1}
  #allocation0 [shape = 'u32[]', space=smem, size = 0x4, offset = 0x4, fixed_abs, tag = 'smem constant byte address 0x4 - core index']
  #allocation1 [shape = 'u32[72,128]{1,0:T(1,128)}', space=vmem, size = 0x9000, scoped, tag = 'internal scratch']
  #allocation2 [shape = 'f32[248,32]{1,0:T(8,128)}', space=vmem, size = 0x1f000, scoped, tag = 'scratch operand']
  #allocation3 [shape = 'f32[216,32]{1,0:T(8,128)}', space=vmem, size = 0x1b000, scoped, tag = 'scratch operand']
  %s0 = inlined_call_operand.vmem [shape: f32[2,1088,4], index: 0, kind: input, shape index: {}]
  %s1 = inlined_call_operand.vmem [shape: f32[9,4,32], index: 1, kind: input, shape index: {}]
  %s2 = inlined_call_operand.vmem [shape: f32[1,32], index: 2, kind: input, shape index: {}]
  %s3 = inlined_call_operand.vmem [shape: f32[9,32,32], index: 3, kind: input, shape index: {}]
  %s4 = inlined_call_operand.vmem [shape: f32[1,32], index: 4, kind: input, shape index: {}]
  %s5 = inlined_call_operand.vmem [shape: f32[9,32,32], index: 5, kind: input, shape index: {}]
  %s6 = inlined_call_operand.vmem [shape: f32[1,32], index: 6, kind: input, shape index: {}]
  %s7 = inlined_call_operand.vmem [shape: f32[9,32,32], index: 7, kind: input, shape index: {}]
  %s8 = inlined_call_operand.vmem [shape: f32[1,32], index: 8, kind: input, shape index: {}]
  %s9 = inlined_call_operand.vmem [shape: f32[2,144,32], index: 9, kind: output, shape index: {}]
  %s10 = sld [smem:[#allocation0]]
  $region69: #{encoder_forward.1} parent=0
    _
  %s12 = ssub.s32 1, %s10
  %s13 = scalar_select 0, %s12, %s10
  loop: start=0, step=1, limit=4
  $region2: #{encoder_forward.1} parent=0 // loop_pre_header
    _
  $region3: #{encoder_forward.1} parent=0 // loop_header
    %s15 = sphi 0, %s19
    %p16 = scmp.ge.s32.totalorder %s15, 4
    %s25 = sphi 0, %s27
    %s28 = sphi 0, %s25
    %s29 = sphi 0, %s28
    %s45 = sphi 0, %s29
    %s49 = sphi 0, %s49
    %s51 = sphi 0, %s49
    %s52 = sphi 0, %s51
    %s66 = sphi 0, %s52
    %s70 = sphi 0, %s70
    %s72 = sphi 0, %s70
    %s73 = sphi 0, %s72
    %s87 = sphi 0, %s73
    %s91 = sphi 0, %s91
    %s93 = sphi 0, %s91
    %s94 = sphi 0, %s93
    %s108 = sphi 0, %s94
    %s112 = sphi 0, %s112
    %s114 = sphi 0, %s112
    %s115 = sphi 0, %s114
    %s129 = sphi 0, %s115
    %s133 = sphi 0, %s133
    %s135 = sphi 0, %s133
    %s136 = sphi 0, %s135
    %s150 = sphi 0, %s136
    %s154 = sphi 0, %s154
    %s156 = sphi 0, %s154
    %s157 = sphi 0, %s156
    %s171 = sphi 0, %s157
    %s175 = sphi 0, %s175
    %s177 = sphi 0, %s175
    %s178 = sphi 0, %s177
    %s192 = sphi 0, %s178
    %s196 = sphi 0, %s196
    %s198 = sphi 0, %s196
    %s199 = sphi 0, %s198
    %s213 = sphi 0, %s199
    %s219 = sphi 0, %s221
    %s222 = sphi 0, %s219
    %s223 = sphi 0, %s222
    %s239 = sphi 0, %s223
  $region4: #{encoder_forward.1} parent=0 // loop_header_branch
    %18 = sbr.rel (%p16) target = $region8
  $region5: #{encoder_forward.1} parent=0 // loop_body
    %s20 = ssub.s32 %s15, 1
    %s21 = ssub.s32 %s15, 2
    %s22 = sadd.s32 %s15, 1
    %s23 = ssub.s32 %s15, %s22
    %p24 = scmp.eq.s32.totalorder %s23, 0
    %s26 = sadd.s32 %s25, 1
    %s27 = scalar_select %p24, %s25, %s26
    %p30 = pneg %p24
    %p31 = scmp.eq.s32.totalorder %s15, 1
    %p32 = por %p30, %p31
    %p33 = scmp.ne.s32.totalorder %s25, %s28
    %p34 = scmp.eq.s32.totalorder %s15, 0
    %p35 = por %p33, %p34
    %p36 = scmp.ne.s32.totalorder %s25, %s28
    %p37 = scmp.eq.s32.totalorder %s20, 1
    %p38 = por %p36, %p37
    %p39 = scmp.ne.s32.totalorder %s28, %s29
    %p40 = scmp.eq.s32.totalorder %s20, 0
    %p41 = por %p39, %p40
    %p42 = scmp.ne.s32.totalorder %s28, %s29
    %p43 = scmp.eq.s32.totalorder %s21, 1
    %p44 = por %p42, %p43
    %p46 = scmp.ne.s32.totalorder %s29, %s45
    %p47 = scmp.eq.s32.totalorder %s21, 0
    %p48 = por %p46, %p47
    %s50 = sadd.s32 %s49, 1
    %p53 = scmp.eq.s32.totalorder %s15, 1
    %p54 = scmp.ne.s32.totalorder %s49, %s51
    %p55 = scmp.eq.s32.totalorder %s15, 0
    %p56 = por %p54, %p55
    %p57 = scmp.ne.s32.totalorder %s49, %s51
    %p58 = scmp.eq.s32.totalorder %s20, 1
    %p59 = por %p57, %p58
    %p60 = scmp.ne.s32.totalorder %s51, %s52
    %p61 = scmp.eq.s32.totalorder %s20, 0
    %p62 = por %p60, %p61
    %p63 = scmp.ne.s32.totalorder %s51, %s52
    %p64 = scmp.eq.s32.totalorder %s21, 1
    %p65 = por %p63, %p64
    %p67 = scmp.ne.s32.totalorder %s52, %s66
    %p68 = scmp.eq.s32.totalorder %s21, 0
    %p69 = por %p67, %p68
    %s71 = sadd.s32 %s70, 1
    %p74 = scmp.eq.s32.totalorder %s15, 1
    %p75 = scmp.ne.s32.totalorder %s70, %s72
    %p76 = scmp.eq.s32.totalorder %s15, 0
    %p77 = por %p75, %p76
    %p78 = scmp.ne.s32.totalorder %s70, %s72
    %p79 = scmp.eq.s32.totalorder %s20, 1
    %p80 = por %p78, %p79
    %p81 = scmp.ne.s32.totalorder %s72, %s73
    %p82 = scmp.eq.s32.totalorder %s20, 0
    %p83 = por %p81, %p82
    %p84 = scmp.ne.s32.totalorder %s72, %s73
    %p85 = scmp.eq.s32.totalorder %s21, 1
    %p86 = por %p84, %p85
    %p88 = scmp.ne.s32.totalorder %s73, %s87
    %p89 = scmp.eq.s32.totalorder %s21, 0
    %p90 = por %p88, %p89
    %s92 = sadd.s32 %s91, 1
    %p95 = scmp.eq.s32.totalorder %s15, 1
    %p96 = scmp.ne.s32.totalorder %s91, %s93
    %p97 = scmp.eq.s32.totalorder %s15, 0
    %p98 = por %p96, %p97
    %p99 = scmp.ne.s32.totalorder %s91, %s93
    %p100 = scmp.eq.s32.totalorder %s20, 1
    %p101 = por %p99, %p100
    %p102 = scmp.ne.s32.totalorder %s93, %s94
    %p103 = scmp.eq.s32.totalorder %s20, 0
    %p104 = por %p102, %p103
    %p105 = scmp.ne.s32.totalorder %s93, %s94
    %p106 = scmp.eq.s32.totalorder %s21, 1
    %p107 = por %p105, %p106
    %p109 = scmp.ne.s32.totalorder %s94, %s108
    %p110 = scmp.eq.s32.totalorder %s21, 0
    %p111 = por %p109, %p110
    %s113 = sadd.s32 %s112, 1
    %p116 = scmp.eq.s32.totalorder %s15, 1
    %p117 = scmp.ne.s32.totalorder %s112, %s114
    %p118 = scmp.eq.s32.totalorder %s15, 0
    %p119 = por %p117, %p118
    %p120 = scmp.ne.s32.totalorder %s112, %s114
    %p121 = scmp.eq.s32.totalorder %s20, 1
    %p122 = por %p120, %p121
    %p123 = scmp.ne.s32.totalorder %s114, %s115
    %p124 = scmp.eq.s32.totalorder %s20, 0
    %p125 = por %p123, %p124
    %p126 = scmp.ne.s32.totalorder %s114, %s115
    %p127 = scmp.eq.s32.totalorder %s21, 1
    %p128 = por %p126, %p127
    %p130 = scmp.ne.s32.totalorder %s115, %s129
    %p131 = scmp.eq.s32.totalorder %s21, 0
    %p132 = por %p130, %p131
    %s134 = sadd.s32 %s133, 1
    %p137 = scmp.eq.s32.totalorder %s15, 1
    %p138 = scmp.ne.s32.totalorder %s133, %s135
    %p139 = scmp.eq.s32.totalorder %s15, 0
    %p140 = por %p138, %p139
    %p141 = scmp.ne.s32.totalorder %s133, %s135
    %p142 = scmp.eq.s32.totalorder %s20, 1
    %p143 = por %p141, %p142
    %p144 = scmp.ne.s32.totalorder %s135, %s136
    %p145 = scmp.eq.s32.totalorder %s20, 0
    %p146 = por %p144, %p145
    %p147 = scmp.ne.s32.totalorder %s135, %s136
    %p148 = scmp.eq.s32.totalorder %s21, 1
    %p149 = por %p147, %p148
    %p151 = scmp.ne.s32.totalorder %s136, %s150
    %p152 = scmp.eq.s32.totalorder %s21, 0
    %p153 = por %p151, %p152
    %s155 = sadd.s32 %s154, 1
    %p158 = scmp.eq.s32.totalorder %s15, 1
    %p159 = scmp.ne.s32.totalorder %s154, %s156
    %p160 = scmp.eq.s32.totalorder %s15, 0
    %p161 = por %p159, %p160
    %p162 = scmp.ne.s32.totalorder %s154, %s156
    %p163 = scmp.eq.s32.totalorder %s20, 1
    %p164 = por %p162, %p163
    %p165 = scmp.ne.s32.totalorder %s156, %s157
    %p166 = scmp.eq.s32.totalorder %s20, 0
    %p167 = por %p165, %p166
    %p168 = scmp.ne.s32.totalorder %s156, %s157
    %p169 = scmp.eq.s32.totalorder %s21, 1
    %p170 = por %p168, %p169
    %p172 = scmp.ne.s32.totalorder %s157, %s171
    %p173 = scmp.eq.s32.totalorder %s21, 0
    %p174 = por %p172, %p173
    %s176 = sadd.s32 %s175, 1
    %p179 = scmp.eq.s32.totalorder %s15, 1
    %p180 = scmp.ne.s32.totalorder %s175, %s177
    %p181 = scmp.eq.s32.totalorder %s15, 0
    %p182 = por %p180, %p181
    %p183 = scmp.ne.s32.totalorder %s175, %s177
    %p184 = scmp.eq.s32.totalorder %s20, 1
    %p185 = por %p183, %p184
    %p186 = scmp.ne.s32.totalorder %s177, %s178
    %p187 = scmp.eq.s32.totalorder %s20, 0
    %p188 = por %p186, %p187
    %p189 = scmp.ne.s32.totalorder %s177, %s178
    %p190 = scmp.eq.s32.totalorder %s21, 1
    %p191 = por %p189, %p190
    %p193 = scmp.ne.s32.totalorder %s178, %s192
    %p194 = scmp.eq.s32.totalorder %s21, 0
    %p195 = por %p193, %p194
    %s197 = sadd.s32 %s196, 1
    %p200 = scmp.eq.s32.totalorder %s15, 1
    %p201 = scmp.ne.s32.totalorder %s196, %s198
    %p202 = scmp.eq.s32.totalorder %s15, 0
    %p203 = por %p201, %p202
    %p204 = scmp.ne.s32.totalorder %s196, %s198
    %p205 = scmp.eq.s32.totalorder %s20, 1
    %p206 = por %p204, %p205
    %p207 = scmp.ne.s32.totalorder %s198, %s199
    %p208 = scmp.eq.s32.totalorder %s20, 0
    %p209 = por %p207, %p208
    %p210 = scmp.ne.s32.totalorder %s198, %s199
    %p211 = scmp.eq.s32.totalorder %s21, 1
    %p212 = por %p210, %p211
    %p214 = scmp.ne.s32.totalorder %s199, %s213
    %p215 = scmp.eq.s32.totalorder %s21, 0
    %p216 = por %p214, %p215
    %s217 = ssub.s32 %s15, %s22
    %p218 = scmp.eq.s32.totalorder %s217, 0
    %s220 = sadd.s32 %s219, 1
    %s221 = scalar_select %p218, %s219, %s220
    %p224 = pneg %p218
    %p225 = scmp.eq.s32.totalorder %s15, 1
    %p226 = por %p224, %p225
    %p227 = scmp.ne.s32.totalorder %s219, %s222
    %p228 = scmp.eq.s32.totalorder %s15, 0
    %p229 = por %p227, %p228
    %p230 = scmp.ne.s32.totalorder %s219, %s222
    %p231 = scmp.eq.s32.totalorder %s20, 1
    %p232 = por %p230, %p231
    %p233 = scmp.ne.s32.totalorder %s222, %s223
    %p234 = scmp.eq.s32.totalorder %s20, 0
    %p235 = por %p233, %p234
    %p236 = scmp.ne.s32.totalorder %s222, %s223
    %p237 = scmp.eq.s32.totalorder %s21, 1
    %p238 = por %p236, %p237
    %p240 = scmp.ne.s32.totalorder %s223, %s239
    %p241 = scmp.eq.s32.totalorder %s21, 0
    %p242 = por %p240, %p241
    %p243 = scmp.le.s32.totalorder 1, %s15
    %p244 = scmp.lt.s32.totalorder %s15, 3
    %p245 = pnand %p243, %p244
    %p246 = pneg %p245
    // Predicated region
    $region9: #{encoder_forward.1} parent=5 // pred_check
      _
    $region10: #{encoder_forward.1} parent=5 // pred_check_branch
      %248 = sbr.rel (%p245) target = $region12
    $region11: #{encoder_forward.1} parent=5 // pred_region
      %s249 = ssub.s32 %s15, 1
      // Predicated region
      $region13: #{encoder_forward.1} parent=11 // pred_check
        %p250 = pneg %p62
      $region14: #{encoder_forward.1} parent=11 // pred_check_branch
        %252 = sbr.rel (%p250) target = $region16
      $region15: #{encoder_forward.1} parent=11 // pred_region
        _
      $region16: #{encoder_forward.1} parent=11 // pred_fallthru
        _
      // Predicated region
      $region17: #{encoder_forward.1} parent=11 // pred_check
        %p253 = pneg %p83
      $region18: #{encoder_forward.1} parent=11 // pred_check_branch
        %255 = sbr.rel (%p253) target = $region20
      $region19: #{encoder_forward.1} parent=11 // pred_region
        _
      $region20: #{encoder_forward.1} parent=11 // pred_fallthru
        _
      // Predicated region
      $region21: #{encoder_forward.1} parent=11 // pred_check
        %p256 = pneg %p104
      $region22: #{encoder_forward.1} parent=11 // pred_check_branch
        %258 = sbr.rel (%p256) target = $region24
      $region23: #{encoder_forward.1} parent=11 // pred_region
        _
      $region24: #{encoder_forward.1} parent=11 // pred_fallthru
        _
      // Predicated region
      $region25: #{encoder_forward.1} parent=11 // pred_check
        %p259 = pneg %p125
      $region26: #{encoder_forward.1} parent=11 // pred_check_branch
        %261 = sbr.rel (%p259) target = $region28
      $region27: #{encoder_forward.1} parent=11 // pred_region
        _
      $region28: #{encoder_forward.1} parent=11 // pred_fallthru
        _
      // Predicated region
      $region29: #{encoder_forward.1} parent=11 // pred_check
        %p262 = pneg %p146
      $region30: #{encoder_forward.1} parent=11 // pred_check_branch
        %264 = sbr.rel (%p262) target = $region32
      $region31: #{encoder_forward.1} parent=11 // pred_region
        _
      $region32: #{encoder_forward.1} parent=11 // pred_fallthru
        _
      // Predicated region
      $region33: #{encoder_forward.1} parent=11 // pred_check
        %p265 = pneg %p167
      $region34: #{encoder_forward.1} parent=11 // pred_check_branch
        %267 = sbr.rel (%p265) target = $region36
      $region35: #{encoder_forward.1} parent=11 // pred_region
        _
      $region36: #{encoder_forward.1} parent=11 // pred_fallthru
        _
      // Predicated region
      $region37: #{encoder_forward.1} parent=11 // pred_check
        %p268 = pneg %p188
      $region38: #{encoder_forward.1} parent=11 // pred_check_branch
        %270 = sbr.rel (%p268) target = $region40
      $region39: #{encoder_forward.1} parent=11 // pred_region
        _
      $region40: #{encoder_forward.1} parent=11 // pred_fallthru
        _
      // Predicated region
      $region41: #{encoder_forward.1} parent=11 // pred_check
        %p271 = pneg %p209
      $region42: #{encoder_forward.1} parent=11 // pred_check_branch
        %273 = sbr.rel (%p271) target = $region44
      $region43: #{encoder_forward.1} parent=11 // pred_region
        _
      $region44: #{encoder_forward.1} parent=11 // pred_fallthru
        _
    $region12: #{encoder_forward.1} parent=5 // pred_fallthru
      _
    %p274 = scmp.lt.s32.totalorder %s15, 2
    // Predicated region
    $region45: #{encoder_forward.1} parent=5 // pred_check
      %p275 = pneg %p274
    $region46: #{encoder_forward.1} parent=5 // pred_check_branch
      %277 = sbr.rel (%p275) target = $region48
    $region47: #{encoder_forward.1} parent=5 // pred_region
      // Predicated region
      $region49: #{encoder_forward.1} parent=47 // pred_check
        %p278 = pneg %p35
      $region50: #{encoder_forward.1} parent=47 // pred_check_branch
        %280 = sbr.rel (%p278) target = $region52
      $region51: #{encoder_forward.1} parent=47 // pred_region
        %p281 = scmp.lt.s32.totalorder %s15, 1
        %s282 = scalar_select %p281, %s15, 1
        %s283 = smul.addr %s282, 136
        %s284 = smul.addr %s283, 8
        %s285 = scalar_lea.vmem %s0, %s284
      $region52: #{encoder_forward.1} parent=47 // pred_fallthru
        _
    $region48: #{encoder_forward.1} parent=5 // pred_fallthru
      _
    %p286 = scmp.le.s32.totalorder 1, %s15
    %p287 = scmp.lt.s32.totalorder %s15, 3
    %p288 = pnand %p286, %p287
    %p289 = pneg %p288
    // Predicated region
    $region53: #{encoder_forward.1} parent=5 // pred_check
      _
    $region54: #{encoder_forward.1} parent=5 // pred_check_branch
      %291 = sbr.rel (%p288) target = $region56
    $region55: #{encoder_forward.1} parent=5 // pred_region
      %s292 = ssub.s32 %s15, 1
      %p293 = scmp.lt.s32.totalorder %s20, 1
      %s294 = scalar_select %p293, %s20, 1
      %s295 = smul.addr %s294, 136
      %s296 = smul.addr %s295, 8
      %s297 = scalar_lea.vmem %s0, %s296
      %p298 = pneg %p41
      %p299 = pneg %p38
      %p300 = pneg %p62
      %p301 = pneg %p59
      %p302 = pneg %p83
      %p303 = pneg %p80
      %p304 = pneg %p104
      %p305 = pneg %p101
      %p306 = pneg %p125
      %p307 = pneg %p122
      %p308 = pneg %p146
      %p309 = pneg %p143
      %p310 = pneg %p167
      %p311 = pneg %p164
      %p312 = pneg %p188
      %p313 = pneg %p185
      %p314 = pneg %p209
      %p315 = pneg %p206
      %p316 = pneg %p235
      %p317 = pneg %p232
      %p318 = scmp.lt.s32.totalorder %s20, 1
      %s319 = scalar_select %p318, %s20, 1
      %s320 = smul.addr %s319, 18
      %s321 = smul.addr %s320, 8
      %s322 = scalar_lea.vmem %s9, %s321
      %p323 = scmp.lt.s32.totalorder %s20, 1
      %s324 = scalar_select %p323, %s20, 1
      %s325 = smul.addr %s324, 136
      %s326 = smul.addr %s325, 8
      %s327 = scalar_lea.vmem %s0, %s326
      %p328 = scmp.lt.s32.totalorder %s20, 1
      %s329 = scalar_select %p328, %s20, 1
      %s330 = smul.addr %s329, 18
      %s331 = smul.addr %s330, 8
      %s332 = scalar_lea.vmem %s9, %s331
      %vm333 = vcmask 261120
      %334 = vst.msk [vmem:[#allocation2 + $0xf0] sm:$0xff] %vm333, 0.0
      %335 = vst.msk [vmem:[#allocation3 + $0xd0] sm:$0xff] %vm333, 0.0
      %v336 = vld [vmem:[%s2] sm:$0x1]
      %v337 = vld [vmem:[%s327] sm:$0xff]
      %v338 = vld [vmem:[%s327 + $0x8] sm:$0xff]
      %v339 = vld [vmem:[%s327 + $0x10] sm:$0xff]
      %v340 = vld [vmem:[%s327 + $0x18] sm:$0xff]
      %v341 = vld [vmem:[%s327 + $0x20] sm:$0xff]
      %v342 = vld [vmem:[%s327 + $0x28] sm:$0xff]
      %v343 = vld [vmem:[%s327 + $0x30] sm:$0xff]
      %v344 = vld [vmem:[%s327 + $0x38] sm:$0xff]
      %v345 = vld [vmem:[%s327 + $0x40] sm:$0xff]
      %v346 = vld [vmem:[%s327 + $0x48] sm:$0xff]
      %v347 = vld [vmem:[%s327 + $0x50] sm:$0xff]
      %v348 = vld [vmem:[%s327 + $0x58] sm:$0xff]
      %v349 = vld [vmem:[%s327 + $0x60] sm:$0xff]
      %v350 = vld [vmem:[%s327 + $0x68] sm:$0xff]
      %v351 = vld [vmem:[%s327 + $0x70] sm:$0xff]
      %v352 = vld [vmem:[%s327 + $0x78] sm:$0xff]
      %v353 = vld [vmem:[%s1] sm:$0xf]
      %v354 = vld [vmem:[%s327 + $0x110] sm:$0xff]
      %v355 = vld [vmem:[%s327 + $0x118] sm:$0xff]
      %v356 = vld [vmem:[%s327 + $0x120] sm:$0xff]
      %v357 = vld [vmem:[%s327 + $0x128] sm:$0xff]
      %v358 = vld [vmem:[%s327 + $0x130] sm:$0xff]
      %v359 = vld [vmem:[%s327 + $0x138] sm:$0xff]
      %v360 = vld [vmem:[%s327 + $0x140] sm:$0xff]
      %v361 = vld [vmem:[%s327 + $0x148] sm:$0xff]
      %v362 = vld [vmem:[%s327 + $0x150] sm:$0xff]
      %v363 = vld [vmem:[%s327 + $0x158] sm:$0xff]
      %v364 = vld [vmem:[%s327 + $0x160] sm:$0xff]
      %v365 = vld [vmem:[%s327 + $0x168] sm:$0xff]
      %v366 = vld [vmem:[%s327 + $0x170] sm:$0xff]
      %v367 = vld [vmem:[%s327 + $0x178] sm:$0xff]
      %v368 = vld [vmem:[%s327 + $0x180] sm:$0xff]
      %v369 = vld [vmem:[%s327 + $0x188] sm:$0xff]
      %s370 = scalar_lea.vmem %s1, 4
      %v371 = vld [vmem:[%s370] sm:$0xf]
      %vm372 = vcmask 31744
      %v374 = vsel %vm372, %v354, 0
      %v377 = vsel %vm372, %v355, 0
      %v380 = vsel %vm372, %v356, 0
      %v383 = vsel %vm372, %v357, 0
      %v386 = vsel %vm372, %v358, 0
      %v389 = vsel %vm372, %v359, 0
      %v392 = vsel %vm372, %v360, 0
      %v395 = vsel %vm372, %v361, 0
      %v398 = vsel %vm372, %v362, 0
      %v401 = vsel %vm372, %v363, 0
      %v404 = vsel %vm372, %v364, 0
      %v407 = vsel %vm372, %v365, 0
      %v410 = vsel %vm372, %v366, 0
      %v413 = vsel %vm372, %v367, 0
      %v416 = vsel %vm372, %v368, 0
      %v419 = vsel %vm372, %v369, 0
      %vm421 = vcmask 1043456
      %v423 = vsel %vm421, %v371, 0
      %425 = vmatpush.msra.mxu0 0.0
      %426 = vmatpush.msra.mxu0 0.0
      %427 = vmatpush.msra.mxu0 0.0
      %428 = vmatpush.msra.mxu0 0.0
      %429 = vmatpush.msra.mxu0 0.0
      %430 = vmatpush.msra.mxu0 0.0
      %431 = vmatpush.msra.mxu0 0.0
      %432 = vmatpush.msra.mxu0 0.0
      %433 = vmatpush.msra.mxu0 0.0
      %434 = vmatpush.msra.mxu0 0.0
      %435 = vmatpush.msra.mxu0 0.0
      %436 = vmatpush.msra.mxu0 0.0
      %437 = vmatpush.msra.mxu0 0.0
      %438 = vmatpush.msra.mxu0 0.0
      %439 = vmatpush.msra.mxu0 0.0
      %440 = vmatpush.msra.mxu0 %v423
      %441 = vmatmul.f32.gmra.mxu0 %v374
      %v442 = vpop.f32.mrf.mxu0
      %v443 = vadd.f32 0.0, %v442
      %444 = vmatmul.f32.gmra.mxu0 %v377
      %v445 = vpop.f32.mrf.mxu0
      %v446 = vadd.f32 0.0, %v445
      %447 = vmatmul.f32.gmra.mxu0 %v380
      %v448 = vpop.f32.mrf.mxu0
      %v449 = vadd.f32 0.0, %v448
      %450 = vmatmul.f32.gmra.mxu0 %v383
      %v451 = vpop.f32.mrf.mxu0
      %v452 = vadd.f32 0.0, %v451
      %453 = vmatmul.f32.gmra.mxu0 %v386
      %v454 = vpop.f32.mrf.mxu0
      %v455 = vadd.f32 0.0, %v454
      %456 = vmatmul.f32.gmra.mxu0 %v389
      %v457 = vpop.f32.mrf.mxu0
      %v458 = vadd.f32 0.0, %v457
      %459 = vmatmul.f32.gmra.mxu0 %v392
      %v460 = vpop.f32.mrf.mxu0
      %v461 = vadd.f32 0.0, %v460
      %462 = vmatmul.f32.gmra.mxu0 %v395
      %v463 = vpop.f32.mrf.mxu0
      %v464 = vadd.f32 0.0, %v463
      %465 = vmatmul.f32.gmra.mxu0 %v398
      %v466 = vpop.f32.mrf.mxu0
      %v467 = vadd.f32 0.0, %v466
      %468 = vmatmul.f32.gmra.mxu0 %v401
      %v469 = vpop.f32.mrf.mxu0
      %v470 = vadd.f32 0.0, %v469
      %471 = vmatmul.f32.gmra.mxu0 %v404
      %v472 = vpop.f32.mrf.mxu0
      %v473 = vadd.f32 0.0, %v472
      %474 = vmatmul.f32.gmra.mxu0 %v407
      %v475 = vpop.f32.mrf.mxu0
      %v476 = vadd.f32 0.0, %v475
      %477 = vmatmul.f32.gmra.mxu0 %v410
      %v478 = vpop.f32.mrf.mxu0
      %v479 = vadd.f32 0.0, %v478
      %480 = vmatmul.f32.gmra.mxu0 %v413
      %v481 = vpop.f32.mrf.mxu0
      %v482 = vadd.f32 0.0, %v481
      %483 = vmatmul.f32.gmra.mxu0 %v416
      %v484 = vpop.f32.mrf.mxu0
      %v485 = vadd.f32 0.0, %v484
      %486 = vmatmul.f32.gmra.mxu0 %v419
      %v487 = vpop.f32.mrf.mxu0
      %v488 = vadd.f32 0.0, %v487
      %489 = vdwg.mxu0
      %v491 = vsel %vm372, %v337, 0
      %v494 = vsel %vm372, %v338, 0
      %v497 = vsel %vm372, %v339, 0
      %v500 = vsel %vm372, %v340, 0
      %v503 = vsel %vm372, %v341, 0
      %v506 = vsel %vm372, %v342, 0
      %v509 = vsel %vm372, %v343, 0
      %v512 = vsel %vm372, %v344, 0
      %v515 = vsel %vm372, %v345, 0
      %v518 = vsel %vm372, %v346, 0
      %v521 = vsel %vm372, %v347, 0
      %v524 = vsel %vm372, %v348, 0
      %v527 = vsel %vm372, %v349, 0
      %v530 = vsel %vm372, %v350, 0
      %v533 = vsel %vm372, %v351, 0
      %v536 = vsel %vm372, %v352, 0
      %v539 = vsel %vm421, %v353, 0
      %541 = vmatpush.msra.mxu0 0.0
      %542 = vmatpush.msra.mxu0 0.0
      %543 = vmatpush.msra.mxu0 0.0
      %544 = vmatpush.msra.mxu0 0.0
      %545 = vmatpush.msra.mxu0 0.0
      %546 = vmatpush.msra.mxu0 0.0
      %547 = vmatpush.msra.mxu0 0.0
      %548 = vmatpush.msra.mxu0 0.0
      %549 = vmatpush.msra.mxu0 0.0
      %550 = vmatpush.msra.mxu0 0.0
      %551 = vmatpush.msra.mxu0 0.0
      %552 = vmatpush.msra.mxu0 0.0
      %553 = vmatpush.msra.mxu0 0.0
      %554 = vmatpush.msra.mxu0 0.0
      %555 = vmatpush.msra.mxu0 0.0
      %556 = vmatpush.msra.mxu0 %v539
      %557 = vmatmul.f32.gmra.mxu0 %v491
      %v558 = vpop.f32.mrf.mxu0
      %v559 = vadd.f32 %v443, %v558
      %560 = vmatmul.f32.gmra.mxu0 %v494
      %v561 = vpop.f32.mrf.mxu0
      %v562 = vadd.f32 %v446, %v561
      %563 = vmatmul.f32.gmra.mxu0 %v497
      %v564 = vpop.f32.mrf.mxu0
      %v565 = vadd.f32 %v449, %v564
      %566 = vmatmul.f32.gmra.mxu0 %v500
      %v567 = vpop.f32.mrf.mxu0
      %v568 = vadd.f32 %v452, %v567
      %569 = vmatmul.f32.gmra.mxu0 %v503
      %v570 = vpop.f32.mrf.mxu0
      %v571 = vadd.f32 %v455, %v570
      %572 = vmatmul.f32.gmra.mxu0 %v506
      %v573 = vpop.f32.mrf.mxu0
      %v574 = vadd.f32 %v458, %v573
      %575 = vmatmul.f32.gmra.mxu0 %v509
      %v576 = vpop.f32.mrf.mxu0
      %v577 = vadd.f32 %v461, %v576
      %578 = vmatmul.f32.gmra.mxu0 %v512
      %v579 = vpop.f32.mrf.mxu0
      %v580 = vadd.f32 %v464, %v579
      %581 = vmatmul.f32.gmra.mxu0 %v515
      %v582 = vpop.f32.mrf.mxu0
      %v583 = vadd.f32 %v467, %v582
      %584 = vmatmul.f32.gmra.mxu0 %v518
      %v585 = vpop.f32.mrf.mxu0
      %v586 = vadd.f32 %v470, %v585
      %587 = vmatmul.f32.gmra.mxu0 %v521
      %v588 = vpop.f32.mrf.mxu0
      %v589 = vadd.f32 %v473, %v588
      %590 = vmatmul.f32.gmra.mxu0 %v524
      %v591 = vpop.f32.mrf.mxu0
      %v592 = vadd.f32 %v476, %v591
      %593 = vmatmul.f32.gmra.mxu0 %v527
      %v594 = vpop.f32.mrf.mxu0
      %v595 = vadd.f32 %v479, %v594
      %596 = vmatmul.f32.gmra.mxu0 %v530
      %v597 = vpop.f32.mrf.mxu0
      %v598 = vadd.f32 %v482, %v597
      %599 = vmatmul.f32.gmra.mxu0 %v533
      %v600 = vpop.f32.mrf.mxu0
      %v601 = vadd.f32 %v485, %v600
      %602 = vmatmul.f32.gmra.mxu0 %v536
      %v603 = vpop.f32.mrf.mxu0
      %v604 = vadd.f32 %v488, %v603
      %605 = vdwg.mxu0
      %v606 = vld [vmem:[%s327 + $0x1] sm:$0xff]
      %v607 = vld [vmem:[%s327 + $0x9] sm:$0xff]
      %v608 = vld [vmem:[%s327 + $0x11] sm:$0xff]
      %v609 = vld [vmem:[%s327 + $0x19] sm:$0xff]
      %v610 = vld [vmem:[%s327 + $0x21] sm:$0xff]
      %v611 = vld [vmem:[%s327 + $0x29] sm:$0xff]
      %v612 = vld [vmem:[%s327 + $0x31] sm:$0xff]
      %v613 = vld [vmem:[%s327 + $0x39] sm:$0xff]
      %v614 = vld [vmem:[%s327 + $0x41] sm:$0xff]
      %v615 = vld [vmem:[%s327 + $0x49] sm:$0xff]
      %v616 = vld [vmem:[%s327 + $0x51] sm:$0xff]
      %v617 = vld [vmem:[%s327 + $0x59] sm:$0xff]
      %v618 = vld [vmem:[%s327 + $0x61] sm:$0xff]
      %v619 = vld [vmem:[%s327 + $0x69] sm:$0xff]
      %v620 = vld [vmem:[%s327 + $0x71] sm:$0xff]
      %v621 = vld [vmem:[%s327 + $0x79] sm:$0xff]
      %s622 = scalar_lea.vmem %s1, 8
      %v623 = vld [vmem:[%s622] sm:$0xf]
      %v625 = vsel %vm372, %v606, 0
      %v628 = vsel %vm372, %v607, 0
      %v631 = vsel %vm372, %v608, 0
      %v634 = vsel %vm372, %v609, 0
      %v637 = vsel %vm372, %v610, 0
      %v640 = vsel %vm372, %v611, 0
      %v643 = vsel %vm372, %v612, 0
      %v646 = vsel %vm372, %v613, 0
      %v649 = vsel %vm372, %v614, 0
      %v652 = vsel %vm372, %v615, 0
      %v655 = vsel %vm372, %v616, 0
      %v658 = vsel %vm372, %v617, 0
      %v661 = vsel %vm372, %v618, 0
      %v664 = vsel %vm372, %v619, 0
      %v667 = vsel %vm372, %v620, 0
      %v670 = vsel %vm372, %v621, 0
      %v673 = vsel %vm421, %v623, 0
      %675 = vmatpush.msra.mxu0 0.0
      %676 = vmatpush.msra.mxu0 0.0
      %677 = vmatpush.msra.mxu0 0.0
      %678 = vmatpush.msra.mxu0 0.0
      %679 = vmatpush.msra.mxu0 0.0
      %680 = vmatpush.msra.mxu0 0.0
      %681 = vmatpush.msra.mxu0 0.0
      %682 = vmatpush.msra.mxu0 0.0
      %683 = vmatpush.msra.mxu0 0.0
      %684 = vmatpush.msra.mxu0 0.0
      %685 = vmatpush.msra.mxu0 0.0
      %686 = vmatpush.msra.mxu0 0.0
      %687 = vmatpush.msra.mxu0 0.0
      %688 = vmatpush.msra.mxu0 0.0
      %689 = vmatpush.msra.mxu0 0.0
      %690 = vmatpush.msra.mxu0 %v673
      %691 = vmatmul.f32.gmra.mxu0 %v625
      %v692 = vpop.f32.mrf.mxu0
      %v693 = vadd.f32 0.0, %v692
      %694 = vmatmul.f32.gmra.mxu0 %v628
      %v695 = vpop.f32.mrf.mxu0
      %v696 = vadd.f32 0.0, %v695
      %697 = vmatmul.f32.gmra.mxu0 %v631
      %v698 = vpop.f32.mrf.mxu0
      %v699 = vadd.f32 0.0, %v698
      %700 = vmatmul.f32.gmra.mxu0 %v634
      %v701 = vpop.f32.mrf.mxu0
      %v702 = vadd.f32 0.0, %v701
      %703 = vmatmul.f32.gmra.mxu0 %v637
      %v704 = vpop.f32.mrf.mxu0
      %v705 = vadd.f32 0.0, %v704
      %706 = vmatmul.f32.gmra.mxu0 %v640
      %v707 = vpop.f32.mrf.mxu0
      %v708 = vadd.f32 0.0, %v707
      %709 = vmatmul.f32.gmra.mxu0 %v643
      %v710 = vpop.f32.mrf.mxu0
      %v711 = vadd.f32 0.0, %v710
      %712 = vmatmul.f32.gmra.mxu0 %v646
      %v713 = vpop.f32.mrf.mxu0
      %v714 = vadd.f32 0.0, %v713
      %715 = vmatmul.f32.gmra.mxu0 %v649
      %v716 = vpop.f32.mrf.mxu0
      %v717 = vadd.f32 0.0, %v716
      %718 = vmatmul.f32.gmra.mxu0 %v652
      %v719 = vpop.f32.mrf.mxu0
      %v720 = vadd.f32 0.0, %v719
      %721 = vmatmul.f32.gmra.mxu0 %v655
      %v722 = vpop.f32.mrf.mxu0
      %v723 = vadd.f32 0.0, %v722
      %724 = vmatmul.f32.gmra.mxu0 %v658
      %v725 = vpop.f32.mrf.mxu0
      %v726 = vadd.f32 0.0, %v725
      %727 = vmatmul.f32.gmra.mxu0 %v661
      %v728 = vpop.f32.mrf.mxu0
      %v729 = vadd.f32 0.0, %v728
      %730 = vmatmul.f32.gmra.mxu0 %v664
      %v731 = vpop.f32.mrf.mxu0
      %v732 = vadd.f32 0.0, %v731
      %733 = vmatmul.f32.gmra.mxu0 %v667
      %v734 = vpop.f32.mrf.mxu0
      %v735 = vadd.f32 0.0, %v734
      %736 = vmatmul.f32.gmra.mxu0 %v670
      %v737 = vpop.f32.mrf.mxu0
      %v738 = vadd.f32 0.0, %v737
      %739 = vdwg.mxu0
      %v740 = vadd.f32 %v559, %v693
      %v741 = vadd.f32 %v562, %v696
      %v742 = vadd.f32 %v565, %v699
      %v743 = vadd.f32 %v568, %v702
      %v744 = vadd.f32 %v571, %v705
      %v745 = vadd.f32 %v574, %v708
      %v746 = vadd.f32 %v577, %v711
      %v747 = vadd.f32 %v580, %v714
      %v748 = vadd.f32 %v583, %v717
      %v749 = vadd.f32 %v586, %v720
      %v750 = vadd.f32 %v589, %v723
      %v751 = vadd.f32 %v592, %v726
      %v752 = vadd.f32 %v595, %v729
      %v753 = vadd.f32 %v598, %v732
      %v754 = vadd.f32 %v601, %v735
      %v755 = vadd.f32 %v604, %v738
      %v756 = vld [vmem:[%s327 + $0x220] sm:$0xff]
      %v757 = vld [vmem:[%s327 + $0x228] sm:$0xff]
      %v758 = vld [vmem:[%s327 + $0x230] sm:$0xff]
      %v759 = vld [vmem:[%s327 + $0x238] sm:$0xff]
      %v760 = vld [vmem:[%s327 + $0x240] sm:$0xff]
      %v761 = vld [vmem:[%s327 + $0x248] sm:$0xff]
      %v762 = vld [vmem:[%s327 + $0x250] sm:$0xff]
      %v763 = vld [vmem:[%s327 + $0x258] sm:$0xff]
      %v764 = vld [vmem:[%s327 + $0x260] sm:$0xff]
      %v765 = vld [vmem:[%s327 + $0x268] sm:$0xff]
      %v766 = vld [vmem:[%s327 + $0x270] sm:$0xff]
      %v767 = vld [vmem:[%s327 + $0x278] sm:$0xff]
      %v768 = vld [vmem:[%s327 + $0x280] sm:$0xff]
      %v769 = vld [vmem:[%s327 + $0x288] sm:$0xff]
      %v770 = vld [vmem:[%s327 + $0x290] sm:$0xff]
      %v771 = vld [vmem:[%s327 + $0x298] sm:$0xff]
      %s772 = scalar_lea.vmem %s1, 12
      %v773 = vld [vmem:[%s772] sm:$0xf]
      %v775 = vsel %vm372, %v756, 0
      %v778 = vsel %vm372, %v757, 0
      %v781 = vsel %vm372, %v758, 0
      %v784 = vsel %vm372, %v759, 0
      %v787 = vsel %vm372, %v760, 0
      %v790 = vsel %vm372, %v761, 0
      %v793 = vsel %vm372, %v762, 0
      %v796 = vsel %vm372, %v763, 0
      %v799 = vsel %vm372, %v764, 0
      %v802 = vsel %vm372, %v765, 0
      %v805 = vsel %vm372, %v766, 0
      %v808 = vsel %vm372, %v767, 0
      %v811 = vsel %vm372, %v768, 0
      %v814 = vsel %vm372, %v769, 0
      %v817 = vsel %vm372, %v770, 0
      %v820 = vsel %vm372, %v771, 0
      %v823 = vsel %vm421, %v773, 0
      %825 = vmatpush.msra.mxu0 0.0
      %826 = vmatpush.msra.mxu0 0.0
      %827 = vmatpush.msra.mxu0 0.0
      %828 = vmatpush.msra.mxu0 0.0
      %829 = vmatpush.msra.mxu0 0.0
      %830 = vmatpush.msra.mxu0 0.0
      %831 = vmatpush.msra.mxu0 0.0
      %832 = vmatpush.msra.mxu0 0.0
      %833 = vmatpush.msra.mxu0 0.0
      %834 = vmatpush.msra.mxu0 0.0
      %835 = vmatpush.msra.mxu0 0.0
      %836 = vmatpush.msra.mxu0 0.0
      %837 = vmatpush.msra.mxu0 0.0
      %838 = vmatpush.msra.mxu0 0.0
      %839 = vmatpush.msra.mxu0 0.0
      %840 = vmatpush.msra.mxu0 %v823
      %841 = vmatmul.f32.gmra.mxu0 %v775
      %v842 = vpop.f32.mrf.mxu0
      %v843 = vadd.f32 0.0, %v842
      %844 = vmatmul.f32.gmra.mxu0 %v778
      %v845 = vpop.f32.mrf.mxu0
      %v846 = vadd.f32 0.0, %v845
      %847 = vmatmul.f32.gmra.mxu0 %v781
      %v848 = vpop.f32.mrf.mxu0
      %v849 = vadd.f32 0.0, %v848
      %850 = vmatmul.f32.gmra.mxu0 %v784
      %v851 = vpop.f32.mrf.mxu0
      %v852 = vadd.f32 0.0, %v851
      %853 = vmatmul.f32.gmra.mxu0 %v787
      %v854 = vpop.f32.mrf.mxu0
      %v855 = vadd.f32 0.0, %v854
      %856 = vmatmul.f32.gmra.mxu0 %v790
      %v857 = vpop.f32.mrf.mxu0
      %v858 = vadd.f32 0.0, %v857
      %859 = vmatmul.f32.gmra.mxu0 %v793
      %v860 = vpop.f32.mrf.mxu0
      %v861 = vadd.f32 0.0, %v860
      %862 = vmatmul.f32.gmra.mxu0 %v796
      %v863 = vpop.f32.mrf.mxu0
      %v864 = vadd.f32 0.0, %v863
      %865 = vmatmul.f32.gmra.mxu0 %v799
      %v866 = vpop.f32.mrf.mxu0
      %v867 = vadd.f32 0.0, %v866
      %868 = vmatmul.f32.gmra.mxu0 %v802
      %v869 = vpop.f32.mrf.mxu0
      %v870 = vadd.f32 0.0, %v869
      %871 = vmatmul.f32.gmra.mxu0 %v805
      %v872 = vpop.f32.mrf.mxu0
      %v873 = vadd.f32 0.0, %v872
      %874 = vmatmul.f32.gmra.mxu0 %v808
      %v875 = vpop.f32.mrf.mxu0
      %v876 = vadd.f32 0.0, %v875
      %877 = vmatmul.f32.gmra.mxu0 %v811
      %v878 = vpop.f32.mrf.mxu0
      %v879 = vadd.f32 0.0, %v878
      %880 = vmatmul.f32.gmra.mxu0 %v814
      %v881 = vpop.f32.mrf.mxu0
      %v882 = vadd.f32 0.0, %v881
      %883 = vmatmul.f32.gmra.mxu0 %v817
      %v884 = vpop.f32.mrf.mxu0
      %v885 = vadd.f32 0.0, %v884
      %886 = vmatmul.f32.gmra.mxu0 %v820
      %v887 = vpop.f32.mrf.mxu0
      %v888 = vadd.f32 0.0, %v887
      %889 = vdwg.mxu0
      %v890 = vadd.f32 %v740, %v843
      %v891 = vadd.f32 %v741, %v846
      %v892 = vadd.f32 %v742, %v849
      %v893 = vadd.f32 %v743, %v852
      %v894 = vadd.f32 %v744, %v855
      %v895 = vadd.f32 %v745, %v858
      %v896 = vadd.f32 %v746, %v861
      %v897 = vadd.f32 %v747, %v864
      %v898 = vadd.f32 %v748, %v867
      %v899 = vadd.f32 %v749, %v870
      %v900 = vadd.f32 %v750, %v873
      %v901 = vadd.f32 %v751, %v876
      %v902 = vadd.f32 %v752, %v879
      %v903 = vadd.f32 %v753, %v882
      %v904 = vadd.f32 %v754, %v885
      %v905 = vadd.f32 %v755, %v888
      %v906 = vld [vmem:[%s327 + $0x330] sm:$0xff]
      %v907 = vld [vmem:[%s327 + $0x338] sm:$0xff]
      %v908 = vld [vmem:[%s327 + $0x340] sm:$0xff]
      %v909 = vld [vmem:[%s327 + $0x348] sm:$0xff]
      %v910 = vld [vmem:[%s327 + $0x350] sm:$0xff]
      %v911 = vld [vmem:[%s327 + $0x358] sm:$0xff]
      %v912 = vld [vmem:[%s327 + $0x360] sm:$0xff]
      %v913 = vld [vmem:[%s327 + $0x368] sm:$0xff]
      %v914 = vld [vmem:[%s327 + $0x370] sm:$0xff]
      %v915 = vld [vmem:[%s327 + $0x378] sm:$0xff]
      %v916 = vld [vmem:[%s327 + $0x380] sm:$0xff]
      %v917 = vld [vmem:[%s327 + $0x388] sm:$0xff]
      %v918 = vld [vmem:[%s327 + $0x390] sm:$0xff]
      %v919 = vld [vmem:[%s327 + $0x398] sm:$0xff]
      %v920 = vld [vmem:[%s327 + $0x3a0] sm:$0xff]
      %v921 = vld [vmem:[%s327 + $0x3a8] sm:$0xff]
      %s922 = scalar_lea.vmem %s1, 16
      %v923 = vld [vmem:[%s922] sm:$0xf]
      %v925 = vsel %vm372, %v906, 0
      %v928 = vsel %vm372, %v907, 0
      %v931 = vsel %vm372, %v908, 0
      %v934 = vsel %vm372, %v909, 0
      %v937 = vsel %vm372, %v910, 0
      %v940 = vsel %vm372, %v911, 0
      %v943 = vsel %vm372, %v912, 0
      %v946 = vsel %vm372, %v913, 0
      %v949 = vsel %vm372, %v914, 0
      %v952 = vsel %vm372, %v915, 0
      %v955 = vsel %vm372, %v916, 0
      %v958 = vsel %vm372, %v917, 0
      %v961 = vsel %vm372, %v918, 0
      %v964 = vsel %vm372, %v919, 0
      %v967 = vsel %vm372, %v920, 0
      %v970 = vsel %vm372, %v921, 0
      %v973 = vsel %vm421, %v923, 0
      %975 = vmatpush.msra.mxu0 0.0
      %976 = vmatpush.msra.mxu0 0.0
      %977 = vmatpush.msra.mxu0 0.0
      %978 = vmatpush.msra.mxu0 0.0
      %979 = vmatpush.msra.mxu0 0.0
      %980 = vmatpush.msra.mxu0 0.0
      %981 = vmatpush.msra.mxu0 0.0
      %982 = vmatpush.msra.mxu0 0.0
      %983 = vmatpush.msra.mxu0 0.0
      %984 = vmatpush.msra.mxu0 0.0
      %985 = vmatpush.msra.mxu0 0.0
      %986 = vmatpush.msra.mxu0 0.0
      %987 = vmatpush.msra.mxu0 0.0
      %988 = vmatpush.msra.mxu0 0.0
      %989 = vmatpush.msra.mxu0 0.0
      %990 = vmatpush.msra.mxu0 %v973
      %991 = vmatmul.f32.gmra.mxu0 %v925
      %v992 = vpop.f32.mrf.mxu0
      %v993 = vadd.f32 0.0, %v992
      %994 = vmatmul.f32.gmra.mxu0 %v928
      %v995 = vpop.f32.mrf.mxu0
      %v996 = vadd.f32 0.0, %v995
      %997 = vmatmul.f32.gmra.mxu0 %v931
      %v998 = vpop.f32.mrf.mxu0
      %v999 = vadd.f32 0.0, %v998
      %1000 = vmatmul.f32.gmra.mxu0 %v934
      %v1001 = vpop.f32.mrf.mxu0
      %v1002 = vadd.f32 0.0, %v1001
      %1003 = vmatmul.f32.gmra.mxu0 %v937
      %v1004 = vpop.f32.mrf.mxu0
      %v1005 = vadd.f32 0.0, %v1004
      %1006 = vmatmul.f32.gmra.mxu0 %v940
      %v1007 = vpop.f32.mrf.mxu0
      %v1008 = vadd.f32 0.0, %v1007
      %1009 = vmatmul.f32.gmra.mxu0 %v943
      %v1010 = vpop.f32.mrf.mxu0
      %v1011 = vadd.f32 0.0, %v1010
      %1012 = vmatmul.f32.gmra.mxu0 %v946
      %v1013 = vpop.f32.mrf.mxu0
      %v1014 = vadd.f32 0.0, %v1013
      %1015 = vmatmul.f32.gmra.mxu0 %v949
      %v1016 = vpop.f32.mrf.mxu0
      %v1017 = vadd.f32 0.0, %v1016
      %1018 = vmatmul.f32.gmra.mxu0 %v952
      %v1019 = vpop.f32.mrf.mxu0
      %v1020 = vadd.f32 0.0, %v1019
      %1021 = vmatmul.f32.gmra.mxu0 %v955
      %v1022 = vpop.f32.mrf.mxu0
      %v1023 = vadd.f32 0.0, %v1022
      %1024 = vmatmul.f32.gmra.mxu0 %v958
      %v1025 = vpop.f32.mrf.mxu0
      %v1026 = vadd.f32 0.0, %v1025
      %1027 = vmatmul.f32.gmra.mxu0 %v961
      %v1028 = vpop.f32.mrf.mxu0
      %v1029 = vadd.f32 0.0, %v1028
      %1030 = vmatmul.f32.gmra.mxu0 %v964
      %v1031 = vpop.f32.mrf.mxu0
      %v1032 = vadd.f32 0.0, %v1031
      %1033 = vmatmul.f32.gmra.mxu0 %v967
      %v1034 = vpop.f32.mrf.mxu0
      %v1035 = vadd.f32 0.0, %v1034
      %1036 = vmatmul.f32.gmra.mxu0 %v970
      %v1037 = vpop.f32.mrf.mxu0
      %v1038 = vadd.f32 0.0, %v1037
      %1039 = vdwg.mxu0
      %v1040 = vadd.f32 %v890, %v993
      %v1041 = vadd.f32 %v891, %v996
      %v1042 = vadd.f32 %v892, %v999
      %v1043 = vadd.f32 %v893, %v1002
      %v1044 = vadd.f32 %v894, %v1005
      %v1045 = vadd.f32 %v895, %v1008
      %v1046 = vadd.f32 %v896, %v1011
      %v1047 = vadd.f32 %v897, %v1014
      %v1048 = vadd.f32 %v898, %v1017
      %v1049 = vadd.f32 %v899, %v1020
      %v1050 = vadd.f32 %v900, %v1023
      %v1051 = vadd.f32 %v901, %v1026
      %v1052 = vadd.f32 %v902, %v1029
      %v1053 = vadd.f32 %v903, %v1032
      %v1054 = vadd.f32 %v904, %v1035
      %v1055 = vadd.f32 %v905, %v1038
      %v1056 = vld [vmem:[%s327 + $0x221] sm:$0xff]
      %v1057 = vld [vmem:[%s327 + $0x229] sm:$0xff]
      %v1058 = vld [vmem:[%s327 + $0x231] sm:$0xff]
      %v1059 = vld [vmem:[%s327 + $0x239] sm:$0xff]
      %v1060 = vld [vmem:[%s327 + $0x241] sm:$0xff]
      %v1061 = vld [vmem:[%s327 + $0x249] sm:$0xff]
      %v1062 = vld [vmem:[%s327 + $0x251] sm:$0xff]
      %v1063 = vld [vmem:[%s327 + $0x259] sm:$0xff]
      %v1064 = vld [vmem:[%s327 + $0x261] sm:$0xff]
      %v1065 = vld [vmem:[%s327 + $0x269] sm:$0xff]
      %v1066 = vld [vmem:[%s327 + $0x271] sm:$0xff]
      %v1067 = vld [vmem:[%s327 + $0x279] sm:$0xff]
      %v1068 = vld [vmem:[%s327 + $0x281] sm:$0xff]
      %v1069 = vld [vmem:[%s327 + $0x289] sm:$0xff]
      %v1070 = vld [vmem:[%s327 + $0x291] sm:$0xff]
      %v1071 = vld [vmem:[%s327 + $0x299] sm:$0xff]
      %s1072 = scalar_lea.vmem %s1, 20
      %v1073 = vld [vmem:[%s1072] sm:$0xf]
      %v1075 = vsel %vm372, %v1056, 0
      %v1078 = vsel %vm372, %v1057, 0
      %v1081 = vsel %vm372, %v1058, 0
      %v1084 = vsel %vm372, %v1059, 0
      %v1087 = vsel %vm372, %v1060, 0
      %v1090 = vsel %vm372, %v1061, 0
      %v1093 = vsel %vm372, %v1062, 0
      %v1096 = vsel %vm372, %v1063, 0
      %v1099 = vsel %vm372, %v1064, 0
      %v1102 = vsel %vm372, %v1065, 0
      %v1105 = vsel %vm372, %v1066, 0
      %v1108 = vsel %vm372, %v1067, 0
      %v1111 = vsel %vm372, %v1068, 0
      %v1114 = vsel %vm372, %v1069, 0
      %v1117 = vsel %vm372, %v1070, 0
      %v1120 = vsel %vm372, %v1071, 0
      %v1123 = vsel %vm421, %v1073, 0
      %1125 = vmatpush.msra.mxu0 0.0
      %1126 = vmatpush.msra.mxu0 0.0
      %1127 = vmatpush.msra.mxu0 0.0
      %1128 = vmatpush.msra.mxu0 0.0
      %1129 = vmatpush.msra.mxu0 0.0
      %1130 = vmatpush.msra.mxu0 0.0
      %1131 = vmatpush.msra.mxu0 0.0
      %1132 = vmatpush.msra.mxu0 0.0
      %1133 = vmatpush.msra.mxu0 0.0
      %1134 = vmatpush.msra.mxu0 0.0
      %1135 = vmatpush.msra.mxu0 0.0
      %1136 = vmatpush.msra.mxu0 0.0
      %1137 = vmatpush.msra.mxu0 0.0
      %1138 = vmatpush.msra.mxu0 0.0
      %1139 = vmatpush.msra.mxu0 0.0
      %1140 = vmatpush.msra.mxu0 %v1123
      %1141 = vmatmul.f32.gmra.mxu0 %v1075
      %v1142 = vpop.f32.mrf.mxu0
      %v1143 = vadd.f32 0.0, %v1142
      %1144 = vmatmul.f32.gmra.mxu0 %v1078
      %v1145 = vpop.f32.mrf.mxu0
      %v1146 = vadd.f32 0.0, %v1145
      %1147 = vmatmul.f32.gmra.mxu0 %v1081
      %v1148 = vpop.f32.mrf.mxu0
      %v1149 = vadd.f32 0.0, %v1148
      %1150 = vmatmul.f32.gmra.mxu0 %v1084
      %v1151 = vpop.f32.mrf.mxu0
      %v1152 = vadd.f32 0.0, %v1151
      %1153 = vmatmul.f32.gmra.mxu0 %v1087
      %v1154 = vpop.f32.mrf.mxu0
      %v1155 = vadd.f32 0.0, %v1154
      %1156 = vmatmul.f32.gmra.mxu0 %v1090
      %v1157 = vpop.f32.mrf.mxu0
      %v1158 = vadd.f32 0.0, %v1157
      %1159 = vmatmul.f32.gmra.mxu0 %v1093
      %v1160 = vpop.f32.mrf.mxu0
      %v1161 = vadd.f32 0.0, %v1160
      %1162 = vmatmul.f32.gmra.mxu0 %v1096
      %v1163 = vpop.f32.mrf.mxu0
      %v1164 = vadd.f32 0.0, %v1163
      %1165 = vmatmul.f32.gmra.mxu0 %v1099
      %v1166 = vpop.f32.mrf.mxu0
      %v1167 = vadd.f32 0.0, %v1166
      %1168 = vmatmul.f32.gmra.mxu0 %v1102
      %v1169 = vpop.f32.mrf.mxu0
      %v1170 = vadd.f32 0.0, %v1169
      %1171 = vmatmul.f32.gmra.mxu0 %v1105
      %v1172 = vpop.f32.mrf.mxu0
      %v1173 = vadd.f32 0.0, %v1172
      %1174 = vmatmul.f32.gmra.mxu0 %v1108
      %v1175 = vpop.f32.mrf.mxu0
      %v1176 = vadd.f32 0.0, %v1175
      %1177 = vmatmul.f32.gmra.mxu0 %v1111
      %v1178 = vpop.f32.mrf.mxu0
      %v1179 = vadd.f32 0.0, %v1178
      %1180 = vmatmul.f32.gmra.mxu0 %v1114
      %v1181 = vpop.f32.mrf.mxu0
      %v1182 = vadd.f32 0.0, %v1181
      %1183 = vmatmul.f32.gmra.mxu0 %v1117
      %v1184 = vpop.f32.mrf.mxu0
      %v1185 = vadd.f32 0.0, %v1184
      %1186 = vmatmul.f32.gmra.mxu0 %v1120
      %v1187 = vpop.f32.mrf.mxu0
      %v1188 = vadd.f32 0.0, %v1187
      %1189 = vdwg.mxu0
      %v1190 = vadd.f32 %v1040, %v1143
      %v1191 = vadd.f32 %v1041, %v1146
      %v1192 = vadd.f32 %v1042, %v1149
      %v1193 = vadd.f32 %v1043, %v1152
      %v1194 = vadd.f32 %v1044, %v1155
      %v1195 = vadd.f32 %v1045, %v1158
      %v1196 = vadd.f32 %v1046, %v1161
      %v1197 = vadd.f32 %v1047, %v1164
      %v1198 = vadd.f32 %v1048, %v1167
      %v1199 = vadd.f32 %v1049, %v1170
      %v1200 = vadd.f32 %v1050, %v1173
      %v1201 = vadd.f32 %v1051, %v1176
      %v1202 = vadd.f32 %v1052, %v1179
      %v1203 = vadd.f32 %v1053, %v1182
      %v1204 = vadd.f32 %v1054, %v1185
      %v1205 = vadd.f32 %v1055, %v1188
      %v1206 = vld [vmem:[%s327 + $0x10] sm:$0xff]
      %v1207 = vld [vmem:[%s327 + $0x18] sm:$0xff]
      %v1208 = vld [vmem:[%s327 + $0x20] sm:$0xff]
      %v1209 = vld [vmem:[%s327 + $0x28] sm:$0xff]
      %v1210 = vld [vmem:[%s327 + $0x30] sm:$0xff]
      %v1211 = vld [vmem:[%s327 + $0x38] sm:$0xff]
      %v1212 = vld [vmem:[%s327 + $0x40] sm:$0xff]
      %v1213 = vld [vmem:[%s327 + $0x48] sm:$0xff]
      %v1214 = vld [vmem:[%s327 + $0x50] sm:$0xff]
      %v1215 = vld [vmem:[%s327 + $0x58] sm:$0xff]
      %v1216 = vld [vmem:[%s327 + $0x60] sm:$0xff]
      %v1217 = vld [vmem:[%s327 + $0x68] sm:$0xff]
      %v1218 = vld [vmem:[%s327 + $0x70] sm:$0xff]
      %v1219 = vld [vmem:[%s327 + $0x78] sm:$0xff]
      %v1220 = vld [vmem:[%s327 + $0x80] sm:$0xff]
      %v1221 = vld [vmem:[%s327 + $0x88] sm:$0xff]
      %s1222 = scalar_lea.vmem %s1, 24
      %v1223 = vld [vmem:[%s1222] sm:$0xf]
      %v1225 = vsel %vm372, %v1206, 0
      %v1228 = vsel %vm372, %v1207, 0
      %v1231 = vsel %vm372, %v1208, 0
      %v1234 = vsel %vm372, %v1209, 0
      %v1237 = vsel %vm372, %v1210, 0
      %v1240 = vsel %vm372, %v1211, 0
      %v1243 = vsel %vm372, %v1212, 0
      %v1246 = vsel %vm372, %v1213, 0
      %v1249 = vsel %vm372, %v1214, 0
      %v1252 = vsel %vm372, %v1215, 0
      %v1255 = vsel %vm372, %v1216, 0
      %v1258 = vsel %vm372, %v1217, 0
      %v1261 = vsel %vm372, %v1218, 0
      %v1264 = vsel %vm372, %v1219, 0
      %v1267 = vsel %vm372, %v1220, 0
      %v1270 = vsel %vm372, %v1221, 0
      %v1273 = vsel %vm421, %v1223, 0
      %1275 = vmatpush.msra.mxu0 0.0
      %1276 = vmatpush.msra.mxu0 0.0
      %1277 = vmatpush.msra.mxu0 0.0
      %1278 = vmatpush.msra.mxu0 0.0
      %1279 = vmatpush.msra.mxu0 0.0
      %1280 = vmatpush.msra.mxu0 0.0
      %1281 = vmatpush.msra.mxu0 0.0
      %1282 = vmatpush.msra.mxu0 0.0
      %1283 = vmatpush.msra.mxu0 0.0
      %1284 = vmatpush.msra.mxu0 0.0
      %1285 = vmatpush.msra.mxu0 0.0
      %1286 = vmatpush.msra.mxu0 0.0
      %1287 = vmatpush.msra.mxu0 0.0
      %1288 = vmatpush.msra.mxu0 0.0
      %1289 = vmatpush.msra.mxu0 0.0
      %1290 = vmatpush.msra.mxu0 %v1273
      %1291 = vmatmul.f32.gmra.mxu0 %v1225
      %v1292 = vpop.f32.mrf.mxu0
      %v1293 = vadd.f32 0.0, %v1292
      %1294 = vmatmul.f32.gmra.mxu0 %v1228
      %v1295 = vpop.f32.mrf.mxu0
      %v1296 = vadd.f32 0.0, %v1295
      %1297 = vmatmul.f32.gmra.mxu0 %v1231
      %v1298 = vpop.f32.mrf.mxu0
      %v1299 = vadd.f32 0.0, %v1298
      %1300 = vmatmul.f32.gmra.mxu0 %v1234
      %v1301 = vpop.f32.mrf.mxu0
      %v1302 = vadd.f32 0.0, %v1301
      %1303 = vmatmul.f32.gmra.mxu0 %v1237
      %v1304 = vpop.f32.mrf.mxu0
      %v1305 = vadd.f32 0.0, %v1304
      %1306 = vmatmul.f32.gmra.mxu0 %v1240
      %v1307 = vpop.f32.mrf.mxu0
      %v1308 = vadd.f32 0.0, %v1307
      %1309 = vmatmul.f32.gmra.mxu0 %v1243
      %v1310 = vpop.f32.mrf.mxu0
      %v1311 = vadd.f32 0.0, %v1310
      %1312 = vmatmul.f32.gmra.mxu0 %v1246
      %v1313 = vpop.f32.mrf.mxu0
      %v1314 = vadd.f32 0.0, %v1313
      %1315 = vmatmul.f32.gmra.mxu0 %v1249
      %v1316 = vpop.f32.mrf.mxu0
      %v1317 = vadd.f32 0.0, %v1316
      %1318 = vmatmul.f32.gmra.mxu0 %v1252
      %v1319 = vpop.f32.mrf.mxu0
      %v1320 = vadd.f32 0.0, %v1319
      %1321 = vmatmul.f32.gmra.mxu0 %v1255
      %v1322 = vpop.f32.mrf.mxu0
      %v1323 = vadd.f32 0.0, %v1322
      %1324 = vmatmul.f32.gmra.mxu0 %v1258
      %v1325 = vpop.f32.mrf.mxu0
      %v1326 = vadd.f32 0.0, %v1325
      %1327 = vmatmul.f32.gmra.mxu0 %v1261
      %v1328 = vpop.f32.mrf.mxu0
      %v1329 = vadd.f32 0.0, %v1328
      %1330 = vmatmul.f32.gmra.mxu0 %v1264
      %v1331 = vpop.f32.mrf.mxu0
      %v1332 = vadd.f32 0.0, %v1331
      %1333 = vmatmul.f32.gmra.mxu0 %v1267
      %v1334 = vpop.f32.mrf.mxu0
      %v1335 = vadd.f32 0.0, %v1334
      %1336 = vmatmul.f32.gmra.mxu0 %v1270
      %v1337 = vpop.f32.mrf.mxu0
      %v1338 = vadd.f32 0.0, %v1337
      %1339 = vdwg.mxu0
      %v1340 = vadd.f32 %v1190, %v1293
      %v1341 = vadd.f32 %v1191, %v1296
      %v1342 = vadd.f32 %v1192, %v1299
      %v1343 = vadd.f32 %v1193, %v1302
      %v1344 = vadd.f32 %v1194, %v1305
      %v1345 = vadd.f32 %v1195, %v1308
      %v1346 = vadd.f32 %v1196, %v1311
      %v1347 = vadd.f32 %v1197, %v1314
      %v1348 = vadd.f32 %v1198, %v1317
      %v1349 = vadd.f32 %v1199, %v1320
      %v1350 = vadd.f32 %v1200, %v1323
      %v1351 = vadd.f32 %v1201, %v1326
      %v1352 = vadd.f32 %v1202, %v1329
      %v1353 = vadd.f32 %v1203, %v1332
      %v1354 = vadd.f32 %v1204, %v1335
      %v1355 = vadd.f32 %v1205, %v1338
      %v1356 = vld [vmem:[%s327 + $0x120] sm:$0xff]
      %v1357 = vld [vmem:[%s327 + $0x128] sm:$0xff]
      %v1358 = vld [vmem:[%s327 + $0x130] sm:$0xff]
      %v1359 = vld [vmem:[%s327 + $0x138] sm:$0xff]
      %v1360 = vld [vmem:[%s327 + $0x140] sm:$0xff]
      %v1361 = vld [vmem:[%s327 + $0x148] sm:$0xff]
      %v1362 = vld [vmem:[%s327 + $0x150] sm:$0xff]
      %v1363 = vld [vmem:[%s327 + $0x158] sm:$0xff]
      %v1364 = vld [vmem:[%s327 + $0x160] sm:$0xff]
      %v1365 = vld [vmem:[%s327 + $0x168] sm:$0xff]
      %v1366 = vld [vmem:[%s327 + $0x170] sm:$0xff]
      %v1367 = vld [vmem:[%s327 + $0x178] sm:$0xff]
      %v1368 = vld [vmem:[%s327 + $0x180] sm:$0xff]
      %v1369 = vld [vmem:[%s327 + $0x188] sm:$0xff]
      %v1370 = vld [vmem:[%s327 + $0x190] sm:$0xff]
      %v1371 = vld [vmem:[%s327 + $0x198] sm:$0xff]
      %s1372 = scalar_lea.vmem %s1, 28
      %v1373 = vld [vmem:[%s1372] sm:$0xf]
      %v1375 = vsel %vm372, %v1356, 0
      %v1378 = vsel %vm372, %v1357, 0
      %v1381 = vsel %vm372, %v1358, 0
      %v1384 = vsel %vm372, %v1359, 0
      %v1387 = vsel %vm372, %v1360, 0
      %v1390 = vsel %vm372, %v1361, 0
      %v1393 = vsel %vm372, %v1362, 0
      %v1396 = vsel %vm372, %v1363, 0
      %v1399 = vsel %vm372, %v1364, 0
      %v1402 = vsel %vm372, %v1365, 0
      %v1405 = vsel %vm372, %v1366, 0
      %v1408 = vsel %vm372, %v1367, 0
      %v1411 = vsel %vm372, %v1368, 0
      %v1414 = vsel %vm372, %v1369, 0
      %v1417 = vsel %vm372, %v1370, 0
      %v1420 = vsel %vm372, %v1371, 0
      %v1423 = vsel %vm421, %v1373, 0
      %1425 = vmatpush.msra.mxu0 0.0
      %1426 = vmatpush.msra.mxu0 0.0
      %1427 = vmatpush.msra.mxu0 0.0
      %1428 = vmatpush.msra.mxu0 0.0
      %1429 = vmatpush.msra.mxu0 0.0
      %1430 = vmatpush.msra.mxu0 0.0
      %1431 = vmatpush.msra.mxu0 0.0
      %1432 = vmatpush.msra.mxu0 0.0
      %1433 = vmatpush.msra.mxu0 0.0
      %1434 = vmatpush.msra.mxu0 0.0
      %1435 = vmatpush.msra.mxu0 0.0
      %1436 = vmatpush.msra.mxu0 0.0
      %1437 = vmatpush.msra.mxu0 0.0
      %1438 = vmatpush.msra.mxu0 0.0
      %1439 = vmatpush.msra.mxu0 0.0
      %1440 = vmatpush.msra.mxu0 %v1423
      %1441 = vmatmul.f32.gmra.mxu0 %v1375
      %v1442 = vpop.f32.mrf.mxu0
      %v1443 = vadd.f32 0.0, %v1442
      %1444 = vmatmul.f32.gmra.mxu0 %v1378
      %v1445 = vpop.f32.mrf.mxu0
      %v1446 = vadd.f32 0.0, %v1445
      %1447 = vmatmul.f32.gmra.mxu0 %v1381
      %v1448 = vpop.f32.mrf.mxu0
      %v1449 = vadd.f32 0.0, %v1448
      %1450 = vmatmul.f32.gmra.mxu0 %v1384
      %v1451 = vpop.f32.mrf.mxu0
      %v1452 = vadd.f32 0.0, %v1451
      %1453 = vmatmul.f32.gmra.mxu0 %v1387
      %v1454 = vpop.f32.mrf.mxu0
      %v1455 = vadd.f32 0.0, %v1454
      %1456 = vmatmul.f32.gmra.mxu0 %v1390
      %v1457 = vpop.f32.mrf.mxu0
      %v1458 = vadd.f32 0.0, %v1457
      %1459 = vmatmul.f32.gmra.mxu0 %v1393
      %v1460 = vpop.f32.mrf.mxu0
      %v1461 = vadd.f32 0.0, %v1460
      %1462 = vmatmul.f32.gmra.mxu0 %v1396
      %v1463 = vpop.f32.mrf.mxu0
      %v1464 = vadd.f32 0.0, %v1463
      %1465 = vmatmul.f32.gmra.mxu0 %v1399
      %v1466 = vpop.f32.mrf.mxu0
      %v1467 = vadd.f32 0.0, %v1466
      %1468 = vmatmul.f32.gmra.mxu0 %v1402
      %v1469 = vpop.f32.mrf.mxu0
      %v1470 = vadd.f32 0.0, %v1469
      %1471 = vmatmul.f32.gmra.mxu0 %v1405
      %v1472 = vpop.f32.mrf.mxu0
      %v1473 = vadd.f32 0.0, %v1472
      %1474 = vmatmul.f32.gmra.mxu0 %v1408
      %v1475 = vpop.f32.mrf.mxu0
      %v1476 = vadd.f32 0.0, %v1475
      %1477 = vmatmul.f32.gmra.mxu0 %v1411
      %v1478 = vpop.f32.mrf.mxu0
      %v1479 = vadd.f32 0.0, %v1478
      %1480 = vmatmul.f32.gmra.mxu0 %v1414
      %v1481 = vpop.f32.mrf.mxu0
      %v1482 = vadd.f32 0.0, %v1481
      %1483 = vmatmul.f32.gmra.mxu0 %v1417
      %v1484 = vpop.f32.mrf.mxu0
      %v1485 = vadd.f32 0.0, %v1484
      %1486 = vmatmul.f32.gmra.mxu0 %v1420
      %v1487 = vpop.f32.mrf.mxu0
      %v1488 = vadd.f32 0.0, %v1487
      %1489 = vdwg.mxu0
      %v1490 = vadd.f32 %v1340, %v1443
      %v1491 = vadd.f32 %v1341, %v1446
      %v1492 = vadd.f32 %v1342, %v1449
      %v1493 = vadd.f32 %v1343, %v1452
      %v1494 = vadd.f32 %v1344, %v1455
      %v1495 = vadd.f32 %v1345, %v1458
      %v1496 = vadd.f32 %v1346, %v1461
      %v1497 = vadd.f32 %v1347, %v1464
      %v1498 = vadd.f32 %v1348, %v1467
      %v1499 = vadd.f32 %v1349, %v1470
      %v1500 = vadd.f32 %v1350, %v1473
      %v1501 = vadd.f32 %v1351, %v1476
      %v1502 = vadd.f32 %v1352, %v1479
      %v1503 = vadd.f32 %v1353, %v1482
      %v1504 = vadd.f32 %v1354, %v1485
      %v1505 = vadd.f32 %v1355, %v1488
      %v1506 = vld [vmem:[%s327 + $0x11] sm:$0xff]
      %v1507 = vld [vmem:[%s327 + $0x19] sm:$0xff]
      %v1508 = vld [vmem:[%s327 + $0x21] sm:$0xff]
      %v1509 = vld [vmem:[%s327 + $0x29] sm:$0xff]
      %v1510 = vld [vmem:[%s327 + $0x31] sm:$0xff]
      %v1511 = vld [vmem:[%s327 + $0x39] sm:$0xff]
      %v1512 = vld [vmem:[%s327 + $0x41] sm:$0xff]
      %v1513 = vld [vmem:[%s327 + $0x49] sm:$0xff]
      %v1514 = vld [vmem:[%s327 + $0x51] sm:$0xff]
      %v1515 = vld [vmem:[%s327 + $0x59] sm:$0xff]
      %v1516 = vld [vmem:[%s327 + $0x61] sm:$0xff]
      %v1517 = vld [vmem:[%s327 + $0x69] sm:$0xff]
      %v1518 = vld [vmem:[%s327 + $0x71] sm:$0xff]
      %v1519 = vld [vmem:[%s327 + $0x79] sm:$0xff]
      %v1520 = vld [vmem:[%s327 + $0x81] sm:$0xff]
      %v1521 = vld [vmem:[%s327 + $0x89] sm:$0xff]
      %s1522 = scalar_lea.vmem %s1, 32
      %v1523 = vld [vmem:[%s1522] sm:$0xf]
      %v1525 = vsel %vm372, %v1506, 0
      %v1528 = vsel %vm372, %v1507, 0
      %v1531 = vsel %vm372, %v1508, 0
      %v1534 = vsel %vm372, %v1509, 0
      %v1537 = vsel %vm372, %v1510, 0
      %v1540 = vsel %vm372, %v1511, 0
      %v1543 = vsel %vm372, %v1512, 0
      %v1546 = vsel %vm372, %v1513, 0
      %v1549 = vsel %vm372, %v1514, 0
      %v1552 = vsel %vm372, %v1515, 0
      %v1555 = vsel %vm372, %v1516, 0
      %v1558 = vsel %vm372, %v1517, 0
      %v1561 = vsel %vm372, %v1518, 0
      %v1564 = vsel %vm372, %v1519, 0
      %v1567 = vsel %vm372, %v1520, 0
      %v1570 = vsel %vm372, %v1521, 0
      %v1573 = vsel %vm421, %v1523, 0
      %1575 = vmatpush.msra.mxu0 0.0
      %1576 = vmatpush.msra.mxu0 0.0
      %1577 = vmatpush.msra.mxu0 0.0
      %1578 = vmatpush.msra.mxu0 0.0
      %1579 = vmatpush.msra.mxu0 0.0
      %1580 = vmatpush.msra.mxu0 0.0
      %1581 = vmatpush.msra.mxu0 0.0
      %1582 = vmatpush.msra.mxu0 0.0
      %1583 = vmatpush.msra.mxu0 0.0
      %1584 = vmatpush.msra.mxu0 0.0
      %1585 = vmatpush.msra.mxu0 0.0
      %1586 = vmatpush.msra.mxu0 0.0
      %1587 = vmatpush.msra.mxu0 0.0
      %1588 = vmatpush.msra.mxu0 0.0
      %1589 = vmatpush.msra.mxu0 0.0
      %1590 = vmatpush.msra.mxu0 %v1573
      %1591 = vmatmul.f32.gmra.mxu0 %v1525
      %v1592 = vpop.f32.mrf.mxu0
      %v1593 = vadd.f32 0.0, %v1592
      %1594 = vmatmul.f32.gmra.mxu0 %v1528
      %v1595 = vpop.f32.mrf.mxu0
      %v1596 = vadd.f32 0.0, %v1595
      %1597 = vmatmul.f32.gmra.mxu0 %v1531
      %v1598 = vpop.f32.mrf.mxu0
      %v1599 = vadd.f32 0.0, %v1598
      %1600 = vmatmul.f32.gmra.mxu0 %v1534
      %v1601 = vpop.f32.mrf.mxu0
      %v1602 = vadd.f32 0.0, %v1601
      %1603 = vmatmul.f32.gmra.mxu0 %v1537
      %v1604 = vpop.f32.mrf.mxu0
      %v1605 = vadd.f32 0.0, %v1604
      %1606 = vmatmul.f32.gmra.mxu0 %v1540
      %v1607 = vpop.f32.mrf.mxu0
      %v1608 = vadd.f32 0.0, %v1607
      %1609 = vmatmul.f32.gmra.mxu0 %v1543
      %v1610 = vpop.f32.mrf.mxu0
      %v1611 = vadd.f32 0.0, %v1610
      %1612 = vmatmul.f32.gmra.mxu0 %v1546
      %v1613 = vpop.f32.mrf.mxu0
      %v1614 = vadd.f32 0.0, %v1613
      %1615 = vmatmul.f32.gmra.mxu0 %v1549
      %v1616 = vpop.f32.mrf.mxu0
      %v1617 = vadd.f32 0.0, %v1616
      %1618 = vmatmul.f32.gmra.mxu0 %v1552
      %v1619 = vpop.f32.mrf.mxu0
      %v1620 = vadd.f32 0.0, %v1619
      %1621 = vmatmul.f32.gmra.mxu0 %v1555
      %v1622 = vpop.f32.mrf.mxu0
      %v1623 = vadd.f32 0.0, %v1622
      %1624 = vmatmul.f32.gmra.mxu0 %v1558
      %v1625 = vpop.f32.mrf.mxu0
      %v1626 = vadd.f32 0.0, %v1625
      %1627 = vmatmul.f32.gmra.mxu0 %v1561
      %v1628 = vpop.f32.mrf.mxu0
      %v1629 = vadd.f32 0.0, %v1628
      %1630 = vmatmul.f32.gmra.mxu0 %v1564
      %v1631 = vpop.f32.mrf.mxu0
      %v1632 = vadd.f32 0.0, %v1631
      %1633 = vmatmul.f32.gmra.mxu0 %v1567
      %v1634 = vpop.f32.mrf.mxu0
      %v1635 = vadd.f32 0.0, %v1634
      %1636 = vmatmul.f32.gmra.mxu0 %v1570
      %v1637 = vpop.f32.mrf.mxu0
      %v1638 = vadd.f32 0.0, %v1637
      %1639 = vdwg.mxu0
      %v1640 = vadd.f32 %v1490, %v1593
      %v1641 = vadd.f32 %v1491, %v1596
      %v1642 = vadd.f32 %v1492, %v1599
      %v1643 = vadd.f32 %v1493, %v1602
      %v1644 = vadd.f32 %v1494, %v1605
      %v1645 = vadd.f32 %v1495, %v1608
      %v1646 = vadd.f32 %v1496, %v1611
      %v1647 = vadd.f32 %v1497, %v1614
      %v1648 = vadd.f32 %v1498, %v1617
      %v1649 = vadd.f32 %v1499, %v1620
      %v1650 = vadd.f32 %v1500, %v1623
      %v1651 = vadd.f32 %v1501, %v1626
      %v1652 = vadd.f32 %v1502, %v1629
      %v1653 = vadd.f32 %v1503, %v1632
      %v1654 = vadd.f32 %v1504, %v1635
      %v1655 = vadd.f32 %v1505, %v1638
      %v1657 = vperm.slane %v336, 0
      %v1659 = vadd.f32 %v1640, %v1657
      %v1660 = vadd.f32 %v1641, %v1657
      %v1661 = vadd.f32 %v1642, %v1657
      %v1662 = vadd.f32 %v1643, %v1657
      %v1663 = vadd.f32 %v1644, %v1657
      %v1664 = vadd.f32 %v1645, %v1657
      %v1665 = vadd.f32 %v1646, %v1657
      %v1666 = vadd.f32 %v1647, %v1657
      %v1667 = vadd.f32 %v1648, %v1657
      %v1668 = vadd.f32 %v1649, %v1657
      %v1669 = vadd.f32 %v1650, %v1657
      %v1670 = vadd.f32 %v1651, %v1657
      %v1671 = vadd.f32 %v1652, %v1657
      %v1672 = vadd.f32 %v1653, %v1657
      %v1673 = vadd.f32 %v1654, %v1657
      %v1674 = vadd.f32 %v1655, %v1657
      %v1675 = vmax.f32 %v1659, 0.0
      %v1676 = vmax.f32 %v1660, 0.0
      %v1677 = vmax.f32 %v1661, 0.0
      %v1678 = vmax.f32 %v1662, 0.0
      %v1679 = vmax.f32 %v1663, 0.0
      %v1680 = vmax.f32 %v1664, 0.0
      %v1681 = vmax.f32 %v1665, 0.0
      %v1682 = vmax.f32 %v1666, 0.0
      %v1683 = vmax.f32 %v1667, 0.0
      %v1684 = vmax.f32 %v1668, 0.0
      %v1685 = vmax.f32 %v1669, 0.0
      %v1686 = vmax.f32 %v1670, 0.0
      %v1687 = vmax.f32 %v1671, 0.0
      %v1688 = vmax.f32 %v1672, 0.0
      %v1689 = vmax.f32 %v1673, 0.0
      %v1690 = vmax.f32 %v1674, 0.0
      %1691 = vst.msk [vmem:[#allocation2] sm:$0xff] %vm333, %v1675
      %1692 = vst.msk [vmem:[#allocation2 + $0x8] sm:$0xff] %vm333, %v1676
      %1693 = vst.msk [vmem:[#allocation2 + $0x10] sm:$0xff] %vm333, %v1677
      %1694 = vst.msk [vmem:[#allocation2 + $0x18] sm:$0xff] %vm333, %v1678
      %1695 = vst.msk [vmem:[#allocation2 + $0x20] sm:$0xff] %vm333, %v1679
      %1696 = vst.msk [vmem:[#allocation2 + $0x28] sm:$0xff] %vm333, %v1680
      %1697 = vst.msk [vmem:[#allocation2 + $0x30] sm:$0xff] %vm333, %v1681
      %1698 = vst.msk [vmem:[#allocation2 + $0x38] sm:$0xff] %vm333, %v1682
      %1699 = vst.msk [vmem:[#allocation2 + $0x40] sm:$0xff] %vm333, %v1683
      %1700 = vst.msk [vmem:[#allocation2 + $0x48] sm:$0xff] %vm333, %v1684
      %1701 = vst.msk [vmem:[#allocation2 + $0x50] sm:$0xff] %vm333, %v1685
      %1702 = vst.msk [vmem:[#allocation2 + $0x58] sm:$0xff] %vm333, %v1686
      %1703 = vst.msk [vmem:[#allocation2 + $0x60] sm:$0xff] %vm333, %v1687
      %1704 = vst.msk [vmem:[#allocation2 + $0x68] sm:$0xff] %vm333, %v1688
      %1705 = vst.msk [vmem:[#allocation2 + $0x70] sm:$0xff] %vm333, %v1689
      %1706 = vst.msk [vmem:[#allocation2 + $0x78] sm:$0xff] %vm333, %v1690
      %v1707 = vld [vmem:[%s327 + $0x80] sm:$0xff]
      %v1708 = vld [vmem:[%s327 + $0x88] sm:$0xff]
      %v1709 = vld [vmem:[%s327 + $0x90] sm:$0xff]
      %v1710 = vld [vmem:[%s327 + $0x98] sm:$0xff]
      %v1711 = vld [vmem:[%s327 + $0xa0] sm:$0xff]
      %v1712 = vld [vmem:[%s327 + $0xa8] sm:$0xff]
      %v1713 = vld [vmem:[%s327 + $0xb0] sm:$0xff]
      %v1714 = vld [vmem:[%s327 + $0xb8] sm:$0xff]
      %v1715 = vld [vmem:[%s327 + $0xc0] sm:$0xff]
      %v1716 = vld [vmem:[%s327 + $0xc8] sm:$0xff]
      %v1717 = vld [vmem:[%s327 + $0xd0] sm:$0xff]
      %v1718 = vld [vmem:[%s327 + $0xd8] sm:$0xff]
      %v1719 = vld [vmem:[%s327 + $0xe0] sm:$0xff]
      %v1720 = vld [vmem:[%s327 + $0xe8] sm:$0xff]
      %v1721 = vld [vmem:[%s1] sm:$0xf]
      %v1722 = vld [vmem:[%s327 + $0x190] sm:$0xff]
      %v1723 = vld [vmem:[%s327 + $0x198] sm:$0xff]
      %v1724 = vld [vmem:[%s327 + $0x1a0] sm:$0xff]
      %v1725 = vld [vmem:[%s327 + $0x1a8] sm:$0xff]
      %v1726 = vld [vmem:[%s327 + $0x1b0] sm:$0xff]
      %v1727 = vld [vmem:[%s327 + $0x1b8] sm:$0xff]
      %v1728 = vld [vmem:[%s327 + $0x1c0] sm:$0xff]
      %v1729 = vld [vmem:[%s327 + $0x1c8] sm:$0xff]
      %v1730 = vld [vmem:[%s327 + $0x1d0] sm:$0xff]
      %v1731 = vld [vmem:[%s327 + $0x1d8] sm:$0xff]
      %v1732 = vld [vmem:[%s327 + $0x1e0] sm:$0xff]
      %v1733 = vld [vmem:[%s327 + $0x1e8] sm:$0xff]
      %v1734 = vld [vmem:[%s327 + $0x1f0] sm:$0xff]
      %v1735 = vld [vmem:[%s327 + $0x1f8] sm:$0xff]
      %v1736 = vld [vmem:[%s370] sm:$0xf]
      %v1738 = vsel %vm372, %v1722, 0
      %v1741 = vsel %vm372, %v1723, 0
      %v1744 = vsel %vm372, %v1724, 0
      %v1747 = vsel %vm372, %v1725, 0
      %v1750 = vsel %vm372, %v1726, 0
      %v1753 = vsel %vm372, %v1727, 0
      %v1756 = vsel %vm372, %v1728, 0
      %v1759 = vsel %vm372, %v1729, 0
      %v1762 = vsel %vm372, %v1730, 0
      %v1765 = vsel %vm372, %v1731, 0
      %v1768 = vsel %vm372, %v1732, 0
      %v1771 = vsel %vm372, %v1733, 0
      %v1774 = vsel %vm372, %v1734, 0
      %v1777 = vsel %vm372, %v1735, 0
      %v1780 = vsel %vm421, %v1736, 0
      %1782 = vmatpush.msra.mxu0 0.0
      %1783 = vmatpush.msra.mxu0 0.0
      %1784 = vmatpush.msra.mxu0 0.0
      %1785 = vmatpush.msra.mxu0 0.0
      %1786 = vmatpush.msra.mxu0 0.0
      %1787 = vmatpush.msra.mxu0 0.0
      %1788 = vmatpush.msra.mxu0 0.0
      %1789 = vmatpush.msra.mxu0 0.0
      %1790 = vmatpush.msra.mxu0 0.0
      %1791 = vmatpush.msra.mxu0 0.0
      %1792 = vmatpush.msra.mxu0 0.0
      %1793 = vmatpush.msra.mxu0 0.0
      %1794 = vmatpush.msra.mxu0 0.0
      %1795 = vmatpush.msra.mxu0 0.0
      %1796 = vmatpush.msra.mxu0 0.0
      %1797 = vmatpush.msra.mxu0 %v1780
      %1798 = vmatmul.f32.gmra.mxu0 %v1738
      %v1799 = vpop.f32.mrf.mxu0
      %v1800 = vadd.f32 0.0, %v1799
      %1801 = vmatmul.f32.gmra.mxu0 %v1741
      %v1802 = vpop.f32.mrf.mxu0
      %v1803 = vadd.f32 0.0, %v1802
      %1804 = vmatmul.f32.gmra.mxu0 %v1744
      %v1805 = vpop.f32.mrf.mxu0
      %v1806 = vadd.f32 0.0, %v1805
      %1807 = vmatmul.f32.gmra.mxu0 %v1747
      %v1808 = vpop.f32.mrf.mxu0
      %v1809 = vadd.f32 0.0, %v1808
      %1810 = vmatmul.f32.gmra.mxu0 %v1750
      %v1811 = vpop.f32.mrf.mxu0
      %v1812 = vadd.f32 0.0, %v1811
      %1813 = vmatmul.f32.gmra.mxu0 %v1753
      %v1814 = vpop.f32.mrf.mxu0
      %v1815 = vadd.f32 0.0, %v1814
      %1816 = vmatmul.f32.gmra.mxu0 %v1756
      %v1817 = vpop.f32.mrf.mxu0
      %v1818 = vadd.f32 0.0, %v1817
      %1819 = vmatmul.f32.gmra.mxu0 %v1759
      %v1820 = vpop.f32.mrf.mxu0
      %v1821 = vadd.f32 0.0, %v1820
      %1822 = vmatmul.f32.gmra.mxu0 %v1762
      %v1823 = vpop.f32.mrf.mxu0
      %v1824 = vadd.f32 0.0, %v1823
      %1825 = vmatmul.f32.gmra.mxu0 %v1765
      %v1826 = vpop.f32.mrf.mxu0
      %v1827 = vadd.f32 0.0, %v1826
      %1828 = vmatmul.f32.gmra.mxu0 %v1768
      %v1829 = vpop.f32.mrf.mxu0
      %v1830 = vadd.f32 0.0, %v1829
      %1831 = vmatmul.f32.gmra.mxu0 %v1771
      %v1832 = vpop.f32.mrf.mxu0
      %v1833 = vadd.f32 0.0, %v1832
      %1834 = vmatmul.f32.gmra.mxu0 %v1774
      %v1835 = vpop.f32.mrf.mxu0
      %v1836 = vadd.f32 0.0, %v1835
      %1837 = vmatmul.f32.gmra.mxu0 %v1777
      %v1838 = vpop.f32.mrf.mxu0
      %v1839 = vadd.f32 0.0, %v1838
      %1840 = vdwg.mxu0
      %v1842 = vsel %vm372, %v1707, 0
      %v1845 = vsel %vm372, %v1708, 0
      %v1848 = vsel %vm372, %v1709, 0
      %v1851 = vsel %vm372, %v1710, 0
      %v1854 = vsel %vm372, %v1711, 0
      %v1857 = vsel %vm372, %v1712, 0
      %v1860 = vsel %vm372, %v1713, 0
      %v1863 = vsel %vm372, %v1714, 0
      %v1866 = vsel %vm372, %v1715, 0
      %v1869 = vsel %vm372, %v1716, 0
      %v1872 = vsel %vm372, %v1717, 0
      %v1875 = vsel %vm372, %v1718, 0
      %v1878 = vsel %vm372, %v1719, 0
      %v1881 = vsel %vm372, %v1720, 0
      %v1884 = vsel %vm421, %v1721, 0
      %1886 = vmatpush.msra.mxu0 0.0
      %1887 = vmatpush.msra.mxu0 0.0
      %1888 = vmatpush.msra.mxu0 0.0
      %1889 = vmatpush.msra.mxu0 0.0
      %1890 = vmatpush.msra.mxu0 0.0
      %1891 = vmatpush.msra.mxu0 0.0
      %1892 = vmatpush.msra.mxu0 0.0
      %1893 = vmatpush.msra.mxu0 0.0
      %1894 = vmatpush.msra.mxu0 0.0
      %1895 = vmatpush.msra.mxu0 0.0
      %1896 = vmatpush.msra.mxu0 0.0
      %1897 = vmatpush.msra.mxu0 0.0
      %1898 = vmatpush.msra.mxu0 0.0
      %1899 = vmatpush.msra.mxu0 0.0
      %1900 = vmatpush.msra.mxu0 0.0
      %1901 = vmatpush.msra.mxu0 %v1884
      %1902 = vmatmul.f32.gmra.mxu0 %v1842
      %v1903 = vpop.f32.mrf.mxu0
      %v1904 = vadd.f32 %v1800, %v1903
      %1905 = vmatmul.f32.gmra.mxu0 %v1845
      %v1906 = vpop.f32.mrf.mxu0
      %v1907 = vadd.f32 %v1803, %v1906
      %1908 = vmatmul.f32.gmra.mxu0 %v1848
      %v1909 = vpop.f32.mrf.mxu0
      %v1910 = vadd.f32 %v1806, %v1909
      %1911 = vmatmul.f32.gmra.mxu0 %v1851
      %v1912 = vpop.f32.mrf.mxu0
      %v1913 = vadd.f32 %v1809, %v1912
      %1914 = vmatmul.f32.gmra.mxu0 %v1854
      %v1915 = vpop.f32.mrf.mxu0
      %v1916 = vadd.f32 %v1812, %v1915
      %1917 = vmatmul.f32.gmra.mxu0 %v1857
      %v1918 = vpop.f32.mrf.mxu0
      %v1919 = vadd.f32 %v1815, %v1918
      %1920 = vmatmul.f32.gmra.mxu0 %v1860
      %v1921 = vpop.f32.mrf.mxu0
      %v1922 = vadd.f32 %v1818, %v1921
      %1923 = vmatmul.f32.gmra.mxu0 %v1863
      %v1924 = vpop.f32.mrf.mxu0
      %v1925 = vadd.f32 %v1821, %v1924
      %1926 = vmatmul.f32.gmra.mxu0 %v1866
      %v1927 = vpop.f32.mrf.mxu0
      %v1928 = vadd.f32 %v1824, %v1927
      %1929 = vmatmul.f32.gmra.mxu0 %v1869
      %v1930 = vpop.f32.mrf.mxu0
      %v1931 = vadd.f32 %v1827, %v1930
      %1932 = vmatmul.f32.gmra.mxu0 %v1872
      %v1933 = vpop.f32.mrf.mxu0
      %v1934 = vadd.f32 %v1830, %v1933
      %1935 = vmatmul.f32.gmra.mxu0 %v1875
      %v1936 = vpop.f32.mrf.mxu0
      %v1937 = vadd.f32 %v1833, %v1936
      %1938 = vmatmul.f32.gmra.mxu0 %v1878
      %v1939 = vpop.f32.mrf.mxu0
      %v1940 = vadd.f32 %v1836, %v1939
      %1941 = vmatmul.f32.gmra.mxu0 %v1881
      %v1942 = vpop.f32.mrf.mxu0
      %v1943 = vadd.f32 %v1839, %v1942
      %1944 = vdwg.mxu0
      %v1945 = vld [vmem:[%s327 + $0x81] sm:$0xff]
      %v1946 = vld [vmem:[%s327 + $0x89] sm:$0xff]
      %v1947 = vld [vmem:[%s327 + $0x91] sm:$0xff]
      %v1948 = vld [vmem:[%s327 + $0x99] sm:$0xff]
      %v1949 = vld [vmem:[%s327 + $0xa1] sm:$0xff]
      %v1950 = vld [vmem:[%s327 + $0xa9] sm:$0xff]
      %v1951 = vld [vmem:[%s327 + $0xb1] sm:$0xff]
      %v1952 = vld [vmem:[%s327 + $0xb9] sm:$0xff]
      %v1953 = vld [vmem:[%s327 + $0xc1] sm:$0xff]
      %v1954 = vld [vmem:[%s327 + $0xc9] sm:$0xff]
      %v1955 = vld [vmem:[%s327 + $0xd1] sm:$0xff]
      %v1956 = vld [vmem:[%s327 + $0xd9] sm:$0xff]
      %v1957 = vld [vmem:[%s327 + $0xe1] sm:$0xff]
      %v1958 = vld [vmem:[%s327 + $0xe9] sm:$0xff]
      %v1959 = vld [vmem:[%s622] sm:$0xf]
      %v1961 = vsel %vm372, %v1945, 0
      %v1964 = vsel %vm372, %v1946, 0
      %v1967 = vsel %vm372, %v1947, 0
      %v1970 = vsel %vm372, %v1948, 0
      %v1973 = vsel %vm372, %v1949, 0
      %v1976 = vsel %vm372, %v1950, 0
      %v1979 = vsel %vm372, %v1951, 0
      %v1982 = vsel %vm372, %v1952, 0
      %v1985 = vsel %vm372, %v1953, 0
      %v1988 = vsel %vm372, %v1954, 0
      %v1991 = vsel %vm372, %v1955, 0
      %v1994 = vsel %vm372, %v1956, 0
      %v1997 = vsel %vm372, %v1957, 0
      %v2000 = vsel %vm372, %v1958, 0
      %v2003 = vsel %vm421, %v1959, 0
      %2005 = vmatpush.msra.mxu0 0.0
      %2006 = vmatpush.msra.mxu0 0.0
      %2007 = vmatpush.msra.mxu0 0.0
      %2008 = vmatpush.msra.mxu0 0.0
      %2009 = vmatpush.msra.mxu0 0.0
      %2010 = vmatpush.msra.mxu0 0.0
      %2011 = vmatpush.msra.mxu0 0.0
      %2012 = vmatpush.msra.mxu0 0.0
      %2013 = vmatpush.msra.mxu0 0.0
      %2014 = vmatpush.msra.mxu0 0.0
      %2015 = vmatpush.msra.mxu0 0.0
      %2016 = vmatpush.msra.mxu0 0.0
      %2017 = vmatpush.msra.mxu0 0.0
      %2018 = vmatpush.msra.mxu0 0.0
      %2019 = vmatpush.msra.mxu0 0.0
      %2020 = vmatpush.msra.mxu0 %v2003
      %2021 = vmatmul.f32.gmra.mxu0 %v1961
      %v2022 = vpop.f32.mrf.mxu0
      %v2023 = vadd.f32 0.0, %v2022
      %2024 = vmatmul.f32.gmra.mxu0 %v1964
      %v2025 = vpop.f32.mrf.mxu0
      %v2026 = vadd.f32 0.0, %v2025
      %2027 = vmatmul.f32.gmra.mxu0 %v1967
      %v2028 = vpop.f32.mrf.mxu0
      %v2029 = vadd.f32 0.0, %v2028
      %2030 = vmatmul.f32.gmra.mxu0 %v1970
      %v2031 = vpop.f32.mrf.mxu0
      %v2032 = vadd.f32 0.0, %v2031
      %2033 = vmatmul.f32.gmra.mxu0 %v1973
      %v2034 = vpop.f32.mrf.mxu0
      %v2035 = vadd.f32 0.0, %v2034
      %2036 = vmatmul.f32.gmra.mxu0 %v1976
      %v2037 = vpop.f32.mrf.mxu0
      %v2038 = vadd.f32 0.0, %v2037
      %2039 = vmatmul.f32.gmra.mxu0 %v1979
      %v2040 = vpop.f32.mrf.mxu0
      %v2041 = vadd.f32 0.0, %v2040
      %2042 = vmatmul.f32.gmra.mxu0 %v1982
      %v2043 = vpop.f32.mrf.mxu0
      %v2044 = vadd.f32 0.0, %v2043
      %2045 = vmatmul.f32.gmra.mxu0 %v1985
      %v2046 = vpop.f32.mrf.mxu0
      %v2047 = vadd.f32 0.0, %v2046
      %2048 = vmatmul.f32.gmra.mxu0 %v1988
      %v2049 = vpop.f32.mrf.mxu0
      %v2050 = vadd.f32 0.0, %v2049
      %2051 = vmatmul.f32.gmra.mxu0 %v1991
      %v2052 = vpop.f32.mrf.mxu0
      %v2053 = vadd.f32 0.0, %v2052
      %2054 = vmatmul.f32.gmra.mxu0 %v1994
      %v2055 = vpop.f32.mrf.mxu0
      %v2056 = vadd.f32 0.0, %v2055
      %2057 = vmatmul.f32.gmra.mxu0 %v1997
      %v2058 = vpop.f32.mrf.mxu0
      %v2059 = vadd.f32 0.0, %v2058
      %2060 = vmatmul.f32.gmra.mxu0 %v2000
      %v2061 = vpop.f32.mrf.mxu0
      %v2062 = vadd.f32 0.0, %v2061
      %2063 = vdwg.mxu0
      %v2064 = vadd.f32 %v1904, %v2023
      %v2065 = vadd.f32 %v1907, %v2026
      %v2066 = vadd.f32 %v1910, %v2029
      %v2067 = vadd.f32 %v1913, %v2032
      %v2068 = vadd.f32 %v1916, %v2035
      %v2069 = vadd.f32 %v1919, %v2038
      %v2070 = vadd.f32 %v1922, %v2041
      %v2071 = vadd.f32 %v1925, %v2044
      %v2072 = vadd.f32 %v1928, %v2047
      %v2073 = vadd.f32 %v1931, %v2050
      %v2074 = vadd.f32 %v1934, %v2053
      %v2075 = vadd.f32 %v1937, %v2056
      %v2076 = vadd.f32 %v1940, %v2059
      %v2077 = vadd.f32 %v1943, %v2062
      %v2078 = vld [vmem:[%s327 + $0x2a0] sm:$0xff]
      %v2079 = vld [vmem:[%s327 + $0x2a8] sm:$0xff]
      %v2080 = vld [vmem:[%s327 + $0x2b0] sm:$0xff]
      %v2081 = vld [vmem:[%s327 + $0x2b8] sm:$0xff]
      %v2082 = vld [vmem:[%s327 + $0x2c0] sm:$0xff]
      %v2083 = vld [vmem:[%s327 + $0x2c8] sm:$0xff]
      %v2084 = vld [vmem:[%s327 + $0x2d0] sm:$0xff]
      %v2085 = vld [vmem:[%s327 + $0x2d8] sm:$0xff]
      %v2086 = vld [vmem:[%s327 + $0x2e0] sm:$0xff]
      %v2087 = vld [vmem:[%s327 + $0x2e8] sm:$0xff]
      %v2088 = vld [vmem:[%s327 + $0x2f0] sm:$0xff]
      %v2089 = vld [vmem:[%s327 + $0x2f8] sm:$0xff]
      %v2090 = vld [vmem:[%s327 + $0x300] sm:$0xff]
      %v2091 = vld [vmem:[%s327 + $0x308] sm:$0xff]
      %v2092 = vld [vmem:[%s772] sm:$0xf]
      %v2094 = vsel %vm372, %v2078, 0
      %v2097 = vsel %vm372, %v2079, 0
      %v2100 = vsel %vm372, %v2080, 0
      %v2103 = vsel %vm372, %v2081, 0
      %v2106 = vsel %vm372, %v2082, 0
      %v2109 = vsel %vm372, %v2083, 0
      %v2112 = vsel %vm372, %v2084, 0
      %v2115 = vsel %vm372, %v2085, 0
      %v2118 = vsel %vm372, %v2086, 0
      %v2121 = vsel %vm372, %v2087, 0
      %v2124 = vsel %vm372, %v2088, 0
      %v2127 = vsel %vm372, %v2089, 0
      %v2130 = vsel %vm372, %v2090, 0
      %v2133 = vsel %vm372, %v2091, 0
      %v2136 = vsel %vm421, %v2092, 0
      %2138 = vmatpush.msra.mxu0 0.0
      %2139 = vmatpush.msra.mxu0 0.0
      %2140 = vmatpush.msra.mxu0 0.0
      %2141 = vmatpush.msra.mxu0 0.0
      %2142 = vmatpush.msra.mxu0 0.0
      %2143 = vmatpush.msra.mxu0 0.0
      %2144 = vmatpush.msra.mxu0 0.0
      %2145 = vmatpush.msra.mxu0 0.0
      %2146 = vmatpush.msra.mxu0 0.0
      %2147 = vmatpush.msra.mxu0 0.0
      %2148 = vmatpush.msra.mxu0 0.0
      %2149 = vmatpush.msra.mxu0 0.0
      %2150 = vmatpush.msra.mxu0 0.0
      %2151 = vmatpush.msra.mxu0 0.0
      %2152 = vmatpush.msra.mxu0 0.0
      %2153 = vmatpush.msra.mxu0 %v2136
      %2154 = vmatmul.f32.gmra.mxu0 %v2094
      %v2155 = vpop.f32.mrf.mxu0
      %v2156 = vadd.f32 0.0, %v2155
      %2157 = vmatmul.f32.gmra.mxu0 %v2097
      %v2158 = vpop.f32.mrf.mxu0
      %v2159 = vadd.f32 0.0, %v2158
      %2160 = vmatmul.f32.gmra.mxu0 %v2100
      %v2161 = vpop.f32.mrf.mxu0
      %v2162 = vadd.f32 0.0, %v2161
      %2163 = vmatmul.f32.gmra.mxu0 %v2103
      %v2164 = vpop.f32.mrf.mxu0
      %v2165 = vadd.f32 0.0, %v2164
      %2166 = vmatmul.f32.gmra.mxu0 %v2106
      %v2167 = vpop.f32.mrf.mxu0
      %v2168 = vadd.f32 0.0, %v2167
      %2169 = vmatmul.f32.gmra.mxu0 %v2109
      %v2170 = vpop.f32.mrf.mxu0
      %v2171 = vadd.f32 0.0, %v2170
      %2172 = vmatmul.f32.gmra.mxu0 %v2112
      %v2173 = vpop.f32.mrf.mxu0
      %v2174 = vadd.f32 0.0, %v2173
      %2175 = vmatmul.f32.gmra.mxu0 %v2115
      %v2176 = vpop.f32.mrf.mxu0
      %v2177 = vadd.f32 0.0, %v2176
      %2178 = vmatmul.f32.gmra.mxu0 %v2118
      %v2179 = vpop.f32.mrf.mxu0
      %v2180 = vadd.f32 0.0, %v2179
      %2181 = vmatmul.f32.gmra.mxu0 %v2121
      %v2182 = vpop.f32.mrf.mxu0
      %v2183 = vadd.f32 0.0, %v2182
      %2184 = vmatmul.f32.gmra.mxu0 %v2124
      %v2185 = vpop.f32.mrf.mxu0
      %v2186 = vadd.f32 0.0, %v2185
      %2187 = vmatmul.f32.gmra.mxu0 %v2127
      %v2188 = vpop.f32.mrf.mxu0
      %v2189 = vadd.f32 0.0, %v2188
      %2190 = vmatmul.f32.gmra.mxu0 %v2130
      %v2191 = vpop.f32.mrf.mxu0
      %v2192 = vadd.f32 0.0, %v2191
      %2193 = vmatmul.f32.gmra.mxu0 %v2133
      %v2194 = vpop.f32.mrf.mxu0
      %v2195 = vadd.f32 0.0, %v2194
      %2196 = vdwg.mxu0
      %v2197 = vadd.f32 %v2064, %v2156
      %v2198 = vadd.f32 %v2065, %v2159
      %v2199 = vadd.f32 %v2066, %v2162
      %v2200 = vadd.f32 %v2067, %v2165
      %v2201 = vadd.f32 %v2068, %v2168
      %v2202 = vadd.f32 %v2069, %v2171
      %v2203 = vadd.f32 %v2070, %v2174
      %v2204 = vadd.f32 %v2071, %v2177
      %v2205 = vadd.f32 %v2072, %v2180
      %v2206 = vadd.f32 %v2073, %v2183
      %v2207 = vadd.f32 %v2074, %v2186
      %v2208 = vadd.f32 %v2075, %v2189
      %v2209 = vadd.f32 %v2076, %v2192
      %v2210 = vadd.f32 %v2077, %v2195
      %v2211 = vld [vmem:[%s327 + $0x3b0] sm:$0xff]
      %v2212 = vld [vmem:[%s327 + $0x3b8] sm:$0xff]
      %v2213 = vld [vmem:[%s327 + $0x3c0] sm:$0xff]
      %v2214 = vld [vmem:[%s327 + $0x3c8] sm:$0xff]
      %v2215 = vld [vmem:[%s327 + $0x3d0] sm:$0xff]
      %v2216 = vld [vmem:[%s327 + $0x3d8] sm:$0xff]
      %v2217 = vld [vmem:[%s327 + $0x3e0] sm:$0xff]
      %v2218 = vld [vmem:[%s327 + $0x3e8] sm:$0xff]
      %v2219 = vld [vmem:[%s327 + $0x3f0] sm:$0xff]
      %v2220 = vld [vmem:[%s327 + $0x3f8] sm:$0xff]
      %v2221 = vld [vmem:[%s327 + $0x400] sm:$0xff]
      %v2222 = vld [vmem:[%s327 + $0x408] sm:$0xff]
      %v2223 = vld [vmem:[%s327 + $0x410] sm:$0xff]
      %v2224 = vld [vmem:[%s327 + $0x418] sm:$0xff]
      %v2225 = vld [vmem:[%s922] sm:$0xf]
      %v2227 = vsel %vm372, %v2211, 0
      %v2230 = vsel %vm372, %v2212, 0
      %v2233 = vsel %vm372, %v2213, 0
      %v2236 = vsel %vm372, %v2214, 0
      %v2239 = vsel %vm372, %v2215, 0
      %v2242 = vsel %vm372, %v2216, 0
      %v2245 = vsel %vm372, %v2217, 0
      %v2248 = vsel %vm372, %v2218, 0
      %v2251 = vsel %vm372, %v2219, 0
      %v2254 = vsel %vm372, %v2220, 0
      %v2257 = vsel %vm372, %v2221, 0
      %v2260 = vsel %vm372, %v2222, 0
      %v2263 = vsel %vm372, %v2223, 0
      %v2266 = vsel %vm372, %v2224, 0
      %v2269 = vsel %vm421, %v2225, 0
      %2271 = vmatpush.msra.mxu0 0.0
      %2272 = vmatpush.msra.mxu0 0.0
      %2273 = vmatpush.msra.mxu0 0.0
      %2274 = vmatpush.msra.mxu0 0.0
      %2275 = vmatpush.msra.mxu0 0.0
      %2276 = vmatpush.msra.mxu0 0.0
      %2277 = vmatpush.msra.mxu0 0.0
      %2278 = vmatpush.msra.mxu0 0.0
      %2279 = vmatpush.msra.mxu0 0.0
      %2280 = vmatpush.msra.mxu0 0.0
      %2281 = vmatpush.msra.mxu0 0.0
      %2282 = vmatpush.msra.mxu0 0.0
      %2283 = vmatpush.msra.mxu0 0.0
      %2284 = vmatpush.msra.mxu0 0.0
      %2285 = vmatpush.msra.mxu0 0.0
      %2286 = vmatpush.msra.mxu0 %v2269
      %2287 = vmatmul.f32.gmra.mxu0 %v2227
      %v2288 = vpop.f32.mrf.mxu0
      %v2289 = vadd.f32 0.0, %v2288
      %2290 = vmatmul.f32.gmra.mxu0 %v2230
      %v2291 = vpop.f32.mrf.mxu0
      %v2292 = vadd.f32 0.0, %v2291
      %2293 = vmatmul.f32.gmra.mxu0 %v2233
      %v2294 = vpop.f32.mrf.mxu0
      %v2295 = vadd.f32 0.0, %v2294
      %2296 = vmatmul.f32.gmra.mxu0 %v2236
      %v2297 = vpop.f32.mrf.mxu0
      %v2298 = vadd.f32 0.0, %v2297
      %2299 = vmatmul.f32.gmra.mxu0 %v2239
      %v2300 = vpop.f32.mrf.mxu0
      %v2301 = vadd.f32 0.0, %v2300
      %2302 = vmatmul.f32.gmra.mxu0 %v2242
      %v2303 = vpop.f32.mrf.mxu0
      %v2304 = vadd.f32 0.0, %v2303
      %2305 = vmatmul.f32.gmra.mxu0 %v2245
      %v2306 = vpop.f32.mrf.mxu0
      %v2307 = vadd.f32 0.0, %v2306
      %2308 = vmatmul.f32.gmra.mxu0 %v2248
      %v2309 = vpop.f32.mrf.mxu0
      %v2310 = vadd.f32 0.0, %v2309
      %2311 = vmatmul.f32.gmra.mxu0 %v2251
      %v2312 = vpop.f32.mrf.mxu0
      %v2313 = vadd.f32 0.0, %v2312
      %2314 = vmatmul.f32.gmra.mxu0 %v2254
      %v2315 = vpop.f32.mrf.mxu0
      %v2316 = vadd.f32 0.0, %v2315
      %2317 = vmatmul.f32.gmra.mxu0 %v2257
      %v2318 = vpop.f32.mrf.mxu0
      %v2319 = vadd.f32 0.0, %v2318
      %2320 = vmatmul.f32.gmra.mxu0 %v2260
      %v2321 = vpop.f32.mrf.mxu0
      %v2322 = vadd.f32 0.0, %v2321
      %2323 = vmatmul.f32.gmra.mxu0 %v2263
      %v2324 = vpop.f32.mrf.mxu0
      %v2325 = vadd.f32 0.0, %v2324
      %2326 = vmatmul.f32.gmra.mxu0 %v2266
      %v2327 = vpop.f32.mrf.mxu0
      %v2328 = vadd.f32 0.0, %v2327
      %2329 = vdwg.mxu0
      %v2330 = vadd.f32 %v2197, %v2289
      %v2331 = vadd.f32 %v2198, %v2292
      %v2332 = vadd.f32 %v2199, %v2295
      %v2333 = vadd.f32 %v2200, %v2298
      %v2334 = vadd.f32 %v2201, %v2301
      %v2335 = vadd.f32 %v2202, %v2304
      %v2336 = vadd.f32 %v2203, %v2307
      %v2337 = vadd.f32 %v2204, %v2310
      %v2338 = vadd.f32 %v2205, %v2313
      %v2339 = vadd.f32 %v2206, %v2316
      %v2340 = vadd.f32 %v2207, %v2319
      %v2341 = vadd.f32 %v2208, %v2322
      %v2342 = vadd.f32 %v2209, %v2325
      %v2343 = vadd.f32 %v2210, %v2328
      %v2344 = vld [vmem:[%s327 + $0x2a1] sm:$0xff]
      %v2345 = vld [vmem:[%s327 + $0x2a9] sm:$0xff]
      %v2346 = vld [vmem:[%s327 + $0x2b1] sm:$0xff]
      %v2347 = vld [vmem:[%s327 + $0x2b9] sm:$0xff]
      %v2348 = vld [vmem:[%s327 + $0x2c1] sm:$0xff]
      %v2349 = vld [vmem:[%s327 + $0x2c9] sm:$0xff]
      %v2350 = vld [vmem:[%s327 + $0x2d1] sm:$0xff]
      %v2351 = vld [vmem:[%s327 + $0x2d9] sm:$0xff]
      %v2352 = vld [vmem:[%s327 + $0x2e1] sm:$0xff]
      %v2353 = vld [vmem:[%s327 + $0x2e9] sm:$0xff]
      %v2354 = vld [vmem:[%s327 + $0x2f1] sm:$0xff]
      %v2355 = vld [vmem:[%s327 + $0x2f9] sm:$0xff]
      %v2356 = vld [vmem:[%s327 + $0x301] sm:$0xff]
      %v2357 = vld [vmem:[%s327 + $0x309] sm:$0xff]
      %v2358 = vld [vmem:[%s1072] sm:$0xf]
      %v2360 = vsel %vm372, %v2344, 0
      %v2363 = vsel %vm372, %v2345, 0
      %v2366 = vsel %vm372, %v2346, 0
      %v2369 = vsel %vm372, %v2347, 0
      %v2372 = vsel %vm372, %v2348, 0
      %v2375 = vsel %vm372, %v2349, 0
      %v2378 = vsel %vm372, %v2350, 0
      %v2381 = vsel %vm372, %v2351, 0
      %v2384 = vsel %vm372, %v2352, 0
      %v2387 = vsel %vm372, %v2353, 0
      %v2390 = vsel %vm372, %v2354, 0
      %v2393 = vsel %vm372, %v2355, 0
      %v2396 = vsel %vm372, %v2356, 0
      %v2399 = vsel %vm372, %v2357, 0
      %v2402 = vsel %vm421, %v2358, 0
      %2404 = vmatpush.msra.mxu0 0.0
      %2405 = vmatpush.msra.mxu0 0.0
      %2406 = vmatpush.msra.mxu0 0.0
      %2407 = vmatpush.msra.mxu0 0.0
      %2408 = vmatpush.msra.mxu0 0.0
      %2409 = vmatpush.msra.mxu0 0.0
      %2410 = vmatpush.msra.mxu0 0.0
      %2411 = vmatpush.msra.mxu0 0.0
      %2412 = vmatpush.msra.mxu0 0.0
      %2413 = vmatpush.msra.mxu0 0.0
      %2414 = vmatpush.msra.mxu0 0.0
      %2415 = vmatpush.msra.mxu0 0.0
      %2416 = vmatpush.msra.mxu0 0.0
      %2417 = vmatpush.msra.mxu0 0.0
      %2418 = vmatpush.msra.mxu0 0.0
      %2419 = vmatpush.msra.mxu0 %v2402
      %2420 = vmatmul.f32.gmra.mxu0 %v2360
      %v2421 = vpop.f32.mrf.mxu0
      %v2422 = vadd.f32 0.0, %v2421
      %2423 = vmatmul.f32.gmra.mxu0 %v2363
      %v2424 = vpop.f32.mrf.mxu0
      %v2425 = vadd.f32 0.0, %v2424
      %2426 = vmatmul.f32.gmra.mxu0 %v2366
      %v2427 = vpop.f32.mrf.mxu0
      %v2428 = vadd.f32 0.0, %v2427
      %2429 = vmatmul.f32.gmra.mxu0 %v2369
      %v2430 = vpop.f32.mrf.mxu0
      %v2431 = vadd.f32 0.0, %v2430
      %2432 = vmatmul.f32.gmra.mxu0 %v2372
      %v2433 = vpop.f32.mrf.mxu0
      %v2434 = vadd.f32 0.0, %v2433
      %2435 = vmatmul.f32.gmra.mxu0 %v2375
      %v2436 = vpop.f32.mrf.mxu0
      %v2437 = vadd.f32 0.0, %v2436
      %2438 = vmatmul.f32.gmra.mxu0 %v2378
      %v2439 = vpop.f32.mrf.mxu0
      %v2440 = vadd.f32 0.0, %v2439
      %2441 = vmatmul.f32.gmra.mxu0 %v2381
      %v2442 = vpop.f32.mrf.mxu0
      %v2443 = vadd.f32 0.0, %v2442
      %2444 = vmatmul.f32.gmra.mxu0 %v2384
      %v2445 = vpop.f32.mrf.mxu0
      %v2446 = vadd.f32 0.0, %v2445
      %2447 = vmatmul.f32.gmra.mxu0 %v2387
      %v2448 = vpop.f32.mrf.mxu0
      %v2449 = vadd.f32 0.0, %v2448
      %2450 = vmatmul.f32.gmra.mxu0 %v2390
      %v2451 = vpop.f32.mrf.mxu0
      %v2452 = vadd.f32 0.0, %v2451
      %2453 = vmatmul.f32.gmra.mxu0 %v2393
      %v2454 = vpop.f32.mrf.mxu0
      %v2455 = vadd.f32 0.0, %v2454
      %2456 = vmatmul.f32.gmra.mxu0 %v2396
      %v2457 = vpop.f32.mrf.mxu0
      %v2458 = vadd.f32 0.0, %v2457
      %2459 = vmatmul.f32.gmra.mxu0 %v2399
      %v2460 = vpop.f32.mrf.mxu0
      %v2461 = vadd.f32 0.0, %v2460
      %2462 = vdwg.mxu0
      %v2463 = vadd.f32 %v2330, %v2422
      %v2464 = vadd.f32 %v2331, %v2425
      %v2465 = vadd.f32 %v2332, %v2428
      %v2466 = vadd.f32 %v2333, %v2431
      %v2467 = vadd.f32 %v2334, %v2434
      %v2468 = vadd.f32 %v2335, %v2437
      %v2469 = vadd.f32 %v2336, %v2440
      %v2470 = vadd.f32 %v2337, %v2443
      %v2471 = vadd.f32 %v2338, %v2446
      %v2472 = vadd.f32 %v2339, %v2449
      %v2473 = vadd.f32 %v2340, %v2452
      %v2474 = vadd.f32 %v2341, %v2455
      %v2475 = vadd.f32 %v2342, %v2458
      %v2476 = vadd.f32 %v2343, %v2461
      %v2477 = vld [vmem:[%s327 + $0x90] sm:$0xff]
      %v2478 = vld [vmem:[%s327 + $0x98] sm:$0xff]
      %v2479 = vld [vmem:[%s327 + $0xa0] sm:$0xff]
      %v2480 = vld [vmem:[%s327 + $0xa8] sm:$0xff]
      %v2481 = vld [vmem:[%s327 + $0xb0] sm:$0xff]
      %v2482 = vld [vmem:[%s327 + $0xb8] sm:$0xff]
      %v2483 = vld [vmem:[%s327 + $0xc0] sm:$0xff]
      %v2484 = vld [vmem:[%s327 + $0xc8] sm:$0xff]
      %v2485 = vld [vmem:[%s327 + $0xd0] sm:$0xff]
      %v2486 = vld [vmem:[%s327 + $0xd8] sm:$0xff]
      %v2487 = vld [vmem:[%s327 + $0xe0] sm:$0xff]
      %v2488 = vld [vmem:[%s327 + $0xe8] sm:$0xff]
      %v2489 = vld [vmem:[%s327 + $0xf0] sm:$0xff]
      %v2490 = vld [vmem:[%s327 + $0xf8] sm:$0xff]
      %v2491 = vld [vmem:[%s1222] sm:$0xf]
      %v2493 = vsel %vm372, %v2477, 0
      %v2496 = vsel %vm372, %v2478, 0
      %v2499 = vsel %vm372, %v2479, 0
      %v2502 = vsel %vm372, %v2480, 0
      %v2505 = vsel %vm372, %v2481, 0
      %v2508 = vsel %vm372, %v2482, 0
      %v2511 = vsel %vm372, %v2483, 0
      %v2514 = vsel %vm372, %v2484, 0
      %v2517 = vsel %vm372, %v2485, 0
      %v2520 = vsel %vm372, %v2486, 0
      %v2523 = vsel %vm372, %v2487, 0
      %v2526 = vsel %vm372, %v2488, 0
      %v2529 = vsel %vm372, %v2489, 0
      %v2532 = vsel %vm372, %v2490, 0
      %v2535 = vsel %vm421, %v2491, 0
      %2537 = vmatpush.msra.mxu0 0.0
      %2538 = vmatpush.msra.mxu0 0.0
      %2539 = vmatpush.msra.mxu0 0.0
      %2540 = vmatpush.msra.mxu0 0.0
      %2541 = vmatpush.msra.mxu0 0.0
      %2542 = vmatpush.msra.mxu0 0.0
      %2543 = vmatpush.msra.mxu0 0.0
      %2544 = vmatpush.msra.mxu0 0.0
      %2545 = vmatpush.msra.mxu0 0.0
      %2546 = vmatpush.msra.mxu0 0.0
      %2547 = vmatpush.msra.mxu0 0.0
      %2548 = vmatpush.msra.mxu0 0.0
      %2549 = vmatpush.msra.mxu0 0.0
      %2550 = vmatpush.msra.mxu0 0.0
      %2551 = vmatpush.msra.mxu0 0.0
      %2552 = vmatpush.msra.mxu0 %v2535
      %2553 = vmatmul.f32.gmra.mxu0 %v2493
      %v2554 = vpop.f32.mrf.mxu0
      %v2555 = vadd.f32 0.0, %v2554
      %2556 = vmatmul.f32.gmra.mxu0 %v2496
      %v2557 = vpop.f32.mrf.mxu0
      %v2558 = vadd.f32 0.0, %v2557
      %2559 = vmatmul.f32.gmra.mxu0 %v2499
      %v2560 = vpop.f32.mrf.mxu0
      %v2561 = vadd.f32 0.0, %v2560
      %2562 = vmatmul.f32.gmra.mxu0 %v2502
      %v2563 = vpop.f32.mrf.mxu0
      %v2564 = vadd.f32 0.0, %v2563
      %2565 = vmatmul.f32.gmra.mxu0 %v2505
      %v2566 = vpop.f32.mrf.mxu0
      %v2567 = vadd.f32 0.0, %v2566
      %2568 = vmatmul.f32.gmra.mxu0 %v2508
      %v2569 = vpop.f32.mrf.mxu0
      %v2570 = vadd.f32 0.0, %v2569
      %2571 = vmatmul.f32.gmra.mxu0 %v2511
      %v2572 = vpop.f32.mrf.mxu0
      %v2573 = vadd.f32 0.0, %v2572
      %2574 = vmatmul.f32.gmra.mxu0 %v2514
      %v2575 = vpop.f32.mrf.mxu0
      %v2576 = vadd.f32 0.0, %v2575
      %2577 = vmatmul.f32.gmra.mxu0 %v2517
      %v2578 = vpop.f32.mrf.mxu0
      %v2579 = vadd.f32 0.0, %v2578
      %2580 = vmatmul.f32.gmra.mxu0 %v2520
      %v2581 = vpop.f32.mrf.mxu0
      %v2582 = vadd.f32 0.0, %v2581
      %2583 = vmatmul.f32.gmra.mxu0 %v2523
      %v2584 = vpop.f32.mrf.mxu0
      %v2585 = vadd.f32 0.0, %v2584
      %2586 = vmatmul.f32.gmra.mxu0 %v2526
      %v2587 = vpop.f32.mrf.mxu0
      %v2588 = vadd.f32 0.0, %v2587
      %2589 = vmatmul.f32.gmra.mxu0 %v2529
      %v2590 = vpop.f32.mrf.mxu0
      %v2591 = vadd.f32 0.0, %v2590
      %2592 = vmatmul.f32.gmra.mxu0 %v2532
      %v2593 = vpop.f32.mrf.mxu0
      %v2594 = vadd.f32 0.0, %v2593
      %2595 = vdwg.mxu0
      %v2596 = vadd.f32 %v2463, %v2555
      %v2597 = vadd.f32 %v2464, %v2558
      %v2598 = vadd.f32 %v2465, %v2561
      %v2599 = vadd.f32 %v2466, %v2564
      %v2600 = vadd.f32 %v2467, %v2567
      %v2601 = vadd.f32 %v2468, %v2570
      %v2602 = vadd.f32 %v2469, %v2573
      %v2603 = vadd.f32 %v2470, %v2576
      %v2604 = vadd.f32 %v2471, %v2579
      %v2605 = vadd.f32 %v2472, %v2582
      %v2606 = vadd.f32 %v2473, %v2585
      %v2607 = vadd.f32 %v2474, %v2588
      %v2608 = vadd.f32 %v2475, %v2591
      %v2609 = vadd.f32 %v2476, %v2594
      %v2610 = vld [vmem:[%s327 + $0x1a0] sm:$0xff]
      %v2611 = vld [vmem:[%s327 + $0x1a8] sm:$0xff]
      %v2612 = vld [vmem:[%s327 + $0x1b0] sm:$0xff]
      %v2613 = vld [vmem:[%s327 + $0x1b8] sm:$0xff]
      %v2614 = vld [vmem:[%s327 + $0x1c0] sm:$0xff]
      %v2615 = vld [vmem:[%s327 + $0x1c8] sm:$0xff]
      %v2616 = vld [vmem:[%s327 + $0x1d0] sm:$0xff]
      %v2617 = vld [vmem:[%s327 + $0x1d8] sm:$0xff]
      %v2618 = vld [vmem:[%s327 + $0x1e0] sm:$0xff]
      %v2619 = vld [vmem:[%s327 + $0x1e8] sm:$0xff]
      %v2620 = vld [vmem:[%s327 + $0x1f0] sm:$0xff]
      %v2621 = vld [vmem:[%s327 + $0x1f8] sm:$0xff]
      %v2622 = vld [vmem:[%s327 + $0x200] sm:$0xff]
      %v2623 = vld [vmem:[%s327 + $0x208] sm:$0xff]
      %v2624 = vld [vmem:[%s1372] sm:$0xf]
      %v2626 = vsel %vm372, %v2610, 0
      %v2629 = vsel %vm372, %v2611, 0
      %v2632 = vsel %vm372, %v2612, 0
      %v2635 = vsel %vm372, %v2613, 0
      %v2638 = vsel %vm372, %v2614, 0
      %v2641 = vsel %vm372, %v2615, 0
      %v2644 = vsel %vm372, %v2616, 0
      %v2647 = vsel %vm372, %v2617, 0
      %v2650 = vsel %vm372, %v2618, 0
      %v2653 = vsel %vm372, %v2619, 0
      %v2656 = vsel %vm372, %v2620, 0
      %v2659 = vsel %vm372, %v2621, 0
      %v2662 = vsel %vm372, %v2622, 0
      %v2665 = vsel %vm372, %v2623, 0
      %v2668 = vsel %vm421, %v2624, 0
      %2670 = vmatpush.msra.mxu0 0.0
      %2671 = vmatpush.msra.mxu0 0.0
      %2672 = vmatpush.msra.mxu0 0.0
      %2673 = vmatpush.msra.mxu0 0.0
      %2674 = vmatpush.msra.mxu0 0.0
      %2675 = vmatpush.msra.mxu0 0.0
      %2676 = vmatpush.msra.mxu0 0.0
      %2677 = vmatpush.msra.mxu0 0.0
      %2678 = vmatpush.msra.mxu0 0.0
      %2679 = vmatpush.msra.mxu0 0.0
      %2680 = vmatpush.msra.mxu0 0.0
      %2681 = vmatpush.msra.mxu0 0.0
      %2682 = vmatpush.msra.mxu0 0.0
      %2683 = vmatpush.msra.mxu0 0.0
      %2684 = vmatpush.msra.mxu0 0.0
      %2685 = vmatpush.msra.mxu0 %v2668
      %2686 = vmatmul.f32.gmra.mxu0 %v2626
      %v2687 = vpop.f32.mrf.mxu0
      %v2688 = vadd.f32 0.0, %v2687
      %2689 = vmatmul.f32.gmra.mxu0 %v2629
      %v2690 = vpop.f32.mrf.mxu0
      %v2691 = vadd.f32 0.0, %v2690
      %2692 = vmatmul.f32.gmra.mxu0 %v2632
      %v2693 = vpop.f32.mrf.mxu0
      %v2694 = vadd.f32 0.0, %v2693
      %2695 = vmatmul.f32.gmra.mxu0 %v2635
      %v2696 = vpop.f32.mrf.mxu0
      %v2697 = vadd.f32 0.0, %v2696
      %2698 = vmatmul.f32.gmra.mxu0 %v2638
      %v2699 = vpop.f32.mrf.mxu0
      %v2700 = vadd.f32 0.0, %v2699
      %2701 = vmatmul.f32.gmra.mxu0 %v2641
      %v2702 = vpop.f32.mrf.mxu0
      %v2703 = vadd.f32 0.0, %v2702
      %2704 = vmatmul.f32.gmra.mxu0 %v2644
      %v2705 = vpop.f32.mrf.mxu0
      %v2706 = vadd.f32 0.0, %v2705
      %2707 = vmatmul.f32.gmra.mxu0 %v2647
      %v2708 = vpop.f32.mrf.mxu0
      %v2709 = vadd.f32 0.0, %v2708
      %2710 = vmatmul.f32.gmra.mxu0 %v2650
      %v2711 = vpop.f32.mrf.mxu0
      %v2712 = vadd.f32 0.0, %v2711
      %2713 = vmatmul.f32.gmra.mxu0 %v2653
      %v2714 = vpop.f32.mrf.mxu0
      %v2715 = vadd.f32 0.0, %v2714
      %2716 = vmatmul.f32.gmra.mxu0 %v2656
      %v2717 = vpop.f32.mrf.mxu0
      %v2718 = vadd.f32 0.0, %v2717
      %2719 = vmatmul.f32.gmra.mxu0 %v2659
      %v2720 = vpop.f32.mrf.mxu0
      %v2721 = vadd.f32 0.0, %v2720
      %2722 = vmatmul.f32.gmra.mxu0 %v2662
      %v2723 = vpop.f32.mrf.mxu0
      %v2724 = vadd.f32 0.0, %v2723
      %2725 = vmatmul.f32.gmra.mxu0 %v2665
      %v2726 = vpop.f32.mrf.mxu0
      %v2727 = vadd.f32 0.0, %v2726
      %2728 = vdwg.mxu0
      %v2729 = vadd.f32 %v2596, %v2688
      %v2730 = vadd.f32 %v2597, %v2691
      %v2731 = vadd.f32 %v2598, %v2694
      %v2732 = vadd.f32 %v2599, %v2697
      %v2733 = vadd.f32 %v2600, %v2700
      %v2734 = vadd.f32 %v2601, %v2703
      %v2735 = vadd.f32 %v2602, %v2706
      %v2736 = vadd.f32 %v2603, %v2709
      %v2737 = vadd.f32 %v2604, %v2712
      %v2738 = vadd.f32 %v2605, %v2715
      %v2739 = vadd.f32 %v2606, %v2718
      %v2740 = vadd.f32 %v2607, %v2721
      %v2741 = vadd.f32 %v2608, %v2724
      %v2742 = vadd.f32 %v2609, %v2727
      %v2743 = vld [vmem:[%s327 + $0x91] sm:$0xff]
      %v2744 = vld [vmem:[%s327 + $0x99] sm:$0xff]
      %v2745 = vld [vmem:[%s327 + $0xa1] sm:$0xff]
      %v2746 = vld [vmem:[%s327 + $0xa9] sm:$0xff]
      %v2747 = vld [vmem:[%s327 + $0xb1] sm:$0xff]
      %v2748 = vld [vmem:[%s327 + $0xb9] sm:$0xff]
      %v2749 = vld [vmem:[%s327 + $0xc1] sm:$0xff]
      %v2750 = vld [vmem:[%s327 + $0xc9] sm:$0xff]
      %v2751 = vld [vmem:[%s327 + $0xd1] sm:$0xff]
      %v2752 = vld [vmem:[%s327 + $0xd9] sm:$0xff]
      %v2753 = vld [vmem:[%s327 + $0xe1] sm:$0xff]
      %v2754 = vld [vmem:[%s327 + $0xe9] sm:$0xff]
      %v2755 = vld [vmem:[%s327 + $0xf1] sm:$0xff]
      %v2756 = vld [vmem:[%s327 + $0xf9] sm:$0xff]
      %v2757 = vld [vmem:[%s1522] sm:$0xf]
      %v2759 = vsel %vm372, %v2743, 0
      %v2762 = vsel %vm372, %v2744, 0
      %v2765 = vsel %vm372, %v2745, 0
      %v2768 = vsel %vm372, %v2746, 0
      %v2771 = vsel %vm372, %v2747, 0
      %v2774 = vsel %vm372, %v2748, 0
      %v2777 = vsel %vm372, %v2749, 0
      %v2780 = vsel %vm372, %v2750, 0
      %v2783 = vsel %vm372, %v2751, 0
      %v2786 = vsel %vm372, %v2752, 0
      %v2789 = vsel %vm372, %v2753, 0
      %v2792 = vsel %vm372, %v2754, 0
      %v2795 = vsel %vm372, %v2755, 0
      %v2798 = vsel %vm372, %v2756, 0
      %v2801 = vsel %vm421, %v2757, 0
      %2803 = vmatpush.msra.mxu0 0.0
      %2804 = vmatpush.msra.mxu0 0.0
      %2805 = vmatpush.msra.mxu0 0.0
      %2806 = vmatpush.msra.mxu0 0.0
      %2807 = vmatpush.msra.mxu0 0.0
      %2808 = vmatpush.msra.mxu0 0.0
      %2809 = vmatpush.msra.mxu0 0.0
      %2810 = vmatpush.msra.mxu0 0.0
      %2811 = vmatpush.msra.mxu0 0.0
      %2812 = vmatpush.msra.mxu0 0.0
      %2813 = vmatpush.msra.mxu0 0.0
      %2814 = vmatpush.msra.mxu0 0.0
      %2815 = vmatpush.msra.mxu0 0.0
      %2816 = vmatpush.msra.mxu0 0.0
      %2817 = vmatpush.msra.mxu0 0.0
      %2818 = vmatpush.msra.mxu0 %v2801
      %2819 = vmatmul.f32.gmra.mxu0 %v2759
      %v2820 = vpop.f32.mrf.mxu0
      %v2821 = vadd.f32 0.0, %v2820
      %2822 = vmatmul.f32.gmra.mxu0 %v2762
      %v2823 = vpop.f32.mrf.mxu0
      %v2824 = vadd.f32 0.0, %v2823
      %2825 = vmatmul.f32.gmra.mxu0 %v2765
      %v2826 = vpop.f32.mrf.mxu0
      %v2827 = vadd.f32 0.0, %v2826
      %2828 = vmatmul.f32.gmra.mxu0 %v2768
      %v2829 = vpop.f32.mrf.mxu0
      %v2830 = vadd.f32 0.0, %v2829
      %2831 = vmatmul.f32.gmra.mxu0 %v2771
      %v2832 = vpop.f32.mrf.mxu0
      %v2833 = vadd.f32 0.0, %v2832
      %2834 = vmatmul.f32.gmra.mxu0 %v2774
      %v2835 = vpop.f32.mrf.mxu0
      %v2836 = vadd.f32 0.0, %v2835
      %2837 = vmatmul.f32.gmra.mxu0 %v2777
      %v2838 = vpop.f32.mrf.mxu0
      %v2839 = vadd.f32 0.0, %v2838
      %2840 = vmatmul.f32.gmra.mxu0 %v2780
      %v2841 = vpop.f32.mrf.mxu0
      %v2842 = vadd.f32 0.0, %v2841
      %2843 = vmatmul.f32.gmra.mxu0 %v2783
      %v2844 = vpop.f32.mrf.mxu0
      %v2845 = vadd.f32 0.0, %v2844
      %2846 = vmatmul.f32.gmra.mxu0 %v2786
      %v2847 = vpop.f32.mrf.mxu0
      %v2848 = vadd.f32 0.0, %v2847
      %2849 = vmatmul.f32.gmra.mxu0 %v2789
      %v2850 = vpop.f32.mrf.mxu0
      %v2851 = vadd.f32 0.0, %v2850
      %2852 = vmatmul.f32.gmra.mxu0 %v2792
      %v2853 = vpop.f32.mrf.mxu0
      %v2854 = vadd.f32 0.0, %v2853
      %2855 = vmatmul.f32.gmra.mxu0 %v2795
      %v2856 = vpop.f32.mrf.mxu0
      %v2857 = vadd.f32 0.0, %v2856
      %2858 = vmatmul.f32.gmra.mxu0 %v2798
      %v2859 = vpop.f32.mrf.mxu0
      %v2860 = vadd.f32 0.0, %v2859
      %2861 = vdwg.mxu0
      %v2862 = vadd.f32 %v2729, %v2821
      %v2863 = vadd.f32 %v2730, %v2824
      %v2864 = vadd.f32 %v2731, %v2827
      %v2865 = vadd.f32 %v2732, %v2830
      %v2866 = vadd.f32 %v2733, %v2833
      %v2867 = vadd.f32 %v2734, %v2836
      %v2868 = vadd.f32 %v2735, %v2839
      %v2869 = vadd.f32 %v2736, %v2842
      %v2870 = vadd.f32 %v2737, %v2845
      %v2871 = vadd.f32 %v2738, %v2848
      %v2872 = vadd.f32 %v2739, %v2851
      %v2873 = vadd.f32 %v2740, %v2854
      %v2874 = vadd.f32 %v2741, %v2857
      %v2875 = vadd.f32 %v2742, %v2860
      %v2876 = vadd.f32 %v2862, %v1657
      %v2877 = vadd.f32 %v2863, %v1657
      %v2878 = vadd.f32 %v2864, %v1657
      %v2879 = vadd.f32 %v2865, %v1657
      %v2880 = vadd.f32 %v2866, %v1657
      %v2881 = vadd.f32 %v2867, %v1657
      %v2882 = vadd.f32 %v2868, %v1657
      %v2883 = vadd.f32 %v2869, %v1657
      %v2884 = vadd.f32 %v2870, %v1657
      %v2885 = vadd.f32 %v2871, %v1657
      %v2886 = vadd.f32 %v2872, %v1657
      %v2887 = vadd.f32 %v2873, %v1657
      %v2888 = vadd.f32 %v2874, %v1657
      %v2889 = vadd.f32 %v2875, %v1657
      %v2890 = vmax.f32 %v2876, 0.0
      %v2891 = vmax.f32 %v2877, 0.0
      %v2892 = vmax.f32 %v2878, 0.0
      %v2893 = vmax.f32 %v2879, 0.0
      %v2894 = vmax.f32 %v2880, 0.0
      %v2895 = vmax.f32 %v2881, 0.0
      %v2896 = vmax.f32 %v2882, 0.0
      %v2897 = vmax.f32 %v2883, 0.0
      %v2898 = vmax.f32 %v2884, 0.0
      %v2899 = vmax.f32 %v2885, 0.0
      %v2900 = vmax.f32 %v2886, 0.0
      %v2901 = vmax.f32 %v2887, 0.0
      %v2902 = vmax.f32 %v2888, 0.0
      %v2903 = vmax.f32 %v2889, 0.0
      %2904 = vst.msk [vmem:[#allocation2 + $0x80] sm:$0xff] %vm333, %v2890
      %2905 = vst.msk [vmem:[#allocation2 + $0x88] sm:$0xff] %vm333, %v2891
      %2906 = vst.msk [vmem:[#allocation2 + $0x90] sm:$0xff] %vm333, %v2892
      %2907 = vst.msk [vmem:[#allocation2 + $0x98] sm:$0xff] %vm333, %v2893
      %2908 = vst.msk [vmem:[#allocation2 + $0xa0] sm:$0xff] %vm333, %v2894
      %2909 = vst.msk [vmem:[#allocation2 + $0xa8] sm:$0xff] %vm333, %v2895
      %2910 = vst.msk [vmem:[#allocation2 + $0xb0] sm:$0xff] %vm333, %v2896
      %2911 = vst.msk [vmem:[#allocation2 + $0xb8] sm:$0xff] %vm333, %v2897
      %2912 = vst.msk [vmem:[#allocation2 + $0xc0] sm:$0xff] %vm333, %v2898
      %2913 = vst.msk [vmem:[#allocation2 + $0xc8] sm:$0xff] %vm333, %v2899
      %2914 = vst.msk [vmem:[#allocation2 + $0xd0] sm:$0xff] %vm333, %v2900
      %2915 = vst.msk [vmem:[#allocation2 + $0xd8] sm:$0xff] %vm333, %v2901
      %2916 = vst.msk [vmem:[#allocation2 + $0xe0] sm:$0xff] %vm333, %v2902
      %2917 = vst.msk [vmem:[#allocation2 + $0xe8] sm:$0xff] %vm333, %v2903
      %v2918 = vld [vmem:[%s4] sm:$0x1]
      %v2919 = vld [vmem:[#allocation2] sm:$0xff]
      %v2920 = vld [vmem:[#allocation2 + $0x8] sm:$0xff]
      %v2921 = vld [vmem:[#allocation2 + $0x10] sm:$0xff]
      %v2922 = vld [vmem:[#allocation2 + $0x18] sm:$0xff]
      %v2923 = vld [vmem:[#allocation2 + $0x20] sm:$0xff]
      %v2924 = vld [vmem:[#allocation2 + $0x28] sm:$0xff]
      %v2925 = vld [vmem:[#allocation2 + $0x30] sm:$0xff]
      %v2926 = vld [vmem:[#allocation2 + $0x38] sm:$0xff]
      %v2927 = vld [vmem:[#allocation2 + $0x40] sm:$0xff]
      %v2928 = vld [vmem:[#allocation2 + $0x48] sm:$0xff]
      %v2929 = vld [vmem:[#allocation2 + $0x50] sm:$0xff]
      %v2930 = vld [vmem:[#allocation2 + $0x58] sm:$0xff]
      %v2931 = vld [vmem:[#allocation2 + $0x60] sm:$0xff]
      %v2932 = vld [vmem:[#allocation2 + $0x68] sm:$0xff]
      %v2933 = vld [vmem:[#allocation2 + $0x70] sm:$0xff]
      %v2934 = vld [vmem:[#allocation2 + $0x78] sm:$0xff]
      %v2935 = vld [vmem:[%s3] sm:$0xff]
      %v2936 = vld [vmem:[%s3 + $0x8] sm:$0xff]
      %v2937 = vld [vmem:[%s3 + $0x10] sm:$0xff]
      %v2938 = vld [vmem:[%s3 + $0x18] sm:$0xff]
      %v2939 = vld [vmem:[#allocation2 + $0x1] sm:$0xff]
      %v2940 = vld [vmem:[#allocation2 + $0x9] sm:$0xff]
      %v2941 = vld [vmem:[#allocation2 + $0x11] sm:$0xff]
      %v2942 = vld [vmem:[#allocation2 + $0x19] sm:$0xff]
      %v2943 = vld [vmem:[#allocation2 + $0x21] sm:$0xff]
      %v2944 = vld [vmem:[#allocation2 + $0x29] sm:$0xff]
      %v2945 = vld [vmem:[#allocation2 + $0x31] sm:$0xff]
      %v2946 = vld [vmem:[#allocation2 + $0x39] sm:$0xff]
      %v2947 = vld [vmem:[#allocation2 + $0x41] sm:$0xff]
      %v2948 = vld [vmem:[#allocation2 + $0x49] sm:$0xff]
      %v2949 = vld [vmem:[#allocation2 + $0x51] sm:$0xff]
      %v2950 = vld [vmem:[#allocation2 + $0x59] sm:$0xff]
      %v2951 = vld [vmem:[#allocation2 + $0x61] sm:$0xff]
      %v2952 = vld [vmem:[#allocation2 + $0x69] sm:$0xff]
      %v2953 = vld [vmem:[#allocation2 + $0x71] sm:$0xff]
      %v2954 = vld [vmem:[#allocation2 + $0x79] sm:$0xff]
      %s2955 = scalar_lea.vmem %s3, 32
      %v2956 = vld [vmem:[%s2955] sm:$0xff]
      %v2957 = vld [vmem:[%s2955 + $0x8] sm:$0xff]
      %v2958 = vld [vmem:[%s2955 + $0x10] sm:$0xff]
      %v2959 = vld [vmem:[%s2955 + $0x18] sm:$0xff]
      %v2961 = vsel %vm333, %v2939, 0
      %v2964 = vsel %vm333, %v2940, 0
      %v2967 = vsel %vm333, %v2941, 0
      %v2970 = vsel %vm333, %v2942, 0
      %v2973 = vsel %vm333, %v2943, 0
      %v2976 = vsel %vm333, %v2944, 0
      %v2979 = vsel %vm333, %v2945, 0
      %v2982 = vsel %vm333, %v2946, 0
      %v2985 = vsel %vm333, %v2947, 0
      %v2988 = vsel %vm333, %v2948, 0
      %v2991 = vsel %vm333, %v2949, 0
      %v2994 = vsel %vm333, %v2950, 0
      %v2997 = vsel %vm333, %v2951, 0
      %v3000 = vsel %vm333, %v2952, 0
      %v3003 = vsel %vm333, %v2953, 0
      %v3006 = vsel %vm333, %v2954, 0
      %3008 = vmatpush.msra.mxu0 0.0
      %3009 = vmatpush.msra.mxu0 0.0
      %3010 = vmatpush.msra.mxu0 0.0
      %3011 = vmatpush.msra.mxu0 0.0
      %3012 = vmatpush.msra.mxu0 0.0
      %3013 = vmatpush.msra.mxu0 0.0
      %3014 = vmatpush.msra.mxu0 0.0
      %3015 = vmatpush.msra.mxu0 0.0
      %3016 = vmatpush.msra.mxu0 0.0
      %3017 = vmatpush.msra.mxu0 0.0
      %3018 = vmatpush.msra.mxu0 0.0
      %3019 = vmatpush.msra.mxu0 0.0
      %3020 = vmatpush.msra.mxu0 %v2959
      %3021 = vmatpush.msra.mxu0 %v2958
      %3022 = vmatpush.msra.mxu0 %v2957
      %3023 = vmatpush.msra.mxu0 %v2956
      %3024 = vmatmul.f32.gmra.mxu0 %v2961
      %v3025 = vpop.f32.mrf.mxu0
      %v3026 = vadd.f32 0.0, %v3025
      %3027 = vmatmul.f32.gmra.mxu0 %v2964
      %v3028 = vpop.f32.mrf.mxu0
      %v3029 = vadd.f32 0.0, %v3028
      %3030 = vmatmul.f32.gmra.mxu0 %v2967
      %v3031 = vpop.f32.mrf.mxu0
      %v3032 = vadd.f32 0.0, %v3031
      %3033 = vmatmul.f32.gmra.mxu0 %v2970
      %v3034 = vpop.f32.mrf.mxu0
      %v3035 = vadd.f32 0.0, %v3034
      %3036 = vmatmul.f32.gmra.mxu0 %v2973
      %v3037 = vpop.f32.mrf.mxu0
      %v3038 = vadd.f32 0.0, %v3037
      %3039 = vmatmul.f32.gmra.mxu0 %v2976
      %v3040 = vpop.f32.mrf.mxu0
      %v3041 = vadd.f32 0.0, %v3040
      %3042 = vmatmul.f32.gmra.mxu0 %v2979
      %v3043 = vpop.f32.mrf.mxu0
      %v3044 = vadd.f32 0.0, %v3043
      %3045 = vmatmul.f32.gmra.mxu0 %v2982
      %v3046 = vpop.f32.mrf.mxu0
      %v3047 = vadd.f32 0.0, %v3046
      %3048 = vmatmul.f32.gmra.mxu0 %v2985
      %v3049 = vpop.f32.mrf.mxu0
      %v3050 = vadd.f32 0.0, %v3049
      %3051 = vmatmul.f32.gmra.mxu0 %v2988
      %v3052 = vpop.f32.mrf.mxu0
      %v3053 = vadd.f32 0.0, %v3052
      %3054 = vmatmul.f32.gmra.mxu0 %v2991
      %v3055 = vpop.f32.mrf.mxu0
      %v3056 = vadd.f32 0.0, %v3055
      %3057 = vmatmul.f32.gmra.mxu0 %v2994
      %v3058 = vpop.f32.mrf.mxu0
      %v3059 = vadd.f32 0.0, %v3058
      %3060 = vmatmul.f32.gmra.mxu0 %v2997
      %v3061 = vpop.f32.mrf.mxu0
      %v3062 = vadd.f32 0.0, %v3061
      %3063 = vmatmul.f32.gmra.mxu0 %v3000
      %v3064 = vpop.f32.mrf.mxu0
      %v3065 = vadd.f32 0.0, %v3064
      %3066 = vmatmul.f32.gmra.mxu0 %v3003
      %v3067 = vpop.f32.mrf.mxu0
      %v3068 = vadd.f32 0.0, %v3067
      %3069 = vmatmul.f32.gmra.mxu0 %v3006
      %v3070 = vpop.f32.mrf.mxu0
      %v3071 = vadd.f32 0.0, %v3070
      %3072 = vdwg.mxu0
      %v3074 = vsel %vm333, %v2919, 0
      %v3077 = vsel %vm333, %v2920, 0
      %v3080 = vsel %vm333, %v2921, 0
      %v3083 = vsel %vm333, %v2922, 0
      %v3086 = vsel %vm333, %v2923, 0
      %v3089 = vsel %vm333, %v2924, 0
      %v3092 = vsel %vm333, %v2925, 0
      %v3095 = vsel %vm333, %v2926, 0
      %v3098 = vsel %vm333, %v2927, 0
      %v3101 = vsel %vm333, %v2928, 0
      %v3104 = vsel %vm333, %v2929, 0
      %v3107 = vsel %vm333, %v2930, 0
      %v3110 = vsel %vm333, %v2931, 0
      %v3113 = vsel %vm333, %v2932, 0
      %v3116 = vsel %vm333, %v2933, 0
      %v3119 = vsel %vm333, %v2934, 0
      %3121 = vmatpush.msra.mxu0 0.0
      %3122 = vmatpush.msra.mxu0 0.0
      %3123 = vmatpush.msra.mxu0 0.0
      %3124 = vmatpush.msra.mxu0 0.0
      %3125 = vmatpush.msra.mxu0 0.0
      %3126 = vmatpush.msra.mxu0 0.0
      %3127 = vmatpush.msra.mxu0 0.0
      %3128 = vmatpush.msra.mxu0 0.0
      %3129 = vmatpush.msra.mxu0 0.0
      %3130 = vmatpush.msra.mxu0 0.0
      %3131 = vmatpush.msra.mxu0 0.0
      %3132 = vmatpush.msra.mxu0 0.0
      %3133 = vmatpush.msra.mxu0 %v2938
      %3134 = vmatpush.msra.mxu0 %v2937
      %3135 = vmatpush.msra.mxu0 %v2936
      %3136 = vmatpush.msra.mxu0 %v2935
      %3137 = vmatmul.f32.gmra.mxu0 %v3074
      %v3138 = vpop.f32.mrf.mxu0
      %v3139 = vadd.f32 %v3026, %v3138
      %3140 = vmatmul.f32.gmra.mxu0 %v3077
      %v3141 = vpop.f32.mrf.mxu0
      %v3142 = vadd.f32 %v3029, %v3141
      %3143 = vmatmul.f32.gmra.mxu0 %v3080
      %v3144 = vpop.f32.mrf.mxu0
      %v3145 = vadd.f32 %v3032, %v3144
      %3146 = vmatmul.f32.gmra.mxu0 %v3083
      %v3147 = vpop.f32.mrf.mxu0
      %v3148 = vadd.f32 %v3035, %v3147
      %3149 = vmatmul.f32.gmra.mxu0 %v3086
      %v3150 = vpop.f32.mrf.mxu0
      %v3151 = vadd.f32 %v3038, %v3150
      %3152 = vmatmul.f32.gmra.mxu0 %v3089
      %v3153 = vpop.f32.mrf.mxu0
      %v3154 = vadd.f32 %v3041, %v3153
      %3155 = vmatmul.f32.gmra.mxu0 %v3092
      %v3156 = vpop.f32.mrf.mxu0
      %v3157 = vadd.f32 %v3044, %v3156
      %3158 = vmatmul.f32.gmra.mxu0 %v3095
      %v3159 = vpop.f32.mrf.mxu0
      %v3160 = vadd.f32 %v3047, %v3159
      %3161 = vmatmul.f32.gmra.mxu0 %v3098
      %v3162 = vpop.f32.mrf.mxu0
      %v3163 = vadd.f32 %v3050, %v3162
      %3164 = vmatmul.f32.gmra.mxu0 %v3101
      %v3165 = vpop.f32.mrf.mxu0
      %v3166 = vadd.f32 %v3053, %v3165
      %3167 = vmatmul.f32.gmra.mxu0 %v3104
      %v3168 = vpop.f32.mrf.mxu0
      %v3169 = vadd.f32 %v3056, %v3168
      %3170 = vmatmul.f32.gmra.mxu0 %v3107
      %v3171 = vpop.f32.mrf.mxu0
      %v3172 = vadd.f32 %v3059, %v3171
      %3173 = vmatmul.f32.gmra.mxu0 %v3110
      %v3174 = vpop.f32.mrf.mxu0
      %v3175 = vadd.f32 %v3062, %v3174
      %3176 = vmatmul.f32.gmra.mxu0 %v3113
      %v3177 = vpop.f32.mrf.mxu0
      %v3178 = vadd.f32 %v3065, %v3177
      %3179 = vmatmul.f32.gmra.mxu0 %v3116
      %v3180 = vpop.f32.mrf.mxu0
      %v3181 = vadd.f32 %v3068, %v3180
      %3182 = vmatmul.f32.gmra.mxu0 %v3119
      %v3183 = vpop.f32.mrf.mxu0
      %v3184 = vadd.f32 %v3071, %v3183
      %3185 = vdwg.mxu0
      %v3186 = vld [vmem:[#allocation2 + $0x2] sm:$0xff]
      %v3187 = vld [vmem:[#allocation2 + $0xa] sm:$0xff]
      %v3188 = vld [vmem:[#allocation2 + $0x12] sm:$0xff]
      %v3189 = vld [vmem:[#allocation2 + $0x1a] sm:$0xff]
      %v3190 = vld [vmem:[#allocation2 + $0x22] sm:$0xff]
      %v3191 = vld [vmem:[#allocation2 + $0x2a] sm:$0xff]
      %v3192 = vld [vmem:[#allocation2 + $0x32] sm:$0xff]
      %v3193 = vld [vmem:[#allocation2 + $0x3a] sm:$0xff]
      %v3194 = vld [vmem:[#allocation2 + $0x42] sm:$0xff]
      %v3195 = vld [vmem:[#allocation2 + $0x4a] sm:$0xff]
      %v3196 = vld [vmem:[#allocation2 + $0x52] sm:$0xff]
      %v3197 = vld [vmem:[#allocation2 + $0x5a] sm:$0xff]
      %v3198 = vld [vmem:[#allocation2 + $0x62] sm:$0xff]
      %v3199 = vld [vmem:[#allocation2 + $0x6a] sm:$0xff]
      %v3200 = vld [vmem:[#allocation2 + $0x72] sm:$0xff]
      %v3201 = vld [vmem:[#allocation2 + $0x7a] sm:$0xff]
      %s3202 = scalar_lea.vmem %s3, 64
      %v3203 = vld [vmem:[%s3202] sm:$0xff]
      %v3204 = vld [vmem:[%s3202 + $0x8] sm:$0xff]
      %v3205 = vld [vmem:[%s3202 + $0x10] sm:$0xff]
      %v3206 = vld [vmem:[%s3202 + $0x18] sm:$0xff]
      %v3208 = vsel %vm333, %v3186, 0
      %v3211 = vsel %vm333, %v3187, 0
      %v3214 = vsel %vm333, %v3188, 0
      %v3217 = vsel %vm333, %v3189, 0
      %v3220 = vsel %vm333, %v3190, 0
      %v3223 = vsel %vm333, %v3191, 0
      %v3226 = vsel %vm333, %v3192, 0
      %v3229 = vsel %vm333, %v3193, 0
      %v3232 = vsel %vm333, %v3194, 0
      %v3235 = vsel %vm333, %v3195, 0
      %v3238 = vsel %vm333, %v3196, 0
      %v3241 = vsel %vm333, %v3197, 0
      %v3244 = vsel %vm333, %v3198, 0
      %v3247 = vsel %vm333, %v3199, 0
      %v3250 = vsel %vm333, %v3200, 0
      %v3253 = vsel %vm333, %v3201, 0
      %3255 = vmatpush.msra.mxu0 0.0
      %3256 = vmatpush.msra.mxu0 0.0
      %3257 = vmatpush.msra.mxu0 0.0
      %3258 = vmatpush.msra.mxu0 0.0
      %3259 = vmatpush.msra.mxu0 0.0
      %3260 = vmatpush.msra.mxu0 0.0
      %3261 = vmatpush.msra.mxu0 0.0
      %3262 = vmatpush.msra.mxu0 0.0
      %3263 = vmatpush.msra.mxu0 0.0
      %3264 = vmatpush.msra.mxu0 0.0
      %3265 = vmatpush.msra.mxu0 0.0
      %3266 = vmatpush.msra.mxu0 0.0
      %3267 = vmatpush.msra.mxu0 %v3206
      %3268 = vmatpush.msra.mxu0 %v3205
      %3269 = vmatpush.msra.mxu0 %v3204
      %3270 = vmatpush.msra.mxu0 %v3203
      %3271 = vmatmul.f32.gmra.mxu0 %v3208
      %v3272 = vpop.f32.mrf.mxu0
      %v3273 = vadd.f32 0.0, %v3272
      %3274 = vmatmul.f32.gmra.mxu0 %v3211
      %v3275 = vpop.f32.mrf.mxu0
      %v3276 = vadd.f32 0.0, %v3275
      %3277 = vmatmul.f32.gmra.mxu0 %v3214
      %v3278 = vpop.f32.mrf.mxu0
      %v3279 = vadd.f32 0.0, %v3278
      %3280 = vmatmul.f32.gmra.mxu0 %v3217
      %v3281 = vpop.f32.mrf.mxu0
      %v3282 = vadd.f32 0.0, %v3281
      %3283 = vmatmul.f32.gmra.mxu0 %v3220
      %v3284 = vpop.f32.mrf.mxu0
      %v3285 = vadd.f32 0.0, %v3284
      %3286 = vmatmul.f32.gmra.mxu0 %v3223
      %v3287 = vpop.f32.mrf.mxu0
      %v3288 = vadd.f32 0.0, %v3287
      %3289 = vmatmul.f32.gmra.mxu0 %v3226
      %v3290 = vpop.f32.mrf.mxu0
      %v3291 = vadd.f32 0.0, %v3290
      %3292 = vmatmul.f32.gmra.mxu0 %v3229
      %v3293 = vpop.f32.mrf.mxu0
      %v3294 = vadd.f32 0.0, %v3293
      %3295 = vmatmul.f32.gmra.mxu0 %v3232
      %v3296 = vpop.f32.mrf.mxu0
      %v3297 = vadd.f32 0.0, %v3296
      %3298 = vmatmul.f32.gmra.mxu0 %v3235
      %v3299 = vpop.f32.mrf.mxu0
      %v3300 = vadd.f32 0.0, %v3299
      %3301 = vmatmul.f32.gmra.mxu0 %v3238
      %v3302 = vpop.f32.mrf.mxu0
      %v3303 = vadd.f32 0.0, %v3302
      %3304 = vmatmul.f32.gmra.mxu0 %v3241
      %v3305 = vpop.f32.mrf.mxu0
      %v3306 = vadd.f32 0.0, %v3305
      %3307 = vmatmul.f32.gmra.mxu0 %v3244
      %v3308 = vpop.f32.mrf.mxu0
      %v3309 = vadd.f32 0.0, %v3308
      %3310 = vmatmul.f32.gmra.mxu0 %v3247
      %v3311 = vpop.f32.mrf.mxu0
      %v3312 = vadd.f32 0.0, %v3311
      %3313 = vmatmul.f32.gmra.mxu0 %v3250
      %v3314 = vpop.f32.mrf.mxu0
      %v3315 = vadd.f32 0.0, %v3314
      %3316 = vmatmul.f32.gmra.mxu0 %v3253
      %v3317 = vpop.f32.mrf.mxu0
      %v3318 = vadd.f32 0.0, %v3317
      %3319 = vdwg.mxu0
      %v3320 = vadd.f32 %v3139, %v3273
      %v3321 = vadd.f32 %v3142, %v3276
      %v3322 = vadd.f32 %v3145, %v3279
      %v3323 = vadd.f32 %v3148, %v3282
      %v3324 = vadd.f32 %v3151, %v3285
      %v3325 = vadd.f32 %v3154, %v3288
      %v3326 = vadd.f32 %v3157, %v3291
      %v3327 = vadd.f32 %v3160, %v3294
      %v3328 = vadd.f32 %v3163, %v3297
      %v3329 = vadd.f32 %v3166, %v3300
      %v3330 = vadd.f32 %v3169, %v3303
      %v3331 = vadd.f32 %v3172, %v3306
      %v3332 = vadd.f32 %v3175, %v3309
      %v3333 = vadd.f32 %v3178, %v3312
      %v3334 = vadd.f32 %v3181, %v3315
      %v3335 = vadd.f32 %v3184, %v3318
      %v3336 = vld [vmem:[#allocation2 + $0x10] sm:$0xff]
      %v3337 = vld [vmem:[#allocation2 + $0x18] sm:$0xff]
      %v3338 = vld [vmem:[#allocation2 + $0x20] sm:$0xff]
      %v3339 = vld [vmem:[#allocation2 + $0x28] sm:$0xff]
      %v3340 = vld [vmem:[#allocation2 + $0x30] sm:$0xff]
      %v3341 = vld [vmem:[#allocation2 + $0x38] sm:$0xff]
      %v3342 = vld [vmem:[#allocation2 + $0x40] sm:$0xff]
      %v3343 = vld [vmem:[#allocation2 + $0x48] sm:$0xff]
      %v3344 = vld [vmem:[#allocation2 + $0x50] sm:$0xff]
      %v3345 = vld [vmem:[#allocation2 + $0x58] sm:$0xff]
      %v3346 = vld [vmem:[#allocation2 + $0x60] sm:$0xff]
      %v3347 = vld [vmem:[#allocation2 + $0x68] sm:$0xff]
      %v3348 = vld [vmem:[#allocation2 + $0x70] sm:$0xff]
      %v3349 = vld [vmem:[#allocation2 + $0x78] sm:$0xff]
      %v3350 = vld [vmem:[#allocation2 + $0x80] sm:$0xff]
      %v3351 = vld [vmem:[#allocation2 + $0x88] sm:$0xff]
      %s3352 = scalar_lea.vmem %s3, 96
      %v3353 = vld [vmem:[%s3352] sm:$0xff]
      %v3354 = vld [vmem:[%s3352 + $0x8] sm:$0xff]
      %v3355 = vld [vmem:[%s3352 + $0x10] sm:$0xff]
      %v3356 = vld [vmem:[%s3352 + $0x18] sm:$0xff]
      %v3358 = vsel %vm333, %v3336, 0
      %v3361 = vsel %vm333, %v3337, 0
      %v3364 = vsel %vm333, %v3338, 0
      %v3367 = vsel %vm333, %v3339, 0
      %v3370 = vsel %vm333, %v3340, 0
      %v3373 = vsel %vm333, %v3341, 0
      %v3376 = vsel %vm333, %v3342, 0
      %v3379 = vsel %vm333, %v3343, 0
      %v3382 = vsel %vm333, %v3344, 0
      %v3385 = vsel %vm333, %v3345, 0
      %v3388 = vsel %vm333, %v3346, 0
      %v3391 = vsel %vm333, %v3347, 0
      %v3394 = vsel %vm333, %v3348, 0
      %v3397 = vsel %vm333, %v3349, 0
      %v3400 = vsel %vm333, %v3350, 0
      %v3403 = vsel %vm333, %v3351, 0
      %3405 = vmatpush.msra.mxu0 0.0
      %3406 = vmatpush.msra.mxu0 0.0
      %3407 = vmatpush.msra.mxu0 0.0
      %3408 = vmatpush.msra.mxu0 0.0
      %3409 = vmatpush.msra.mxu0 0.0
      %3410 = vmatpush.msra.mxu0 0.0
      %3411 = vmatpush.msra.mxu0 0.0
      %3412 = vmatpush.msra.mxu0 0.0
      %3413 = vmatpush.msra.mxu0 0.0
      %3414 = vmatpush.msra.mxu0 0.0
      %3415 = vmatpush.msra.mxu0 0.0
      %3416 = vmatpush.msra.mxu0 0.0
      %3417 = vmatpush.msra.mxu0 %v3356
      %3418 = vmatpush.msra.mxu0 %v3355
      %3419 = vmatpush.msra.mxu0 %v3354
      %3420 = vmatpush.msra.mxu0 %v3353
      %3421 = vmatmul.f32.gmra.mxu0 %v3358
      %v3422 = vpop.f32.mrf.mxu0
      %v3423 = vadd.f32 0.0, %v3422
      %3424 = vmatmul.f32.gmra.mxu0 %v3361
      %v3425 = vpop.f32.mrf.mxu0
      %v3426 = vadd.f32 0.0, %v3425
      %3427 = vmatmul.f32.gmra.mxu0 %v3364
      %v3428 = vpop.f32.mrf.mxu0
      %v3429 = vadd.f32 0.0, %v3428
      %3430 = vmatmul.f32.gmra.mxu0 %v3367
      %v3431 = vpop.f32.mrf.mxu0
      %v3432 = vadd.f32 0.0, %v3431
      %3433 = vmatmul.f32.gmra.mxu0 %v3370
      %v3434 = vpop.f32.mrf.mxu0
      %v3435 = vadd.f32 0.0, %v3434
      %3436 = vmatmul.f32.gmra.mxu0 %v3373
      %v3437 = vpop.f32.mrf.mxu0
      %v3438 = vadd.f32 0.0, %v3437
      %3439 = vmatmul.f32.gmra.mxu0 %v3376
      %v3440 = vpop.f32.mrf.mxu0
      %v3441 = vadd.f32 0.0, %v3440
      %3442 = vmatmul.f32.gmra.mxu0 %v3379
      %v3443 = vpop.f32.mrf.mxu0
      %v3444 = vadd.f32 0.0, %v3443
      %3445 = vmatmul.f32.gmra.mxu0 %v3382
      %v3446 = vpop.f32.mrf.mxu0
      %v3447 = vadd.f32 0.0, %v3446
      %3448 = vmatmul.f32.gmra.mxu0 %v3385
      %v3449 = vpop.f32.mrf.mxu0
      %v3450 = vadd.f32 0.0, %v3449
      %3451 = vmatmul.f32.gmra.mxu0 %v3388
      %v3452 = vpop.f32.mrf.mxu0
      %v3453 = vadd.f32 0.0, %v3452
      %3454 = vmatmul.f32.gmra.mxu0 %v3391
      %v3455 = vpop.f32.mrf.mxu0
      %v3456 = vadd.f32 0.0, %v3455
      %3457 = vmatmul.f32.gmra.mxu0 %v3394
      %v3458 = vpop.f32.mrf.mxu0
      %v3459 = vadd.f32 0.0, %v3458
      %3460 = vmatmul.f32.gmra.mxu0 %v3397
      %v3461 = vpop.f32.mrf.mxu0
      %v3462 = vadd.f32 0.0, %v3461
      %3463 = vmatmul.f32.gmra.mxu0 %v3400
      %v3464 = vpop.f32.mrf.mxu0
      %v3465 = vadd.f32 0.0, %v3464
      %3466 = vmatmul.f32.gmra.mxu0 %v3403
      %v3467 = vpop.f32.mrf.mxu0
      %v3468 = vadd.f32 0.0, %v3467
      %3469 = vdwg.mxu0
      %v3470 = vadd.f32 %v3320, %v3423
      %v3471 = vadd.f32 %v3321, %v3426
      %v3472 = vadd.f32 %v3322, %v3429
      %v3473 = vadd.f32 %v3323, %v3432
      %v3474 = vadd.f32 %v3324, %v3435
      %v3475 = vadd.f32 %v3325, %v3438
      %v3476 = vadd.f32 %v3326, %v3441
      %v3477 = vadd.f32 %v3327, %v3444
      %v3478 = vadd.f32 %v3328, %v3447
      %v3479 = vadd.f32 %v3329, %v3450
      %v3480 = vadd.f32 %v3330, %v3453
      %v3481 = vadd.f32 %v3331, %v3456
      %v3482 = vadd.f32 %v3332, %v3459
      %v3483 = vadd.f32 %v3333, %v3462
      %v3484 = vadd.f32 %v3334, %v3465
      %v3485 = vadd.f32 %v3335, %v3468
      %v3486 = vld [vmem:[#allocation2 + $0x11] sm:$0xff]
      %v3487 = vld [vmem:[#allocation2 + $0x19] sm:$0xff]
      %v3488 = vld [vmem:[#allocation2 + $0x21] sm:$0xff]
      %v3489 = vld [vmem:[#allocation2 + $0x29] sm:$0xff]
      %v3490 = vld [vmem:[#allocation2 + $0x31] sm:$0xff]
      %v3491 = vld [vmem:[#allocation2 + $0x39] sm:$0xff]
      %v3492 = vld [vmem:[#allocation2 + $0x41] sm:$0xff]
      %v3493 = vld [vmem:[#allocation2 + $0x49] sm:$0xff]
      %v3494 = vld [vmem:[#allocation2 + $0x51] sm:$0xff]
      %v3495 = vld [vmem:[#allocation2 + $0x59] sm:$0xff]
      %v3496 = vld [vmem:[#allocation2 + $0x61] sm:$0xff]
      %v3497 = vld [vmem:[#allocation2 + $0x69] sm:$0xff]
      %v3498 = vld [vmem:[#allocation2 + $0x71] sm:$0xff]
      %v3499 = vld [vmem:[#allocation2 + $0x79] sm:$0xff]
      %v3500 = vld [vmem:[#allocation2 + $0x81] sm:$0xff]
      %v3501 = vld [vmem:[#allocation2 + $0x89] sm:$0xff]
      %s3502 = scalar_lea.vmem %s3, 128
      %v3503 = vld [vmem:[%s3502] sm:$0xff]
      %v3504 = vld [vmem:[%s3502 + $0x8] sm:$0xff]
      %v3505 = vld [vmem:[%s3502 + $0x10] sm:$0xff]
      %v3506 = vld [vmem:[%s3502 + $0x18] sm:$0xff]
      %v3508 = vsel %vm333, %v3486, 0
      %v3511 = vsel %vm333, %v3487, 0
      %v3514 = vsel %vm333, %v3488, 0
      %v3517 = vsel %vm333, %v3489, 0
      %v3520 = vsel %vm333, %v3490, 0
      %v3523 = vsel %vm333, %v3491, 0
      %v3526 = vsel %vm333, %v3492, 0
      %v3529 = vsel %vm333, %v3493, 0
      %v3532 = vsel %vm333, %v3494, 0
      %v3535 = vsel %vm333, %v3495, 0
      %v3538 = vsel %vm333, %v3496, 0
      %v3541 = vsel %vm333, %v3497, 0
      %v3544 = vsel %vm333, %v3498, 0
      %v3547 = vsel %vm333, %v3499, 0
      %v3550 = vsel %vm333, %v3500, 0
      %v3553 = vsel %vm333, %v3501, 0
      %3555 = vmatpush.msra.mxu0 0.0
      %3556 = vmatpush.msra.mxu0 0.0
      %3557 = vmatpush.msra.mxu0 0.0
      %3558 = vmatpush.msra.mxu0 0.0
      %3559 = vmatpush.msra.mxu0 0.0
      %3560 = vmatpush.msra.mxu0 0.0
      %3561 = vmatpush.msra.mxu0 0.0
      %3562 = vmatpush.msra.mxu0 0.0
      %3563 = vmatpush.msra.mxu0 0.0
      %3564 = vmatpush.msra.mxu0 0.0
      %3565 = vmatpush.msra.mxu0 0.0
      %3566 = vmatpush.msra.mxu0 0.0
      %3567 = vmatpush.msra.mxu0 %v3506
      %3568 = vmatpush.msra.mxu0 %v3505
      %3569 = vmatpush.msra.mxu0 %v3504
      %3570 = vmatpush.msra.mxu0 %v3503
      %3571 = vmatmul.f32.gmra.mxu0 %v3508
      %v3572 = vpop.f32.mrf.mxu0
      %v3573 = vadd.f32 0.0, %v3572
      %3574 = vmatmul.f32.gmra.mxu0 %v3511
      %v3575 = vpop.f32.mrf.mxu0
      %v3576 = vadd.f32 0.0, %v3575
      %3577 = vmatmul.f32.gmra.mxu0 %v3514
      %v3578 = vpop.f32.mrf.mxu0
      %v3579 = vadd.f32 0.0, %v3578
      %3580 = vmatmul.f32.gmra.mxu0 %v3517
      %v3581 = vpop.f32.mrf.mxu0
      %v3582 = vadd.f32 0.0, %v3581
      %3583 = vmatmul.f32.gmra.mxu0 %v3520
      %v3584 = vpop.f32.mrf.mxu0
      %v3585 = vadd.f32 0.0, %v3584
      %3586 = vmatmul.f32.gmra.mxu0 %v3523
      %v3587 = vpop.f32.mrf.mxu0
      %v3588 = vadd.f32 0.0, %v3587
      %3589 = vmatmul.f32.gmra.mxu0 %v3526
      %v3590 = vpop.f32.mrf.mxu0
      %v3591 = vadd.f32 0.0, %v3590
      %3592 = vmatmul.f32.gmra.mxu0 %v3529
      %v3593 = vpop.f32.mrf.mxu0
      %v3594 = vadd.f32 0.0, %v3593
      %3595 = vmatmul.f32.gmra.mxu0 %v3532
      %v3596 = vpop.f32.mrf.mxu0
      %v3597 = vadd.f32 0.0, %v3596
      %3598 = vmatmul.f32.gmra.mxu0 %v3535
      %v3599 = vpop.f32.mrf.mxu0
      %v3600 = vadd.f32 0.0, %v3599
      %3601 = vmatmul.f32.gmra.mxu0 %v3538
      %v3602 = vpop.f32.mrf.mxu0
      %v3603 = vadd.f32 0.0, %v3602
      %3604 = vmatmul.f32.gmra.mxu0 %v3541
      %v3605 = vpop.f32.mrf.mxu0
      %v3606 = vadd.f32 0.0, %v3605
      %3607 = vmatmul.f32.gmra.mxu0 %v3544
      %v3608 = vpop.f32.mrf.mxu0
      %v3609 = vadd.f32 0.0, %v3608
      %3610 = vmatmul.f32.gmra.mxu0 %v3547
      %v3611 = vpop.f32.mrf.mxu0
      %v3612 = vadd.f32 0.0, %v3611
      %3613 = vmatmul.f32.gmra.mxu0 %v3550
      %v3614 = vpop.f32.mrf.mxu0
      %v3615 = vadd.f32 0.0, %v3614
      %3616 = vmatmul.f32.gmra.mxu0 %v3553
      %v3617 = vpop.f32.mrf.mxu0
      %v3618 = vadd.f32 0.0, %v3617
      %3619 = vdwg.mxu0
      %v3620 = vadd.f32 %v3470, %v3573
      %v3621 = vadd.f32 %v3471, %v3576
      %v3622 = vadd.f32 %v3472, %v3579
      %v3623 = vadd.f32 %v3473, %v3582
      %v3624 = vadd.f32 %v3474, %v3585
      %v3625 = vadd.f32 %v3475, %v3588
      %v3626 = vadd.f32 %v3476, %v3591
      %v3627 = vadd.f32 %v3477, %v3594
      %v3628 = vadd.f32 %v3478, %v3597
      %v3629 = vadd.f32 %v3479, %v3600
      %v3630 = vadd.f32 %v3480, %v3603
      %v3631 = vadd.f32 %v3481, %v3606
      %v3632 = vadd.f32 %v3482, %v3609
      %v3633 = vadd.f32 %v3483, %v3612
      %v3634 = vadd.f32 %v3484, %v3615
      %v3635 = vadd.f32 %v3485, %v3618
      %v3636 = vld [vmem:[#allocation2 + $0x12] sm:$0xff]
      %v3637 = vld [vmem:[#allocation2 + $0x1a] sm:$0xff]
      %v3638 = vld [vmem:[#allocation2 + $0x22] sm:$0xff]
      %v3639 = vld [vmem:[#allocation2 + $0x2a] sm:$0xff]
      %v3640 = vld [vmem:[#allocation2 + $0x32] sm:$0xff]
      %v3641 = vld [vmem:[#allocation2 + $0x3a] sm:$0xff]
      %v3642 = vld [vmem:[#allocation2 + $0x42] sm:$0xff]
      %v3643 = vld [vmem:[#allocation2 + $0x4a] sm:$0xff]
      %v3644 = vld [vmem:[#allocation2 + $0x52] sm:$0xff]
      %v3645 = vld [vmem:[#allocation2 + $0x5a] sm:$0xff]
      %v3646 = vld [vmem:[#allocation2 + $0x62] sm:$0xff]
      %v3647 = vld [vmem:[#allocation2 + $0x6a] sm:$0xff]
      %v3648 = vld [vmem:[#allocation2 + $0x72] sm:$0xff]
      %v3649 = vld [vmem:[#allocation2 + $0x7a] sm:$0xff]
      %v3650 = vld [vmem:[#allocation2 + $0x82] sm:$0xff]
      %v3651 = vld [vmem:[#allocation2 + $0x8a] sm:$0xff]
      %s3652 = scalar_lea.vmem %s3, 160
      %v3653 = vld [vmem:[%s3652] sm:$0xff]
      %v3654 = vld [vmem:[%s3652 + $0x8] sm:$0xff]
      %v3655 = vld [vmem:[%s3652 + $0x10] sm:$0xff]
      %v3656 = vld [vmem:[%s3652 + $0x18] sm:$0xff]
      %v3658 = vsel %vm333, %v3636, 0
      %v3661 = vsel %vm333, %v3637, 0
      %v3664 = vsel %vm333, %v3638, 0
      %v3667 = vsel %vm333, %v3639, 0
      %v3670 = vsel %vm333, %v3640, 0
      %v3673 = vsel %vm333, %v3641, 0
      %v3676 = vsel %vm333, %v3642, 0
      %v3679 = vsel %vm333, %v3643, 0
      %v3682 = vsel %vm333, %v3644, 0
      %v3685 = vsel %vm333, %v3645, 0
      %v3688 = vsel %vm333, %v3646, 0
      %v3691 = vsel %vm333, %v3647, 0
      %v3694 = vsel %vm333, %v3648, 0
      %v3697 = vsel %vm333, %v3649, 0
      %v3700 = vsel %vm333, %v3650, 0
      %v3703 = vsel %vm333, %v3651, 0
      %3705 = vmatpush.msra.mxu0 0.0
      %3706 = vmatpush.msra.mxu0 0.0
      %3707 = vmatpush.msra.mxu0 0.0
      %3708 = vmatpush.msra.mxu0 0.0
      %3709 = vmatpush.msra.mxu0 0.0
      %3710 = vmatpush.msra.mxu0 0.0
      %3711 = vmatpush.msra.mxu0 0.0
      %3712 = vmatpush.msra.mxu0 0.0
      %3713 = vmatpush.msra.mxu0 0.0
      %3714 = vmatpush.msra.mxu0 0.0
      %3715 = vmatpush.msra.mxu0 0.0
      %3716 = vmatpush.msra.mxu0 0.0
      %3717 = vmatpush.msra.mxu0 %v3656
      %3718 = vmatpush.msra.mxu0 %v3655
      %3719 = vmatpush.msra.mxu0 %v3654
      %3720 = vmatpush.msra.mxu0 %v3653
      %3721 = vmatmul.f32.gmra.mxu0 %v3658
      %v3722 = vpop.f32.mrf.mxu0
      %v3723 = vadd.f32 0.0, %v3722
      %3724 = vmatmul.f32.gmra.mxu0 %v3661
      %v3725 = vpop.f32.mrf.mxu0
      %v3726 = vadd.f32 0.0, %v3725
      %3727 = vmatmul.f32.gmra.mxu0 %v3664
      %v3728 = vpop.f32.mrf.mxu0
      %v3729 = vadd.f32 0.0, %v3728
      %3730 = vmatmul.f32.gmra.mxu0 %v3667
      %v3731 = vpop.f32.mrf.mxu0
      %v3732 = vadd.f32 0.0, %v3731
      %3733 = vmatmul.f32.gmra.mxu0 %v3670
      %v3734 = vpop.f32.mrf.mxu0
      %v3735 = vadd.f32 0.0, %v3734
      %3736 = vmatmul.f32.gmra.mxu0 %v3673
      %v3737 = vpop.f32.mrf.mxu0
      %v3738 = vadd.f32 0.0, %v3737
      %3739 = vmatmul.f32.gmra.mxu0 %v3676
      %v3740 = vpop.f32.mrf.mxu0
      %v3741 = vadd.f32 0.0, %v3740
      %3742 = vmatmul.f32.gmra.mxu0 %v3679
      %v3743 = vpop.f32.mrf.mxu0
      %v3744 = vadd.f32 0.0, %v3743
      %3745 = vmatmul.f32.gmra.mxu0 %v3682
      %v3746 = vpop.f32.mrf.mxu0
      %v3747 = vadd.f32 0.0, %v3746
      %3748 = vmatmul.f32.gmra.mxu0 %v3685
      %v3749 = vpop.f32.mrf.mxu0
      %v3750 = vadd.f32 0.0, %v3749
      %3751 = vmatmul.f32.gmra.mxu0 %v3688
      %v3752 = vpop.f32.mrf.mxu0
      %v3753 = vadd.f32 0.0, %v3752
      %3754 = vmatmul.f32.gmra.mxu0 %v3691
      %v3755 = vpop.f32.mrf.mxu0
      %v3756 = vadd.f32 0.0, %v3755
      %3757 = vmatmul.f32.gmra.mxu0 %v3694
      %v3758 = vpop.f32.mrf.mxu0
      %v3759 = vadd.f32 0.0, %v3758
      %3760 = vmatmul.f32.gmra.mxu0 %v3697
      %v3761 = vpop.f32.mrf.mxu0
      %v3762 = vadd.f32 0.0, %v3761
      %3763 = vmatmul.f32.gmra.mxu0 %v3700
      %v3764 = vpop.f32.mrf.mxu0
      %v3765 = vadd.f32 0.0, %v3764
      %3766 = vmatmul.f32.gmra.mxu0 %v3703
      %v3767 = vpop.f32.mrf.mxu0
      %v3768 = vadd.f32 0.0, %v3767
      %3769 = vdwg.mxu0
      %v3770 = vadd.f32 %v3620, %v3723
      %v3771 = vadd.f32 %v3621, %v3726
      %v3772 = vadd.f32 %v3622, %v3729
      %v3773 = vadd.f32 %v3623, %v3732
      %v3774 = vadd.f32 %v3624, %v3735
      %v3775 = vadd.f32 %v3625, %v3738
      %v3776 = vadd.f32 %v3626, %v3741
      %v3777 = vadd.f32 %v3627, %v3744
      %v3778 = vadd.f32 %v3628, %v3747
      %v3779 = vadd.f32 %v3629, %v3750
      %v3780 = vadd.f32 %v3630, %v3753
      %v3781 = vadd.f32 %v3631, %v3756
      %v3782 = vadd.f32 %v3632, %v3759
      %v3783 = vadd.f32 %v3633, %v3762
      %v3784 = vadd.f32 %v3634, %v3765
      %v3785 = vadd.f32 %v3635, %v3768
      %v3786 = vld [vmem:[#allocation2 + $0x20] sm:$0xff]
      %v3787 = vld [vmem:[#allocation2 + $0x28] sm:$0xff]
      %v3788 = vld [vmem:[#allocation2 + $0x30] sm:$0xff]
      %v3789 = vld [vmem:[#allocation2 + $0x38] sm:$0xff]
      %v3790 = vld [vmem:[#allocation2 + $0x40] sm:$0xff]
      %v3791 = vld [vmem:[#allocation2 + $0x48] sm:$0xff]
      %v3792 = vld [vmem:[#allocation2 + $0x50] sm:$0xff]
      %v3793 = vld [vmem:[#allocation2 + $0x58] sm:$0xff]
      %v3794 = vld [vmem:[#allocation2 + $0x60] sm:$0xff]
      %v3795 = vld [vmem:[#allocation2 + $0x68] sm:$0xff]
      %v3796 = vld [vmem:[#allocation2 + $0x70] sm:$0xff]
      %v3797 = vld [vmem:[#allocation2 + $0x78] sm:$0xff]
      %v3798 = vld [vmem:[#allocation2 + $0x80] sm:$0xff]
      %v3799 = vld [vmem:[#allocation2 + $0x88] sm:$0xff]
      %v3800 = vld [vmem:[#allocation2 + $0x90] sm:$0xff]
      %v3801 = vld [vmem:[#allocation2 + $0x98] sm:$0xff]
      %s3802 = scalar_lea.vmem %s3, 192
      %v3803 = vld [vmem:[%s3802] sm:$0xff]
      %v3804 = vld [vmem:[%s3802 + $0x8] sm:$0xff]
      %v3805 = vld [vmem:[%s3802 + $0x10] sm:$0xff]
      %v3806 = vld [vmem:[%s3802 + $0x18] sm:$0xff]
      %v3808 = vsel %vm333, %v3786, 0
      %v3811 = vsel %vm333, %v3787, 0
      %v3814 = vsel %vm333, %v3788, 0
      %v3817 = vsel %vm333, %v3789, 0
      %v3820 = vsel %vm333, %v3790, 0
      %v3823 = vsel %vm333, %v3791, 0
      %v3826 = vsel %vm333, %v3792, 0
      %v3829 = vsel %vm333, %v3793, 0
      %v3832 = vsel %vm333, %v3794, 0
      %v3835 = vsel %vm333, %v3795, 0
      %v3838 = vsel %vm333, %v3796, 0
      %v3841 = vsel %vm333, %v3797, 0
      %v3844 = vsel %vm333, %v3798, 0
      %v3847 = vsel %vm333, %v3799, 0
      %v3850 = vsel %vm333, %v3800, 0
      %v3853 = vsel %vm333, %v3801, 0
      %3855 = vmatpush.msra.mxu0 0.0
      %3856 = vmatpush.msra.mxu0 0.0
      %3857 = vmatpush.msra.mxu0 0.0
      %3858 = vmatpush.msra.mxu0 0.0
      %3859 = vmatpush.msra.mxu0 0.0
      %3860 = vmatpush.msra.mxu0 0.0
      %3861 = vmatpush.msra.mxu0 0.0
      %3862 = vmatpush.msra.mxu0 0.0
      %3863 = vmatpush.msra.mxu0 0.0
      %3864 = vmatpush.msra.mxu0 0.0
      %3865 = vmatpush.msra.mxu0 0.0
      %3866 = vmatpush.msra.mxu0 0.0
      %3867 = vmatpush.msra.mxu0 %v3806
      %3868 = vmatpush.msra.mxu0 %v3805
      %3869 = vmatpush.msra.mxu0 %v3804
      %3870 = vmatpush.msra.mxu0 %v3803
      %3871 = vmatmul.f32.gmra.mxu0 %v3808
      %v3872 = vpop.f32.mrf.mxu0
      %v3873 = vadd.f32 0.0, %v3872
      %3874 = vmatmul.f32.gmra.mxu0 %v3811
      %v3875 = vpop.f32.mrf.mxu0
      %v3876 = vadd.f32 0.0, %v3875
      %3877 = vmatmul.f32.gmra.mxu0 %v3814
      %v3878 = vpop.f32.mrf.mxu0
      %v3879 = vadd.f32 0.0, %v3878
      %3880 = vmatmul.f32.gmra.mxu0 %v3817
      %v3881 = vpop.f32.mrf.mxu0
      %v3882 = vadd.f32 0.0, %v3881
      %3883 = vmatmul.f32.gmra.mxu0 %v3820
      %v3884 = vpop.f32.mrf.mxu0
      %v3885 = vadd.f32 0.0, %v3884
      %3886 = vmatmul.f32.gmra.mxu0 %v3823
      %v3887 = vpop.f32.mrf.mxu0
      %v3888 = vadd.f32 0.0, %v3887
      %3889 = vmatmul.f32.gmra.mxu0 %v3826
      %v3890 = vpop.f32.mrf.mxu0
      %v3891 = vadd.f32 0.0, %v3890
      %3892 = vmatmul.f32.gmra.mxu0 %v3829
      %v3893 = vpop.f32.mrf.mxu0
      %v3894 = vadd.f32 0.0, %v3893
      %3895 = vmatmul.f32.gmra.mxu0 %v3832
      %v3896 = vpop.f32.mrf.mxu0
      %v3897 = vadd.f32 0.0, %v3896
      %3898 = vmatmul.f32.gmra.mxu0 %v3835
      %v3899 = vpop.f32.mrf.mxu0
      %v3900 = vadd.f32 0.0, %v3899
      %3901 = vmatmul.f32.gmra.mxu0 %v3838
      %v3902 = vpop.f32.mrf.mxu0
      %v3903 = vadd.f32 0.0, %v3902
      %3904 = vmatmul.f32.gmra.mxu0 %v3841
      %v3905 = vpop.f32.mrf.mxu0
      %v3906 = vadd.f32 0.0, %v3905
      %3907 = vmatmul.f32.gmra.mxu0 %v3844
      %v3908 = vpop.f32.mrf.mxu0
      %v3909 = vadd.f32 0.0, %v3908
      %3910 = vmatmul.f32.gmra.mxu0 %v3847
      %v3911 = vpop.f32.mrf.mxu0
      %v3912 = vadd.f32 0.0, %v3911
      %3913 = vmatmul.f32.gmra.mxu0 %v3850
      %v3914 = vpop.f32.mrf.mxu0
      %v3915 = vadd.f32 0.0, %v3914
      %3916 = vmatmul.f32.gmra.mxu0 %v3853
      %v3917 = vpop.f32.mrf.mxu0
      %v3918 = vadd.f32 0.0, %v3917
      %3919 = vdwg.mxu0
      %v3920 = vadd.f32 %v3770, %v3873
      %v3921 = vadd.f32 %v3771, %v3876
      %v3922 = vadd.f32 %v3772, %v3879
      %v3923 = vadd.f32 %v3773, %v3882
      %v3924 = vadd.f32 %v3774, %v3885
      %v3925 = vadd.f32 %v3775, %v3888
      %v3926 = vadd.f32 %v3776, %v3891
      %v3927 = vadd.f32 %v3777, %v3894
      %v3928 = vadd.f32 %v3778, %v3897
      %v3929 = vadd.f32 %v3779, %v3900
      %v3930 = vadd.f32 %v3780, %v3903
      %v3931 = vadd.f32 %v3781, %v3906
      %v3932 = vadd.f32 %v3782, %v3909
      %v3933 = vadd.f32 %v3783, %v3912
      %v3934 = vadd.f32 %v3784, %v3915
      %v3935 = vadd.f32 %v3785, %v3918
      %v3936 = vld [vmem:[#allocation2 + $0x21] sm:$0xff]
      %v3937 = vld [vmem:[#allocation2 + $0x29] sm:$0xff]
      %v3938 = vld [vmem:[#allocation2 + $0x31] sm:$0xff]
      %v3939 = vld [vmem:[#allocation2 + $0x39] sm:$0xff]
      %v3940 = vld [vmem:[#allocation2 + $0x41] sm:$0xff]
      %v3941 = vld [vmem:[#allocation2 + $0x49] sm:$0xff]
      %v3942 = vld [vmem:[#allocation2 + $0x51] sm:$0xff]
      %v3943 = vld [vmem:[#allocation2 + $0x59] sm:$0xff]
      %v3944 = vld [vmem:[#allocation2 + $0x61] sm:$0xff]
      %v3945 = vld [vmem:[#allocation2 + $0x69] sm:$0xff]
      %v3946 = vld [vmem:[#allocation2 + $0x71] sm:$0xff]
      %v3947 = vld [vmem:[#allocation2 + $0x79] sm:$0xff]
      %v3948 = vld [vmem:[#allocation2 + $0x81] sm:$0xff]
      %v3949 = vld [vmem:[#allocation2 + $0x89] sm:$0xff]
      %v3950 = vld [vmem:[#allocation2 + $0x91] sm:$0xff]
      %v3951 = vld [vmem:[#allocation2 + $0x99] sm:$0xff]
      %s3952 = scalar_lea.vmem %s3, 224
      %v3953 = vld [vmem:[%s3952] sm:$0xff]
      %v3954 = vld [vmem:[%s3952 + $0x8] sm:$0xff]
      %v3955 = vld [vmem:[%s3952 + $0x10] sm:$0xff]
      %v3956 = vld [vmem:[%s3952 + $0x18] sm:$0xff]
      %v3958 = vsel %vm333, %v3936, 0
      %v3961 = vsel %vm333, %v3937, 0
      %v3964 = vsel %vm333, %v3938, 0
      %v3967 = vsel %vm333, %v3939, 0
      %v3970 = vsel %vm333, %v3940, 0
      %v3973 = vsel %vm333, %v3941, 0
      %v3976 = vsel %vm333, %v3942, 0
      %v3979 = vsel %vm333, %v3943, 0
      %v3982 = vsel %vm333, %v3944, 0
      %v3985 = vsel %vm333, %v3945, 0
      %v3988 = vsel %vm333, %v3946, 0
      %v3991 = vsel %vm333, %v3947, 0
      %v3994 = vsel %vm333, %v3948, 0
      %v3997 = vsel %vm333, %v3949, 0
      %v4000 = vsel %vm333, %v3950, 0
      %v4003 = vsel %vm333, %v3951, 0
      %4005 = vmatpush.msra.mxu0 0.0
      %4006 = vmatpush.msra.mxu0 0.0
      %4007 = vmatpush.msra.mxu0 0.0
      %4008 = vmatpush.msra.mxu0 0.0
      %4009 = vmatpush.msra.mxu0 0.0
      %4010 = vmatpush.msra.mxu0 0.0
      %4011 = vmatpush.msra.mxu0 0.0
      %4012 = vmatpush.msra.mxu0 0.0
      %4013 = vmatpush.msra.mxu0 0.0
      %4014 = vmatpush.msra.mxu0 0.0
      %4015 = vmatpush.msra.mxu0 0.0
      %4016 = vmatpush.msra.mxu0 0.0
      %4017 = vmatpush.msra.mxu0 %v3956
      %4018 = vmatpush.msra.mxu0 %v3955
      %4019 = vmatpush.msra.mxu0 %v3954
      %4020 = vmatpush.msra.mxu0 %v3953
      %4021 = vmatmul.f32.gmra.mxu0 %v3958
      %v4022 = vpop.f32.mrf.mxu0
      %v4023 = vadd.f32 0.0, %v4022
      %4024 = vmatmul.f32.gmra.mxu0 %v3961
      %v4025 = vpop.f32.mrf.mxu0
      %v4026 = vadd.f32 0.0, %v4025
      %4027 = vmatmul.f32.gmra.mxu0 %v3964
      %v4028 = vpop.f32.mrf.mxu0
      %v4029 = vadd.f32 0.0, %v4028
      %4030 = vmatmul.f32.gmra.mxu0 %v3967
      %v4031 = vpop.f32.mrf.mxu0
      %v4032 = vadd.f32 0.0, %v4031
      %4033 = vmatmul.f32.gmra.mxu0 %v3970
      %v4034 = vpop.f32.mrf.mxu0
      %v4035 = vadd.f32 0.0, %v4034
      %4036 = vmatmul.f32.gmra.mxu0 %v3973
      %v4037 = vpop.f32.mrf.mxu0
      %v4038 = vadd.f32 0.0, %v4037
      %4039 = vmatmul.f32.gmra.mxu0 %v3976
      %v4040 = vpop.f32.mrf.mxu0
      %v4041 = vadd.f32 0.0, %v4040
      %4042 = vmatmul.f32.gmra.mxu0 %v3979
      %v4043 = vpop.f32.mrf.mxu0
      %v4044 = vadd.f32 0.0, %v4043
      %4045 = vmatmul.f32.gmra.mxu0 %v3982
      %v4046 = vpop.f32.mrf.mxu0
      %v4047 = vadd.f32 0.0, %v4046
      %4048 = vmatmul.f32.gmra.mxu0 %v3985
      %v4049 = vpop.f32.mrf.mxu0
      %v4050 = vadd.f32 0.0, %v4049
      %4051 = vmatmul.f32.gmra.mxu0 %v3988
      %v4052 = vpop.f32.mrf.mxu0
      %v4053 = vadd.f32 0.0, %v4052
      %4054 = vmatmul.f32.gmra.mxu0 %v3991
      %v4055 = vpop.f32.mrf.mxu0
      %v4056 = vadd.f32 0.0, %v4055
      %4057 = vmatmul.f32.gmra.mxu0 %v3994
      %v4058 = vpop.f32.mrf.mxu0
      %v4059 = vadd.f32 0.0, %v4058
      %4060 = vmatmul.f32.gmra.mxu0 %v3997
      %v4061 = vpop.f32.mrf.mxu0
      %v4062 = vadd.f32 0.0, %v4061
      %4063 = vmatmul.f32.gmra.mxu0 %v4000
      %v4064 = vpop.f32.mrf.mxu0
      %v4065 = vadd.f32 0.0, %v4064
      %4066 = vmatmul.f32.gmra.mxu0 %v4003
      %v4067 = vpop.f32.mrf.mxu0
      %v4068 = vadd.f32 0.0, %v4067
      %4069 = vdwg.mxu0
      %v4070 = vadd.f32 %v3920, %v4023
      %v4071 = vadd.f32 %v3921, %v4026
      %v4072 = vadd.f32 %v3922, %v4029
      %v4073 = vadd.f32 %v3923, %v4032
      %v4074 = vadd.f32 %v3924, %v4035
      %v4075 = vadd.f32 %v3925, %v4038
      %v4076 = vadd.f32 %v3926, %v4041
      %v4077 = vadd.f32 %v3927, %v4044
      %v4078 = vadd.f32 %v3928, %v4047
      %v4079 = vadd.f32 %v3929, %v4050
      %v4080 = vadd.f32 %v3930, %v4053
      %v4081 = vadd.f32 %v3931, %v4056
      %v4082 = vadd.f32 %v3932, %v4059
      %v4083 = vadd.f32 %v3933, %v4062
      %v4084 = vadd.f32 %v3934, %v4065
      %v4085 = vadd.f32 %v3935, %v4068
      %v4086 = vld [vmem:[#allocation2 + $0x22] sm:$0xff]
      %v4087 = vld [vmem:[#allocation2 + $0x2a] sm:$0xff]
      %v4088 = vld [vmem:[#allocation2 + $0x32] sm:$0xff]
      %v4089 = vld [vmem:[#allocation2 + $0x3a] sm:$0xff]
      %v4090 = vld [vmem:[#allocation2 + $0x42] sm:$0xff]
      %v4091 = vld [vmem:[#allocation2 + $0x4a] sm:$0xff]
      %v4092 = vld [vmem:[#allocation2 + $0x52] sm:$0xff]
      %v4093 = vld [vmem:[#allocation2 + $0x5a] sm:$0xff]
      %v4094 = vld [vmem:[#allocation2 + $0x62] sm:$0xff]
      %v4095 = vld [vmem:[#allocation2 + $0x6a] sm:$0xff]
      %v4096 = vld [vmem:[#allocation2 + $0x72] sm:$0xff]
      %v4097 = vld [vmem:[#allocation2 + $0x7a] sm:$0xff]
      %v4098 = vld [vmem:[#allocation2 + $0x82] sm:$0xff]
      %v4099 = vld [vmem:[#allocation2 + $0x8a] sm:$0xff]
      %v4100 = vld [vmem:[#allocation2 + $0x92] sm:$0xff]
      %v4101 = vld [vmem:[#allocation2 + $0x9a] sm:$0xff]
      %s4102 = scalar_lea.vmem %s3, 256
      %v4103 = vld [vmem:[%s4102] sm:$0xff]
      %v4104 = vld [vmem:[%s4102 + $0x8] sm:$0xff]
      %v4105 = vld [vmem:[%s4102 + $0x10] sm:$0xff]
      %v4106 = vld [vmem:[%s4102 + $0x18] sm:$0xff]
      %v4108 = vsel %vm333, %v4086, 0
      %v4111 = vsel %vm333, %v4087, 0
      %v4114 = vsel %vm333, %v4088, 0
      %v4117 = vsel %vm333, %v4089, 0
      %v4120 = vsel %vm333, %v4090, 0
      %v4123 = vsel %vm333, %v4091, 0
      %v4126 = vsel %vm333, %v4092, 0
      %v4129 = vsel %vm333, %v4093, 0
      %v4132 = vsel %vm333, %v4094, 0
      %v4135 = vsel %vm333, %v4095, 0
      %v4138 = vsel %vm333, %v4096, 0
      %v4141 = vsel %vm333, %v4097, 0
      %v4144 = vsel %vm333, %v4098, 0
      %v4147 = vsel %vm333, %v4099, 0
      %v4150 = vsel %vm333, %v4100, 0
      %v4153 = vsel %vm333, %v4101, 0
      %4155 = vmatpush.msra.mxu0 0.0
      %4156 = vmatpush.msra.mxu0 0.0
      %4157 = vmatpush.msra.mxu0 0.0
      %4158 = vmatpush.msra.mxu0 0.0
      %4159 = vmatpush.msra.mxu0 0.0
      %4160 = vmatpush.msra.mxu0 0.0
      %4161 = vmatpush.msra.mxu0 0.0
      %4162 = vmatpush.msra.mxu0 0.0
      %4163 = vmatpush.msra.mxu0 0.0
      %4164 = vmatpush.msra.mxu0 0.0
      %4165 = vmatpush.msra.mxu0 0.0
      %4166 = vmatpush.msra.mxu0 0.0
      %4167 = vmatpush.msra.mxu0 %v4106
      %4168 = vmatpush.msra.mxu0 %v4105
      %4169 = vmatpush.msra.mxu0 %v4104
      %4170 = vmatpush.msra.mxu0 %v4103
      %4171 = vmatmul.f32.gmra.mxu0 %v4108
      %v4172 = vpop.f32.mrf.mxu0
      %v4173 = vadd.f32 0.0, %v4172
      %4174 = vmatmul.f32.gmra.mxu0 %v4111
      %v4175 = vpop.f32.mrf.mxu0
      %v4176 = vadd.f32 0.0, %v4175
      %4177 = vmatmul.f32.gmra.mxu0 %v4114
      %v4178 = vpop.f32.mrf.mxu0
      %v4179 = vadd.f32 0.0, %v4178
      %4180 = vmatmul.f32.gmra.mxu0 %v4117
      %v4181 = vpop.f32.mrf.mxu0
      %v4182 = vadd.f32 0.0, %v4181
      %4183 = vmatmul.f32.gmra.mxu0 %v4120
      %v4184 = vpop.f32.mrf.mxu0
      %v4185 = vadd.f32 0.0, %v4184
      %4186 = vmatmul.f32.gmra.mxu0 %v4123
      %v4187 = vpop.f32.mrf.mxu0
      %v4188 = vadd.f32 0.0, %v4187
      %4189 = vmatmul.f32.gmra.mxu0 %v4126
      %v4190 = vpop.f32.mrf.mxu0
      %v4191 = vadd.f32 0.0, %v4190
      %4192 = vmatmul.f32.gmra.mxu0 %v4129
      %v4193 = vpop.f32.mrf.mxu0
      %v4194 = vadd.f32 0.0, %v4193
      %4195 = vmatmul.f32.gmra.mxu0 %v4132
      %v4196 = vpop.f32.mrf.mxu0
      %v4197 = vadd.f32 0.0, %v4196
      %4198 = vmatmul.f32.gmra.mxu0 %v4135
      %v4199 = vpop.f32.mrf.mxu0
      %v4200 = vadd.f32 0.0, %v4199
      %4201 = vmatmul.f32.gmra.mxu0 %v4138
      %v4202 = vpop.f32.mrf.mxu0
      %v4203 = vadd.f32 0.0, %v4202
      %4204 = vmatmul.f32.gmra.mxu0 %v4141
      %v4205 = vpop.f32.mrf.mxu0
      %v4206 = vadd.f32 0.0, %v4205
      %4207 = vmatmul.f32.gmra.mxu0 %v4144
      %v4208 = vpop.f32.mrf.mxu0
      %v4209 = vadd.f32 0.0, %v4208
      %4210 = vmatmul.f32.gmra.mxu0 %v4147
      %v4211 = vpop.f32.mrf.mxu0
      %v4212 = vadd.f32 0.0, %v4211
      %4213 = vmatmul.f32.gmra.mxu0 %v4150
      %v4214 = vpop.f32.mrf.mxu0
      %v4215 = vadd.f32 0.0, %v4214
      %4216 = vmatmul.f32.gmra.mxu0 %v4153
      %v4217 = vpop.f32.mrf.mxu0
      %v4218 = vadd.f32 0.0, %v4217
      %4219 = vdwg.mxu0
      %v4220 = vadd.f32 %v4070, %v4173
      %v4221 = vadd.f32 %v4071, %v4176
      %v4222 = vadd.f32 %v4072, %v4179
      %v4223 = vadd.f32 %v4073, %v4182
      %v4224 = vadd.f32 %v4074, %v4185
      %v4225 = vadd.f32 %v4075, %v4188
      %v4226 = vadd.f32 %v4076, %v4191
      %v4227 = vadd.f32 %v4077, %v4194
      %v4228 = vadd.f32 %v4078, %v4197
      %v4229 = vadd.f32 %v4079, %v4200
      %v4230 = vadd.f32 %v4080, %v4203
      %v4231 = vadd.f32 %v4081, %v4206
      %v4232 = vadd.f32 %v4082, %v4209
      %v4233 = vadd.f32 %v4083, %v4212
      %v4234 = vadd.f32 %v4084, %v4215
      %v4235 = vadd.f32 %v4085, %v4218
      %v4237 = vperm.slane %v2918, 0
      %v4239 = vadd.f32 %v4220, %v4237
      %v4240 = vadd.f32 %v4221, %v4237
      %v4241 = vadd.f32 %v4222, %v4237
      %v4242 = vadd.f32 %v4223, %v4237
      %v4243 = vadd.f32 %v4224, %v4237
      %v4244 = vadd.f32 %v4225, %v4237
      %v4245 = vadd.f32 %v4226, %v4237
      %v4246 = vadd.f32 %v4227, %v4237
      %v4247 = vadd.f32 %v4228, %v4237
      %v4248 = vadd.f32 %v4229, %v4237
      %v4249 = vadd.f32 %v4230, %v4237
      %v4250 = vadd.f32 %v4231, %v4237
      %v4251 = vadd.f32 %v4232, %v4237
      %v4252 = vadd.f32 %v4233, %v4237
      %v4253 = vadd.f32 %v4234, %v4237
      %v4254 = vadd.f32 %v4235, %v4237
      %v4255 = vmax.f32 %v4239, 0.0
      %v4256 = vmax.f32 %v4240, 0.0
      %v4257 = vmax.f32 %v4241, 0.0
      %v4258 = vmax.f32 %v4242, 0.0
      %v4259 = vmax.f32 %v4243, 0.0
      %v4260 = vmax.f32 %v4244, 0.0
      %v4261 = vmax.f32 %v4245, 0.0
      %v4262 = vmax.f32 %v4246, 0.0
      %v4263 = vmax.f32 %v4247, 0.0
      %v4264 = vmax.f32 %v4248, 0.0
      %v4265 = vmax.f32 %v4249, 0.0
      %v4266 = vmax.f32 %v4250, 0.0
      %v4267 = vmax.f32 %v4251, 0.0
      %v4268 = vmax.f32 %v4252, 0.0
      %v4269 = vmax.f32 %v4253, 0.0
      %v4270 = vmax.f32 %v4254, 0.0
      %4271 = vst.msk [vmem:[#allocation3] sm:$0xff] %vm333, %v4255
      %4272 = vst.msk [vmem:[#allocation3 + $0x8] sm:$0xff] %vm333, %v4256
      %4273 = vst.msk [vmem:[#allocation3 + $0x10] sm:$0xff] %vm333, %v4257
      %4274 = vst.msk [vmem:[#allocation3 + $0x18] sm:$0xff] %vm333, %v4258
      %4275 = vst.msk [vmem:[#allocation3 + $0x20] sm:$0xff] %vm333, %v4259
      %4276 = vst.msk [vmem:[#allocation3 + $0x28] sm:$0xff] %vm333, %v4260
      %4277 = vst.msk [vmem:[#allocation3 + $0x30] sm:$0xff] %vm333, %v4261
      %4278 = vst.msk [vmem:[#allocation3 + $0x38] sm:$0xff] %vm333, %v4262
      %4279 = vst.msk [vmem:[#allocation3 + $0x40] sm:$0xff] %vm333, %v4263
      %4280 = vst.msk [vmem:[#allocation3 + $0x48] sm:$0xff] %vm333, %v4264
      %4281 = vst.msk [vmem:[#allocation3 + $0x50] sm:$0xff] %vm333, %v4265
      %4282 = vst.msk [vmem:[#allocation3 + $0x58] sm:$0xff] %vm333, %v4266
      %4283 = vst.msk [vmem:[#allocation3 + $0x60] sm:$0xff] %vm333, %v4267
      %4284 = vst.msk [vmem:[#allocation3 + $0x68] sm:$0xff] %vm333, %v4268
      %4285 = vst.msk [vmem:[#allocation3 + $0x70] sm:$0xff] %vm333, %v4269
      %4286 = vst.msk [vmem:[#allocation3 + $0x78] sm:$0xff] %vm333, %v4270
      %v4287 = vld [vmem:[#allocation2 + $0x80] sm:$0xff]
      %v4288 = vld [vmem:[#allocation2 + $0x88] sm:$0xff]
      %v4289 = vld [vmem:[#allocation2 + $0x90] sm:$0xff]
      %v4290 = vld [vmem:[#allocation2 + $0x98] sm:$0xff]
      %v4291 = vld [vmem:[#allocation2 + $0xa0] sm:$0xff]
      %v4292 = vld [vmem:[#allocation2 + $0xa8] sm:$0xff]
      %v4293 = vld [vmem:[#allocation2 + $0xb0] sm:$0xff]
      %v4294 = vld [vmem:[#allocation2 + $0xb8] sm:$0xff]
      %v4295 = vld [vmem:[#allocation2 + $0xc0] sm:$0xff]
      %v4296 = vld [vmem:[#allocation2 + $0xc8] sm:$0xff]
      %v4297 = vld [vmem:[%s3] sm:$0xff]
      %v4298 = vld [vmem:[%s3 + $0x8] sm:$0xff]
      %v4299 = vld [vmem:[%s3 + $0x10] sm:$0xff]
      %v4300 = vld [vmem:[%s3 + $0x18] sm:$0xff]
      %v4301 = vld [vmem:[#allocation2 + $0x81] sm:$0xff]
      %v4302 = vld [vmem:[#allocation2 + $0x89] sm:$0xff]
      %v4303 = vld [vmem:[#allocation2 + $0x91] sm:$0xff]
      %v4304 = vld [vmem:[#allocation2 + $0x99] sm:$0xff]
      %v4305 = vld [vmem:[#allocation2 + $0xa1] sm:$0xff]
      %v4306 = vld [vmem:[#allocation2 + $0xa9] sm:$0xff]
      %v4307 = vld [vmem:[#allocation2 + $0xb1] sm:$0xff]
      %v4308 = vld [vmem:[#allocation2 + $0xb9] sm:$0xff]
      %v4309 = vld [vmem:[#allocation2 + $0xc1] sm:$0xff]
      %v4310 = vld [vmem:[#allocation2 + $0xc9] sm:$0xff]
      %v4311 = vld [vmem:[%s2955] sm:$0xff]
      %v4312 = vld [vmem:[%s2955 + $0x8] sm:$0xff]
      %v4313 = vld [vmem:[%s2955 + $0x10] sm:$0xff]
      %v4314 = vld [vmem:[%s2955 + $0x18] sm:$0xff]
      %v4316 = vsel %vm333, %v4301, 0
      %v4319 = vsel %vm333, %v4302, 0
      %v4322 = vsel %vm333, %v4303, 0
      %v4325 = vsel %vm333, %v4304, 0
      %v4328 = vsel %vm333, %v4305, 0
      %v4331 = vsel %vm333, %v4306, 0
      %v4334 = vsel %vm333, %v4307, 0
      %v4337 = vsel %vm333, %v4308, 0
      %v4340 = vsel %vm333, %v4309, 0
      %v4343 = vsel %vm333, %v4310, 0
      %4345 = vmatpush.msra.mxu0 0.0
      %4346 = vmatpush.msra.mxu0 0.0
      %4347 = vmatpush.msra.mxu0 0.0
      %4348 = vmatpush.msra.mxu0 0.0
      %4349 = vmatpush.msra.mxu0 0.0
      %4350 = vmatpush.msra.mxu0 0.0
      %4351 = vmatpush.msra.mxu0 0.0
      %4352 = vmatpush.msra.mxu0 0.0
      %4353 = vmatpush.msra.mxu0 0.0
      %4354 = vmatpush.msra.mxu0 0.0
      %4355 = vmatpush.msra.mxu0 0.0
      %4356 = vmatpush.msra.mxu0 0.0
      %4357 = vmatpush.msra.mxu0 %v4314
      %4358 = vmatpush.msra.mxu0 %v4313
      %4359 = vmatpush.msra.mxu0 %v4312
      %4360 = vmatpush.msra.mxu0 %v4311
      %4361 = vmatmul.f32.gmra.mxu0 %v4316
      %v4362 = vpop.f32.mrf.mxu0
      %v4363 = vadd.f32 0.0, %v4362
      %4364 = vmatmul.f32.gmra.mxu0 %v4319
      %v4365 = vpop.f32.mrf.mxu0
      %v4366 = vadd.f32 0.0, %v4365
      %4367 = vmatmul.f32.gmra.mxu0 %v4322
      %v4368 = vpop.f32.mrf.mxu0
      %v4369 = vadd.f32 0.0, %v4368
      %4370 = vmatmul.f32.gmra.mxu0 %v4325
      %v4371 = vpop.f32.mrf.mxu0
      %v4372 = vadd.f32 0.0, %v4371
      %4373 = vmatmul.f32.gmra.mxu0 %v4328
      %v4374 = vpop.f32.mrf.mxu0
      %v4375 = vadd.f32 0.0, %v4374
      %4376 = vmatmul.f32.gmra.mxu0 %v4331
      %v4377 = vpop.f32.mrf.mxu0
      %v4378 = vadd.f32 0.0, %v4377
      %4379 = vmatmul.f32.gmra.mxu0 %v4334
      %v4380 = vpop.f32.mrf.mxu0
      %v4381 = vadd.f32 0.0, %v4380
      %4382 = vmatmul.f32.gmra.mxu0 %v4337
      %v4383 = vpop.f32.mrf.mxu0
      %v4384 = vadd.f32 0.0, %v4383
      %4385 = vmatmul.f32.gmra.mxu0 %v4340
      %v4386 = vpop.f32.mrf.mxu0
      %v4387 = vadd.f32 0.0, %v4386
      %4388 = vmatmul.f32.gmra.mxu0 %v4343
      %v4389 = vpop.f32.mrf.mxu0
      %v4390 = vadd.f32 0.0, %v4389
      %4391 = vdwg.mxu0
      %v4393 = vsel %vm333, %v4287, 0
      %v4396 = vsel %vm333, %v4288, 0
      %v4399 = vsel %vm333, %v4289, 0
      %v4402 = vsel %vm333, %v4290, 0
      %v4405 = vsel %vm333, %v4291, 0
      %v4408 = vsel %vm333, %v4292, 0
      %v4411 = vsel %vm333, %v4293, 0
      %v4414 = vsel %vm333, %v4294, 0
      %v4417 = vsel %vm333, %v4295, 0
      %v4420 = vsel %vm333, %v4296, 0
      %4422 = vmatpush.msra.mxu0 0.0
      %4423 = vmatpush.msra.mxu0 0.0
      %4424 = vmatpush.msra.mxu0 0.0
      %4425 = vmatpush.msra.mxu0 0.0
      %4426 = vmatpush.msra.mxu0 0.0
      %4427 = vmatpush.msra.mxu0 0.0
      %4428 = vmatpush.msra.mxu0 0.0
      %4429 = vmatpush.msra.mxu0 0.0
      %4430 = vmatpush.msra.mxu0 0.0
      %4431 = vmatpush.msra.mxu0 0.0
      %4432 = vmatpush.msra.mxu0 0.0
      %4433 = vmatpush.msra.mxu0 0.0
      %4434 = vmatpush.msra.mxu0 %v4300
      %4435 = vmatpush.msra.mxu0 %v4299
      %4436 = vmatpush.msra.mxu0 %v4298
      %4437 = vmatpush.msra.mxu0 %v4297
      %4438 = vmatmul.f32.gmra.mxu0 %v4393
      %v4439 = vpop.f32.mrf.mxu0
      %v4440 = vadd.f32 %v4363, %v4439
      %4441 = vmatmul.f32.gmra.mxu0 %v4396
      %v4442 = vpop.f32.mrf.mxu0
      %v4443 = vadd.f32 %v4366, %v4442
      %4444 = vmatmul.f32.gmra.mxu0 %v4399
      %v4445 = vpop.f32.mrf.mxu0
      %v4446 = vadd.f32 %v4369, %v4445
      %4447 = vmatmul.f32.gmra.mxu0 %v4402
      %v4448 = vpop.f32.mrf.mxu0
      %v4449 = vadd.f32 %v4372, %v4448
      %4450 = vmatmul.f32.gmra.mxu0 %v4405
      %v4451 = vpop.f32.mrf.mxu0
      %v4452 = vadd.f32 %v4375, %v4451
      %4453 = vmatmul.f32.gmra.mxu0 %v4408
      %v4454 = vpop.f32.mrf.mxu0
      %v4455 = vadd.f32 %v4378, %v4454
      %4456 = vmatmul.f32.gmra.mxu0 %v4411
      %v4457 = vpop.f32.mrf.mxu0
      %v4458 = vadd.f32 %v4381, %v4457
      %4459 = vmatmul.f32.gmra.mxu0 %v4414
      %v4460 = vpop.f32.mrf.mxu0
      %v4461 = vadd.f32 %v4384, %v4460
      %4462 = vmatmul.f32.gmra.mxu0 %v4417
      %v4463 = vpop.f32.mrf.mxu0
      %v4464 = vadd.f32 %v4387, %v4463
      %4465 = vmatmul.f32.gmra.mxu0 %v4420
      %v4466 = vpop.f32.mrf.mxu0
      %v4467 = vadd.f32 %v4390, %v4466
      %4468 = vdwg.mxu0
      %v4469 = vld [vmem:[#allocation2 + $0x82] sm:$0xff]
      %v4470 = vld [vmem:[#allocation2 + $0x8a] sm:$0xff]
      %v4471 = vld [vmem:[#allocation2 + $0x92] sm:$0xff]
      %v4472 = vld [vmem:[#allocation2 + $0x9a] sm:$0xff]
      %v4473 = vld [vmem:[#allocation2 + $0xa2] sm:$0xff]
      %v4474 = vld [vmem:[#allocation2 + $0xaa] sm:$0xff]
      %v4475 = vld [vmem:[#allocation2 + $0xb2] sm:$0xff]
      %v4476 = vld [vmem:[#allocation2 + $0xba] sm:$0xff]
      %v4477 = vld [vmem:[#allocation2 + $0xc2] sm:$0xff]
      %v4478 = vld [vmem:[#allocation2 + $0xca] sm:$0xff]
      %v4479 = vld [vmem:[%s3202] sm:$0xff]
      %v4480 = vld [vmem:[%s3202 + $0x8] sm:$0xff]
      %v4481 = vld [vmem:[%s3202 + $0x10] sm:$0xff]
      %v4482 = vld [vmem:[%s3202 + $0x18] sm:$0xff]
      %v4484 = vsel %vm333, %v4469, 0
      %v4487 = vsel %vm333, %v4470, 0
      %v4490 = vsel %vm333, %v4471, 0
      %v4493 = vsel %vm333, %v4472, 0
      %v4496 = vsel %vm333, %v4473, 0
      %v4499 = vsel %vm333, %v4474, 0
      %v4502 = vsel %vm333, %v4475, 0
      %v4505 = vsel %vm333, %v4476, 0
      %v4508 = vsel %vm333, %v4477, 0
      %v4511 = vsel %vm333, %v4478, 0
      %4513 = vmatpush.msra.mxu0 0.0
      %4514 = vmatpush.msra.mxu0 0.0
      %4515 = vmatpush.msra.mxu0 0.0
      %4516 = vmatpush.msra.mxu0 0.0
      %4517 = vmatpush.msra.mxu0 0.0
      %4518 = vmatpush.msra.mxu0 0.0
      %4519 = vmatpush.msra.mxu0 0.0
      %4520 = vmatpush.msra.mxu0 0.0
      %4521 = vmatpush.msra.mxu0 0.0
      %4522 = vmatpush.msra.mxu0 0.0
      %4523 = vmatpush.msra.mxu0 0.0
      %4524 = vmatpush.msra.mxu0 0.0
      %4525 = vmatpush.msra.mxu0 %v4482
      %4526 = vmatpush.msra.mxu0 %v4481
      %4527 = vmatpush.msra.mxu0 %v4480
      %4528 = vmatpush.msra.mxu0 %v4479
      %4529 = vmatmul.f32.gmra.mxu0 %v4484
      %v4530 = vpop.f32.mrf.mxu0
      %v4531 = vadd.f32 0.0, %v4530
      %4532 = vmatmul.f32.gmra.mxu0 %v4487
      %v4533 = vpop.f32.mrf.mxu0
      %v4534 = vadd.f32 0.0, %v4533
      %4535 = vmatmul.f32.gmra.mxu0 %v4490
      %v4536 = vpop.f32.mrf.mxu0
      %v4537 = vadd.f32 0.0, %v4536
      %4538 = vmatmul.f32.gmra.mxu0 %v4493
      %v4539 = vpop.f32.mrf.mxu0
      %v4540 = vadd.f32 0.0, %v4539
      %4541 = vmatmul.f32.gmra.mxu0 %v4496
      %v4542 = vpop.f32.mrf.mxu0
      %v4543 = vadd.f32 0.0, %v4542
      %4544 = vmatmul.f32.gmra.mxu0 %v4499
      %v4545 = vpop.f32.mrf.mxu0
      %v4546 = vadd.f32 0.0, %v4545
      %4547 = vmatmul.f32.gmra.mxu0 %v4502
      %v4548 = vpop.f32.mrf.mxu0
      %v4549 = vadd.f32 0.0, %v4548
      %4550 = vmatmul.f32.gmra.mxu0 %v4505
      %v4551 = vpop.f32.mrf.mxu0
      %v4552 = vadd.f32 0.0, %v4551
      %4553 = vmatmul.f32.gmra.mxu0 %v4508
      %v4554 = vpop.f32.mrf.mxu0
      %v4555 = vadd.f32 0.0, %v4554
      %4556 = vmatmul.f32.gmra.mxu0 %v4511
      %v4557 = vpop.f32.mrf.mxu0
      %v4558 = vadd.f32 0.0, %v4557
      %4559 = vdwg.mxu0
      %v4560 = vadd.f32 %v4440, %v4531
      %v4561 = vadd.f32 %v4443, %v4534
      %v4562 = vadd.f32 %v4446, %v4537
      %v4563 = vadd.f32 %v4449, %v4540
      %v4564 = vadd.f32 %v4452, %v4543
      %v4565 = vadd.f32 %v4455, %v4546
      %v4566 = vadd.f32 %v4458, %v4549
      %v4567 = vadd.f32 %v4461, %v4552
      %v4568 = vadd.f32 %v4464, %v4555
      %v4569 = vadd.f32 %v4467, %v4558
      %v4570 = vld [vmem:[#allocation2 + $0x90] sm:$0xff]
      %v4571 = vld [vmem:[#allocation2 + $0x98] sm:$0xff]
      %v4572 = vld [vmem:[#allocation2 + $0xa0] sm:$0xff]
      %v4573 = vld [vmem:[#allocation2 + $0xa8] sm:$0xff]
      %v4574 = vld [vmem:[#allocation2 + $0xb0] sm:$0xff]
      %v4575 = vld [vmem:[#allocation2 + $0xb8] sm:$0xff]
      %v4576 = vld [vmem:[#allocation2 + $0xc0] sm:$0xff]
      %v4577 = vld [vmem:[#allocation2 + $0xc8] sm:$0xff]
      %v4578 = vld [vmem:[#allocation2 + $0xd0] sm:$0xff]
      %v4579 = vld [vmem:[#allocation2 + $0xd8] sm:$0xff]
      %v4580 = vld [vmem:[%s3352] sm:$0xff]
      %v4581 = vld [vmem:[%s3352 + $0x8] sm:$0xff]
      %v4582 = vld [vmem:[%s3352 + $0x10] sm:$0xff]
      %v4583 = vld [vmem:[%s3352 + $0x18] sm:$0xff]
      %v4585 = vsel %vm333, %v4570, 0
      %v4588 = vsel %vm333, %v4571, 0
      %v4591 = vsel %vm333, %v4572, 0
      %v4594 = vsel %vm333, %v4573, 0
      %v4597 = vsel %vm333, %v4574, 0
      %v4600 = vsel %vm333, %v4575, 0
      %v4603 = vsel %vm333, %v4576, 0
      %v4606 = vsel %vm333, %v4577, 0
      %v4609 = vsel %vm333, %v4578, 0
      %v4612 = vsel %vm333, %v4579, 0
      %4614 = vmatpush.msra.mxu0 0.0
      %4615 = vmatpush.msra.mxu0 0.0
      %4616 = vmatpush.msra.mxu0 0.0
      %4617 = vmatpush.msra.mxu0 0.0
      %4618 = vmatpush.msra.mxu0 0.0
      %4619 = vmatpush.msra.mxu0 0.0
      %4620 = vmatpush.msra.mxu0 0.0
      %4621 = vmatpush.msra.mxu0 0.0
      %4622 = vmatpush.msra.mxu0 0.0
      %4623 = vmatpush.msra.mxu0 0.0
      %4624 = vmatpush.msra.mxu0 0.0
      %4625 = vmatpush.msra.mxu0 0.0
      %4626 = vmatpush.msra.mxu0 %v4583
      %4627 = vmatpush.msra.mxu0 %v4582
      %4628 = vmatpush.msra.mxu0 %v4581
      %4629 = vmatpush.msra.mxu0 %v4580
      %4630 = vmatmul.f32.gmra.mxu0 %v4585
      %v4631 = vpop.f32.mrf.mxu0
      %v4632 = vadd.f32 0.0, %v4631
      %4633 = vmatmul.f32.gmra.mxu0 %v4588
      %v4634 = vpop.f32.mrf.mxu0
      %v4635 = vadd.f32 0.0, %v4634
      %4636 = vmatmul.f32.gmra.mxu0 %v4591
      %v4637 = vpop.f32.mrf.mxu0
      %v4638 = vadd.f32 0.0, %v4637
      %4639 = vmatmul.f32.gmra.mxu0 %v4594
      %v4640 = vpop.f32.mrf.mxu0
      %v4641 = vadd.f32 0.0, %v4640
      %4642 = vmatmul.f32.gmra.mxu0 %v4597
      %v4643 = vpop.f32.mrf.mxu0
      %v4644 = vadd.f32 0.0, %v4643
      %4645 = vmatmul.f32.gmra.mxu0 %v4600
      %v4646 = vpop.f32.mrf.mxu0
      %v4647 = vadd.f32 0.0, %v4646
      %4648 = vmatmul.f32.gmra.mxu0 %v4603
      %v4649 = vpop.f32.mrf.mxu0
      %v4650 = vadd.f32 0.0, %v4649
      %4651 = vmatmul.f32.gmra.mxu0 %v4606
      %v4652 = vpop.f32.mrf.mxu0
      %v4653 = vadd.f32 0.0, %v4652
      %4654 = vmatmul.f32.gmra.mxu0 %v4609
      %v4655 = vpop.f32.mrf.mxu0
      %v4656 = vadd.f32 0.0, %v4655
      %4657 = vmatmul.f32.gmra.mxu0 %v4612
      %v4658 = vpop.f32.mrf.mxu0
      %v4659 = vadd.f32 0.0, %v4658
      %4660 = vdwg.mxu0
      %v4661 = vadd.f32 %v4560, %v4632
      %v4662 = vadd.f32 %v4561, %v4635
      %v4663 = vadd.f32 %v4562, %v4638
      %v4664 = vadd.f32 %v4563, %v4641
      %v4665 = vadd.f32 %v4564, %v4644
      %v4666 = vadd.f32 %v4565, %v4647
      %v4667 = vadd.f32 %v4566, %v4650
      %v4668 = vadd.f32 %v4567, %v4653
      %v4669 = vadd.f32 %v4568, %v4656
      %v4670 = vadd.f32 %v4569, %v4659
      %v4671 = vld [vmem:[#allocation2 + $0x91] sm:$0xff]
      %v4672 = vld [vmem:[#allocation2 + $0x99] sm:$0xff]
      %v4673 = vld [vmem:[#allocation2 + $0xa1] sm:$0xff]
      %v4674 = vld [vmem:[#allocation2 + $0xa9] sm:$0xff]
      %v4675 = vld [vmem:[#allocation2 + $0xb1] sm:$0xff]
      %v4676 = vld [vmem:[#allocation2 + $0xb9] sm:$0xff]
      %v4677 = vld [vmem:[#allocation2 + $0xc1] sm:$0xff]
      %v4678 = vld [vmem:[#allocation2 + $0xc9] sm:$0xff]
      %v4679 = vld [vmem:[#allocation2 + $0xd1] sm:$0xff]
      %v4680 = vld [vmem:[#allocation2 + $0xd9] sm:$0xff]
      %v4681 = vld [vmem:[%s3502] sm:$0xff]
      %v4682 = vld [vmem:[%s3502 + $0x8] sm:$0xff]
      %v4683 = vld [vmem:[%s3502 + $0x10] sm:$0xff]
      %v4684 = vld [vmem:[%s3502 + $0x18] sm:$0xff]
      %v4686 = vsel %vm333, %v4671, 0
      %v4689 = vsel %vm333, %v4672, 0
      %v4692 = vsel %vm333, %v4673, 0
      %v4695 = vsel %vm333, %v4674, 0
      %v4698 = vsel %vm333, %v4675, 0
      %v4701 = vsel %vm333, %v4676, 0
      %v4704 = vsel %vm333, %v4677, 0
      %v4707 = vsel %vm333, %v4678, 0
      %v4710 = vsel %vm333, %v4679, 0
      %v4713 = vsel %vm333, %v4680, 0
      %4715 = vmatpush.msra.mxu0 0.0
      %4716 = vmatpush.msra.mxu0 0.0
      %4717 = vmatpush.msra.mxu0 0.0
      %4718 = vmatpush.msra.mxu0 0.0
      %4719 = vmatpush.msra.mxu0 0.0
      %4720 = vmatpush.msra.mxu0 0.0
      %4721 = vmatpush.msra.mxu0 0.0
      %4722 = vmatpush.msra.mxu0 0.0
      %4723 = vmatpush.msra.mxu0 0.0
      %4724 = vmatpush.msra.mxu0 0.0
      %4725 = vmatpush.msra.mxu0 0.0
      %4726 = vmatpush.msra.mxu0 0.0
      %4727 = vmatpush.msra.mxu0 %v4684
      %4728 = vmatpush.msra.mxu0 %v4683
      %4729 = vmatpush.msra.mxu0 %v4682
      %4730 = vmatpush.msra.mxu0 %v4681
      %4731 = vmatmul.f32.gmra.mxu0 %v4686
      %v4732 = vpop.f32.mrf.mxu0
      %v4733 = vadd.f32 0.0, %v4732
      %4734 = vmatmul.f32.gmra.mxu0 %v4689
      %v4735 = vpop.f32.mrf.mxu0
      %v4736 = vadd.f32 0.0, %v4735
      %4737 = vmatmul.f32.gmra.mxu0 %v4692
      %v4738 = vpop.f32.mrf.mxu0
      %v4739 = vadd.f32 0.0, %v4738
      %4740 = vmatmul.f32.gmra.mxu0 %v4695
      %v4741 = vpop.f32.mrf.mxu0
      %v4742 = vadd.f32 0.0, %v4741
      %4743 = vmatmul.f32.gmra.mxu0 %v4698
      %v4744 = vpop.f32.mrf.mxu0
      %v4745 = vadd.f32 0.0, %v4744
      %4746 = vmatmul.f32.gmra.mxu0 %v4701
      %v4747 = vpop.f32.mrf.mxu0
      %v4748 = vadd.f32 0.0, %v4747
      %4749 = vmatmul.f32.gmra.mxu0 %v4704
      %v4750 = vpop.f32.mrf.mxu0
      %v4751 = vadd.f32 0.0, %v4750
      %4752 = vmatmul.f32.gmra.mxu0 %v4707
      %v4753 = vpop.f32.mrf.mxu0
      %v4754 = vadd.f32 0.0, %v4753
      %4755 = vmatmul.f32.gmra.mxu0 %v4710
      %v4756 = vpop.f32.mrf.mxu0
      %v4757 = vadd.f32 0.0, %v4756
      %4758 = vmatmul.f32.gmra.mxu0 %v4713
      %v4759 = vpop.f32.mrf.mxu0
      %v4760 = vadd.f32 0.0, %v4759
      %4761 = vdwg.mxu0
      %v4762 = vadd.f32 %v4661, %v4733
      %v4763 = vadd.f32 %v4662, %v4736
      %v4764 = vadd.f32 %v4663, %v4739
      %v4765 = vadd.f32 %v4664, %v4742
      %v4766 = vadd.f32 %v4665, %v4745
      %v4767 = vadd.f32 %v4666, %v4748
      %v4768 = vadd.f32 %v4667, %v4751
      %v4769 = vadd.f32 %v4668, %v4754
      %v4770 = vadd.f32 %v4669, %v4757
      %v4771 = vadd.f32 %v4670, %v4760
      %v4772 = vld [vmem:[#allocation2 + $0x92] sm:$0xff]
      %v4773 = vld [vmem:[#allocation2 + $0x9a] sm:$0xff]
      %v4774 = vld [vmem:[#allocation2 + $0xa2] sm:$0xff]
      %v4775 = vld [vmem:[#allocation2 + $0xaa] sm:$0xff]
      %v4776 = vld [vmem:[#allocation2 + $0xb2] sm:$0xff]
      %v4777 = vld [vmem:[#allocation2 + $0xba] sm:$0xff]
      %v4778 = vld [vmem:[#allocation2 + $0xc2] sm:$0xff]
      %v4779 = vld [vmem:[#allocation2 + $0xca] sm:$0xff]
      %v4780 = vld [vmem:[#allocation2 + $0xd2] sm:$0xff]
      %v4781 = vld [vmem:[#allocation2 + $0xda] sm:$0xff]
      %v4782 = vld [vmem:[%s3652] sm:$0xff]
      %v4783 = vld [vmem:[%s3652 + $0x8] sm:$0xff]
      %v4784 = vld [vmem:[%s3652 + $0x10] sm:$0xff]
      %v4785 = vld [vmem:[%s3652 + $0x18] sm:$0xff]
      %v4787 = vsel %vm333, %v4772, 0
      %v4790 = vsel %vm333, %v4773, 0
      %v4793 = vsel %vm333, %v4774, 0
      %v4796 = vsel %vm333, %v4775, 0
      %v4799 = vsel %vm333, %v4776, 0
      %v4802 = vsel %vm333, %v4777, 0
      %v4805 = vsel %vm333, %v4778, 0
      %v4808 = vsel %vm333, %v4779, 0
      %v4811 = vsel %vm333, %v4780, 0
      %v4814 = vsel %vm333, %v4781, 0
      %4816 = vmatpush.msra.mxu0 0.0
      %4817 = vmatpush.msra.mxu0 0.0
      %4818 = vmatpush.msra.mxu0 0.0
      %4819 = vmatpush.msra.mxu0 0.0
      %4820 = vmatpush.msra.mxu0 0.0
      %4821 = vmatpush.msra.mxu0 0.0
      %4822 = vmatpush.msra.mxu0 0.0
      %4823 = vmatpush.msra.mxu0 0.0
      %4824 = vmatpush.msra.mxu0 0.0
      %4825 = vmatpush.msra.mxu0 0.0
      %4826 = vmatpush.msra.mxu0 0.0
      %4827 = vmatpush.msra.mxu0 0.0
      %4828 = vmatpush.msra.mxu0 %v4785
      %4829 = vmatpush.msra.mxu0 %v4784
      %4830 = vmatpush.msra.mxu0 %v4783
      %4831 = vmatpush.msra.mxu0 %v4782
      %4832 = vmatmul.f32.gmra.mxu0 %v4787
      %v4833 = vpop.f32.mrf.mxu0
      %v4834 = vadd.f32 0.0, %v4833
      %4835 = vmatmul.f32.gmra.mxu0 %v4790
      %v4836 = vpop.f32.mrf.mxu0
      %v4837 = vadd.f32 0.0, %v4836
      %4838 = vmatmul.f32.gmra.mxu0 %v4793
      %v4839 = vpop.f32.mrf.mxu0
      %v4840 = vadd.f32 0.0, %v4839
      %4841 = vmatmul.f32.gmra.mxu0 %v4796
      %v4842 = vpop.f32.mrf.mxu0
      %v4843 = vadd.f32 0.0, %v4842
      %4844 = vmatmul.f32.gmra.mxu0 %v4799
      %v4845 = vpop.f32.mrf.mxu0
      %v4846 = vadd.f32 0.0, %v4845
      %4847 = vmatmul.f32.gmra.mxu0 %v4802
      %v4848 = vpop.f32.mrf.mxu0
      %v4849 = vadd.f32 0.0, %v4848
      %4850 = vmatmul.f32.gmra.mxu0 %v4805
      %v4851 = vpop.f32.mrf.mxu0
      %v4852 = vadd.f32 0.0, %v4851
      %4853 = vmatmul.f32.gmra.mxu0 %v4808
      %v4854 = vpop.f32.mrf.mxu0
      %v4855 = vadd.f32 0.0, %v4854
      %4856 = vmatmul.f32.gmra.mxu0 %v4811
      %v4857 = vpop.f32.mrf.mxu0
      %v4858 = vadd.f32 0.0, %v4857
      %4859 = vmatmul.f32.gmra.mxu0 %v4814
      %v4860 = vpop.f32.mrf.mxu0
      %v4861 = vadd.f32 0.0, %v4860
      %4862 = vdwg.mxu0
      %v4863 = vadd.f32 %v4762, %v4834
      %v4864 = vadd.f32 %v4763, %v4837
      %v4865 = vadd.f32 %v4764, %v4840
      %v4866 = vadd.f32 %v4765, %v4843
      %v4867 = vadd.f32 %v4766, %v4846
      %v4868 = vadd.f32 %v4767, %v4849
      %v4869 = vadd.f32 %v4768, %v4852
      %v4870 = vadd.f32 %v4769, %v4855
      %v4871 = vadd.f32 %v4770, %v4858
      %v4872 = vadd.f32 %v4771, %v4861
      %v4873 = vld [vmem:[#allocation2 + $0xa0] sm:$0xff]
      %v4874 = vld [vmem:[#allocation2 + $0xa8] sm:$0xff]
      %v4875 = vld [vmem:[#allocation2 + $0xb0] sm:$0xff]
      %v4876 = vld [vmem:[#allocation2 + $0xb8] sm:$0xff]
      %v4877 = vld [vmem:[#allocation2 + $0xc0] sm:$0xff]
      %v4878 = vld [vmem:[#allocation2 + $0xc8] sm:$0xff]
      %v4879 = vld [vmem:[#allocation2 + $0xd0] sm:$0xff]
      %v4880 = vld [vmem:[#allocation2 + $0xd8] sm:$0xff]
      %v4881 = vld [vmem:[#allocation2 + $0xe0] sm:$0xff]
      %v4882 = vld [vmem:[#allocation2 + $0xe8] sm:$0xff]
      %v4883 = vld [vmem:[%s3802] sm:$0xff]
      %v4884 = vld [vmem:[%s3802 + $0x8] sm:$0xff]
      %v4885 = vld [vmem:[%s3802 + $0x10] sm:$0xff]
      %v4886 = vld [vmem:[%s3802 + $0x18] sm:$0xff]
      %v4888 = vsel %vm333, %v4873, 0
      %v4891 = vsel %vm333, %v4874, 0
      %v4894 = vsel %vm333, %v4875, 0
      %v4897 = vsel %vm333, %v4876, 0
      %v4900 = vsel %vm333, %v4877, 0
      %v4903 = vsel %vm333, %v4878, 0
      %v4906 = vsel %vm333, %v4879, 0
      %v4909 = vsel %vm333, %v4880, 0
      %v4912 = vsel %vm333, %v4881, 0
      %v4915 = vsel %vm333, %v4882, 0
      %4917 = vmatpush.msra.mxu0 0.0
      %4918 = vmatpush.msra.mxu0 0.0
      %4919 = vmatpush.msra.mxu0 0.0
      %4920 = vmatpush.msra.mxu0 0.0
      %4921 = vmatpush.msra.mxu0 0.0
      %4922 = vmatpush.msra.mxu0 0.0
      %4923 = vmatpush.msra.mxu0 0.0
      %4924 = vmatpush.msra.mxu0 0.0
      %4925 = vmatpush.msra.mxu0 0.0
      %4926 = vmatpush.msra.mxu0 0.0
      %4927 = vmatpush.msra.mxu0 0.0
      %4928 = vmatpush.msra.mxu0 0.0
      %4929 = vmatpush.msra.mxu0 %v4886
      %4930 = vmatpush.msra.mxu0 %v4885
      %4931 = vmatpush.msra.mxu0 %v4884
      %4932 = vmatpush.msra.mxu0 %v4883
      %4933 = vmatmul.f32.gmra.mxu0 %v4888
      %v4934 = vpop.f32.mrf.mxu0
      %v4935 = vadd.f32 0.0, %v4934
      %4936 = vmatmul.f32.gmra.mxu0 %v4891
      %v4937 = vpop.f32.mrf.mxu0
      %v4938 = vadd.f32 0.0, %v4937
      %4939 = vmatmul.f32.gmra.mxu0 %v4894
      %v4940 = vpop.f32.mrf.mxu0
      %v4941 = vadd.f32 0.0, %v4940
      %4942 = vmatmul.f32.gmra.mxu0 %v4897
      %v4943 = vpop.f32.mrf.mxu0
      %v4944 = vadd.f32 0.0, %v4943
      %4945 = vmatmul.f32.gmra.mxu0 %v4900
      %v4946 = vpop.f32.mrf.mxu0
      %v4947 = vadd.f32 0.0, %v4946
      %4948 = vmatmul.f32.gmra.mxu0 %v4903
      %v4949 = vpop.f32.mrf.mxu0
      %v4950 = vadd.f32 0.0, %v4949
      %4951 = vmatmul.f32.gmra.mxu0 %v4906
      %v4952 = vpop.f32.mrf.mxu0
      %v4953 = vadd.f32 0.0, %v4952
      %4954 = vmatmul.f32.gmra.mxu0 %v4909
      %v4955 = vpop.f32.mrf.mxu0
      %v4956 = vadd.f32 0.0, %v4955
      %4957 = vmatmul.f32.gmra.mxu0 %v4912
      %v4958 = vpop.f32.mrf.mxu0
      %v4959 = vadd.f32 0.0, %v4958
      %4960 = vmatmul.f32.gmra.mxu0 %v4915
      %v4961 = vpop.f32.mrf.mxu0
      %v4962 = vadd.f32 0.0, %v4961
      %4963 = vdwg.mxu0
      %v4964 = vadd.f32 %v4863, %v4935
      %v4965 = vadd.f32 %v4864, %v4938
      %v4966 = vadd.f32 %v4865, %v4941
      %v4967 = vadd.f32 %v4866, %v4944
      %v4968 = vadd.f32 %v4867, %v4947
      %v4969 = vadd.f32 %v4868, %v4950
      %v4970 = vadd.f32 %v4869, %v4953
      %v4971 = vadd.f32 %v4870, %v4956
      %v4972 = vadd.f32 %v4871, %v4959
      %v4973 = vadd.f32 %v4872, %v4962
      %v4974 = vld [vmem:[#allocation2 + $0xa1] sm:$0xff]
      %v4975 = vld [vmem:[#allocation2 + $0xa9] sm:$0xff]
      %v4976 = vld [vmem:[#allocation2 + $0xb1] sm:$0xff]
      %v4977 = vld [vmem:[#allocation2 + $0xb9] sm:$0xff]
      %v4978 = vld [vmem:[#allocation2 + $0xc1] sm:$0xff]
      %v4979 = vld [vmem:[#allocation2 + $0xc9] sm:$0xff]
      %v4980 = vld [vmem:[#allocation2 + $0xd1] sm:$0xff]
      %v4981 = vld [vmem:[#allocation2 + $0xd9] sm:$0xff]
      %v4982 = vld [vmem:[#allocation2 + $0xe1] sm:$0xff]
      %v4983 = vld [vmem:[#allocation2 + $0xe9] sm:$0xff]
      %v4984 = vld [vmem:[%s3952] sm:$0xff]
      %v4985 = vld [vmem:[%s3952 + $0x8] sm:$0xff]
      %v4986 = vld [vmem:[%s3952 + $0x10] sm:$0xff]
      %v4987 = vld [vmem:[%s3952 + $0x18] sm:$0xff]
      %v4989 = vsel %vm333, %v4974, 0
      %v4992 = vsel %vm333, %v4975, 0
      %v4995 = vsel %vm333, %v4976, 0
      %v4998 = vsel %vm333, %v4977, 0
      %v5001 = vsel %vm333, %v4978, 0
      %v5004 = vsel %vm333, %v4979, 0
      %v5007 = vsel %vm333, %v4980, 0
      %v5010 = vsel %vm333, %v4981, 0
      %v5013 = vsel %vm333, %v4982, 0
      %v5016 = vsel %vm333, %v4983, 0
      %5018 = vmatpush.msra.mxu0 0.0
      %5019 = vmatpush.msra.mxu0 0.0
      %5020 = vmatpush.msra.mxu0 0.0
      %5021 = vmatpush.msra.mxu0 0.0
      %5022 = vmatpush.msra.mxu0 0.0
      %5023 = vmatpush.msra.mxu0 0.0
      %5024 = vmatpush.msra.mxu0 0.0
      %5025 = vmatpush.msra.mxu0 0.0
      %5026 = vmatpush.msra.mxu0 0.0
      %5027 = vmatpush.msra.mxu0 0.0
      %5028 = vmatpush.msra.mxu0 0.0
      %5029 = vmatpush.msra.mxu0 0.0
      %5030 = vmatpush.msra.mxu0 %v4987
      %5031 = vmatpush.msra.mxu0 %v4986
      %5032 = vmatpush.msra.mxu0 %v4985
      %5033 = vmatpush.msra.mxu0 %v4984
      %5034 = vmatmul.f32.gmra.mxu0 %v4989
      %v5035 = vpop.f32.mrf.mxu0
      %v5036 = vadd.f32 0.0, %v5035
      %5037 = vmatmul.f32.gmra.mxu0 %v4992
      %v5038 = vpop.f32.mrf.mxu0
      %v5039 = vadd.f32 0.0, %v5038
      %5040 = vmatmul.f32.gmra.mxu0 %v4995
      %v5041 = vpop.f32.mrf.mxu0
      %v5042 = vadd.f32 0.0, %v5041
      %5043 = vmatmul.f32.gmra.mxu0 %v4998
      %v5044 = vpop.f32.mrf.mxu0
      %v5045 = vadd.f32 0.0, %v5044
      %5046 = vmatmul.f32.gmra.mxu0 %v5001
      %v5047 = vpop.f32.mrf.mxu0
      %v5048 = vadd.f32 0.0, %v5047
      %5049 = vmatmul.f32.gmra.mxu0 %v5004
      %v5050 = vpop.f32.mrf.mxu0
      %v5051 = vadd.f32 0.0, %v5050
      %5052 = vmatmul.f32.gmra.mxu0 %v5007
      %v5053 = vpop.f32.mrf.mxu0
      %v5054 = vadd.f32 0.0, %v5053
      %5055 = vmatmul.f32.gmra.mxu0 %v5010
      %v5056 = vpop.f32.mrf.mxu0
      %v5057 = vadd.f32 0.0, %v5056
      %5058 = vmatmul.f32.gmra.mxu0 %v5013
      %v5059 = vpop.f32.mrf.mxu0
      %v5060 = vadd.f32 0.0, %v5059
      %5061 = vmatmul.f32.gmra.mxu0 %v5016
      %v5062 = vpop.f32.mrf.mxu0
      %v5063 = vadd.f32 0.0, %v5062
      %5064 = vdwg.mxu0
      %v5065 = vadd.f32 %v4964, %v5036
      %v5066 = vadd.f32 %v4965, %v5039
      %v5067 = vadd.f32 %v4966, %v5042
      %v5068 = vadd.f32 %v4967, %v5045
      %v5069 = vadd.f32 %v4968, %v5048
      %v5070 = vadd.f32 %v4969, %v5051
      %v5071 = vadd.f32 %v4970, %v5054
      %v5072 = vadd.f32 %v4971, %v5057
      %v5073 = vadd.f32 %v4972, %v5060
      %v5074 = vadd.f32 %v4973, %v5063
      %v5075 = vld [vmem:[#allocation2 + $0xa2] sm:$0xff]
      %v5076 = vld [vmem:[#allocation2 + $0xaa] sm:$0xff]
      %v5077 = vld [vmem:[#allocation2 + $0xb2] sm:$0xff]
      %v5078 = vld [vmem:[#allocation2 + $0xba] sm:$0xff]
      %v5079 = vld [vmem:[#allocation2 + $0xc2] sm:$0xff]
      %v5080 = vld [vmem:[#allocation2 + $0xca] sm:$0xff]
      %v5081 = vld [vmem:[#allocation2 + $0xd2] sm:$0xff]
      %v5082 = vld [vmem:[#allocation2 + $0xda] sm:$0xff]
      %v5083 = vld [vmem:[#allocation2 + $0xe2] sm:$0xff]
      %v5084 = vld [vmem:[#allocation2 + $0xea] sm:$0xff]
      %v5085 = vld [vmem:[%s4102] sm:$0xff]
      %v5086 = vld [vmem:[%s4102 + $0x8] sm:$0xff]
      %v5087 = vld [vmem:[%s4102 + $0x10] sm:$0xff]
      %v5088 = vld [vmem:[%s4102 + $0x18] sm:$0xff]
      %v5090 = vsel %vm333, %v5075, 0
      %v5093 = vsel %vm333, %v5076, 0
      %v5096 = vsel %vm333, %v5077, 0
      %v5099 = vsel %vm333, %v5078, 0
      %v5102 = vsel %vm333, %v5079, 0
      %v5105 = vsel %vm333, %v5080, 0
      %v5108 = vsel %vm333, %v5081, 0
      %v5111 = vsel %vm333, %v5082, 0
      %v5114 = vsel %vm333, %v5083, 0
      %v5117 = vsel %vm333, %v5084, 0
      %5119 = vmatpush.msra.mxu0 0.0
      %5120 = vmatpush.msra.mxu0 0.0
      %5121 = vmatpush.msra.mxu0 0.0
      %5122 = vmatpush.msra.mxu0 0.0
      %5123 = vmatpush.msra.mxu0 0.0
      %5124 = vmatpush.msra.mxu0 0.0
      %5125 = vmatpush.msra.mxu0 0.0
      %5126 = vmatpush.msra.mxu0 0.0
      %5127 = vmatpush.msra.mxu0 0.0
      %5128 = vmatpush.msra.mxu0 0.0
      %5129 = vmatpush.msra.mxu0 0.0
      %5130 = vmatpush.msra.mxu0 0.0
      %5131 = vmatpush.msra.mxu0 %v5088
      %5132 = vmatpush.msra.mxu0 %v5087
      %5133 = vmatpush.msra.mxu0 %v5086
      %5134 = vmatpush.msra.mxu0 %v5085
      %5135 = vmatmul.f32.gmra.mxu0 %v5090
      %v5136 = vpop.f32.mrf.mxu0
      %v5137 = vadd.f32 0.0, %v5136
      %5138 = vmatmul.f32.gmra.mxu0 %v5093
      %v5139 = vpop.f32.mrf.mxu0
      %v5140 = vadd.f32 0.0, %v5139
      %5141 = vmatmul.f32.gmra.mxu0 %v5096
      %v5142 = vpop.f32.mrf.mxu0
      %v5143 = vadd.f32 0.0, %v5142
      %5144 = vmatmul.f32.gmra.mxu0 %v5099
      %v5145 = vpop.f32.mrf.mxu0
      %v5146 = vadd.f32 0.0, %v5145
      %5147 = vmatmul.f32.gmra.mxu0 %v5102
      %v5148 = vpop.f32.mrf.mxu0
      %v5149 = vadd.f32 0.0, %v5148
      %5150 = vmatmul.f32.gmra.mxu0 %v5105
      %v5151 = vpop.f32.mrf.mxu0
      %v5152 = vadd.f32 0.0, %v5151
      %5153 = vmatmul.f32.gmra.mxu0 %v5108
      %v5154 = vpop.f32.mrf.mxu0
      %v5155 = vadd.f32 0.0, %v5154
      %5156 = vmatmul.f32.gmra.mxu0 %v5111
      %v5157 = vpop.f32.mrf.mxu0
      %v5158 = vadd.f32 0.0, %v5157
      %5159 = vmatmul.f32.gmra.mxu0 %v5114
      %v5160 = vpop.f32.mrf.mxu0
      %v5161 = vadd.f32 0.0, %v5160
      %5162 = vmatmul.f32.gmra.mxu0 %v5117
      %v5163 = vpop.f32.mrf.mxu0
      %v5164 = vadd.f32 0.0, %v5163
      %5165 = vdwg.mxu0
      %v5166 = vadd.f32 %v5065, %v5137
      %v5167 = vadd.f32 %v5066, %v5140
      %v5168 = vadd.f32 %v5067, %v5143
      %v5169 = vadd.f32 %v5068, %v5146
      %v5170 = vadd.f32 %v5069, %v5149
      %v5171 = vadd.f32 %v5070, %v5152
      %v5172 = vadd.f32 %v5071, %v5155
      %v5173 = vadd.f32 %v5072, %v5158
      %v5174 = vadd.f32 %v5073, %v5161
      %v5175 = vadd.f32 %v5074, %v5164
      %v5176 = vadd.f32 %v5166, %v4237
      %v5177 = vadd.f32 %v5167, %v4237
      %v5178 = vadd.f32 %v5168, %v4237
      %v5179 = vadd.f32 %v5169, %v4237
      %v5180 = vadd.f32 %v5170, %v4237
      %v5181 = vadd.f32 %v5171, %v4237
      %v5182 = vadd.f32 %v5172, %v4237
      %v5183 = vadd.f32 %v5173, %v4237
      %v5184 = vadd.f32 %v5174, %v4237
      %v5185 = vadd.f32 %v5175, %v4237
      %v5186 = vmax.f32 %v5176, 0.0
      %v5187 = vmax.f32 %v5177, 0.0
      %v5188 = vmax.f32 %v5178, 0.0
      %v5189 = vmax.f32 %v5179, 0.0
      %v5190 = vmax.f32 %v5180, 0.0
      %v5191 = vmax.f32 %v5181, 0.0
      %v5192 = vmax.f32 %v5182, 0.0
      %v5193 = vmax.f32 %v5183, 0.0
      %v5194 = vmax.f32 %v5184, 0.0
      %v5195 = vmax.f32 %v5185, 0.0
      %5196 = vst.msk [vmem:[#allocation3 + $0x80] sm:$0xff] %vm333, %v5186
      %5197 = vst.msk [vmem:[#allocation3 + $0x88] sm:$0xff] %vm333, %v5187
      %5198 = vst.msk [vmem:[#allocation3 + $0x90] sm:$0xff] %vm333, %v5188
      %5199 = vst.msk [vmem:[#allocation3 + $0x98] sm:$0xff] %vm333, %v5189
      %5200 = vst.msk [vmem:[#allocation3 + $0xa0] sm:$0xff] %vm333, %v5190
      %5201 = vst.msk [vmem:[#allocation3 + $0xa8] sm:$0xff] %vm333, %v5191
      %5202 = vst.msk [vmem:[#allocation3 + $0xb0] sm:$0xff] %vm333, %v5192
      %5203 = vst.msk [vmem:[#allocation3 + $0xb8] sm:$0xff] %vm333, %v5193
      %5204 = vst.msk [vmem:[#allocation3 + $0xc0] sm:$0xff] %vm333, %v5194
      %5205 = vst.msk [vmem:[#allocation3 + $0xc8] sm:$0xff] %vm333, %v5195
      %v5206 = vld [vmem:[%s6] sm:$0x1]
      %v5207 = vld [vmem:[#allocation3] sm:$0xff]
      %v5208 = vld [vmem:[#allocation3 + $0x8] sm:$0xff]
      %v5209 = vld [vmem:[#allocation3 + $0x10] sm:$0xff]
      %v5210 = vld [vmem:[#allocation3 + $0x18] sm:$0xff]
      %v5211 = vld [vmem:[#allocation3 + $0x20] sm:$0xff]
      %v5212 = vld [vmem:[#allocation3 + $0x28] sm:$0xff]
      %v5213 = vld [vmem:[#allocation3 + $0x30] sm:$0xff]
      %v5214 = vld [vmem:[#allocation3 + $0x38] sm:$0xff]
      %v5215 = vld [vmem:[#allocation3 + $0x40] sm:$0xff]
      %v5216 = vld [vmem:[#allocation3 + $0x48] sm:$0xff]
      %v5217 = vld [vmem:[#allocation3 + $0x50] sm:$0xff]
      %v5218 = vld [vmem:[#allocation3 + $0x58] sm:$0xff]
      %v5219 = vld [vmem:[#allocation3 + $0x60] sm:$0xff]
      %v5220 = vld [vmem:[#allocation3 + $0x68] sm:$0xff]
      %v5221 = vld [vmem:[#allocation3 + $0x70] sm:$0xff]
      %v5222 = vld [vmem:[#allocation3 + $0x78] sm:$0xff]
      %v5223 = vld [vmem:[%s5] sm:$0xff]
      %v5224 = vld [vmem:[%s5 + $0x8] sm:$0xff]
      %v5225 = vld [vmem:[%s5 + $0x10] sm:$0xff]
      %v5226 = vld [vmem:[%s5 + $0x18] sm:$0xff]
      %v5227 = vld [vmem:[#allocation3 + $0x1] sm:$0xff]
      %v5228 = vld [vmem:[#allocation3 + $0x9] sm:$0xff]
      %v5229 = vld [vmem:[#allocation3 + $0x11] sm:$0xff]
      %v5230 = vld [vmem:[#allocation3 + $0x19] sm:$0xff]
      %v5231 = vld [vmem:[#allocation3 + $0x21] sm:$0xff]
      %v5232 = vld [vmem:[#allocation3 + $0x29] sm:$0xff]
      %v5233 = vld [vmem:[#allocation3 + $0x31] sm:$0xff]
      %v5234 = vld [vmem:[#allocation3 + $0x39] sm:$0xff]
      %v5235 = vld [vmem:[#allocation3 + $0x41] sm:$0xff]
      %v5236 = vld [vmem:[#allocation3 + $0x49] sm:$0xff]
      %v5237 = vld [vmem:[#allocation3 + $0x51] sm:$0xff]
      %v5238 = vld [vmem:[#allocation3 + $0x59] sm:$0xff]
      %v5239 = vld [vmem:[#allocation3 + $0x61] sm:$0xff]
      %v5240 = vld [vmem:[#allocation3 + $0x69] sm:$0xff]
      %v5241 = vld [vmem:[#allocation3 + $0x71] sm:$0xff]
      %v5242 = vld [vmem:[#allocation3 + $0x79] sm:$0xff]
      %s5243 = scalar_lea.vmem %s5, 32
      %v5244 = vld [vmem:[%s5243] sm:$0xff]
      %v5245 = vld [vmem:[%s5243 + $0x8] sm:$0xff]
      %v5246 = vld [vmem:[%s5243 + $0x10] sm:$0xff]
      %v5247 = vld [vmem:[%s5243 + $0x18] sm:$0xff]
      %v5249 = vsel %vm333, %v5227, 0
      %v5252 = vsel %vm333, %v5228, 0
      %v5255 = vsel %vm333, %v5229, 0
      %v5258 = vsel %vm333, %v5230, 0
      %v5261 = vsel %vm333, %v5231, 0
      %v5264 = vsel %vm333, %v5232, 0
      %v5267 = vsel %vm333, %v5233, 0
      %v5270 = vsel %vm333, %v5234, 0
      %v5273 = vsel %vm333, %v5235, 0
      %v5276 = vsel %vm333, %v5236, 0
      %v5279 = vsel %vm333, %v5237, 0
      %v5282 = vsel %vm333, %v5238, 0
      %v5285 = vsel %vm333, %v5239, 0
      %v5288 = vsel %vm333, %v5240, 0
      %v5291 = vsel %vm333, %v5241, 0
      %v5294 = vsel %vm333, %v5242, 0
      %5296 = vmatpush.msra.mxu0 0.0
      %5297 = vmatpush.msra.mxu0 0.0
      %5298 = vmatpush.msra.mxu0 0.0
      %5299 = vmatpush.msra.mxu0 0.0
      %5300 = vmatpush.msra.mxu0 0.0
      %5301 = vmatpush.msra.mxu0 0.0
      %5302 = vmatpush.msra.mxu0 0.0
      %5303 = vmatpush.msra.mxu0 0.0
      %5304 = vmatpush.msra.mxu0 0.0
      %5305 = vmatpush.msra.mxu0 0.0
      %5306 = vmatpush.msra.mxu0 0.0
      %5307 = vmatpush.msra.mxu0 0.0
      %5308 = vmatpush.msra.mxu0 %v5247
      %5309 = vmatpush.msra.mxu0 %v5246
      %5310 = vmatpush.msra.mxu0 %v5245
      %5311 = vmatpush.msra.mxu0 %v5244
      %5312 = vmatmul.f32.gmra.mxu0 %v5249
      %v5313 = vpop.f32.mrf.mxu0
      %v5314 = vadd.f32 0.0, %v5313
      %5315 = vmatmul.f32.gmra.mxu0 %v5252
      %v5316 = vpop.f32.mrf.mxu0
      %v5317 = vadd.f32 0.0, %v5316
      %5318 = vmatmul.f32.gmra.mxu0 %v5255
      %v5319 = vpop.f32.mrf.mxu0
      %v5320 = vadd.f32 0.0, %v5319
      %5321 = vmatmul.f32.gmra.mxu0 %v5258
      %v5322 = vpop.f32.mrf.mxu0
      %v5323 = vadd.f32 0.0, %v5322
      %5324 = vmatmul.f32.gmra.mxu0 %v5261
      %v5325 = vpop.f32.mrf.mxu0
      %v5326 = vadd.f32 0.0, %v5325
      %5327 = vmatmul.f32.gmra.mxu0 %v5264
      %v5328 = vpop.f32.mrf.mxu0
      %v5329 = vadd.f32 0.0, %v5328
      %5330 = vmatmul.f32.gmra.mxu0 %v5267
      %v5331 = vpop.f32.mrf.mxu0
      %v5332 = vadd.f32 0.0, %v5331
      %5333 = vmatmul.f32.gmra.mxu0 %v5270
      %v5334 = vpop.f32.mrf.mxu0
      %v5335 = vadd.f32 0.0, %v5334
      %5336 = vmatmul.f32.gmra.mxu0 %v5273
      %v5337 = vpop.f32.mrf.mxu0
      %v5338 = vadd.f32 0.0, %v5337
      %5339 = vmatmul.f32.gmra.mxu0 %v5276
      %v5340 = vpop.f32.mrf.mxu0
      %v5341 = vadd.f32 0.0, %v5340
      %5342 = vmatmul.f32.gmra.mxu0 %v5279
      %v5343 = vpop.f32.mrf.mxu0
      %v5344 = vadd.f32 0.0, %v5343
      %5345 = vmatmul.f32.gmra.mxu0 %v5282
      %v5346 = vpop.f32.mrf.mxu0
      %v5347 = vadd.f32 0.0, %v5346
      %5348 = vmatmul.f32.gmra.mxu0 %v5285
      %v5349 = vpop.f32.mrf.mxu0
      %v5350 = vadd.f32 0.0, %v5349
      %5351 = vmatmul.f32.gmra.mxu0 %v5288
      %v5352 = vpop.f32.mrf.mxu0
      %v5353 = vadd.f32 0.0, %v5352
      %5354 = vmatmul.f32.gmra.mxu0 %v5291
      %v5355 = vpop.f32.mrf.mxu0
      %v5356 = vadd.f32 0.0, %v5355
      %5357 = vmatmul.f32.gmra.mxu0 %v5294
      %v5358 = vpop.f32.mrf.mxu0
      %v5359 = vadd.f32 0.0, %v5358
      %5360 = vdwg.mxu0
      %v5362 = vsel %vm333, %v5207, 0
      %v5365 = vsel %vm333, %v5208, 0
      %v5368 = vsel %vm333, %v5209, 0
      %v5371 = vsel %vm333, %v5210, 0
      %v5374 = vsel %vm333, %v5211, 0
      %v5377 = vsel %vm333, %v5212, 0
      %v5380 = vsel %vm333, %v5213, 0
      %v5383 = vsel %vm333, %v5214, 0
      %v5386 = vsel %vm333, %v5215, 0
      %v5389 = vsel %vm333, %v5216, 0
      %v5392 = vsel %vm333, %v5217, 0
      %v5395 = vsel %vm333, %v5218, 0
      %v5398 = vsel %vm333, %v5219, 0
      %v5401 = vsel %vm333, %v5220, 0
      %v5404 = vsel %vm333, %v5221, 0
      %v5407 = vsel %vm333, %v5222, 0
      %5409 = vmatpush.msra.mxu0 0.0
      %5410 = vmatpush.msra.mxu0 0.0
      %5411 = vmatpush.msra.mxu0 0.0
      %5412 = vmatpush.msra.mxu0 0.0
      %5413 = vmatpush.msra.mxu0 0.0
      %5414 = vmatpush.msra.mxu0 0.0
      %5415 = vmatpush.msra.mxu0 0.0
      %5416 = vmatpush.msra.mxu0 0.0
      %5417 = vmatpush.msra.mxu0 0.0
      %5418 = vmatpush.msra.mxu0 0.0
      %5419 = vmatpush.msra.mxu0 0.0
      %5420 = vmatpush.msra.mxu0 0.0
      %5421 = vmatpush.msra.mxu0 %v5226
      %5422 = vmatpush.msra.mxu0 %v5225
      %5423 = vmatpush.msra.mxu0 %v5224
      %5424 = vmatpush.msra.mxu0 %v5223
      %5425 = vmatmul.f32.gmra.mxu0 %v5362
      %v5426 = vpop.f32.mrf.mxu0
      %v5427 = vadd.f32 %v5314, %v5426
      %5428 = vmatmul.f32.gmra.mxu0 %v5365
      %v5429 = vpop.f32.mrf.mxu0
      %v5430 = vadd.f32 %v5317, %v5429
      %5431 = vmatmul.f32.gmra.mxu0 %v5368
      %v5432 = vpop.f32.mrf.mxu0
      %v5433 = vadd.f32 %v5320, %v5432
      %5434 = vmatmul.f32.gmra.mxu0 %v5371
      %v5435 = vpop.f32.mrf.mxu0
      %v5436 = vadd.f32 %v5323, %v5435
      %5437 = vmatmul.f32.gmra.mxu0 %v5374
      %v5438 = vpop.f32.mrf.mxu0
      %v5439 = vadd.f32 %v5326, %v5438
      %5440 = vmatmul.f32.gmra.mxu0 %v5377
      %v5441 = vpop.f32.mrf.mxu0
      %v5442 = vadd.f32 %v5329, %v5441
      %5443 = vmatmul.f32.gmra.mxu0 %v5380
      %v5444 = vpop.f32.mrf.mxu0
      %v5445 = vadd.f32 %v5332, %v5444
      %5446 = vmatmul.f32.gmra.mxu0 %v5383
      %v5447 = vpop.f32.mrf.mxu0
      %v5448 = vadd.f32 %v5335, %v5447
      %5449 = vmatmul.f32.gmra.mxu0 %v5386
      %v5450 = vpop.f32.mrf.mxu0
      %v5451 = vadd.f32 %v5338, %v5450
      %5452 = vmatmul.f32.gmra.mxu0 %v5389
      %v5453 = vpop.f32.mrf.mxu0
      %v5454 = vadd.f32 %v5341, %v5453
      %5455 = vmatmul.f32.gmra.mxu0 %v5392
      %v5456 = vpop.f32.mrf.mxu0
      %v5457 = vadd.f32 %v5344, %v5456
      %5458 = vmatmul.f32.gmra.mxu0 %v5395
      %v5459 = vpop.f32.mrf.mxu0
      %v5460 = vadd.f32 %v5347, %v5459
      %5461 = vmatmul.f32.gmra.mxu0 %v5398
      %v5462 = vpop.f32.mrf.mxu0
      %v5463 = vadd.f32 %v5350, %v5462
      %5464 = vmatmul.f32.gmra.mxu0 %v5401
      %v5465 = vpop.f32.mrf.mxu0
      %v5466 = vadd.f32 %v5353, %v5465
      %5467 = vmatmul.f32.gmra.mxu0 %v5404
      %v5468 = vpop.f32.mrf.mxu0
      %v5469 = vadd.f32 %v5356, %v5468
      %5470 = vmatmul.f32.gmra.mxu0 %v5407
      %v5471 = vpop.f32.mrf.mxu0
      %v5472 = vadd.f32 %v5359, %v5471
      %5473 = vdwg.mxu0
      %v5474 = vld [vmem:[#allocation3 + $0x2] sm:$0xff]
      %v5475 = vld [vmem:[#allocation3 + $0xa] sm:$0xff]
      %v5476 = vld [vmem:[#allocation3 + $0x12] sm:$0xff]
      %v5477 = vld [vmem:[#allocation3 + $0x1a] sm:$0xff]
      %v5478 = vld [vmem:[#allocation3 + $0x22] sm:$0xff]
      %v5479 = vld [vmem:[#allocation3 + $0x2a] sm:$0xff]
      %v5480 = vld [vmem:[#allocation3 + $0x32] sm:$0xff]
      %v5481 = vld [vmem:[#allocation3 + $0x3a] sm:$0xff]
      %v5482 = vld [vmem:[#allocation3 + $0x42] sm:$0xff]
      %v5483 = vld [vmem:[#allocation3 + $0x4a] sm:$0xff]
      %v5484 = vld [vmem:[#allocation3 + $0x52] sm:$0xff]
      %v5485 = vld [vmem:[#allocation3 + $0x5a] sm:$0xff]
      %v5486 = vld [vmem:[#allocation3 + $0x62] sm:$0xff]
      %v5487 = vld [vmem:[#allocation3 + $0x6a] sm:$0xff]
      %v5488 = vld [vmem:[#allocation3 + $0x72] sm:$0xff]
      %v5489 = vld [vmem:[#allocation3 + $0x7a] sm:$0xff]
      %s5490 = scalar_lea.vmem %s5, 64
      %v5491 = vld [vmem:[%s5490] sm:$0xff]
      %v5492 = vld [vmem:[%s5490 + $0x8] sm:$0xff]
      %v5493 = vld [vmem:[%s5490 + $0x10] sm:$0xff]
      %v5494 = vld [vmem:[%s5490 + $0x18] sm:$0xff]
      %v5496 = vsel %vm333, %v5474, 0
      %v5499 = vsel %vm333, %v5475, 0
      %v5502 = vsel %vm333, %v5476, 0
      %v5505 = vsel %vm333, %v5477, 0
      %v5508 = vsel %vm333, %v5478, 0
      %v5511 = vsel %vm333, %v5479, 0
      %v5514 = vsel %vm333, %v5480, 0
      %v5517 = vsel %vm333, %v5481, 0
      %v5520 = vsel %vm333, %v5482, 0
      %v5523 = vsel %vm333, %v5483, 0
      %v5526 = vsel %vm333, %v5484, 0
      %v5529 = vsel %vm333, %v5485, 0
      %v5532 = vsel %vm333, %v5486, 0
      %v5535 = vsel %vm333, %v5487, 0
      %v5538 = vsel %vm333, %v5488, 0
      %v5541 = vsel %vm333, %v5489, 0
      %5543 = vmatpush.msra.mxu0 0.0
      %5544 = vmatpush.msra.mxu0 0.0
      %5545 = vmatpush.msra.mxu0 0.0
      %5546 = vmatpush.msra.mxu0 0.0
      %5547 = vmatpush.msra.mxu0 0.0
      %5548 = vmatpush.msra.mxu0 0.0
      %5549 = vmatpush.msra.mxu0 0.0
      %5550 = vmatpush.msra.mxu0 0.0
      %5551 = vmatpush.msra.mxu0 0.0
      %5552 = vmatpush.msra.mxu0 0.0
      %5553 = vmatpush.msra.mxu0 0.0
      %5554 = vmatpush.msra.mxu0 0.0
      %5555 = vmatpush.msra.mxu0 %v5494
      %5556 = vmatpush.msra.mxu0 %v5493
      %5557 = vmatpush.msra.mxu0 %v5492
      %5558 = vmatpush.msra.mxu0 %v5491
      %5559 = vmatmul.f32.gmra.mxu0 %v5496
      %v5560 = vpop.f32.mrf.mxu0
      %v5561 = vadd.f32 0.0, %v5560
      %5562 = vmatmul.f32.gmra.mxu0 %v5499
      %v5563 = vpop.f32.mrf.mxu0
      %v5564 = vadd.f32 0.0, %v5563
      %5565 = vmatmul.f32.gmra.mxu0 %v5502
      %v5566 = vpop.f32.mrf.mxu0
      %v5567 = vadd.f32 0.0, %v5566
      %5568 = vmatmul.f32.gmra.mxu0 %v5505
      %v5569 = vpop.f32.mrf.mxu0
      %v5570 = vadd.f32 0.0, %v5569
      %5571 = vmatmul.f32.gmra.mxu0 %v5508
      %v5572 = vpop.f32.mrf.mxu0
      %v5573 = vadd.f32 0.0, %v5572
      %5574 = vmatmul.f32.gmra.mxu0 %v5511
      %v5575 = vpop.f32.mrf.mxu0
      %v5576 = vadd.f32 0.0, %v5575
      %5577 = vmatmul.f32.gmra.mxu0 %v5514
      %v5578 = vpop.f32.mrf.mxu0
      %v5579 = vadd.f32 0.0, %v5578
      %5580 = vmatmul.f32.gmra.mxu0 %v5517
      %v5581 = vpop.f32.mrf.mxu0
      %v5582 = vadd.f32 0.0, %v5581
      %5583 = vmatmul.f32.gmra.mxu0 %v5520
      %v5584 = vpop.f32.mrf.mxu0
      %v5585 = vadd.f32 0.0, %v5584
      %5586 = vmatmul.f32.gmra.mxu0 %v5523
      %v5587 = vpop.f32.mrf.mxu0
      %v5588 = vadd.f32 0.0, %v5587
      %5589 = vmatmul.f32.gmra.mxu0 %v5526
      %v5590 = vpop.f32.mrf.mxu0
      %v5591 = vadd.f32 0.0, %v5590
      %5592 = vmatmul.f32.gmra.mxu0 %v5529
      %v5593 = vpop.f32.mrf.mxu0
      %v5594 = vadd.f32 0.0, %v5593
      %5595 = vmatmul.f32.gmra.mxu0 %v5532
      %v5596 = vpop.f32.mrf.mxu0
      %v5597 = vadd.f32 0.0, %v5596
      %5598 = vmatmul.f32.gmra.mxu0 %v5535
      %v5599 = vpop.f32.mrf.mxu0
      %v5600 = vadd.f32 0.0, %v5599
      %5601 = vmatmul.f32.gmra.mxu0 %v5538
      %v5602 = vpop.f32.mrf.mxu0
      %v5603 = vadd.f32 0.0, %v5602
      %5604 = vmatmul.f32.gmra.mxu0 %v5541
      %v5605 = vpop.f32.mrf.mxu0
      %v5606 = vadd.f32 0.0, %v5605
      %5607 = vdwg.mxu0
      %v5608 = vadd.f32 %v5427, %v5561
      %v5609 = vadd.f32 %v5430, %v5564
      %v5610 = vadd.f32 %v5433, %v5567
      %v5611 = vadd.f32 %v5436, %v5570
      %v5612 = vadd.f32 %v5439, %v5573
      %v5613 = vadd.f32 %v5442, %v5576
      %v5614 = vadd.f32 %v5445, %v5579
      %v5615 = vadd.f32 %v5448, %v5582
      %v5616 = vadd.f32 %v5451, %v5585
      %v5617 = vadd.f32 %v5454, %v5588
      %v5618 = vadd.f32 %v5457, %v5591
      %v5619 = vadd.f32 %v5460, %v5594
      %v5620 = vadd.f32 %v5463, %v5597
      %v5621 = vadd.f32 %v5466, %v5600
      %v5622 = vadd.f32 %v5469, %v5603
      %v5623 = vadd.f32 %v5472, %v5606
      %v5624 = vld [vmem:[#allocation3 + $0x10] sm:$0xff]
      %v5625 = vld [vmem:[#allocation3 + $0x18] sm:$0xff]
      %v5626 = vld [vmem:[#allocation3 + $0x20] sm:$0xff]
      %v5627 = vld [vmem:[#allocation3 + $0x28] sm:$0xff]
      %v5628 = vld [vmem:[#allocation3 + $0x30] sm:$0xff]
      %v5629 = vld [vmem:[#allocation3 + $0x38] sm:$0xff]
      %v5630 = vld [vmem:[#allocation3 + $0x40] sm:$0xff]
      %v5631 = vld [vmem:[#allocation3 + $0x48] sm:$0xff]
      %v5632 = vld [vmem:[#allocation3 + $0x50] sm:$0xff]
      %v5633 = vld [vmem:[#allocation3 + $0x58] sm:$0xff]
      %v5634 = vld [vmem:[#allocation3 + $0x60] sm:$0xff]
      %v5635 = vld [vmem:[#allocation3 + $0x68] sm:$0xff]
      %v5636 = vld [vmem:[#allocation3 + $0x70] sm:$0xff]
      %v5637 = vld [vmem:[#allocation3 + $0x78] sm:$0xff]
      %v5638 = vld [vmem:[#allocation3 + $0x80] sm:$0xff]
      %v5639 = vld [vmem:[#allocation3 + $0x88] sm:$0xff]
      %s5640 = scalar_lea.vmem %s5, 96
      %v5641 = vld [vmem:[%s5640] sm:$0xff]
      %v5642 = vld [vmem:[%s5640 + $0x8] sm:$0xff]
      %v5643 = vld [vmem:[%s5640 + $0x10] sm:$0xff]
      %v5644 = vld [vmem:[%s5640 + $0x18] sm:$0xff]
      %v5646 = vsel %vm333, %v5624, 0
      %v5649 = vsel %vm333, %v5625, 0
      %v5652 = vsel %vm333, %v5626, 0
      %v5655 = vsel %vm333, %v5627, 0
      %v5658 = vsel %vm333, %v5628, 0
      %v5661 = vsel %vm333, %v5629, 0
      %v5664 = vsel %vm333, %v5630, 0
      %v5667 = vsel %vm333, %v5631, 0
      %v5670 = vsel %vm333, %v5632, 0
      %v5673 = vsel %vm333, %v5633, 0
      %v5676 = vsel %vm333, %v5634, 0
      %v5679 = vsel %vm333, %v5635, 0
      %v5682 = vsel %vm333, %v5636, 0
      %v5685 = vsel %vm333, %v5637, 0
      %v5688 = vsel %vm333, %v5638, 0
      %v5691 = vsel %vm333, %v5639, 0
      %5693 = vmatpush.msra.mxu0 0.0
      %5694 = vmatpush.msra.mxu0 0.0
      %5695 = vmatpush.msra.mxu0 0.0
      %5696 = vmatpush.msra.mxu0 0.0
      %5697 = vmatpush.msra.mxu0 0.0
      %5698 = vmatpush.msra.mxu0 0.0
      %5699 = vmatpush.msra.mxu0 0.0
      %5700 = vmatpush.msra.mxu0 0.0
      %5701 = vmatpush.msra.mxu0 0.0
      %5702 = vmatpush.msra.mxu0 0.0
      %5703 = vmatpush.msra.mxu0 0.0
      %5704 = vmatpush.msra.mxu0 0.0
      %5705 = vmatpush.msra.mxu0 %v5644
      %5706 = vmatpush.msra.mxu0 %v5643
      %5707 = vmatpush.msra.mxu0 %v5642
      %5708 = vmatpush.msra.mxu0 %v5641
      %5709 = vmatmul.f32.gmra.mxu0 %v5646
      %v5710 = vpop.f32.mrf.mxu0
      %v5711 = vadd.f32 0.0, %v5710
      %5712 = vmatmul.f32.gmra.mxu0 %v5649
      %v5713 = vpop.f32.mrf.mxu0
      %v5714 = vadd.f32 0.0, %v5713
      %5715 = vmatmul.f32.gmra.mxu0 %v5652
      %v5716 = vpop.f32.mrf.mxu0
      %v5717 = vadd.f32 0.0, %v5716
      %5718 = vmatmul.f32.gmra.mxu0 %v5655
      %v5719 = vpop.f32.mrf.mxu0
      %v5720 = vadd.f32 0.0, %v5719
      %5721 = vmatmul.f32.gmra.mxu0 %v5658
      %v5722 = vpop.f32.mrf.mxu0
      %v5723 = vadd.f32 0.0, %v5722
      %5724 = vmatmul.f32.gmra.mxu0 %v5661
      %v5725 = vpop.f32.mrf.mxu0
      %v5726 = vadd.f32 0.0, %v5725
      %5727 = vmatmul.f32.gmra.mxu0 %v5664
      %v5728 = vpop.f32.mrf.mxu0
      %v5729 = vadd.f32 0.0, %v5728
      %5730 = vmatmul.f32.gmra.mxu0 %v5667
      %v5731 = vpop.f32.mrf.mxu0
      %v5732 = vadd.f32 0.0, %v5731
      %5733 = vmatmul.f32.gmra.mxu0 %v5670
      %v5734 = vpop.f32.mrf.mxu0
      %v5735 = vadd.f32 0.0, %v5734
      %5736 = vmatmul.f32.gmra.mxu0 %v5673
      %v5737 = vpop.f32.mrf.mxu0
      %v5738 = vadd.f32 0.0, %v5737
      %5739 = vmatmul.f32.gmra.mxu0 %v5676
      %v5740 = vpop.f32.mrf.mxu0
      %v5741 = vadd.f32 0.0, %v5740
      %5742 = vmatmul.f32.gmra.mxu0 %v5679
      %v5743 = vpop.f32.mrf.mxu0
      %v5744 = vadd.f32 0.0, %v5743
      %5745 = vmatmul.f32.gmra.mxu0 %v5682
      %v5746 = vpop.f32.mrf.mxu0
      %v5747 = vadd.f32 0.0, %v5746
      %5748 = vmatmul.f32.gmra.mxu0 %v5685
      %v5749 = vpop.f32.mrf.mxu0
      %v5750 = vadd.f32 0.0, %v5749
      %5751 = vmatmul.f32.gmra.mxu0 %v5688
      %v5752 = vpop.f32.mrf.mxu0
      %v5753 = vadd.f32 0.0, %v5752
      %5754 = vmatmul.f32.gmra.mxu0 %v5691
      %v5755 = vpop.f32.mrf.mxu0
      %v5756 = vadd.f32 0.0, %v5755
      %5757 = vdwg.mxu0
      %v5758 = vadd.f32 %v5608, %v5711
      %v5759 = vadd.f32 %v5609, %v5714
      %v5760 = vadd.f32 %v5610, %v5717
      %v5761 = vadd.f32 %v5611, %v5720
      %v5762 = vadd.f32 %v5612, %v5723
      %v5763 = vadd.f32 %v5613, %v5726
      %v5764 = vadd.f32 %v5614, %v5729
      %v5765 = vadd.f32 %v5615, %v5732
      %v5766 = vadd.f32 %v5616, %v5735
      %v5767 = vadd.f32 %v5617, %v5738
      %v5768 = vadd.f32 %v5618, %v5741
      %v5769 = vadd.f32 %v5619, %v5744
      %v5770 = vadd.f32 %v5620, %v5747
      %v5771 = vadd.f32 %v5621, %v5750
      %v5772 = vadd.f32 %v5622, %v5753
      %v5773 = vadd.f32 %v5623, %v5756
      %v5774 = vld [vmem:[#allocation3 + $0x11] sm:$0xff]
      %v5775 = vld [vmem:[#allocation3 + $0x19] sm:$0xff]
      %v5776 = vld [vmem:[#allocation3 + $0x21] sm:$0xff]
      %v5777 = vld [vmem:[#allocation3 + $0x29] sm:$0xff]
      %v5778 = vld [vmem:[#allocation3 + $0x31] sm:$0xff]
      %v5779 = vld [vmem:[#allocation3 + $0x39] sm:$0xff]
      %v5780 = vld [vmem:[#allocation3 + $0x41] sm:$0xff]
      %v5781 = vld [vmem:[#allocation3 + $0x49] sm:$0xff]
      %v5782 = vld [vmem:[#allocation3 + $0x51] sm:$0xff]
      %v5783 = vld [vmem:[#allocation3 + $0x59] sm:$0xff]
      %v5784 = vld [vmem:[#allocation3 + $0x61] sm:$0xff]
      %v5785 = vld [vmem:[#allocation3 + $0x69] sm:$0xff]
      %v5786 = vld [vmem:[#allocation3 + $0x71] sm:$0xff]
      %v5787 = vld [vmem:[#allocation3 + $0x79] sm:$0xff]
      %v5788 = vld [vmem:[#allocation3 + $0x81] sm:$0xff]
      %v5789 = vld [vmem:[#allocation3 + $0x89] sm:$0xff]
      %s5790 = scalar_lea.vmem %s5, 128
      %v5791 = vld [vmem:[%s5790] sm:$0xff]
      %v5792 = vld [vmem:[%s5790 + $0x8] sm:$0xff]
      %v5793 = vld [vmem:[%s5790 + $0x10] sm:$0xff]
      %v5794 = vld [vmem:[%s5790 + $0x18] sm:$0xff]
      %v5796 = vsel %vm333, %v5774, 0
      %v5799 = vsel %vm333, %v5775, 0
      %v5802 = vsel %vm333, %v5776, 0
      %v5805 = vsel %vm333, %v5777, 0
      %v5808 = vsel %vm333, %v5778, 0
      %v5811 = vsel %vm333, %v5779, 0
      %v5814 = vsel %vm333, %v5780, 0
      %v5817 = vsel %vm333, %v5781, 0
      %v5820 = vsel %vm333, %v5782, 0
      %v5823 = vsel %vm333, %v5783, 0
      %v5826 = vsel %vm333, %v5784, 0
      %v5829 = vsel %vm333, %v5785, 0
      %v5832 = vsel %vm333, %v5786, 0
      %v5835 = vsel %vm333, %v5787, 0
      %v5838 = vsel %vm333, %v5788, 0
      %v5841 = vsel %vm333, %v5789, 0
      %5843 = vmatpush.msra.mxu0 0.0
      %5844 = vmatpush.msra.mxu0 0.0
      %5845 = vmatpush.msra.mxu0 0.0
      %5846 = vmatpush.msra.mxu0 0.0
      %5847 = vmatpush.msra.mxu0 0.0
      %5848 = vmatpush.msra.mxu0 0.0
      %5849 = vmatpush.msra.mxu0 0.0
      %5850 = vmatpush.msra.mxu0 0.0
      %5851 = vmatpush.msra.mxu0 0.0
      %5852 = vmatpush.msra.mxu0 0.0
      %5853 = vmatpush.msra.mxu0 0.0
      %5854 = vmatpush.msra.mxu0 0.0
      %5855 = vmatpush.msra.mxu0 %v5794
      %5856 = vmatpush.msra.mxu0 %v5793
      %5857 = vmatpush.msra.mxu0 %v5792
      %5858 = vmatpush.msra.mxu0 %v5791
      %5859 = vmatmul.f32.gmra.mxu0 %v5796
      %v5860 = vpop.f32.mrf.mxu0
      %v5861 = vadd.f32 0.0, %v5860
      %5862 = vmatmul.f32.gmra.mxu0 %v5799
      %v5863 = vpop.f32.mrf.mxu0
      %v5864 = vadd.f32 0.0, %v5863
      %5865 = vmatmul.f32.gmra.mxu0 %v5802
      %v5866 = vpop.f32.mrf.mxu0
      %v5867 = vadd.f32 0.0, %v5866
      %5868 = vmatmul.f32.gmra.mxu0 %v5805
      %v5869 = vpop.f32.mrf.mxu0
      %v5870 = vadd.f32 0.0, %v5869
      %5871 = vmatmul.f32.gmra.mxu0 %v5808
      %v5872 = vpop.f32.mrf.mxu0
      %v5873 = vadd.f32 0.0, %v5872
      %5874 = vmatmul.f32.gmra.mxu0 %v5811
      %v5875 = vpop.f32.mrf.mxu0
      %v5876 = vadd.f32 0.0, %v5875
      %5877 = vmatmul.f32.gmra.mxu0 %v5814
      %v5878 = vpop.f32.mrf.mxu0
      %v5879 = vadd.f32 0.0, %v5878
      %5880 = vmatmul.f32.gmra.mxu0 %v5817
      %v5881 = vpop.f32.mrf.mxu0
      %v5882 = vadd.f32 0.0, %v5881
      %5883 = vmatmul.f32.gmra.mxu0 %v5820
      %v5884 = vpop.f32.mrf.mxu0
      %v5885 = vadd.f32 0.0, %v5884
      %5886 = vmatmul.f32.gmra.mxu0 %v5823
      %v5887 = vpop.f32.mrf.mxu0
      %v5888 = vadd.f32 0.0, %v5887
      %5889 = vmatmul.f32.gmra.mxu0 %v5826
      %v5890 = vpop.f32.mrf.mxu0
      %v5891 = vadd.f32 0.0, %v5890
      %5892 = vmatmul.f32.gmra.mxu0 %v5829
      %v5893 = vpop.f32.mrf.mxu0
      %v5894 = vadd.f32 0.0, %v5893
      %5895 = vmatmul.f32.gmra.mxu0 %v5832
      %v5896 = vpop.f32.mrf.mxu0
      %v5897 = vadd.f32 0.0, %v5896
      %5898 = vmatmul.f32.gmra.mxu0 %v5835
      %v5899 = vpop.f32.mrf.mxu0
      %v5900 = vadd.f32 0.0, %v5899
      %5901 = vmatmul.f32.gmra.mxu0 %v5838
      %v5902 = vpop.f32.mrf.mxu0
      %v5903 = vadd.f32 0.0, %v5902
      %5904 = vmatmul.f32.gmra.mxu0 %v5841
      %v5905 = vpop.f32.mrf.mxu0
      %v5906 = vadd.f32 0.0, %v5905
      %5907 = vdwg.mxu0
      %v5908 = vadd.f32 %v5758, %v5861
      %v5909 = vadd.f32 %v5759, %v5864
      %v5910 = vadd.f32 %v5760, %v5867
      %v5911 = vadd.f32 %v5761, %v5870
      %v5912 = vadd.f32 %v5762, %v5873
      %v5913 = vadd.f32 %v5763, %v5876
      %v5914 = vadd.f32 %v5764, %v5879
      %v5915 = vadd.f32 %v5765, %v5882
      %v5916 = vadd.f32 %v5766, %v5885
      %v5917 = vadd.f32 %v5767, %v5888
      %v5918 = vadd.f32 %v5768, %v5891
      %v5919 = vadd.f32 %v5769, %v5894
      %v5920 = vadd.f32 %v5770, %v5897
      %v5921 = vadd.f32 %v5771, %v5900
      %v5922 = vadd.f32 %v5772, %v5903
      %v5923 = vadd.f32 %v5773, %v5906
      %v5924 = vld [vmem:[#allocation3 + $0x12] sm:$0xff]
      %v5925 = vld [vmem:[#allocation3 + $0x1a] sm:$0xff]
      %v5926 = vld [vmem:[#allocation3 + $0x22] sm:$0xff]
      %v5927 = vld [vmem:[#allocation3 + $0x2a] sm:$0xff]
      %v5928 = vld [vmem:[#allocation3 + $0x32] sm:$0xff]
      %v5929 = vld [vmem:[#allocation3 + $0x3a] sm:$0xff]
      %v5930 = vld [vmem:[#allocation3 + $0x42] sm:$0xff]
      %v5931 = vld [vmem:[#allocation3 + $0x4a] sm:$0xff]
      %v5932 = vld [vmem:[#allocation3 + $0x52] sm:$0xff]
      %v5933 = vld [vmem:[#allocation3 + $0x5a] sm:$0xff]
      %v5934 = vld [vmem:[#allocation3 + $0x62] sm:$0xff]
      %v5935 = vld [vmem:[#allocation3 + $0x6a] sm:$0xff]
      %v5936 = vld [vmem:[#allocation3 + $0x72] sm:$0xff]
      %v5937 = vld [vmem:[#allocation3 + $0x7a] sm:$0xff]
      %v5938 = vld [vmem:[#allocation3 + $0x82] sm:$0xff]
      %v5939 = vld [vmem:[#allocation3 + $0x8a] sm:$0xff]
      %s5940 = scalar_lea.vmem %s5, 160
      %v5941 = vld [vmem:[%s5940] sm:$0xff]
      %v5942 = vld [vmem:[%s5940 + $0x8] sm:$0xff]
      %v5943 = vld [vmem:[%s5940 + $0x10] sm:$0xff]
      %v5944 = vld [vmem:[%s5940 + $0x18] sm:$0xff]
      %v5946 = vsel %vm333, %v5924, 0
      %v5949 = vsel %vm333, %v5925, 0
      %v5952 = vsel %vm333, %v5926, 0
      %v5955 = vsel %vm333, %v5927, 0
      %v5958 = vsel %vm333, %v5928, 0
      %v5961 = vsel %vm333, %v5929, 0
      %v5964 = vsel %vm333, %v5930, 0
      %v5967 = vsel %vm333, %v5931, 0
      %v5970 = vsel %vm333, %v5932, 0
      %v5973 = vsel %vm333, %v5933, 0
      %v5976 = vsel %vm333, %v5934, 0
      %v5979 = vsel %vm333, %v5935, 0
      %v5982 = vsel %vm333, %v5936, 0
      %v5985 = vsel %vm333, %v5937, 0
      %v5988 = vsel %vm333, %v5938, 0
      %v5991 = vsel %vm333, %v5939, 0
      %5993 = vmatpush.msra.mxu0 0.0
      %5994 = vmatpush.msra.mxu0 0.0
      %5995 = vmatpush.msra.mxu0 0.0
      %5996 = vmatpush.msra.mxu0 0.0
      %5997 = vmatpush.msra.mxu0 0.0
      %5998 = vmatpush.msra.mxu0 0.0
      %5999 = vmatpush.msra.mxu0 0.0
      %6000 = vmatpush.msra.mxu0 0.0
      %6001 = vmatpush.msra.mxu0 0.0
      %6002 = vmatpush.msra.mxu0 0.0
      %6003 = vmatpush.msra.mxu0 0.0
      %6004 = vmatpush.msra.mxu0 0.0
      %6005 = vmatpush.msra.mxu0 %v5944
      %6006 = vmatpush.msra.mxu0 %v5943
      %6007 = vmatpush.msra.mxu0 %v5942
      %6008 = vmatpush.msra.mxu0 %v5941
      %6009 = vmatmul.f32.gmra.mxu0 %v5946
      %v6010 = vpop.f32.mrf.mxu0
      %v6011 = vadd.f32 0.0, %v6010
      %6012 = vmatmul.f32.gmra.mxu0 %v5949
      %v6013 = vpop.f32.mrf.mxu0
      %v6014 = vadd.f32 0.0, %v6013
      %6015 = vmatmul.f32.gmra.mxu0 %v5952
      %v6016 = vpop.f32.mrf.mxu0
      %v6017 = vadd.f32 0.0, %v6016
      %6018 = vmatmul.f32.gmra.mxu0 %v5955
      %v6019 = vpop.f32.mrf.mxu0
      %v6020 = vadd.f32 0.0, %v6019
      %6021 = vmatmul.f32.gmra.mxu0 %v5958
      %v6022 = vpop.f32.mrf.mxu0
      %v6023 = vadd.f32 0.0, %v6022
      %6024 = vmatmul.f32.gmra.mxu0 %v5961
      %v6025 = vpop.f32.mrf.mxu0
      %v6026 = vadd.f32 0.0, %v6025
      %6027 = vmatmul.f32.gmra.mxu0 %v5964
      %v6028 = vpop.f32.mrf.mxu0
      %v6029 = vadd.f32 0.0, %v6028
      %6030 = vmatmul.f32.gmra.mxu0 %v5967
      %v6031 = vpop.f32.mrf.mxu0
      %v6032 = vadd.f32 0.0, %v6031
      %6033 = vmatmul.f32.gmra.mxu0 %v5970
      %v6034 = vpop.f32.mrf.mxu0
      %v6035 = vadd.f32 0.0, %v6034
      %6036 = vmatmul.f32.gmra.mxu0 %v5973
      %v6037 = vpop.f32.mrf.mxu0
      %v6038 = vadd.f32 0.0, %v6037
      %6039 = vmatmul.f32.gmra.mxu0 %v5976
      %v6040 = vpop.f32.mrf.mxu0
      %v6041 = vadd.f32 0.0, %v6040
      %6042 = vmatmul.f32.gmra.mxu0 %v5979
      %v6043 = vpop.f32.mrf.mxu0
      %v6044 = vadd.f32 0.0, %v6043
      %6045 = vmatmul.f32.gmra.mxu0 %v5982
      %v6046 = vpop.f32.mrf.mxu0
      %v6047 = vadd.f32 0.0, %v6046
      %6048 = vmatmul.f32.gmra.mxu0 %v5985
      %v6049 = vpop.f32.mrf.mxu0
      %v6050 = vadd.f32 0.0, %v6049
      %6051 = vmatmul.f32.gmra.mxu0 %v5988
      %v6052 = vpop.f32.mrf.mxu0
      %v6053 = vadd.f32 0.0, %v6052
      %6054 = vmatmul.f32.gmra.mxu0 %v5991
      %v6055 = vpop.f32.mrf.mxu0
      %v6056 = vadd.f32 0.0, %v6055
      %6057 = vdwg.mxu0
      %v6058 = vadd.f32 %v5908, %v6011
      %v6059 = vadd.f32 %v5909, %v6014
      %v6060 = vadd.f32 %v5910, %v6017
      %v6061 = vadd.f32 %v5911, %v6020
      %v6062 = vadd.f32 %v5912, %v6023
      %v6063 = vadd.f32 %v5913, %v6026
      %v6064 = vadd.f32 %v5914, %v6029
      %v6065 = vadd.f32 %v5915, %v6032
      %v6066 = vadd.f32 %v5916, %v6035
      %v6067 = vadd.f32 %v5917, %v6038
      %v6068 = vadd.f32 %v5918, %v6041
      %v6069 = vadd.f32 %v5919, %v6044
      %v6070 = vadd.f32 %v5920, %v6047
      %v6071 = vadd.f32 %v5921, %v6050
      %v6072 = vadd.f32 %v5922, %v6053
      %v6073 = vadd.f32 %v5923, %v6056
      %v6074 = vld [vmem:[#allocation3 + $0x20] sm:$0xff]
      %v6075 = vld [vmem:[#allocation3 + $0x28] sm:$0xff]
      %v6076 = vld [vmem:[#allocation3 + $0x30] sm:$0xff]
      %v6077 = vld [vmem:[#allocation3 + $0x38] sm:$0xff]
      %v6078 = vld [vmem:[#allocation3 + $0x40] sm:$0xff]
      %v6079 = vld [vmem:[#allocation3 + $0x48] sm:$0xff]
      %v6080 = vld [vmem:[#allocation3 + $0x50] sm:$0xff]
      %v6081 = vld [vmem:[#allocation3 + $0x58] sm:$0xff]
      %v6082 = vld [vmem:[#allocation3 + $0x60] sm:$0xff]
      %v6083 = vld [vmem:[#allocation3 + $0x68] sm:$0xff]
      %v6084 = vld [vmem:[#allocation3 + $0x70] sm:$0xff]
      %v6085 = vld [vmem:[#allocation3 + $0x78] sm:$0xff]
      %v6086 = vld [vmem:[#allocation3 + $0x80] sm:$0xff]
      %v6087 = vld [vmem:[#allocation3 + $0x88] sm:$0xff]
      %v6088 = vld [vmem:[#allocation3 + $0x90] sm:$0xff]
      %v6089 = vld [vmem:[#allocation3 + $0x98] sm:$0xff]
      %s6090 = scalar_lea.vmem %s5, 192
      %v6091 = vld [vmem:[%s6090] sm:$0xff]
      %v6092 = vld [vmem:[%s6090 + $0x8] sm:$0xff]
      %v6093 = vld [vmem:[%s6090 + $0x10] sm:$0xff]
      %v6094 = vld [vmem:[%s6090 + $0x18] sm:$0xff]
      %v6096 = vsel %vm333, %v6074, 0
      %v6099 = vsel %vm333, %v6075, 0
      %v6102 = vsel %vm333, %v6076, 0
      %v6105 = vsel %vm333, %v6077, 0
      %v6108 = vsel %vm333, %v6078, 0
      %v6111 = vsel %vm333, %v6079, 0
      %v6114 = vsel %vm333, %v6080, 0
      %v6117 = vsel %vm333, %v6081, 0
      %v6120 = vsel %vm333, %v6082, 0
      %v6123 = vsel %vm333, %v6083, 0
      %v6126 = vsel %vm333, %v6084, 0
      %v6129 = vsel %vm333, %v6085, 0
      %v6132 = vsel %vm333, %v6086, 0
      %v6135 = vsel %vm333, %v6087, 0
      %v6138 = vsel %vm333, %v6088, 0
      %v6141 = vsel %vm333, %v6089, 0
      %6143 = vmatpush.msra.mxu0 0.0
      %6144 = vmatpush.msra.mxu0 0.0
      %6145 = vmatpush.msra.mxu0 0.0
      %6146 = vmatpush.msra.mxu0 0.0
      %6147 = vmatpush.msra.mxu0 0.0
      %6148 = vmatpush.msra.mxu0 0.0
      %6149 = vmatpush.msra.mxu0 0.0
      %6150 = vmatpush.msra.mxu0 0.0
      %6151 = vmatpush.msra.mxu0 0.0
      %6152 = vmatpush.msra.mxu0 0.0
      %6153 = vmatpush.msra.mxu0 0.0
      %6154 = vmatpush.msra.mxu0 0.0
      %6155 = vmatpush.msra.mxu0 %v6094
      %6156 = vmatpush.msra.mxu0 %v6093
      %6157 = vmatpush.msra.mxu0 %v6092
      %6158 = vmatpush.msra.mxu0 %v6091
      %6159 = vmatmul.f32.gmra.mxu0 %v6096
      %v6160 = vpop.f32.mrf.mxu0
      %v6161 = vadd.f32 0.0, %v6160
      %6162 = vmatmul.f32.gmra.mxu0 %v6099
      %v6163 = vpop.f32.mrf.mxu0
      %v6164 = vadd.f32 0.0, %v6163
      %6165 = vmatmul.f32.gmra.mxu0 %v6102
      %v6166 = vpop.f32.mrf.mxu0
      %v6167 = vadd.f32 0.0, %v6166
      %6168 = vmatmul.f32.gmra.mxu0 %v6105
      %v6169 = vpop.f32.mrf.mxu0
      %v6170 = vadd.f32 0.0, %v6169
      %6171 = vmatmul.f32.gmra.mxu0 %v6108
      %v6172 = vpop.f32.mrf.mxu0
      %v6173 = vadd.f32 0.0, %v6172
      %6174 = vmatmul.f32.gmra.mxu0 %v6111
      %v6175 = vpop.f32.mrf.mxu0
      %v6176 = vadd.f32 0.0, %v6175
      %6177 = vmatmul.f32.gmra.mxu0 %v6114
      %v6178 = vpop.f32.mrf.mxu0
      %v6179 = vadd.f32 0.0, %v6178
      %6180 = vmatmul.f32.gmra.mxu0 %v6117
      %v6181 = vpop.f32.mrf.mxu0
      %v6182 = vadd.f32 0.0, %v6181
      %6183 = vmatmul.f32.gmra.mxu0 %v6120
      %v6184 = vpop.f32.mrf.mxu0
      %v6185 = vadd.f32 0.0, %v6184
      %6186 = vmatmul.f32.gmra.mxu0 %v6123
      %v6187 = vpop.f32.mrf.mxu0
      %v6188 = vadd.f32 0.0, %v6187
      %6189 = vmatmul.f32.gmra.mxu0 %v6126
      %v6190 = vpop.f32.mrf.mxu0
      %v6191 = vadd.f32 0.0, %v6190
      %6192 = vmatmul.f32.gmra.mxu0 %v6129
      %v6193 = vpop.f32.mrf.mxu0
      %v6194 = vadd.f32 0.0, %v6193
      %6195 = vmatmul.f32.gmra.mxu0 %v6132
      %v6196 = vpop.f32.mrf.mxu0
      %v6197 = vadd.f32 0.0, %v6196
      %6198 = vmatmul.f32.gmra.mxu0 %v6135
      %v6199 = vpop.f32.mrf.mxu0
      %v6200 = vadd.f32 0.0, %v6199
      %6201 = vmatmul.f32.gmra.mxu0 %v6138
      %v6202 = vpop.f32.mrf.mxu0
      %v6203 = vadd.f32 0.0, %v6202
      %6204 = vmatmul.f32.gmra.mxu0 %v6141
      %v6205 = vpop.f32.mrf.mxu0
      %v6206 = vadd.f32 0.0, %v6205
      %6207 = vdwg.mxu0
      %v6208 = vadd.f32 %v6058, %v6161
      %v6209 = vadd.f32 %v6059, %v6164
      %v6210 = vadd.f32 %v6060, %v6167
      %v6211 = vadd.f32 %v6061, %v6170
      %v6212 = vadd.f32 %v6062, %v6173
      %v6213 = vadd.f32 %v6063, %v6176
      %v6214 = vadd.f32 %v6064, %v6179
      %v6215 = vadd.f32 %v6065, %v6182
      %v6216 = vadd.f32 %v6066, %v6185
      %v6217 = vadd.f32 %v6067, %v6188
      %v6218 = vadd.f32 %v6068, %v6191
      %v6219 = vadd.f32 %v6069, %v6194
      %v6220 = vadd.f32 %v6070, %v6197
      %v6221 = vadd.f32 %v6071, %v6200
      %v6222 = vadd.f32 %v6072, %v6203
      %v6223 = vadd.f32 %v6073, %v6206
      %v6224 = vld [vmem:[#allocation3 + $0x21] sm:$0xff]
      %v6225 = vld [vmem:[#allocation3 + $0x29] sm:$0xff]
      %v6226 = vld [vmem:[#allocation3 + $0x31] sm:$0xff]
      %v6227 = vld [vmem:[#allocation3 + $0x39] sm:$0xff]
      %v6228 = vld [vmem:[#allocation3 + $0x41] sm:$0xff]
      %v6229 = vld [vmem:[#allocation3 + $0x49] sm:$0xff]
      %v6230 = vld [vmem:[#allocation3 + $0x51] sm:$0xff]
      %v6231 = vld [vmem:[#allocation3 + $0x59] sm:$0xff]
      %v6232 = vld [vmem:[#allocation3 + $0x61] sm:$0xff]
      %v6233 = vld [vmem:[#allocation3 + $0x69] sm:$0xff]
      %v6234 = vld [vmem:[#allocation3 + $0x71] sm:$0xff]
      %v6235 = vld [vmem:[#allocation3 + $0x79] sm:$0xff]
      %v6236 = vld [vmem:[#allocation3 + $0x81] sm:$0xff]
      %v6237 = vld [vmem:[#allocation3 + $0x89] sm:$0xff]
      %v6238 = vld [vmem:[#allocation3 + $0x91] sm:$0xff]
      %v6239 = vld [vmem:[#allocation3 + $0x99] sm:$0xff]
      %s6240 = scalar_lea.vmem %s5, 224
      %v6241 = vld [vmem:[%s6240] sm:$0xff]
      %v6242 = vld [vmem:[%s6240 + $0x8] sm:$0xff]
      %v6243 = vld [vmem:[%s6240 + $0x10] sm:$0xff]
      %v6244 = vld [vmem:[%s6240 + $0x18] sm:$0xff]
      %v6246 = vsel %vm333, %v6224, 0
      %v6249 = vsel %vm333, %v6225, 0
      %v6252 = vsel %vm333, %v6226, 0
      %v6255 = vsel %vm333, %v6227, 0
      %v6258 = vsel %vm333, %v6228, 0
      %v6261 = vsel %vm333, %v6229, 0
      %v6264 = vsel %vm333, %v6230, 0
      %v6267 = vsel %vm333, %v6231, 0
      %v6270 = vsel %vm333, %v6232, 0
      %v6273 = vsel %vm333, %v6233, 0
      %v6276 = vsel %vm333, %v6234, 0
      %v6279 = vsel %vm333, %v6235, 0
      %v6282 = vsel %vm333, %v6236, 0
      %v6285 = vsel %vm333, %v6237, 0
      %v6288 = vsel %vm333, %v6238, 0
      %v6291 = vsel %vm333, %v6239, 0
      %6293 = vmatpush.msra.mxu0 0.0
      %6294 = vmatpush.msra.mxu0 0.0
      %6295 = vmatpush.msra.mxu0 0.0
      %6296 = vmatpush.msra.mxu0 0.0
      %6297 = vmatpush.msra.mxu0 0.0
      %6298 = vmatpush.msra.mxu0 0.0
      %6299 = vmatpush.msra.mxu0 0.0
      %6300 = vmatpush.msra.mxu0 0.0
      %6301 = vmatpush.msra.mxu0 0.0
      %6302 = vmatpush.msra.mxu0 0.0
      %6303 = vmatpush.msra.mxu0 0.0
      %6304 = vmatpush.msra.mxu0 0.0
      %6305 = vmatpush.msra.mxu0 %v6244
      %6306 = vmatpush.msra.mxu0 %v6243
      %6307 = vmatpush.msra.mxu0 %v6242
      %6308 = vmatpush.msra.mxu0 %v6241
      %6309 = vmatmul.f32.gmra.mxu0 %v6246
      %v6310 = vpop.f32.mrf.mxu0
      %v6311 = vadd.f32 0.0, %v6310
      %6312 = vmatmul.f32.gmra.mxu0 %v6249
      %v6313 = vpop.f32.mrf.mxu0
      %v6314 = vadd.f32 0.0, %v6313
      %6315 = vmatmul.f32.gmra.mxu0 %v6252
      %v6316 = vpop.f32.mrf.mxu0
      %v6317 = vadd.f32 0.0, %v6316
      %6318 = vmatmul.f32.gmra.mxu0 %v6255
      %v6319 = vpop.f32.mrf.mxu0
      %v6320 = vadd.f32 0.0, %v6319
      %6321 = vmatmul.f32.gmra.mxu0 %v6258
      %v6322 = vpop.f32.mrf.mxu0
      %v6323 = vadd.f32 0.0, %v6322
      %6324 = vmatmul.f32.gmra.mxu0 %v6261
      %v6325 = vpop.f32.mrf.mxu0
      %v6326 = vadd.f32 0.0, %v6325
      %6327 = vmatmul.f32.gmra.mxu0 %v6264
      %v6328 = vpop.f32.mrf.mxu0
      %v6329 = vadd.f32 0.0, %v6328
      %6330 = vmatmul.f32.gmra.mxu0 %v6267
      %v6331 = vpop.f32.mrf.mxu0
      %v6332 = vadd.f32 0.0, %v6331
      %6333 = vmatmul.f32.gmra.mxu0 %v6270
      %v6334 = vpop.f32.mrf.mxu0
      %v6335 = vadd.f32 0.0, %v6334
      %6336 = vmatmul.f32.gmra.mxu0 %v6273
      %v6337 = vpop.f32.mrf.mxu0
      %v6338 = vadd.f32 0.0, %v6337
      %6339 = vmatmul.f32.gmra.mxu0 %v6276
      %v6340 = vpop.f32.mrf.mxu0
      %v6341 = vadd.f32 0.0, %v6340
      %6342 = vmatmul.f32.gmra.mxu0 %v6279
      %v6343 = vpop.f32.mrf.mxu0
      %v6344 = vadd.f32 0.0, %v6343
      %6345 = vmatmul.f32.gmra.mxu0 %v6282
      %v6346 = vpop.f32.mrf.mxu0
      %v6347 = vadd.f32 0.0, %v6346
      %6348 = vmatmul.f32.gmra.mxu0 %v6285
      %v6349 = vpop.f32.mrf.mxu0
      %v6350 = vadd.f32 0.0, %v6349
      %6351 = vmatmul.f32.gmra.mxu0 %v6288
      %v6352 = vpop.f32.mrf.mxu0
      %v6353 = vadd.f32 0.0, %v6352
      %6354 = vmatmul.f32.gmra.mxu0 %v6291
      %v6355 = vpop.f32.mrf.mxu0
      %v6356 = vadd.f32 0.0, %v6355
      %6357 = vdwg.mxu0
      %v6358 = vadd.f32 %v6208, %v6311
      %v6359 = vadd.f32 %v6209, %v6314
      %v6360 = vadd.f32 %v6210, %v6317
      %v6361 = vadd.f32 %v6211, %v6320
      %v6362 = vadd.f32 %v6212, %v6323
      %v6363 = vadd.f32 %v6213, %v6326
      %v6364 = vadd.f32 %v6214, %v6329
      %v6365 = vadd.f32 %v6215, %v6332
      %v6366 = vadd.f32 %v6216, %v6335
      %v6367 = vadd.f32 %v6217, %v6338
      %v6368 = vadd.f32 %v6218, %v6341
      %v6369 = vadd.f32 %v6219, %v6344
      %v6370 = vadd.f32 %v6220, %v6347
      %v6371 = vadd.f32 %v6221, %v6350
      %v6372 = vadd.f32 %v6222, %v6353
      %v6373 = vadd.f32 %v6223, %v6356
      %v6374 = vld [vmem:[#allocation3 + $0x22] sm:$0xff]
      %v6375 = vld [vmem:[#allocation3 + $0x2a] sm:$0xff]
      %v6376 = vld [vmem:[#allocation3 + $0x32] sm:$0xff]
      %v6377 = vld [vmem:[#allocation3 + $0x3a] sm:$0xff]
      %v6378 = vld [vmem:[#allocation3 + $0x42] sm:$0xff]
      %v6379 = vld [vmem:[#allocation3 + $0x4a] sm:$0xff]
      %v6380 = vld [vmem:[#allocation3 + $0x52] sm:$0xff]
      %v6381 = vld [vmem:[#allocation3 + $0x5a] sm:$0xff]
      %v6382 = vld [vmem:[#allocation3 + $0x62] sm:$0xff]
      %v6383 = vld [vmem:[#allocation3 + $0x6a] sm:$0xff]
      %v6384 = vld [vmem:[#allocation3 + $0x72] sm:$0xff]
      %v6385 = vld [vmem:[#allocation3 + $0x7a] sm:$0xff]
      %v6386 = vld [vmem:[#allocation3 + $0x82] sm:$0xff]
      %v6387 = vld [vmem:[#allocation3 + $0x8a] sm:$0xff]
      %v6388 = vld [vmem:[#allocation3 + $0x92] sm:$0xff]
      %v6389 = vld [vmem:[#allocation3 + $0x9a] sm:$0xff]
      %s6390 = scalar_lea.vmem %s5, 256
      %v6391 = vld [vmem:[%s6390] sm:$0xff]
      %v6392 = vld [vmem:[%s6390 + $0x8] sm:$0xff]
      %v6393 = vld [vmem:[%s6390 + $0x10] sm:$0xff]
      %v6394 = vld [vmem:[%s6390 + $0x18] sm:$0xff]
      %v6396 = vsel %vm333, %v6374, 0
      %v6399 = vsel %vm333, %v6375, 0
      %v6402 = vsel %vm333, %v6376, 0
      %v6405 = vsel %vm333, %v6377, 0
      %v6408 = vsel %vm333, %v6378, 0
      %v6411 = vsel %vm333, %v6379, 0
      %v6414 = vsel %vm333, %v6380, 0
      %v6417 = vsel %vm333, %v6381, 0
      %v6420 = vsel %vm333, %v6382, 0
      %v6423 = vsel %vm333, %v6383, 0
      %v6426 = vsel %vm333, %v6384, 0
      %v6429 = vsel %vm333, %v6385, 0
      %v6432 = vsel %vm333, %v6386, 0
      %v6435 = vsel %vm333, %v6387, 0
      %v6438 = vsel %vm333, %v6388, 0
      %v6441 = vsel %vm333, %v6389, 0
      %6443 = vmatpush.msra.mxu0 0.0
      %6444 = vmatpush.msra.mxu0 0.0
      %6445 = vmatpush.msra.mxu0 0.0
      %6446 = vmatpush.msra.mxu0 0.0
      %6447 = vmatpush.msra.mxu0 0.0
      %6448 = vmatpush.msra.mxu0 0.0
      %6449 = vmatpush.msra.mxu0 0.0
      %6450 = vmatpush.msra.mxu0 0.0
      %6451 = vmatpush.msra.mxu0 0.0
      %6452 = vmatpush.msra.mxu0 0.0
      %6453 = vmatpush.msra.mxu0 0.0
      %6454 = vmatpush.msra.mxu0 0.0
      %6455 = vmatpush.msra.mxu0 %v6394
      %6456 = vmatpush.msra.mxu0 %v6393
      %6457 = vmatpush.msra.mxu0 %v6392
      %6458 = vmatpush.msra.mxu0 %v6391
      %6459 = vmatmul.f32.gmra.mxu0 %v6396
      %v6460 = vpop.f32.mrf.mxu0
      %v6461 = vadd.f32 0.0, %v6460
      %6462 = vmatmul.f32.gmra.mxu0 %v6399
      %v6463 = vpop.f32.mrf.mxu0
      %v6464 = vadd.f32 0.0, %v6463
      %6465 = vmatmul.f32.gmra.mxu0 %v6402
      %v6466 = vpop.f32.mrf.mxu0
      %v6467 = vadd.f32 0.0, %v6466
      %6468 = vmatmul.f32.gmra.mxu0 %v6405
      %v6469 = vpop.f32.mrf.mxu0
      %v6470 = vadd.f32 0.0, %v6469
      %6471 = vmatmul.f32.gmra.mxu0 %v6408
      %v6472 = vpop.f32.mrf.mxu0
      %v6473 = vadd.f32 0.0, %v6472
      %6474 = vmatmul.f32.gmra.mxu0 %v6411
      %v6475 = vpop.f32.mrf.mxu0
      %v6476 = vadd.f32 0.0, %v6475
      %6477 = vmatmul.f32.gmra.mxu0 %v6414
      %v6478 = vpop.f32.mrf.mxu0
      %v6479 = vadd.f32 0.0, %v6478
      %6480 = vmatmul.f32.gmra.mxu0 %v6417
      %v6481 = vpop.f32.mrf.mxu0
      %v6482 = vadd.f32 0.0, %v6481
      %6483 = vmatmul.f32.gmra.mxu0 %v6420
      %v6484 = vpop.f32.mrf.mxu0
      %v6485 = vadd.f32 0.0, %v6484
      %6486 = vmatmul.f32.gmra.mxu0 %v6423
      %v6487 = vpop.f32.mrf.mxu0
      %v6488 = vadd.f32 0.0, %v6487
      %6489 = vmatmul.f32.gmra.mxu0 %v6426
      %v6490 = vpop.f32.mrf.mxu0
      %v6491 = vadd.f32 0.0, %v6490
      %6492 = vmatmul.f32.gmra.mxu0 %v6429
      %v6493 = vpop.f32.mrf.mxu0
      %v6494 = vadd.f32 0.0, %v6493
      %6495 = vmatmul.f32.gmra.mxu0 %v6432
      %v6496 = vpop.f32.mrf.mxu0
      %v6497 = vadd.f32 0.0, %v6496
      %6498 = vmatmul.f32.gmra.mxu0 %v6435
      %v6499 = vpop.f32.mrf.mxu0
      %v6500 = vadd.f32 0.0, %v6499
      %6501 = vmatmul.f32.gmra.mxu0 %v6438
      %v6502 = vpop.f32.mrf.mxu0
      %v6503 = vadd.f32 0.0, %v6502
      %6504 = vmatmul.f32.gmra.mxu0 %v6441
      %v6505 = vpop.f32.mrf.mxu0
      %v6506 = vadd.f32 0.0, %v6505
      %6507 = vdwg.mxu0
      %v6508 = vadd.f32 %v6358, %v6461
      %v6509 = vadd.f32 %v6359, %v6464
      %v6510 = vadd.f32 %v6360, %v6467
      %v6511 = vadd.f32 %v6361, %v6470
      %v6512 = vadd.f32 %v6362, %v6473
      %v6513 = vadd.f32 %v6363, %v6476
      %v6514 = vadd.f32 %v6364, %v6479
      %v6515 = vadd.f32 %v6365, %v6482
      %v6516 = vadd.f32 %v6366, %v6485
      %v6517 = vadd.f32 %v6367, %v6488
      %v6518 = vadd.f32 %v6368, %v6491
      %v6519 = vadd.f32 %v6369, %v6494
      %v6520 = vadd.f32 %v6370, %v6497
      %v6521 = vadd.f32 %v6371, %v6500
      %v6522 = vadd.f32 %v6372, %v6503
      %v6523 = vadd.f32 %v6373, %v6506
      %v6525 = vperm.slane %v5206, 0
      %v6527 = vadd.f32 %v6508, %v6525
      %v6528 = vadd.f32 %v6509, %v6525
      %v6529 = vadd.f32 %v6510, %v6525
      %v6530 = vadd.f32 %v6511, %v6525
      %v6531 = vadd.f32 %v6512, %v6525
      %v6532 = vadd.f32 %v6513, %v6525
      %v6533 = vadd.f32 %v6514, %v6525
      %v6534 = vadd.f32 %v6515, %v6525
      %v6535 = vadd.f32 %v6516, %v6525
      %v6536 = vadd.f32 %v6517, %v6525
      %v6537 = vadd.f32 %v6518, %v6525
      %v6538 = vadd.f32 %v6519, %v6525
      %v6539 = vadd.f32 %v6520, %v6525
      %v6540 = vadd.f32 %v6521, %v6525
      %v6541 = vadd.f32 %v6522, %v6525
      %v6542 = vadd.f32 %v6523, %v6525
      %v6543 = vmax.f32 %v6527, 0.0
      %v6544 = vmax.f32 %v6528, 0.0
      %v6545 = vmax.f32 %v6529, 0.0
      %v6546 = vmax.f32 %v6530, 0.0
      %v6547 = vmax.f32 %v6531, 0.0
      %v6548 = vmax.f32 %v6532, 0.0
      %v6549 = vmax.f32 %v6533, 0.0
      %v6550 = vmax.f32 %v6534, 0.0
      %v6551 = vmax.f32 %v6535, 0.0
      %v6552 = vmax.f32 %v6536, 0.0
      %v6553 = vmax.f32 %v6537, 0.0
      %v6554 = vmax.f32 %v6538, 0.0
      %v6555 = vmax.f32 %v6539, 0.0
      %v6556 = vmax.f32 %v6540, 0.0
      %v6557 = vmax.f32 %v6541, 0.0
      %v6558 = vmax.f32 %v6542, 0.0
      %6559 = vst.msk [vmem:[#allocation2] sm:$0xff] %vm333, %v6543
      %6560 = vst.msk [vmem:[#allocation2 + $0x8] sm:$0xff] %vm333, %v6544
      %6561 = vst.msk [vmem:[#allocation2 + $0x10] sm:$0xff] %vm333, %v6545
      %6562 = vst.msk [vmem:[#allocation2 + $0x18] sm:$0xff] %vm333, %v6546
      %6563 = vst.msk [vmem:[#allocation2 + $0x20] sm:$0xff] %vm333, %v6547
      %6564 = vst.msk [vmem:[#allocation2 + $0x28] sm:$0xff] %vm333, %v6548
      %6565 = vst.msk [vmem:[#allocation2 + $0x30] sm:$0xff] %vm333, %v6549
      %6566 = vst.msk [vmem:[#allocation2 + $0x38] sm:$0xff] %vm333, %v6550
      %6567 = vst.msk [vmem:[#allocation2 + $0x40] sm:$0xff] %vm333, %v6551
      %6568 = vst.msk [vmem:[#allocation2 + $0x48] sm:$0xff] %vm333, %v6552
      %6569 = vst.msk [vmem:[#allocation2 + $0x50] sm:$0xff] %vm333, %v6553
      %6570 = vst.msk [vmem:[#allocation2 + $0x58] sm:$0xff] %vm333, %v6554
      %6571 = vst.msk [vmem:[#allocation2 + $0x60] sm:$0xff] %vm333, %v6555
      %6572 = vst.msk [vmem:[#allocation2 + $0x68] sm:$0xff] %vm333, %v6556
      %6573 = vst.msk [vmem:[#allocation2 + $0x70] sm:$0xff] %vm333, %v6557
      %6574 = vst.msk [vmem:[#allocation2 + $0x78] sm:$0xff] %vm333, %v6558
      %v6575 = vld [vmem:[#allocation3 + $0x80] sm:$0xff]
      %v6576 = vld [vmem:[#allocation3 + $0x88] sm:$0xff]
      %v6577 = vld [vmem:[#allocation3 + $0x90] sm:$0xff]
      %v6578 = vld [vmem:[#allocation3 + $0x98] sm:$0xff]
      %v6579 = vld [vmem:[#allocation3 + $0xa0] sm:$0xff]
      %v6580 = vld [vmem:[#allocation3 + $0xa8] sm:$0xff]
      %v6581 = vld [vmem:[%s5] sm:$0xff]
      %v6582 = vld [vmem:[%s5 + $0x8] sm:$0xff]
      %v6583 = vld [vmem:[%s5 + $0x10] sm:$0xff]
      %v6584 = vld [vmem:[%s5 + $0x18] sm:$0xff]
      %v6585 = vld [vmem:[#allocation3 + $0x81] sm:$0xff]
      %v6586 = vld [vmem:[#allocation3 + $0x89] sm:$0xff]
      %v6587 = vld [vmem:[#allocation3 + $0x91] sm:$0xff]
      %v6588 = vld [vmem:[#allocation3 + $0x99] sm:$0xff]
      %v6589 = vld [vmem:[#allocation3 + $0xa1] sm:$0xff]
      %v6590 = vld [vmem:[#allocation3 + $0xa9] sm:$0xff]
      %v6591 = vld [vmem:[%s5243] sm:$0xff]
      %v6592 = vld [vmem:[%s5243 + $0x8] sm:$0xff]
      %v6593 = vld [vmem:[%s5243 + $0x10] sm:$0xff]
      %v6594 = vld [vmem:[%s5243 + $0x18] sm:$0xff]
      %v6596 = vsel %vm333, %v6585, 0
      %v6599 = vsel %vm333, %v6586, 0
      %v6602 = vsel %vm333, %v6587, 0
      %v6605 = vsel %vm333, %v6588, 0
      %v6608 = vsel %vm333, %v6589, 0
      %v6611 = vsel %vm333, %v6590, 0
      %6613 = vmatpush.msra.mxu0 0.0
      %6614 = vmatpush.msra.mxu0 0.0
      %6615 = vmatpush.msra.mxu0 0.0
      %6616 = vmatpush.msra.mxu0 0.0
      %6617 = vmatpush.msra.mxu0 0.0
      %6618 = vmatpush.msra.mxu0 0.0
      %6619 = vmatpush.msra.mxu0 0.0
      %6620 = vmatpush.msra.mxu0 0.0
      %6621 = vmatpush.msra.mxu0 0.0
      %6622 = vmatpush.msra.mxu0 0.0
      %6623 = vmatpush.msra.mxu0 0.0
      %6624 = vmatpush.msra.mxu0 0.0
      %6625 = vmatpush.msra.mxu0 %v6594
      %6626 = vmatpush.msra.mxu0 %v6593
      %6627 = vmatpush.msra.mxu0 %v6592
      %6628 = vmatpush.msra.mxu0 %v6591
      %6629 = vmatmul.f32.gmra.mxu0 %v6596
      %v6630 = vpop.f32.mrf.mxu0
      %v6631 = vadd.f32 0.0, %v6630
      %6632 = vmatmul.f32.gmra.mxu0 %v6599
      %v6633 = vpop.f32.mrf.mxu0
      %v6634 = vadd.f32 0.0, %v6633
      %6635 = vmatmul.f32.gmra.mxu0 %v6602
      %v6636 = vpop.f32.mrf.mxu0
      %v6637 = vadd.f32 0.0, %v6636
      %6638 = vmatmul.f32.gmra.mxu0 %v6605
      %v6639 = vpop.f32.mrf.mxu0
      %v6640 = vadd.f32 0.0, %v6639
      %6641 = vmatmul.f32.gmra.mxu0 %v6608
      %v6642 = vpop.f32.mrf.mxu0
      %v6643 = vadd.f32 0.0, %v6642
      %6644 = vmatmul.f32.gmra.mxu0 %v6611
      %v6645 = vpop.f32.mrf.mxu0
      %v6646 = vadd.f32 0.0, %v6645
      %6647 = vdwg.mxu0
      %v6649 = vsel %vm333, %v6575, 0
      %v6652 = vsel %vm333, %v6576, 0
      %v6655 = vsel %vm333, %v6577, 0
      %v6658 = vsel %vm333, %v6578, 0
      %v6661 = vsel %vm333, %v6579, 0
      %v6664 = vsel %vm333, %v6580, 0
      %6666 = vmatpush.msra.mxu0 0.0
      %6667 = vmatpush.msra.mxu0 0.0
      %6668 = vmatpush.msra.mxu0 0.0
      %6669 = vmatpush.msra.mxu0 0.0
      %6670 = vmatpush.msra.mxu0 0.0
      %6671 = vmatpush.msra.mxu0 0.0
      %6672 = vmatpush.msra.mxu0 0.0
      %6673 = vmatpush.msra.mxu0 0.0
      %6674 = vmatpush.msra.mxu0 0.0
      %6675 = vmatpush.msra.mxu0 0.0
      %6676 = vmatpush.msra.mxu0 0.0
      %6677 = vmatpush.msra.mxu0 0.0
      %6678 = vmatpush.msra.mxu0 %v6584
      %6679 = vmatpush.msra.mxu0 %v6583
      %6680 = vmatpush.msra.mxu0 %v6582
      %6681 = vmatpush.msra.mxu0 %v6581
      %6682 = vmatmul.f32.gmra.mxu0 %v6649
      %v6683 = vpop.f32.mrf.mxu0
      %v6684 = vadd.f32 %v6631, %v6683
      %6685 = vmatmul.f32.gmra.mxu0 %v6652
      %v6686 = vpop.f32.mrf.mxu0
      %v6687 = vadd.f32 %v6634, %v6686
      %6688 = vmatmul.f32.gmra.mxu0 %v6655
      %v6689 = vpop.f32.mrf.mxu0
      %v6690 = vadd.f32 %v6637, %v6689
      %6691 = vmatmul.f32.gmra.mxu0 %v6658
      %v6692 = vpop.f32.mrf.mxu0
      %v6693 = vadd.f32 %v6640, %v6692
      %6694 = vmatmul.f32.gmra.mxu0 %v6661
      %v6695 = vpop.f32.mrf.mxu0
      %v6696 = vadd.f32 %v6643, %v6695
      %6697 = vmatmul.f32.gmra.mxu0 %v6664
      %v6698 = vpop.f32.mrf.mxu0
      %v6699 = vadd.f32 %v6646, %v6698
      %6700 = vdwg.mxu0
      %v6701 = vld [vmem:[#allocation3 + $0x82] sm:$0xff]
      %v6702 = vld [vmem:[#allocation3 + $0x8a] sm:$0xff]
      %v6703 = vld [vmem:[#allocation3 + $0x92] sm:$0xff]
      %v6704 = vld [vmem:[#allocation3 + $0x9a] sm:$0xff]
      %v6705 = vld [vmem:[#allocation3 + $0xa2] sm:$0xff]
      %v6706 = vld [vmem:[#allocation3 + $0xaa] sm:$0xff]
      %v6707 = vld [vmem:[%s5490] sm:$0xff]
      %v6708 = vld [vmem:[%s5490 + $0x8] sm:$0xff]
      %v6709 = vld [vmem:[%s5490 + $0x10] sm:$0xff]
      %v6710 = vld [vmem:[%s5490 + $0x18] sm:$0xff]
      %v6712 = vsel %vm333, %v6701, 0
      %v6715 = vsel %vm333, %v6702, 0
      %v6718 = vsel %vm333, %v6703, 0
      %v6721 = vsel %vm333, %v6704, 0
      %v6724 = vsel %vm333, %v6705, 0
      %v6727 = vsel %vm333, %v6706, 0
      %6729 = vmatpush.msra.mxu0 0.0
      %6730 = vmatpush.msra.mxu0 0.0
      %6731 = vmatpush.msra.mxu0 0.0
      %6732 = vmatpush.msra.mxu0 0.0
      %6733 = vmatpush.msra.mxu0 0.0
      %6734 = vmatpush.msra.mxu0 0.0
      %6735 = vmatpush.msra.mxu0 0.0
      %6736 = vmatpush.msra.mxu0 0.0
      %6737 = vmatpush.msra.mxu0 0.0
      %6738 = vmatpush.msra.mxu0 0.0
      %6739 = vmatpush.msra.mxu0 0.0
      %6740 = vmatpush.msra.mxu0 0.0
      %6741 = vmatpush.msra.mxu0 %v6710
      %6742 = vmatpush.msra.mxu0 %v6709
      %6743 = vmatpush.msra.mxu0 %v6708
      %6744 = vmatpush.msra.mxu0 %v6707
      %6745 = vmatmul.f32.gmra.mxu0 %v6712
      %v6746 = vpop.f32.mrf.mxu0
      %v6747 = vadd.f32 0.0, %v6746
      %6748 = vmatmul.f32.gmra.mxu0 %v6715
      %v6749 = vpop.f32.mrf.mxu0
      %v6750 = vadd.f32 0.0, %v6749
      %6751 = vmatmul.f32.gmra.mxu0 %v6718
      %v6752 = vpop.f32.mrf.mxu0
      %v6753 = vadd.f32 0.0, %v6752
      %6754 = vmatmul.f32.gmra.mxu0 %v6721
      %v6755 = vpop.f32.mrf.mxu0
      %v6756 = vadd.f32 0.0, %v6755
      %6757 = vmatmul.f32.gmra.mxu0 %v6724
      %v6758 = vpop.f32.mrf.mxu0
      %v6759 = vadd.f32 0.0, %v6758
      %6760 = vmatmul.f32.gmra.mxu0 %v6727
      %v6761 = vpop.f32.mrf.mxu0
      %v6762 = vadd.f32 0.0, %v6761
      %6763 = vdwg.mxu0
      %v6764 = vadd.f32 %v6684, %v6747
      %v6765 = vadd.f32 %v6687, %v6750
      %v6766 = vadd.f32 %v6690, %v6753
      %v6767 = vadd.f32 %v6693, %v6756
      %v6768 = vadd.f32 %v6696, %v6759
      %v6769 = vadd.f32 %v6699, %v6762
      %v6770 = vld [vmem:[#allocation3 + $0x90] sm:$0xff]
      %v6771 = vld [vmem:[#allocation3 + $0x98] sm:$0xff]
      %v6772 = vld [vmem:[#allocation3 + $0xa0] sm:$0xff]
      %v6773 = vld [vmem:[#allocation3 + $0xa8] sm:$0xff]
      %v6774 = vld [vmem:[#allocation3 + $0xb0] sm:$0xff]
      %v6775 = vld [vmem:[#allocation3 + $0xb8] sm:$0xff]
      %v6776 = vld [vmem:[%s5640] sm:$0xff]
      %v6777 = vld [vmem:[%s5640 + $0x8] sm:$0xff]
      %v6778 = vld [vmem:[%s5640 + $0x10] sm:$0xff]
      %v6779 = vld [vmem:[%s5640 + $0x18] sm:$0xff]
      %v6781 = vsel %vm333, %v6770, 0
      %v6784 = vsel %vm333, %v6771, 0
      %v6787 = vsel %vm333, %v6772, 0
      %v6790 = vsel %vm333, %v6773, 0
      %v6793 = vsel %vm333, %v6774, 0
      %v6796 = vsel %vm333, %v6775, 0
      %6798 = vmatpush.msra.mxu0 0.0
      %6799 = vmatpush.msra.mxu0 0.0
      %6800 = vmatpush.msra.mxu0 0.0
      %6801 = vmatpush.msra.mxu0 0.0
      %6802 = vmatpush.msra.mxu0 0.0
      %6803 = vmatpush.msra.mxu0 0.0
      %6804 = vmatpush.msra.mxu0 0.0
      %6805 = vmatpush.msra.mxu0 0.0
      %6806 = vmatpush.msra.mxu0 0.0
      %6807 = vmatpush.msra.mxu0 0.0
      %6808 = vmatpush.msra.mxu0 0.0
      %6809 = vmatpush.msra.mxu0 0.0
      %6810 = vmatpush.msra.mxu0 %v6779
      %6811 = vmatpush.msra.mxu0 %v6778
      %6812 = vmatpush.msra.mxu0 %v6777
      %6813 = vmatpush.msra.mxu0 %v6776
      %6814 = vmatmul.f32.gmra.mxu0 %v6781
      %v6815 = vpop.f32.mrf.mxu0
      %v6816 = vadd.f32 0.0, %v6815
      %6817 = vmatmul.f32.gmra.mxu0 %v6784
      %v6818 = vpop.f32.mrf.mxu0
      %v6819 = vadd.f32 0.0, %v6818
      %6820 = vmatmul.f32.gmra.mxu0 %v6787
      %v6821 = vpop.f32.mrf.mxu0
      %v6822 = vadd.f32 0.0, %v6821
      %6823 = vmatmul.f32.gmra.mxu0 %v6790
      %v6824 = vpop.f32.mrf.mxu0
      %v6825 = vadd.f32 0.0, %v6824
      %6826 = vmatmul.f32.gmra.mxu0 %v6793
      %v6827 = vpop.f32.mrf.mxu0
      %v6828 = vadd.f32 0.0, %v6827
      %6829 = vmatmul.f32.gmra.mxu0 %v6796
      %v6830 = vpop.f32.mrf.mxu0
      %v6831 = vadd.f32 0.0, %v6830
      %6832 = vdwg.mxu0
      %v6833 = vadd.f32 %v6764, %v6816
      %v6834 = vadd.f32 %v6765, %v6819
      %v6835 = vadd.f32 %v6766, %v6822
      %v6836 = vadd.f32 %v6767, %v6825
      %v6837 = vadd.f32 %v6768, %v6828
      %v6838 = vadd.f32 %v6769, %v6831
      %v6839 = vld [vmem:[#allocation3 + $0x91] sm:$0xff]
      %v6840 = vld [vmem:[#allocation3 + $0x99] sm:$0xff]
      %v6841 = vld [vmem:[#allocation3 + $0xa1] sm:$0xff]
      %v6842 = vld [vmem:[#allocation3 + $0xa9] sm:$0xff]
      %v6843 = vld [vmem:[#allocation3 + $0xb1] sm:$0xff]
      %v6844 = vld [vmem:[#allocation3 + $0xb9] sm:$0xff]
      %v6845 = vld [vmem:[%s5790] sm:$0xff]
      %v6846 = vld [vmem:[%s5790 + $0x8] sm:$0xff]
      %v6847 = vld [vmem:[%s5790 + $0x10] sm:$0xff]
      %v6848 = vld [vmem:[%s5790 + $0x18] sm:$0xff]
      %v6850 = vsel %vm333, %v6839, 0
      %v6853 = vsel %vm333, %v6840, 0
      %v6856 = vsel %vm333, %v6841, 0
      %v6859 = vsel %vm333, %v6842, 0
      %v6862 = vsel %vm333, %v6843, 0
      %v6865 = vsel %vm333, %v6844, 0
      %6867 = vmatpush.msra.mxu0 0.0
      %6868 = vmatpush.msra.mxu0 0.0
      %6869 = vmatpush.msra.mxu0 0.0
      %6870 = vmatpush.msra.mxu0 0.0
      %6871 = vmatpush.msra.mxu0 0.0
      %6872 = vmatpush.msra.mxu0 0.0
      %6873 = vmatpush.msra.mxu0 0.0
      %6874 = vmatpush.msra.mxu0 0.0
      %6875 = vmatpush.msra.mxu0 0.0
      %6876 = vmatpush.msra.mxu0 0.0
      %6877 = vmatpush.msra.mxu0 0.0
      %6878 = vmatpush.msra.mxu0 0.0
      %6879 = vmatpush.msra.mxu0 %v6848
      %6880 = vmatpush.msra.mxu0 %v6847
      %6881 = vmatpush.msra.mxu0 %v6846
      %6882 = vmatpush.msra.mxu0 %v6845
      %6883 = vmatmul.f32.gmra.mxu0 %v6850
      %v6884 = vpop.f32.mrf.mxu0
      %v6885 = vadd.f32 0.0, %v6884
      %6886 = vmatmul.f32.gmra.mxu0 %v6853
      %v6887 = vpop.f32.mrf.mxu0
      %v6888 = vadd.f32 0.0, %v6887
      %6889 = vmatmul.f32.gmra.mxu0 %v6856
      %v6890 = vpop.f32.mrf.mxu0
      %v6891 = vadd.f32 0.0, %v6890
      %6892 = vmatmul.f32.gmra.mxu0 %v6859
      %v6893 = vpop.f32.mrf.mxu0
      %v6894 = vadd.f32 0.0, %v6893
      %6895 = vmatmul.f32.gmra.mxu0 %v6862
      %v6896 = vpop.f32.mrf.mxu0
      %v6897 = vadd.f32 0.0, %v6896
      %6898 = vmatmul.f32.gmra.mxu0 %v6865
      %v6899 = vpop.f32.mrf.mxu0
      %v6900 = vadd.f32 0.0, %v6899
      %6901 = vdwg.mxu0
      %v6902 = vadd.f32 %v6833, %v6885
      %v6903 = vadd.f32 %v6834, %v6888
      %v6904 = vadd.f32 %v6835, %v6891
      %v6905 = vadd.f32 %v6836, %v6894
      %v6906 = vadd.f32 %v6837, %v6897
      %v6907 = vadd.f32 %v6838, %v6900
      %v6908 = vld [vmem:[#allocation3 + $0x92] sm:$0xff]
      %v6909 = vld [vmem:[#allocation3 + $0x9a] sm:$0xff]
      %v6910 = vld [vmem:[#allocation3 + $0xa2] sm:$0xff]
      %v6911 = vld [vmem:[#allocation3 + $0xaa] sm:$0xff]
      %v6912 = vld [vmem:[#allocation3 + $0xb2] sm:$0xff]
      %v6913 = vld [vmem:[#allocation3 + $0xba] sm:$0xff]
      %v6914 = vld [vmem:[%s5940] sm:$0xff]
      %v6915 = vld [vmem:[%s5940 + $0x8] sm:$0xff]
      %v6916 = vld [vmem:[%s5940 + $0x10] sm:$0xff]
      %v6917 = vld [vmem:[%s5940 + $0x18] sm:$0xff]
      %v6919 = vsel %vm333, %v6908, 0
      %v6922 = vsel %vm333, %v6909, 0
      %v6925 = vsel %vm333, %v6910, 0
      %v6928 = vsel %vm333, %v6911, 0
      %v6931 = vsel %vm333, %v6912, 0
      %v6934 = vsel %vm333, %v6913, 0
      %6936 = vmatpush.msra.mxu0 0.0
      %6937 = vmatpush.msra.mxu0 0.0
      %6938 = vmatpush.msra.mxu0 0.0
      %6939 = vmatpush.msra.mxu0 0.0
      %6940 = vmatpush.msra.mxu0 0.0
      %6941 = vmatpush.msra.mxu0 0.0
      %6942 = vmatpush.msra.mxu0 0.0
      %6943 = vmatpush.msra.mxu0 0.0
      %6944 = vmatpush.msra.mxu0 0.0
      %6945 = vmatpush.msra.mxu0 0.0
      %6946 = vmatpush.msra.mxu0 0.0
      %6947 = vmatpush.msra.mxu0 0.0
      %6948 = vmatpush.msra.mxu0 %v6917
      %6949 = vmatpush.msra.mxu0 %v6916
      %6950 = vmatpush.msra.mxu0 %v6915
      %6951 = vmatpush.msra.mxu0 %v6914
      %6952 = vmatmul.f32.gmra.mxu0 %v6919
      %v6953 = vpop.f32.mrf.mxu0
      %v6954 = vadd.f32 0.0, %v6953
      %6955 = vmatmul.f32.gmra.mxu0 %v6922
      %v6956 = vpop.f32.mrf.mxu0
      %v6957 = vadd.f32 0.0, %v6956
      %6958 = vmatmul.f32.gmra.mxu0 %v6925
      %v6959 = vpop.f32.mrf.mxu0
      %v6960 = vadd.f32 0.0, %v6959
      %6961 = vmatmul.f32.gmra.mxu0 %v6928
      %v6962 = vpop.f32.mrf.mxu0
      %v6963 = vadd.f32 0.0, %v6962
      %6964 = vmatmul.f32.gmra.mxu0 %v6931
      %v6965 = vpop.f32.mrf.mxu0
      %v6966 = vadd.f32 0.0, %v6965
      %6967 = vmatmul.f32.gmra.mxu0 %v6934
      %v6968 = vpop.f32.mrf.mxu0
      %v6969 = vadd.f32 0.0, %v6968
      %6970 = vdwg.mxu0
      %v6971 = vadd.f32 %v6902, %v6954
      %v6972 = vadd.f32 %v6903, %v6957
      %v6973 = vadd.f32 %v6904, %v6960
      %v6974 = vadd.f32 %v6905, %v6963
      %v6975 = vadd.f32 %v6906, %v6966
      %v6976 = vadd.f32 %v6907, %v6969
      %v6977 = vld [vmem:[#allocation3 + $0xa0] sm:$0xff]
      %v6978 = vld [vmem:[#allocation3 + $0xa8] sm:$0xff]
      %v6979 = vld [vmem:[#allocation3 + $0xb0] sm:$0xff]
      %v6980 = vld [vmem:[#allocation3 + $0xb8] sm:$0xff]
      %v6981 = vld [vmem:[#allocation3 + $0xc0] sm:$0xff]
      %v6982 = vld [vmem:[#allocation3 + $0xc8] sm:$0xff]
      %v6983 = vld [vmem:[%s6090] sm:$0xff]
      %v6984 = vld [vmem:[%s6090 + $0x8] sm:$0xff]
      %v6985 = vld [vmem:[%s6090 + $0x10] sm:$0xff]
      %v6986 = vld [vmem:[%s6090 + $0x18] sm:$0xff]
      %v6988 = vsel %vm333, %v6977, 0
      %v6991 = vsel %vm333, %v6978, 0
      %v6994 = vsel %vm333, %v6979, 0
      %v6997 = vsel %vm333, %v6980, 0
      %v7000 = vsel %vm333, %v6981, 0
      %v7003 = vsel %vm333, %v6982, 0
      %7005 = vmatpush.msra.mxu0 0.0
      %7006 = vmatpush.msra.mxu0 0.0
      %7007 = vmatpush.msra.mxu0 0.0
      %7008 = vmatpush.msra.mxu0 0.0
      %7009 = vmatpush.msra.mxu0 0.0
      %7010 = vmatpush.msra.mxu0 0.0
      %7011 = vmatpush.msra.mxu0 0.0
      %7012 = vmatpush.msra.mxu0 0.0
      %7013 = vmatpush.msra.mxu0 0.0
      %7014 = vmatpush.msra.mxu0 0.0
      %7015 = vmatpush.msra.mxu0 0.0
      %7016 = vmatpush.msra.mxu0 0.0
      %7017 = vmatpush.msra.mxu0 %v6986
      %7018 = vmatpush.msra.mxu0 %v6985
      %7019 = vmatpush.msra.mxu0 %v6984
      %7020 = vmatpush.msra.mxu0 %v6983
      %7021 = vmatmul.f32.gmra.mxu0 %v6988
      %v7022 = vpop.f32.mrf.mxu0
      %v7023 = vadd.f32 0.0, %v7022
      %7024 = vmatmul.f32.gmra.mxu0 %v6991
      %v7025 = vpop.f32.mrf.mxu0
      %v7026 = vadd.f32 0.0, %v7025
      %7027 = vmatmul.f32.gmra.mxu0 %v6994
      %v7028 = vpop.f32.mrf.mxu0
      %v7029 = vadd.f32 0.0, %v7028
      %7030 = vmatmul.f32.gmra.mxu0 %v6997
      %v7031 = vpop.f32.mrf.mxu0
      %v7032 = vadd.f32 0.0, %v7031
      %7033 = vmatmul.f32.gmra.mxu0 %v7000
      %v7034 = vpop.f32.mrf.mxu0
      %v7035 = vadd.f32 0.0, %v7034
      %7036 = vmatmul.f32.gmra.mxu0 %v7003
      %v7037 = vpop.f32.mrf.mxu0
      %v7038 = vadd.f32 0.0, %v7037
      %7039 = vdwg.mxu0
      %v7040 = vadd.f32 %v6971, %v7023
      %v7041 = vadd.f32 %v6972, %v7026
      %v7042 = vadd.f32 %v6973, %v7029
      %v7043 = vadd.f32 %v6974, %v7032
      %v7044 = vadd.f32 %v6975, %v7035
      %v7045 = vadd.f32 %v6976, %v7038
      %v7046 = vld [vmem:[#allocation3 + $0xa1] sm:$0xff]
      %v7047 = vld [vmem:[#allocation3 + $0xa9] sm:$0xff]
      %v7048 = vld [vmem:[#allocation3 + $0xb1] sm:$0xff]
      %v7049 = vld [vmem:[#allocation3 + $0xb9] sm:$0xff]
      %v7050 = vld [vmem:[#allocation3 + $0xc1] sm:$0xff]
      %v7051 = vld [vmem:[#allocation3 + $0xc9] sm:$0xff]
      %v7052 = vld [vmem:[%s6240] sm:$0xff]
      %v7053 = vld [vmem:[%s6240 + $0x8] sm:$0xff]
      %v7054 = vld [vmem:[%s6240 + $0x10] sm:$0xff]
      %v7055 = vld [vmem:[%s6240 + $0x18] sm:$0xff]
      %v7057 = vsel %vm333, %v7046, 0
      %v7060 = vsel %vm333, %v7047, 0
      %v7063 = vsel %vm333, %v7048, 0
      %v7066 = vsel %vm333, %v7049, 0
      %v7069 = vsel %vm333, %v7050, 0
      %v7072 = vsel %vm333, %v7051, 0
      %7074 = vmatpush.msra.mxu0 0.0
      %7075 = vmatpush.msra.mxu0 0.0
      %7076 = vmatpush.msra.mxu0 0.0
      %7077 = vmatpush.msra.mxu0 0.0
      %7078 = vmatpush.msra.mxu0 0.0
      %7079 = vmatpush.msra.mxu0 0.0
      %7080 = vmatpush.msra.mxu0 0.0
      %7081 = vmatpush.msra.mxu0 0.0
      %7082 = vmatpush.msra.mxu0 0.0
      %7083 = vmatpush.msra.mxu0 0.0
      %7084 = vmatpush.msra.mxu0 0.0
      %7085 = vmatpush.msra.mxu0 0.0
      %7086 = vmatpush.msra.mxu0 %v7055
      %7087 = vmatpush.msra.mxu0 %v7054
      %7088 = vmatpush.msra.mxu0 %v7053
      %7089 = vmatpush.msra.mxu0 %v7052
      %7090 = vmatmul.f32.gmra.mxu0 %v7057
      %v7091 = vpop.f32.mrf.mxu0
      %v7092 = vadd.f32 0.0, %v7091
      %7093 = vmatmul.f32.gmra.mxu0 %v7060
      %v7094 = vpop.f32.mrf.mxu0
      %v7095 = vadd.f32 0.0, %v7094
      %7096 = vmatmul.f32.gmra.mxu0 %v7063
      %v7097 = vpop.f32.mrf.mxu0
      %v7098 = vadd.f32 0.0, %v7097
      %7099 = vmatmul.f32.gmra.mxu0 %v7066
      %v7100 = vpop.f32.mrf.mxu0
      %v7101 = vadd.f32 0.0, %v7100
      %7102 = vmatmul.f32.gmra.mxu0 %v7069
      %v7103 = vpop.f32.mrf.mxu0
      %v7104 = vadd.f32 0.0, %v7103
      %7105 = vmatmul.f32.gmra.mxu0 %v7072
      %v7106 = vpop.f32.mrf.mxu0
      %v7107 = vadd.f32 0.0, %v7106
      %7108 = vdwg.mxu0
      %v7109 = vadd.f32 %v7040, %v7092
      %v7110 = vadd.f32 %v7041, %v7095
      %v7111 = vadd.f32 %v7042, %v7098
      %v7112 = vadd.f32 %v7043, %v7101
      %v7113 = vadd.f32 %v7044, %v7104
      %v7114 = vadd.f32 %v7045, %v7107
      %v7115 = vld [vmem:[#allocation3 + $0xa2] sm:$0xff]
      %v7116 = vld [vmem:[#allocation3 + $0xaa] sm:$0xff]
      %v7117 = vld [vmem:[#allocation3 + $0xb2] sm:$0xff]
      %v7118 = vld [vmem:[#allocation3 + $0xba] sm:$0xff]
      %v7119 = vld [vmem:[#allocation3 + $0xc2] sm:$0xff]
      %v7120 = vld [vmem:[#allocation3 + $0xca] sm:$0xff]
      %v7121 = vld [vmem:[%s6390] sm:$0xff]
      %v7122 = vld [vmem:[%s6390 + $0x8] sm:$0xff]
      %v7123 = vld [vmem:[%s6390 + $0x10] sm:$0xff]
      %v7124 = vld [vmem:[%s6390 + $0x18] sm:$0xff]
      %v7126 = vsel %vm333, %v7115, 0
      %v7129 = vsel %vm333, %v7116, 0
      %v7132 = vsel %vm333, %v7117, 0
      %v7135 = vsel %vm333, %v7118, 0
      %v7138 = vsel %vm333, %v7119, 0
      %v7141 = vsel %vm333, %v7120, 0
      %7143 = vmatpush.msra.mxu0 0.0
      %7144 = vmatpush.msra.mxu0 0.0
      %7145 = vmatpush.msra.mxu0 0.0
      %7146 = vmatpush.msra.mxu0 0.0
      %7147 = vmatpush.msra.mxu0 0.0
      %7148 = vmatpush.msra.mxu0 0.0
      %7149 = vmatpush.msra.mxu0 0.0
      %7150 = vmatpush.msra.mxu0 0.0
      %7151 = vmatpush.msra.mxu0 0.0
      %7152 = vmatpush.msra.mxu0 0.0
      %7153 = vmatpush.msra.mxu0 0.0
      %7154 = vmatpush.msra.mxu0 0.0
      %7155 = vmatpush.msra.mxu0 %v7124
      %7156 = vmatpush.msra.mxu0 %v7123
      %7157 = vmatpush.msra.mxu0 %v7122
      %7158 = vmatpush.msra.mxu0 %v7121
      %7159 = vmatmul.f32.gmra.mxu0 %v7126
      %v7160 = vpop.f32.mrf.mxu0
      %v7161 = vadd.f32 0.0, %v7160
      %7162 = vmatmul.f32.gmra.mxu0 %v7129
      %v7163 = vpop.f32.mrf.mxu0
      %v7164 = vadd.f32 0.0, %v7163
      %7165 = vmatmul.f32.gmra.mxu0 %v7132
      %v7166 = vpop.f32.mrf.mxu0
      %v7167 = vadd.f32 0.0, %v7166
      %7168 = vmatmul.f32.gmra.mxu0 %v7135
      %v7169 = vpop.f32.mrf.mxu0
      %v7170 = vadd.f32 0.0, %v7169
      %7171 = vmatmul.f32.gmra.mxu0 %v7138
      %v7172 = vpop.f32.mrf.mxu0
      %v7173 = vadd.f32 0.0, %v7172
      %7174 = vmatmul.f32.gmra.mxu0 %v7141
      %v7175 = vpop.f32.mrf.mxu0
      %v7176 = vadd.f32 0.0, %v7175
      %7177 = vdwg.mxu0
      %v7178 = vadd.f32 %v7109, %v7161
      %v7179 = vadd.f32 %v7110, %v7164
      %v7180 = vadd.f32 %v7111, %v7167
      %v7181 = vadd.f32 %v7112, %v7170
      %v7182 = vadd.f32 %v7113, %v7173
      %v7183 = vadd.f32 %v7114, %v7176
      %v7184 = vadd.f32 %v7178, %v6525
      %v7185 = vadd.f32 %v7179, %v6525
      %v7186 = vadd.f32 %v7180, %v6525
      %v7187 = vadd.f32 %v7181, %v6525
      %v7188 = vadd.f32 %v7182, %v6525
      %v7189 = vadd.f32 %v7183, %v6525
      %v7190 = vmax.f32 %v7184, 0.0
      %v7191 = vmax.f32 %v7185, 0.0
      %v7192 = vmax.f32 %v7186, 0.0
      %v7193 = vmax.f32 %v7187, 0.0
      %v7194 = vmax.f32 %v7188, 0.0
      %v7195 = vmax.f32 %v7189, 0.0
      %7196 = vst.msk [vmem:[#allocation2 + $0x80] sm:$0xff] %vm333, %v7190
      %7197 = vst.msk [vmem:[#allocation2 + $0x88] sm:$0xff] %vm333, %v7191
      %7198 = vst.msk [vmem:[#allocation2 + $0x90] sm:$0xff] %vm333, %v7192
      %7199 = vst.msk [vmem:[#allocation2 + $0x98] sm:$0xff] %vm333, %v7193
      %7200 = vst.msk [vmem:[#allocation2 + $0xa0] sm:$0xff] %vm333, %v7194
      %7201 = vst.msk [vmem:[#allocation2 + $0xa8] sm:$0xff] %vm333, %v7195
      %v7202 = vld [vmem:[%s8] sm:$0x1]
      %v7203 = vld [vmem:[#allocation2] sm:$0xff]
      %v7204 = vld [vmem:[#allocation2 + $0x8] sm:$0xff]
      %v7205 = vld [vmem:[#allocation2 + $0x10] sm:$0xff]
      %v7206 = vld [vmem:[#allocation2 + $0x18] sm:$0xff]
      %v7207 = vld [vmem:[#allocation2 + $0x20] sm:$0xff]
      %v7208 = vld [vmem:[#allocation2 + $0x28] sm:$0xff]
      %v7209 = vld [vmem:[#allocation2 + $0x30] sm:$0xff]
      %v7210 = vld [vmem:[#allocation2 + $0x38] sm:$0xff]
      %v7211 = vld [vmem:[#allocation2 + $0x40] sm:$0xff]
      %v7212 = vld [vmem:[#allocation2 + $0x48] sm:$0xff]
      %v7213 = vld [vmem:[#allocation2 + $0x50] sm:$0xff]
      %v7214 = vld [vmem:[#allocation2 + $0x58] sm:$0xff]
      %v7215 = vld [vmem:[#allocation2 + $0x60] sm:$0xff]
      %v7216 = vld [vmem:[#allocation2 + $0x68] sm:$0xff]
      %v7217 = vld [vmem:[#allocation2 + $0x70] sm:$0xff]
      %v7218 = vld [vmem:[#allocation2 + $0x78] sm:$0xff]
      %v7219 = vld [vmem:[%s7] sm:$0xff]
      %v7220 = vld [vmem:[%s7 + $0x8] sm:$0xff]
      %v7221 = vld [vmem:[%s7 + $0x10] sm:$0xff]
      %v7222 = vld [vmem:[%s7 + $0x18] sm:$0xff]
      %v7223 = vld [vmem:[#allocation2 + $0x1] sm:$0xff]
      %v7224 = vld [vmem:[#allocation2 + $0x9] sm:$0xff]
      %v7225 = vld [vmem:[#allocation2 + $0x11] sm:$0xff]
      %v7226 = vld [vmem:[#allocation2 + $0x19] sm:$0xff]
      %v7227 = vld [vmem:[#allocation2 + $0x21] sm:$0xff]
      %v7228 = vld [vmem:[#allocation2 + $0x29] sm:$0xff]
      %v7229 = vld [vmem:[#allocation2 + $0x31] sm:$0xff]
      %v7230 = vld [vmem:[#allocation2 + $0x39] sm:$0xff]
      %v7231 = vld [vmem:[#allocation2 + $0x41] sm:$0xff]
      %v7232 = vld [vmem:[#allocation2 + $0x49] sm:$0xff]
      %v7233 = vld [vmem:[#allocation2 + $0x51] sm:$0xff]
      %v7234 = vld [vmem:[#allocation2 + $0x59] sm:$0xff]
      %v7235 = vld [vmem:[#allocation2 + $0x61] sm:$0xff]
      %v7236 = vld [vmem:[#allocation2 + $0x69] sm:$0xff]
      %v7237 = vld [vmem:[#allocation2 + $0x71] sm:$0xff]
      %v7238 = vld [vmem:[#allocation2 + $0x79] sm:$0xff]
      %s7239 = scalar_lea.vmem %s7, 32
      %v7240 = vld [vmem:[%s7239] sm:$0xff]
      %v7241 = vld [vmem:[%s7239 + $0x8] sm:$0xff]
      %v7242 = vld [vmem:[%s7239 + $0x10] sm:$0xff]
      %v7243 = vld [vmem:[%s7239 + $0x18] sm:$0xff]
      %v7245 = vsel %vm333, %v7223, 0
      %v7248 = vsel %vm333, %v7224, 0
      %v7251 = vsel %vm333, %v7225, 0
      %v7254 = vsel %vm333, %v7226, 0
      %v7257 = vsel %vm333, %v7227, 0
      %v7260 = vsel %vm333, %v7228, 0
      %v7263 = vsel %vm333, %v7229, 0
      %v7266 = vsel %vm333, %v7230, 0
      %v7269 = vsel %vm333, %v7231, 0
      %v7272 = vsel %vm333, %v7232, 0
      %v7275 = vsel %vm333, %v7233, 0
      %v7278 = vsel %vm333, %v7234, 0
      %v7281 = vsel %vm333, %v7235, 0
      %v7284 = vsel %vm333, %v7236, 0
      %v7287 = vsel %vm333, %v7237, 0
      %v7290 = vsel %vm333, %v7238, 0
      %7292 = vmatpush.msra.mxu0 0.0
      %7293 = vmatpush.msra.mxu0 0.0
      %7294 = vmatpush.msra.mxu0 0.0
      %7295 = vmatpush.msra.mxu0 0.0
      %7296 = vmatpush.msra.mxu0 0.0
      %7297 = vmatpush.msra.mxu0 0.0
      %7298 = vmatpush.msra.mxu0 0.0
      %7299 = vmatpush.msra.mxu0 0.0
      %7300 = vmatpush.msra.mxu0 0.0
      %7301 = vmatpush.msra.mxu0 0.0
      %7302 = vmatpush.msra.mxu0 0.0
      %7303 = vmatpush.msra.mxu0 0.0
      %7304 = vmatpush.msra.mxu0 %v7243
      %7305 = vmatpush.msra.mxu0 %v7242
      %7306 = vmatpush.msra.mxu0 %v7241
      %7307 = vmatpush.msra.mxu0 %v7240
      %7308 = vmatmul.f32.gmra.mxu0 %v7245
      %v7309 = vpop.f32.mrf.mxu0
      %v7310 = vadd.f32 0.0, %v7309
      %7311 = vmatmul.f32.gmra.mxu0 %v7248
      %v7312 = vpop.f32.mrf.mxu0
      %v7313 = vadd.f32 0.0, %v7312
      %7314 = vmatmul.f32.gmra.mxu0 %v7251
      %v7315 = vpop.f32.mrf.mxu0
      %v7316 = vadd.f32 0.0, %v7315
      %7317 = vmatmul.f32.gmra.mxu0 %v7254
      %v7318 = vpop.f32.mrf.mxu0
      %v7319 = vadd.f32 0.0, %v7318
      %7320 = vmatmul.f32.gmra.mxu0 %v7257
      %v7321 = vpop.f32.mrf.mxu0
      %v7322 = vadd.f32 0.0, %v7321
      %7323 = vmatmul.f32.gmra.mxu0 %v7260
      %v7324 = vpop.f32.mrf.mxu0
      %v7325 = vadd.f32 0.0, %v7324
      %7326 = vmatmul.f32.gmra.mxu0 %v7263
      %v7327 = vpop.f32.mrf.mxu0
      %v7328 = vadd.f32 0.0, %v7327
      %7329 = vmatmul.f32.gmra.mxu0 %v7266
      %v7330 = vpop.f32.mrf.mxu0
      %v7331 = vadd.f32 0.0, %v7330
      %7332 = vmatmul.f32.gmra.mxu0 %v7269
      %v7333 = vpop.f32.mrf.mxu0
      %v7334 = vadd.f32 0.0, %v7333
      %7335 = vmatmul.f32.gmra.mxu0 %v7272
      %v7336 = vpop.f32.mrf.mxu0
      %v7337 = vadd.f32 0.0, %v7336
      %7338 = vmatmul.f32.gmra.mxu0 %v7275
      %v7339 = vpop.f32.mrf.mxu0
      %v7340 = vadd.f32 0.0, %v7339
      %7341 = vmatmul.f32.gmra.mxu0 %v7278
      %v7342 = vpop.f32.mrf.mxu0
      %v7343 = vadd.f32 0.0, %v7342
      %7344 = vmatmul.f32.gmra.mxu0 %v7281
      %v7345 = vpop.f32.mrf.mxu0
      %v7346 = vadd.f32 0.0, %v7345
      %7347 = vmatmul.f32.gmra.mxu0 %v7284
      %v7348 = vpop.f32.mrf.mxu0
      %v7349 = vadd.f32 0.0, %v7348
      %7350 = vmatmul.f32.gmra.mxu0 %v7287
      %v7351 = vpop.f32.mrf.mxu0
      %v7352 = vadd.f32 0.0, %v7351
      %7353 = vmatmul.f32.gmra.mxu0 %v7290
      %v7354 = vpop.f32.mrf.mxu0
      %v7355 = vadd.f32 0.0, %v7354
      %7356 = vdwg.mxu0
      %v7358 = vsel %vm333, %v7203, 0
      %v7361 = vsel %vm333, %v7204, 0
      %v7364 = vsel %vm333, %v7205, 0
      %v7367 = vsel %vm333, %v7206, 0
      %v7370 = vsel %vm333, %v7207, 0
      %v7373 = vsel %vm333, %v7208, 0
      %v7376 = vsel %vm333, %v7209, 0
      %v7379 = vsel %vm333, %v7210, 0
      %v7382 = vsel %vm333, %v7211, 0
      %v7385 = vsel %vm333, %v7212, 0
      %v7388 = vsel %vm333, %v7213, 0
      %v7391 = vsel %vm333, %v7214, 0
      %v7394 = vsel %vm333, %v7215, 0
      %v7397 = vsel %vm333, %v7216, 0
      %v7400 = vsel %vm333, %v7217, 0
      %v7403 = vsel %vm333, %v7218, 0
      %7405 = vmatpush.msra.mxu0 0.0
      %7406 = vmatpush.msra.mxu0 0.0
      %7407 = vmatpush.msra.mxu0 0.0
      %7408 = vmatpush.msra.mxu0 0.0
      %7409 = vmatpush.msra.mxu0 0.0
      %7410 = vmatpush.msra.mxu0 0.0
      %7411 = vmatpush.msra.mxu0 0.0
      %7412 = vmatpush.msra.mxu0 0.0
      %7413 = vmatpush.msra.mxu0 0.0
      %7414 = vmatpush.msra.mxu0 0.0
      %7415 = vmatpush.msra.mxu0 0.0
      %7416 = vmatpush.msra.mxu0 0.0
      %7417 = vmatpush.msra.mxu0 %v7222
      %7418 = vmatpush.msra.mxu0 %v7221
      %7419 = vmatpush.msra.mxu0 %v7220
      %7420 = vmatpush.msra.mxu0 %v7219
      %7421 = vmatmul.f32.gmra.mxu0 %v7358
      %v7422 = vpop.f32.mrf.mxu0
      %v7423 = vadd.f32 %v7310, %v7422
      %7424 = vmatmul.f32.gmra.mxu0 %v7361
      %v7425 = vpop.f32.mrf.mxu0
      %v7426 = vadd.f32 %v7313, %v7425
      %7427 = vmatmul.f32.gmra.mxu0 %v7364
      %v7428 = vpop.f32.mrf.mxu0
      %v7429 = vadd.f32 %v7316, %v7428
      %7430 = vmatmul.f32.gmra.mxu0 %v7367
      %v7431 = vpop.f32.mrf.mxu0
      %v7432 = vadd.f32 %v7319, %v7431
      %7433 = vmatmul.f32.gmra.mxu0 %v7370
      %v7434 = vpop.f32.mrf.mxu0
      %v7435 = vadd.f32 %v7322, %v7434
      %7436 = vmatmul.f32.gmra.mxu0 %v7373
      %v7437 = vpop.f32.mrf.mxu0
      %v7438 = vadd.f32 %v7325, %v7437
      %7439 = vmatmul.f32.gmra.mxu0 %v7376
      %v7440 = vpop.f32.mrf.mxu0
      %v7441 = vadd.f32 %v7328, %v7440
      %7442 = vmatmul.f32.gmra.mxu0 %v7379
      %v7443 = vpop.f32.mrf.mxu0
      %v7444 = vadd.f32 %v7331, %v7443
      %7445 = vmatmul.f32.gmra.mxu0 %v7382
      %v7446 = vpop.f32.mrf.mxu0
      %v7447 = vadd.f32 %v7334, %v7446
      %7448 = vmatmul.f32.gmra.mxu0 %v7385
      %v7449 = vpop.f32.mrf.mxu0
      %v7450 = vadd.f32 %v7337, %v7449
      %7451 = vmatmul.f32.gmra.mxu0 %v7388
      %v7452 = vpop.f32.mrf.mxu0
      %v7453 = vadd.f32 %v7340, %v7452
      %7454 = vmatmul.f32.gmra.mxu0 %v7391
      %v7455 = vpop.f32.mrf.mxu0
      %v7456 = vadd.f32 %v7343, %v7455
      %7457 = vmatmul.f32.gmra.mxu0 %v7394
      %v7458 = vpop.f32.mrf.mxu0
      %v7459 = vadd.f32 %v7346, %v7458
      %7460 = vmatmul.f32.gmra.mxu0 %v7397
      %v7461 = vpop.f32.mrf.mxu0
      %v7462 = vadd.f32 %v7349, %v7461
      %7463 = vmatmul.f32.gmra.mxu0 %v7400
      %v7464 = vpop.f32.mrf.mxu0
      %v7465 = vadd.f32 %v7352, %v7464
      %7466 = vmatmul.f32.gmra.mxu0 %v7403
      %v7467 = vpop.f32.mrf.mxu0
      %v7468 = vadd.f32 %v7355, %v7467
      %7469 = vdwg.mxu0
      %v7470 = vld [vmem:[#allocation2 + $0x2] sm:$0xff]
      %v7471 = vld [vmem:[#allocation2 + $0xa] sm:$0xff]
      %v7472 = vld [vmem:[#allocation2 + $0x12] sm:$0xff]
      %v7473 = vld [vmem:[#allocation2 + $0x1a] sm:$0xff]
      %v7474 = vld [vmem:[#allocation2 + $0x22] sm:$0xff]
      %v7475 = vld [vmem:[#allocation2 + $0x2a] sm:$0xff]
      %v7476 = vld [vmem:[#allocation2 + $0x32] sm:$0xff]
      %v7477 = vld [vmem:[#allocation2 + $0x3a] sm:$0xff]
      %v7478 = vld [vmem:[#allocation2 + $0x42] sm:$0xff]
      %v7479 = vld [vmem:[#allocation2 + $0x4a] sm:$0xff]
      %v7480 = vld [vmem:[#allocation2 + $0x52] sm:$0xff]
      %v7481 = vld [vmem:[#allocation2 + $0x5a] sm:$0xff]
      %v7482 = vld [vmem:[#allocation2 + $0x62] sm:$0xff]
      %v7483 = vld [vmem:[#allocation2 + $0x6a] sm:$0xff]
      %v7484 = vld [vmem:[#allocation2 + $0x72] sm:$0xff]
      %v7485 = vld [vmem:[#allocation2 + $0x7a] sm:$0xff]
      %s7486 = scalar_lea.vmem %s7, 64
      %v7487 = vld [vmem:[%s7486] sm:$0xff]
      %v7488 = vld [vmem:[%s7486 + $0x8] sm:$0xff]
      %v7489 = vld [vmem:[%s7486 + $0x10] sm:$0xff]
      %v7490 = vld [vmem:[%s7486 + $0x18] sm:$0xff]
      %v7492 = vsel %vm333, %v7470, 0
      %v7495 = vsel %vm333, %v7471, 0
      %v7498 = vsel %vm333, %v7472, 0
      %v7501 = vsel %vm333, %v7473, 0
      %v7504 = vsel %vm333, %v7474, 0
      %v7507 = vsel %vm333, %v7475, 0
      %v7510 = vsel %vm333, %v7476, 0
      %v7513 = vsel %vm333, %v7477, 0
      %v7516 = vsel %vm333, %v7478, 0
      %v7519 = vsel %vm333, %v7479, 0
      %v7522 = vsel %vm333, %v7480, 0
      %v7525 = vsel %vm333, %v7481, 0
      %v7528 = vsel %vm333, %v7482, 0
      %v7531 = vsel %vm333, %v7483, 0
      %v7534 = vsel %vm333, %v7484, 0
      %v7537 = vsel %vm333, %v7485, 0
      %7539 = vmatpush.msra.mxu0 0.0
      %7540 = vmatpush.msra.mxu0 0.0
      %7541 = vmatpush.msra.mxu0 0.0
      %7542 = vmatpush.msra.mxu0 0.0
      %7543 = vmatpush.msra.mxu0 0.0
      %7544 = vmatpush.msra.mxu0 0.0
      %7545 = vmatpush.msra.mxu0 0.0
      %7546 = vmatpush.msra.mxu0 0.0
      %7547 = vmatpush.msra.mxu0 0.0
      %7548 = vmatpush.msra.mxu0 0.0
      %7549 = vmatpush.msra.mxu0 0.0
      %7550 = vmatpush.msra.mxu0 0.0
      %7551 = vmatpush.msra.mxu0 %v7490
      %7552 = vmatpush.msra.mxu0 %v7489
      %7553 = vmatpush.msra.mxu0 %v7488
      %7554 = vmatpush.msra.mxu0 %v7487
      %7555 = vmatmul.f32.gmra.mxu0 %v7492
      %v7556 = vpop.f32.mrf.mxu0
      %v7557 = vadd.f32 0.0, %v7556
      %7558 = vmatmul.f32.gmra.mxu0 %v7495
      %v7559 = vpop.f32.mrf.mxu0
      %v7560 = vadd.f32 0.0, %v7559
      %7561 = vmatmul.f32.gmra.mxu0 %v7498
      %v7562 = vpop.f32.mrf.mxu0
      %v7563 = vadd.f32 0.0, %v7562
      %7564 = vmatmul.f32.gmra.mxu0 %v7501
      %v7565 = vpop.f32.mrf.mxu0
      %v7566 = vadd.f32 0.0, %v7565
      %7567 = vmatmul.f32.gmra.mxu0 %v7504
      %v7568 = vpop.f32.mrf.mxu0
      %v7569 = vadd.f32 0.0, %v7568
      %7570 = vmatmul.f32.gmra.mxu0 %v7507
      %v7571 = vpop.f32.mrf.mxu0
      %v7572 = vadd.f32 0.0, %v7571
      %7573 = vmatmul.f32.gmra.mxu0 %v7510
      %v7574 = vpop.f32.mrf.mxu0
      %v7575 = vadd.f32 0.0, %v7574
      %7576 = vmatmul.f32.gmra.mxu0 %v7513
      %v7577 = vpop.f32.mrf.mxu0
      %v7578 = vadd.f32 0.0, %v7577
      %7579 = vmatmul.f32.gmra.mxu0 %v7516
      %v7580 = vpop.f32.mrf.mxu0
      %v7581 = vadd.f32 0.0, %v7580
      %7582 = vmatmul.f32.gmra.mxu0 %v7519
      %v7583 = vpop.f32.mrf.mxu0
      %v7584 = vadd.f32 0.0, %v7583
      %7585 = vmatmul.f32.gmra.mxu0 %v7522
      %v7586 = vpop.f32.mrf.mxu0
      %v7587 = vadd.f32 0.0, %v7586
      %7588 = vmatmul.f32.gmra.mxu0 %v7525
      %v7589 = vpop.f32.mrf.mxu0
      %v7590 = vadd.f32 0.0, %v7589
      %7591 = vmatmul.f32.gmra.mxu0 %v7528
      %v7592 = vpop.f32.mrf.mxu0
      %v7593 = vadd.f32 0.0, %v7592
      %7594 = vmatmul.f32.gmra.mxu0 %v7531
      %v7595 = vpop.f32.mrf.mxu0
      %v7596 = vadd.f32 0.0, %v7595
      %7597 = vmatmul.f32.gmra.mxu0 %v7534
      %v7598 = vpop.f32.mrf.mxu0
      %v7599 = vadd.f32 0.0, %v7598
      %7600 = vmatmul.f32.gmra.mxu0 %v7537
      %v7601 = vpop.f32.mrf.mxu0
      %v7602 = vadd.f32 0.0, %v7601
      %7603 = vdwg.mxu0
      %v7604 = vadd.f32 %v7423, %v7557
      %v7605 = vadd.f32 %v7426, %v7560
      %v7606 = vadd.f32 %v7429, %v7563
      %v7607 = vadd.f32 %v7432, %v7566
      %v7608 = vadd.f32 %v7435, %v7569
      %v7609 = vadd.f32 %v7438, %v7572
      %v7610 = vadd.f32 %v7441, %v7575
      %v7611 = vadd.f32 %v7444, %v7578
      %v7612 = vadd.f32 %v7447, %v7581
      %v7613 = vadd.f32 %v7450, %v7584
      %v7614 = vadd.f32 %v7453, %v7587
      %v7615 = vadd.f32 %v7456, %v7590
      %v7616 = vadd.f32 %v7459, %v7593
      %v7617 = vadd.f32 %v7462, %v7596
      %v7618 = vadd.f32 %v7465, %v7599
      %v7619 = vadd.f32 %v7468, %v7602
      %v7620 = vld [vmem:[#allocation2 + $0x10] sm:$0xff]
      %v7621 = vld [vmem:[#allocation2 + $0x18] sm:$0xff]
      %v7622 = vld [vmem:[#allocation2 + $0x20] sm:$0xff]
      %v7623 = vld [vmem:[#allocation2 + $0x28] sm:$0xff]
      %v7624 = vld [vmem:[#allocation2 + $0x30] sm:$0xff]
      %v7625 = vld [vmem:[#allocation2 + $0x38] sm:$0xff]
      %v7626 = vld [vmem:[#allocation2 + $0x40] sm:$0xff]
      %v7627 = vld [vmem:[#allocation2 + $0x48] sm:$0xff]
      %v7628 = vld [vmem:[#allocation2 + $0x50] sm:$0xff]
      %v7629 = vld [vmem:[#allocation2 + $0x58] sm:$0xff]
      %v7630 = vld [vmem:[#allocation2 + $0x60] sm:$0xff]
      %v7631 = vld [vmem:[#allocation2 + $0x68] sm:$0xff]
      %v7632 = vld [vmem:[#allocation2 + $0x70] sm:$0xff]
      %v7633 = vld [vmem:[#allocation2 + $0x78] sm:$0xff]
      %v7634 = vld [vmem:[#allocation2 + $0x80] sm:$0xff]
      %v7635 = vld [vmem:[#allocation2 + $0x88] sm:$0xff]
      %s7636 = scalar_lea.vmem %s7, 96
      %v7637 = vld [vmem:[%s7636] sm:$0xff]
      %v7638 = vld [vmem:[%s7636 + $0x8] sm:$0xff]
      %v7639 = vld [vmem:[%s7636 + $0x10] sm:$0xff]
      %v7640 = vld [vmem:[%s7636 + $0x18] sm:$0xff]
      %v7642 = vsel %vm333, %v7620, 0
      %v7645 = vsel %vm333, %v7621, 0
      %v7648 = vsel %vm333, %v7622, 0
      %v7651 = vsel %vm333, %v7623, 0
      %v7654 = vsel %vm333, %v7624, 0
      %v7657 = vsel %vm333, %v7625, 0
      %v7660 = vsel %vm333, %v7626, 0
      %v7663 = vsel %vm333, %v7627, 0
      %v7666 = vsel %vm333, %v7628, 0
      %v7669 = vsel %vm333, %v7629, 0
      %v7672 = vsel %vm333, %v7630, 0
      %v7675 = vsel %vm333, %v7631, 0
      %v7678 = vsel %vm333, %v7632, 0
      %v7681 = vsel %vm333, %v7633, 0
      %v7684 = vsel %vm333, %v7634, 0
      %v7687 = vsel %vm333, %v7635, 0
      %7689 = vmatpush.msra.mxu0 0.0
      %7690 = vmatpush.msra.mxu0 0.0
      %7691 = vmatpush.msra.mxu0 0.0
      %7692 = vmatpush.msra.mxu0 0.0
      %7693 = vmatpush.msra.mxu0 0.0
      %7694 = vmatpush.msra.mxu0 0.0
      %7695 = vmatpush.msra.mxu0 0.0
      %7696 = vmatpush.msra.mxu0 0.0
      %7697 = vmatpush.msra.mxu0 0.0
      %7698 = vmatpush.msra.mxu0 0.0
      %7699 = vmatpush.msra.mxu0 0.0
      %7700 = vmatpush.msra.mxu0 0.0
      %7701 = vmatpush.msra.mxu0 %v7640
      %7702 = vmatpush.msra.mxu0 %v7639
      %7703 = vmatpush.msra.mxu0 %v7638
      %7704 = vmatpush.msra.mxu0 %v7637
      %7705 = vmatmul.f32.gmra.mxu0 %v7642
      %v7706 = vpop.f32.mrf.mxu0
      %v7707 = vadd.f32 0.0, %v7706
      %7708 = vmatmul.f32.gmra.mxu0 %v7645
      %v7709 = vpop.f32.mrf.mxu0
      %v7710 = vadd.f32 0.0, %v7709
      %7711 = vmatmul.f32.gmra.mxu0 %v7648
      %v7712 = vpop.f32.mrf.mxu0
      %v7713 = vadd.f32 0.0, %v7712
      %7714 = vmatmul.f32.gmra.mxu0 %v7651
      %v7715 = vpop.f32.mrf.mxu0
      %v7716 = vadd.f32 0.0, %v7715
      %7717 = vmatmul.f32.gmra.mxu0 %v7654
      %v7718 = vpop.f32.mrf.mxu0
      %v7719 = vadd.f32 0.0, %v7718
      %7720 = vmatmul.f32.gmra.mxu0 %v7657
      %v7721 = vpop.f32.mrf.mxu0
      %v7722 = vadd.f32 0.0, %v7721
      %7723 = vmatmul.f32.gmra.mxu0 %v7660
      %v7724 = vpop.f32.mrf.mxu0
      %v7725 = vadd.f32 0.0, %v7724
      %7726 = vmatmul.f32.gmra.mxu0 %v7663
      %v7727 = vpop.f32.mrf.mxu0
      %v7728 = vadd.f32 0.0, %v7727
      %7729 = vmatmul.f32.gmra.mxu0 %v7666
      %v7730 = vpop.f32.mrf.mxu0
      %v7731 = vadd.f32 0.0, %v7730
      %7732 = vmatmul.f32.gmra.mxu0 %v7669
      %v7733 = vpop.f32.mrf.mxu0
      %v7734 = vadd.f32 0.0, %v7733
      %7735 = vmatmul.f32.gmra.mxu0 %v7672
      %v7736 = vpop.f32.mrf.mxu0
      %v7737 = vadd.f32 0.0, %v7736
      %7738 = vmatmul.f32.gmra.mxu0 %v7675
      %v7739 = vpop.f32.mrf.mxu0
      %v7740 = vadd.f32 0.0, %v7739
      %7741 = vmatmul.f32.gmra.mxu0 %v7678
      %v7742 = vpop.f32.mrf.mxu0
      %v7743 = vadd.f32 0.0, %v7742
      %7744 = vmatmul.f32.gmra.mxu0 %v7681
      %v7745 = vpop.f32.mrf.mxu0
      %v7746 = vadd.f32 0.0, %v7745
      %7747 = vmatmul.f32.gmra.mxu0 %v7684
      %v7748 = vpop.f32.mrf.mxu0
      %v7749 = vadd.f32 0.0, %v7748
      %7750 = vmatmul.f32.gmra.mxu0 %v7687
      %v7751 = vpop.f32.mrf.mxu0
      %v7752 = vadd.f32 0.0, %v7751
      %7753 = vdwg.mxu0
      %v7754 = vadd.f32 %v7604, %v7707
      %v7755 = vadd.f32 %v7605, %v7710
      %v7756 = vadd.f32 %v7606, %v7713
      %v7757 = vadd.f32 %v7607, %v7716
      %v7758 = vadd.f32 %v7608, %v7719
      %v7759 = vadd.f32 %v7609, %v7722
      %v7760 = vadd.f32 %v7610, %v7725
      %v7761 = vadd.f32 %v7611, %v7728
      %v7762 = vadd.f32 %v7612, %v7731
      %v7763 = vadd.f32 %v7613, %v7734
      %v7764 = vadd.f32 %v7614, %v7737
      %v7765 = vadd.f32 %v7615, %v7740
      %v7766 = vadd.f32 %v7616, %v7743
      %v7767 = vadd.f32 %v7617, %v7746
      %v7768 = vadd.f32 %v7618, %v7749
      %v7769 = vadd.f32 %v7619, %v7752
      %v7770 = vld [vmem:[#allocation2 + $0x11] sm:$0xff]
      %v7771 = vld [vmem:[#allocation2 + $0x19] sm:$0xff]
      %v7772 = vld [vmem:[#allocation2 + $0x21] sm:$0xff]
      %v7773 = vld [vmem:[#allocation2 + $0x29] sm:$0xff]
      %v7774 = vld [vmem:[#allocation2 + $0x31] sm:$0xff]
      %v7775 = vld [vmem:[#allocation2 + $0x39] sm:$0xff]
      %v7776 = vld [vmem:[#allocation2 + $0x41] sm:$0xff]
      %v7777 = vld [vmem:[#allocation2 + $0x49] sm:$0xff]
      %v7778 = vld [vmem:[#allocation2 + $0x51] sm:$0xff]
      %v7779 = vld [vmem:[#allocation2 + $0x59] sm:$0xff]
      %v7780 = vld [vmem:[#allocation2 + $0x61] sm:$0xff]
      %v7781 = vld [vmem:[#allocation2 + $0x69] sm:$0xff]
      %v7782 = vld [vmem:[#allocation2 + $0x71] sm:$0xff]
      %v7783 = vld [vmem:[#allocation2 + $0x79] sm:$0xff]
      %v7784 = vld [vmem:[#allocation2 + $0x81] sm:$0xff]
      %v7785 = vld [vmem:[#allocation2 + $0x89] sm:$0xff]
      %s7786 = scalar_lea.vmem %s7, 128
      %v7787 = vld [vmem:[%s7786] sm:$0xff]
      %v7788 = vld [vmem:[%s7786 + $0x8] sm:$0xff]
      %v7789 = vld [vmem:[%s7786 + $0x10] sm:$0xff]
      %v7790 = vld [vmem:[%s7786 + $0x18] sm:$0xff]
      %v7792 = vsel %vm333, %v7770, 0
      %v7795 = vsel %vm333, %v7771, 0
      %v7798 = vsel %vm333, %v7772, 0
      %v7801 = vsel %vm333, %v7773, 0
      %v7804 = vsel %vm333, %v7774, 0
      %v7807 = vsel %vm333, %v7775, 0
      %v7810 = vsel %vm333, %v7776, 0
      %v7813 = vsel %vm333, %v7777, 0
      %v7816 = vsel %vm333, %v7778, 0
      %v7819 = vsel %vm333, %v7779, 0
      %v7822 = vsel %vm333, %v7780, 0
      %v7825 = vsel %vm333, %v7781, 0
      %v7828 = vsel %vm333, %v7782, 0
      %v7831 = vsel %vm333, %v7783, 0
      %v7834 = vsel %vm333, %v7784, 0
      %v7837 = vsel %vm333, %v7785, 0
      %7839 = vmatpush.msra.mxu0 0.0
      %7840 = vmatpush.msra.mxu0 0.0
      %7841 = vmatpush.msra.mxu0 0.0
      %7842 = vmatpush.msra.mxu0 0.0
      %7843 = vmatpush.msra.mxu0 0.0
      %7844 = vmatpush.msra.mxu0 0.0
      %7845 = vmatpush.msra.mxu0 0.0
      %7846 = vmatpush.msra.mxu0 0.0
      %7847 = vmatpush.msra.mxu0 0.0
      %7848 = vmatpush.msra.mxu0 0.0
      %7849 = vmatpush.msra.mxu0 0.0
      %7850 = vmatpush.msra.mxu0 0.0
      %7851 = vmatpush.msra.mxu0 %v7790
      %7852 = vmatpush.msra.mxu0 %v7789
      %7853 = vmatpush.msra.mxu0 %v7788
      %7854 = vmatpush.msra.mxu0 %v7787
      %7855 = vmatmul.f32.gmra.mxu0 %v7792
      %v7856 = vpop.f32.mrf.mxu0
      %v7857 = vadd.f32 0.0, %v7856
      %7858 = vmatmul.f32.gmra.mxu0 %v7795
      %v7859 = vpop.f32.mrf.mxu0
      %v7860 = vadd.f32 0.0, %v7859
      %7861 = vmatmul.f32.gmra.mxu0 %v7798
      %v7862 = vpop.f32.mrf.mxu0
      %v7863 = vadd.f32 0.0, %v7862
      %7864 = vmatmul.f32.gmra.mxu0 %v7801
      %v7865 = vpop.f32.mrf.mxu0
      %v7866 = vadd.f32 0.0, %v7865
      %7867 = vmatmul.f32.gmra.mxu0 %v7804
      %v7868 = vpop.f32.mrf.mxu0
      %v7869 = vadd.f32 0.0, %v7868
      %7870 = vmatmul.f32.gmra.mxu0 %v7807
      %v7871 = vpop.f32.mrf.mxu0
      %v7872 = vadd.f32 0.0, %v7871
      %7873 = vmatmul.f32.gmra.mxu0 %v7810
      %v7874 = vpop.f32.mrf.mxu0
      %v7875 = vadd.f32 0.0, %v7874
      %7876 = vmatmul.f32.gmra.mxu0 %v7813
      %v7877 = vpop.f32.mrf.mxu0
      %v7878 = vadd.f32 0.0, %v7877
      %7879 = vmatmul.f32.gmra.mxu0 %v7816
      %v7880 = vpop.f32.mrf.mxu0
      %v7881 = vadd.f32 0.0, %v7880
      %7882 = vmatmul.f32.gmra.mxu0 %v7819
      %v7883 = vpop.f32.mrf.mxu0
      %v7884 = vadd.f32 0.0, %v7883
      %7885 = vmatmul.f32.gmra.mxu0 %v7822
      %v7886 = vpop.f32.mrf.mxu0
      %v7887 = vadd.f32 0.0, %v7886
      %7888 = vmatmul.f32.gmra.mxu0 %v7825
      %v7889 = vpop.f32.mrf.mxu0
      %v7890 = vadd.f32 0.0, %v7889
      %7891 = vmatmul.f32.gmra.mxu0 %v7828
      %v7892 = vpop.f32.mrf.mxu0
      %v7893 = vadd.f32 0.0, %v7892
      %7894 = vmatmul.f32.gmra.mxu0 %v7831
      %v7895 = vpop.f32.mrf.mxu0
      %v7896 = vadd.f32 0.0, %v7895
      %7897 = vmatmul.f32.gmra.mxu0 %v7834
      %v7898 = vpop.f32.mrf.mxu0
      %v7899 = vadd.f32 0.0, %v7898
      %7900 = vmatmul.f32.gmra.mxu0 %v7837
      %v7901 = vpop.f32.mrf.mxu0
      %v7902 = vadd.f32 0.0, %v7901
      %7903 = vdwg.mxu0
      %v7904 = vadd.f32 %v7754, %v7857
      %v7905 = vadd.f32 %v7755, %v7860
      %v7906 = vadd.f32 %v7756, %v7863
      %v7907 = vadd.f32 %v7757, %v7866
      %v7908 = vadd.f32 %v7758, %v7869
      %v7909 = vadd.f32 %v7759, %v7872
      %v7910 = vadd.f32 %v7760, %v7875
      %v7911 = vadd.f32 %v7761, %v7878
      %v7912 = vadd.f32 %v7762, %v7881
      %v7913 = vadd.f32 %v7763, %v7884
      %v7914 = vadd.f32 %v7764, %v7887
      %v7915 = vadd.f32 %v7765, %v7890
      %v7916 = vadd.f32 %v7766, %v7893
      %v7917 = vadd.f32 %v7767, %v7896
      %v7918 = vadd.f32 %v7768, %v7899
      %v7919 = vadd.f32 %v7769, %v7902
      %v7920 = vld [vmem:[#allocation2 + $0x12] sm:$0xff]
      %v7921 = vld [vmem:[#allocation2 + $0x1a] sm:$0xff]
      %v7922 = vld [vmem:[#allocation2 + $0x22] sm:$0xff]
      %v7923 = vld [vmem:[#allocation2 + $0x2a] sm:$0xff]
      %v7924 = vld [vmem:[#allocation2 + $0x32] sm:$0xff]
      %v7925 = vld [vmem:[#allocation2 + $0x3a] sm:$0xff]
      %v7926 = vld [vmem:[#allocation2 + $0x42] sm:$0xff]
      %v7927 = vld [vmem:[#allocation2 + $0x4a] sm:$0xff]
      %v7928 = vld [vmem:[#allocation2 + $0x52] sm:$0xff]
      %v7929 = vld [vmem:[#allocation2 + $0x5a] sm:$0xff]
      %v7930 = vld [vmem:[#allocation2 + $0x62] sm:$0xff]
      %v7931 = vld [vmem:[#allocation2 + $0x6a] sm:$0xff]
      %v7932 = vld [vmem:[#allocation2 + $0x72] sm:$0xff]
      %v7933 = vld [vmem:[#allocation2 + $0x7a] sm:$0xff]
      %v7934 = vld [vmem:[#allocation2 + $0x82] sm:$0xff]
      %v7935 = vld [vmem:[#allocation2 + $0x8a] sm:$0xff]
      %s7936 = scalar_lea.vmem %s7, 160
      %v7937 = vld [vmem:[%s7936] sm:$0xff]
      %v7938 = vld [vmem:[%s7936 + $0x8] sm:$0xff]
      %v7939 = vld [vmem:[%s7936 + $0x10] sm:$0xff]
      %v7940 = vld [vmem:[%s7936 + $0x18] sm:$0xff]
      %v7942 = vsel %vm333, %v7920, 0
      %v7945 = vsel %vm333, %v7921, 0
      %v7948 = vsel %vm333, %v7922, 0
      %v7951 = vsel %vm333, %v7923, 0
      %v7954 = vsel %vm333, %v7924, 0
      %v7957 = vsel %vm333, %v7925, 0
      %v7960 = vsel %vm333, %v7926, 0
      %v7963 = vsel %vm333, %v7927, 0
      %v7966 = vsel %vm333, %v7928, 0
      %v7969 = vsel %vm333, %v7929, 0
      %v7972 = vsel %vm333, %v7930, 0
      %v7975 = vsel %vm333, %v7931, 0
      %v7978 = vsel %vm333, %v7932, 0
      %v7981 = vsel %vm333, %v7933, 0
      %v7984 = vsel %vm333, %v7934, 0
      %v7987 = vsel %vm333, %v7935, 0
      %7989 = vmatpush.msra.mxu0 0.0
      %7990 = vmatpush.msra.mxu0 0.0
      %7991 = vmatpush.msra.mxu0 0.0
      %7992 = vmatpush.msra.mxu0 0.0
      %7993 = vmatpush.msra.mxu0 0.0
      %7994 = vmatpush.msra.mxu0 0.0
      %7995 = vmatpush.msra.mxu0 0.0
      %7996 = vmatpush.msra.mxu0 0.0
      %7997 = vmatpush.msra.mxu0 0.0
      %7998 = vmatpush.msra.mxu0 0.0
      %7999 = vmatpush.msra.mxu0 0.0
      %8000 = vmatpush.msra.mxu0 0.0
      %8001 = vmatpush.msra.mxu0 %v7940
      %8002 = vmatpush.msra.mxu0 %v7939
      %8003 = vmatpush.msra.mxu0 %v7938
      %8004 = vmatpush.msra.mxu0 %v7937
      %8005 = vmatmul.f32.gmra.mxu0 %v7942
      %v8006 = vpop.f32.mrf.mxu0
      %v8007 = vadd.f32 0.0, %v8006
      %8008 = vmatmul.f32.gmra.mxu0 %v7945
      %v8009 = vpop.f32.mrf.mxu0
      %v8010 = vadd.f32 0.0, %v8009
      %8011 = vmatmul.f32.gmra.mxu0 %v7948
      %v8012 = vpop.f32.mrf.mxu0
      %v8013 = vadd.f32 0.0, %v8012
      %8014 = vmatmul.f32.gmra.mxu0 %v7951
      %v8015 = vpop.f32.mrf.mxu0
      %v8016 = vadd.f32 0.0, %v8015
      %8017 = vmatmul.f32.gmra.mxu0 %v7954
      %v8018 = vpop.f32.mrf.mxu0
      %v8019 = vadd.f32 0.0, %v8018
      %8020 = vmatmul.f32.gmra.mxu0 %v7957
      %v8021 = vpop.f32.mrf.mxu0
      %v8022 = vadd.f32 0.0, %v8021
      %8023 = vmatmul.f32.gmra.mxu0 %v7960
      %v8024 = vpop.f32.mrf.mxu0
      %v8025 = vadd.f32 0.0, %v8024
      %8026 = vmatmul.f32.gmra.mxu0 %v7963
      %v8027 = vpop.f32.mrf.mxu0
      %v8028 = vadd.f32 0.0, %v8027
      %8029 = vmatmul.f32.gmra.mxu0 %v7966
      %v8030 = vpop.f32.mrf.mxu0
      %v8031 = vadd.f32 0.0, %v8030
      %8032 = vmatmul.f32.gmra.mxu0 %v7969
      %v8033 = vpop.f32.mrf.mxu0
      %v8034 = vadd.f32 0.0, %v8033
      %8035 = vmatmul.f32.gmra.mxu0 %v7972
      %v8036 = vpop.f32.mrf.mxu0
      %v8037 = vadd.f32 0.0, %v8036
      %8038 = vmatmul.f32.gmra.mxu0 %v7975
      %v8039 = vpop.f32.mrf.mxu0
      %v8040 = vadd.f32 0.0, %v8039
      %8041 = vmatmul.f32.gmra.mxu0 %v7978
      %v8042 = vpop.f32.mrf.mxu0
      %v8043 = vadd.f32 0.0, %v8042
      %8044 = vmatmul.f32.gmra.mxu0 %v7981
      %v8045 = vpop.f32.mrf.mxu0
      %v8046 = vadd.f32 0.0, %v8045
      %8047 = vmatmul.f32.gmra.mxu0 %v7984
      %v8048 = vpop.f32.mrf.mxu0
      %v8049 = vadd.f32 0.0, %v8048
      %8050 = vmatmul.f32.gmra.mxu0 %v7987
      %v8051 = vpop.f32.mrf.mxu0
      %v8052 = vadd.f32 0.0, %v8051
      %8053 = vdwg.mxu0
      %v8054 = vadd.f32 %v7904, %v8007
      %v8055 = vadd.f32 %v7905, %v8010
      %v8056 = vadd.f32 %v7906, %v8013
      %v8057 = vadd.f32 %v7907, %v8016
      %v8058 = vadd.f32 %v7908, %v8019
      %v8059 = vadd.f32 %v7909, %v8022
      %v8060 = vadd.f32 %v7910, %v8025
      %v8061 = vadd.f32 %v7911, %v8028
      %v8062 = vadd.f32 %v7912, %v8031
      %v8063 = vadd.f32 %v7913, %v8034
      %v8064 = vadd.f32 %v7914, %v8037
      %v8065 = vadd.f32 %v7915, %v8040
      %v8066 = vadd.f32 %v7916, %v8043
      %v8067 = vadd.f32 %v7917, %v8046
      %v8068 = vadd.f32 %v7918, %v8049
      %v8069 = vadd.f32 %v7919, %v8052
      %v8070 = vld [vmem:[#allocation2 + $0x20] sm:$0xff]
      %v8071 = vld [vmem:[#allocation2 + $0x28] sm:$0xff]
      %v8072 = vld [vmem:[#allocation2 + $0x30] sm:$0xff]
      %v8073 = vld [vmem:[#allocation2 + $0x38] sm:$0xff]
      %v8074 = vld [vmem:[#allocation2 + $0x40] sm:$0xff]
      %v8075 = vld [vmem:[#allocation2 + $0x48] sm:$0xff]
      %v8076 = vld [vmem:[#allocation2 + $0x50] sm:$0xff]
      %v8077 = vld [vmem:[#allocation2 + $0x58] sm:$0xff]
      %v8078 = vld [vmem:[#allocation2 + $0x60] sm:$0xff]
      %v8079 = vld [vmem:[#allocation2 + $0x68] sm:$0xff]
      %v8080 = vld [vmem:[#allocation2 + $0x70] sm:$0xff]
      %v8081 = vld [vmem:[#allocation2 + $0x78] sm:$0xff]
      %v8082 = vld [vmem:[#allocation2 + $0x80] sm:$0xff]
      %v8083 = vld [vmem:[#allocation2 + $0x88] sm:$0xff]
      %v8084 = vld [vmem:[#allocation2 + $0x90] sm:$0xff]
      %v8085 = vld [vmem:[#allocation2 + $0x98] sm:$0xff]
      %s8086 = scalar_lea.vmem %s7, 192
      %v8087 = vld [vmem:[%s8086] sm:$0xff]
      %v8088 = vld [vmem:[%s8086 + $0x8] sm:$0xff]
      %v8089 = vld [vmem:[%s8086 + $0x10] sm:$0xff]
      %v8090 = vld [vmem:[%s8086 + $0x18] sm:$0xff]
      %v8092 = vsel %vm333, %v8070, 0
      %v8095 = vsel %vm333, %v8071, 0
      %v8098 = vsel %vm333, %v8072, 0
      %v8101 = vsel %vm333, %v8073, 0
      %v8104 = vsel %vm333, %v8074, 0
      %v8107 = vsel %vm333, %v8075, 0
      %v8110 = vsel %vm333, %v8076, 0
      %v8113 = vsel %vm333, %v8077, 0
      %v8116 = vsel %vm333, %v8078, 0
      %v8119 = vsel %vm333, %v8079, 0
      %v8122 = vsel %vm333, %v8080, 0
      %v8125 = vsel %vm333, %v8081, 0
      %v8128 = vsel %vm333, %v8082, 0
      %v8131 = vsel %vm333, %v8083, 0
      %v8134 = vsel %vm333, %v8084, 0
      %v8137 = vsel %vm333, %v8085, 0
      %8139 = vmatpush.msra.mxu0 0.0
      %8140 = vmatpush.msra.mxu0 0.0
      %8141 = vmatpush.msra.mxu0 0.0
      %8142 = vmatpush.msra.mxu0 0.0
      %8143 = vmatpush.msra.mxu0 0.0
      %8144 = vmatpush.msra.mxu0 0.0
      %8145 = vmatpush.msra.mxu0 0.0
      %8146 = vmatpush.msra.mxu0 0.0
      %8147 = vmatpush.msra.mxu0 0.0
      %8148 = vmatpush.msra.mxu0 0.0
      %8149 = vmatpush.msra.mxu0 0.0
      %8150 = vmatpush.msra.mxu0 0.0
      %8151 = vmatpush.msra.mxu0 %v8090
      %8152 = vmatpush.msra.mxu0 %v8089
      %8153 = vmatpush.msra.mxu0 %v8088
      %8154 = vmatpush.msra.mxu0 %v8087
      %8155 = vmatmul.f32.gmra.mxu0 %v8092
      %v8156 = vpop.f32.mrf.mxu0
      %v8157 = vadd.f32 0.0, %v8156
      %8158 = vmatmul.f32.gmra.mxu0 %v8095
      %v8159 = vpop.f32.mrf.mxu0
      %v8160 = vadd.f32 0.0, %v8159
      %8161 = vmatmul.f32.gmra.mxu0 %v8098
      %v8162 = vpop.f32.mrf.mxu0
      %v8163 = vadd.f32 0.0, %v8162
      %8164 = vmatmul.f32.gmra.mxu0 %v8101
      %v8165 = vpop.f32.mrf.mxu0
      %v8166 = vadd.f32 0.0, %v8165
      %8167 = vmatmul.f32.gmra.mxu0 %v8104
      %v8168 = vpop.f32.mrf.mxu0
      %v8169 = vadd.f32 0.0, %v8168
      %8170 = vmatmul.f32.gmra.mxu0 %v8107
      %v8171 = vpop.f32.mrf.mxu0
      %v8172 = vadd.f32 0.0, %v8171
      %8173 = vmatmul.f32.gmra.mxu0 %v8110
      %v8174 = vpop.f32.mrf.mxu0
      %v8175 = vadd.f32 0.0, %v8174
      %8176 = vmatmul.f32.gmra.mxu0 %v8113
      %v8177 = vpop.f32.mrf.mxu0
      %v8178 = vadd.f32 0.0, %v8177
      %8179 = vmatmul.f32.gmra.mxu0 %v8116
      %v8180 = vpop.f32.mrf.mxu0
      %v8181 = vadd.f32 0.0, %v8180
      %8182 = vmatmul.f32.gmra.mxu0 %v8119
      %v8183 = vpop.f32.mrf.mxu0
      %v8184 = vadd.f32 0.0, %v8183
      %8185 = vmatmul.f32.gmra.mxu0 %v8122
      %v8186 = vpop.f32.mrf.mxu0
      %v8187 = vadd.f32 0.0, %v8186
      %8188 = vmatmul.f32.gmra.mxu0 %v8125
      %v8189 = vpop.f32.mrf.mxu0
      %v8190 = vadd.f32 0.0, %v8189
      %8191 = vmatmul.f32.gmra.mxu0 %v8128
      %v8192 = vpop.f32.mrf.mxu0
      %v8193 = vadd.f32 0.0, %v8192
      %8194 = vmatmul.f32.gmra.mxu0 %v8131
      %v8195 = vpop.f32.mrf.mxu0
      %v8196 = vadd.f32 0.0, %v8195
      %8197 = vmatmul.f32.gmra.mxu0 %v8134
      %v8198 = vpop.f32.mrf.mxu0
      %v8199 = vadd.f32 0.0, %v8198
      %8200 = vmatmul.f32.gmra.mxu0 %v8137
      %v8201 = vpop.f32.mrf.mxu0
      %v8202 = vadd.f32 0.0, %v8201
      %8203 = vdwg.mxu0
      %v8204 = vadd.f32 %v8054, %v8157
      %v8205 = vadd.f32 %v8055, %v8160
      %v8206 = vadd.f32 %v8056, %v8163
      %v8207 = vadd.f32 %v8057, %v8166
      %v8208 = vadd.f32 %v8058, %v8169
      %v8209 = vadd.f32 %v8059, %v8172
      %v8210 = vadd.f32 %v8060, %v8175
      %v8211 = vadd.f32 %v8061, %v8178
      %v8212 = vadd.f32 %v8062, %v8181
      %v8213 = vadd.f32 %v8063, %v8184
      %v8214 = vadd.f32 %v8064, %v8187
      %v8215 = vadd.f32 %v8065, %v8190
      %v8216 = vadd.f32 %v8066, %v8193
      %v8217 = vadd.f32 %v8067, %v8196
      %v8218 = vadd.f32 %v8068, %v8199
      %v8219 = vadd.f32 %v8069, %v8202
      %v8220 = vld [vmem:[#allocation2 + $0x21] sm:$0xff]
      %v8221 = vld [vmem:[#allocation2 + $0x29] sm:$0xff]
      %v8222 = vld [vmem:[#allocation2 + $0x31] sm:$0xff]
      %v8223 = vld [vmem:[#allocation2 + $0x39] sm:$0xff]
      %v8224 = vld [vmem:[#allocation2 + $0x41] sm:$0xff]
      %v8225 = vld [vmem:[#allocation2 + $0x49] sm:$0xff]
      %v8226 = vld [vmem:[#allocation2 + $0x51] sm:$0xff]
      %v8227 = vld [vmem:[#allocation2 + $0x59] sm:$0xff]
      %v8228 = vld [vmem:[#allocation2 + $0x61] sm:$0xff]
      %v8229 = vld [vmem:[#allocation2 + $0x69] sm:$0xff]
      %v8230 = vld [vmem:[#allocation2 + $0x71] sm:$0xff]
      %v8231 = vld [vmem:[#allocation2 + $0x79] sm:$0xff]
      %v8232 = vld [vmem:[#allocation2 + $0x81] sm:$0xff]
      %v8233 = vld [vmem:[#allocation2 + $0x89] sm:$0xff]
      %v8234 = vld [vmem:[#allocation2 + $0x91] sm:$0xff]
      %v8235 = vld [vmem:[#allocation2 + $0x99] sm:$0xff]
      %s8236 = scalar_lea.vmem %s7, 224
      %v8237 = vld [vmem:[%s8236] sm:$0xff]
      %v8238 = vld [vmem:[%s8236 + $0x8] sm:$0xff]
      %v8239 = vld [vmem:[%s8236 + $0x10] sm:$0xff]
      %v8240 = vld [vmem:[%s8236 + $0x18] sm:$0xff]
      %v8242 = vsel %vm333, %v8220, 0
      %v8245 = vsel %vm333, %v8221, 0
      %v8248 = vsel %vm333, %v8222, 0
      %v8251 = vsel %vm333, %v8223, 0
      %v8254 = vsel %vm333, %v8224, 0
      %v8257 = vsel %vm333, %v8225, 0
      %v8260 = vsel %vm333, %v8226, 0
      %v8263 = vsel %vm333, %v8227, 0
      %v8266 = vsel %vm333, %v8228, 0
      %v8269 = vsel %vm333, %v8229, 0
      %v8272 = vsel %vm333, %v8230, 0
      %v8275 = vsel %vm333, %v8231, 0
      %v8278 = vsel %vm333, %v8232, 0
      %v8281 = vsel %vm333, %v8233, 0
      %v8284 = vsel %vm333, %v8234, 0
      %v8287 = vsel %vm333, %v8235, 0
      %8289 = vmatpush.msra.mxu0 0.0
      %8290 = vmatpush.msra.mxu0 0.0
      %8291 = vmatpush.msra.mxu0 0.0
      %8292 = vmatpush.msra.mxu0 0.0
      %8293 = vmatpush.msra.mxu0 0.0
      %8294 = vmatpush.msra.mxu0 0.0
      %8295 = vmatpush.msra.mxu0 0.0
      %8296 = vmatpush.msra.mxu0 0.0
      %8297 = vmatpush.msra.mxu0 0.0
      %8298 = vmatpush.msra.mxu0 0.0
      %8299 = vmatpush.msra.mxu0 0.0
      %8300 = vmatpush.msra.mxu0 0.0
      %8301 = vmatpush.msra.mxu0 %v8240
      %8302 = vmatpush.msra.mxu0 %v8239
      %8303 = vmatpush.msra.mxu0 %v8238
      %8304 = vmatpush.msra.mxu0 %v8237
      %8305 = vmatmul.f32.gmra.mxu0 %v8242
      %v8306 = vpop.f32.mrf.mxu0
      %v8307 = vadd.f32 0.0, %v8306
      %8308 = vmatmul.f32.gmra.mxu0 %v8245
      %v8309 = vpop.f32.mrf.mxu0
      %v8310 = vadd.f32 0.0, %v8309
      %8311 = vmatmul.f32.gmra.mxu0 %v8248
      %v8312 = vpop.f32.mrf.mxu0
      %v8313 = vadd.f32 0.0, %v8312
      %8314 = vmatmul.f32.gmra.mxu0 %v8251
      %v8315 = vpop.f32.mrf.mxu0
      %v8316 = vadd.f32 0.0, %v8315
      %8317 = vmatmul.f32.gmra.mxu0 %v8254
      %v8318 = vpop.f32.mrf.mxu0
      %v8319 = vadd.f32 0.0, %v8318
      %8320 = vmatmul.f32.gmra.mxu0 %v8257
      %v8321 = vpop.f32.mrf.mxu0
      %v8322 = vadd.f32 0.0, %v8321
      %8323 = vmatmul.f32.gmra.mxu0 %v8260
      %v8324 = vpop.f32.mrf.mxu0
      %v8325 = vadd.f32 0.0, %v8324
      %8326 = vmatmul.f32.gmra.mxu0 %v8263
      %v8327 = vpop.f32.mrf.mxu0
      %v8328 = vadd.f32 0.0, %v8327
      %8329 = vmatmul.f32.gmra.mxu0 %v8266
      %v8330 = vpop.f32.mrf.mxu0
      %v8331 = vadd.f32 0.0, %v8330
      %8332 = vmatmul.f32.gmra.mxu0 %v8269
      %v8333 = vpop.f32.mrf.mxu0
      %v8334 = vadd.f32 0.0, %v8333
      %8335 = vmatmul.f32.gmra.mxu0 %v8272
      %v8336 = vpop.f32.mrf.mxu0
      %v8337 = vadd.f32 0.0, %v8336
      %8338 = vmatmul.f32.gmra.mxu0 %v8275
      %v8339 = vpop.f32.mrf.mxu0
      %v8340 = vadd.f32 0.0, %v8339
      %8341 = vmatmul.f32.gmra.mxu0 %v8278
      %v8342 = vpop.f32.mrf.mxu0
      %v8343 = vadd.f32 0.0, %v8342
      %8344 = vmatmul.f32.gmra.mxu0 %v8281
      %v8345 = vpop.f32.mrf.mxu0
      %v8346 = vadd.f32 0.0, %v8345
      %8347 = vmatmul.f32.gmra.mxu0 %v8284
      %v8348 = vpop.f32.mrf.mxu0
      %v8349 = vadd.f32 0.0, %v8348
      %8350 = vmatmul.f32.gmra.mxu0 %v8287
      %v8351 = vpop.f32.mrf.mxu0
      %v8352 = vadd.f32 0.0, %v8351
      %8353 = vdwg.mxu0
      %v8354 = vadd.f32 %v8204, %v8307
      %v8355 = vadd.f32 %v8205, %v8310
      %v8356 = vadd.f32 %v8206, %v8313
      %v8357 = vadd.f32 %v8207, %v8316
      %v8358 = vadd.f32 %v8208, %v8319
      %v8359 = vadd.f32 %v8209, %v8322
      %v8360 = vadd.f32 %v8210, %v8325
      %v8361 = vadd.f32 %v8211, %v8328
      %v8362 = vadd.f32 %v8212, %v8331
      %v8363 = vadd.f32 %v8213, %v8334
      %v8364 = vadd.f32 %v8214, %v8337
      %v8365 = vadd.f32 %v8215, %v8340
      %v8366 = vadd.f32 %v8216, %v8343
      %v8367 = vadd.f32 %v8217, %v8346
      %v8368 = vadd.f32 %v8218, %v8349
      %v8369 = vadd.f32 %v8219, %v8352
      %v8370 = vld [vmem:[#allocation2 + $0x22] sm:$0xff]
      %v8371 = vld [vmem:[#allocation2 + $0x2a] sm:$0xff]
      %v8372 = vld [vmem:[#allocation2 + $0x32] sm:$0xff]
      %v8373 = vld [vmem:[#allocation2 + $0x3a] sm:$0xff]
      %v8374 = vld [vmem:[#allocation2 + $0x42] sm:$0xff]
      %v8375 = vld [vmem:[#allocation2 + $0x4a] sm:$0xff]
      %v8376 = vld [vmem:[#allocation2 + $0x52] sm:$0xff]
      %v8377 = vld [vmem:[#allocation2 + $0x5a] sm:$0xff]
      %v8378 = vld [vmem:[#allocation2 + $0x62] sm:$0xff]
      %v8379 = vld [vmem:[#allocation2 + $0x6a] sm:$0xff]
      %v8380 = vld [vmem:[#allocation2 + $0x72] sm:$0xff]
      %v8381 = vld [vmem:[#allocation2 + $0x7a] sm:$0xff]
      %v8382 = vld [vmem:[#allocation2 + $0x82] sm:$0xff]
      %v8383 = vld [vmem:[#allocation2 + $0x8a] sm:$0xff]
      %v8384 = vld [vmem:[#allocation2 + $0x92] sm:$0xff]
      %v8385 = vld [vmem:[#allocation2 + $0x9a] sm:$0xff]
      %s8386 = scalar_lea.vmem %s7, 256
      %v8387 = vld [vmem:[%s8386] sm:$0xff]
      %v8388 = vld [vmem:[%s8386 + $0x8] sm:$0xff]
      %v8389 = vld [vmem:[%s8386 + $0x10] sm:$0xff]
      %v8390 = vld [vmem:[%s8386 + $0x18] sm:$0xff]
      %v8392 = vsel %vm333, %v8370, 0
      %v8395 = vsel %vm333, %v8371, 0
      %v8398 = vsel %vm333, %v8372, 0
      %v8401 = vsel %vm333, %v8373, 0
      %v8404 = vsel %vm333, %v8374, 0
      %v8407 = vsel %vm333, %v8375, 0
      %v8410 = vsel %vm333, %v8376, 0
      %v8413 = vsel %vm333, %v8377, 0
      %v8416 = vsel %vm333, %v8378, 0
      %v8419 = vsel %vm333, %v8379, 0
      %v8422 = vsel %vm333, %v8380, 0
      %v8425 = vsel %vm333, %v8381, 0
      %v8428 = vsel %vm333, %v8382, 0
      %v8431 = vsel %vm333, %v8383, 0
      %v8434 = vsel %vm333, %v8384, 0
      %v8437 = vsel %vm333, %v8385, 0
      %8439 = vmatpush.msra.mxu0 0.0
      %8440 = vmatpush.msra.mxu0 0.0
      %8441 = vmatpush.msra.mxu0 0.0
      %8442 = vmatpush.msra.mxu0 0.0
      %8443 = vmatpush.msra.mxu0 0.0
      %8444 = vmatpush.msra.mxu0 0.0
      %8445 = vmatpush.msra.mxu0 0.0
      %8446 = vmatpush.msra.mxu0 0.0
      %8447 = vmatpush.msra.mxu0 0.0
      %8448 = vmatpush.msra.mxu0 0.0
      %8449 = vmatpush.msra.mxu0 0.0
      %8450 = vmatpush.msra.mxu0 0.0
      %8451 = vmatpush.msra.mxu0 %v8390
      %8452 = vmatpush.msra.mxu0 %v8389
      %8453 = vmatpush.msra.mxu0 %v8388
      %8454 = vmatpush.msra.mxu0 %v8387
      %8455 = vmatmul.f32.gmra.mxu0 %v8392
      %v8456 = vpop.f32.mrf.mxu0
      %v8457 = vadd.f32 0.0, %v8456
      %8458 = vmatmul.f32.gmra.mxu0 %v8395
      %v8459 = vpop.f32.mrf.mxu0
      %v8460 = vadd.f32 0.0, %v8459
      %8461 = vmatmul.f32.gmra.mxu0 %v8398
      %v8462 = vpop.f32.mrf.mxu0
      %v8463 = vadd.f32 0.0, %v8462
      %8464 = vmatmul.f32.gmra.mxu0 %v8401
      %v8465 = vpop.f32.mrf.mxu0
      %v8466 = vadd.f32 0.0, %v8465
      %8467 = vmatmul.f32.gmra.mxu0 %v8404
      %v8468 = vpop.f32.mrf.mxu0
      %v8469 = vadd.f32 0.0, %v8468
      %8470 = vmatmul.f32.gmra.mxu0 %v8407
      %v8471 = vpop.f32.mrf.mxu0
      %v8472 = vadd.f32 0.0, %v8471
      %8473 = vmatmul.f32.gmra.mxu0 %v8410
      %v8474 = vpop.f32.mrf.mxu0
      %v8475 = vadd.f32 0.0, %v8474
      %8476 = vmatmul.f32.gmra.mxu0 %v8413
      %v8477 = vpop.f32.mrf.mxu0
      %v8478 = vadd.f32 0.0, %v8477
      %8479 = vmatmul.f32.gmra.mxu0 %v8416
      %v8480 = vpop.f32.mrf.mxu0
      %v8481 = vadd.f32 0.0, %v8480
      %8482 = vmatmul.f32.gmra.mxu0 %v8419
      %v8483 = vpop.f32.mrf.mxu0
      %v8484 = vadd.f32 0.0, %v8483
      %8485 = vmatmul.f32.gmra.mxu0 %v8422
      %v8486 = vpop.f32.mrf.mxu0
      %v8487 = vadd.f32 0.0, %v8486
      %8488 = vmatmul.f32.gmra.mxu0 %v8425
      %v8489 = vpop.f32.mrf.mxu0
      %v8490 = vadd.f32 0.0, %v8489
      %8491 = vmatmul.f32.gmra.mxu0 %v8428
      %v8492 = vpop.f32.mrf.mxu0
      %v8493 = vadd.f32 0.0, %v8492
      %8494 = vmatmul.f32.gmra.mxu0 %v8431
      %v8495 = vpop.f32.mrf.mxu0
      %v8496 = vadd.f32 0.0, %v8495
      %8497 = vmatmul.f32.gmra.mxu0 %v8434
      %v8498 = vpop.f32.mrf.mxu0
      %v8499 = vadd.f32 0.0, %v8498
      %8500 = vmatmul.f32.gmra.mxu0 %v8437
      %v8501 = vpop.f32.mrf.mxu0
      %v8502 = vadd.f32 0.0, %v8501
      %8503 = vdwg.mxu0
      %v8504 = vadd.f32 %v8354, %v8457
      %v8505 = vadd.f32 %v8355, %v8460
      %v8506 = vadd.f32 %v8356, %v8463
      %v8507 = vadd.f32 %v8357, %v8466
      %v8508 = vadd.f32 %v8358, %v8469
      %v8509 = vadd.f32 %v8359, %v8472
      %v8510 = vadd.f32 %v8360, %v8475
      %v8511 = vadd.f32 %v8361, %v8478
      %v8512 = vadd.f32 %v8362, %v8481
      %v8513 = vadd.f32 %v8363, %v8484
      %v8514 = vadd.f32 %v8364, %v8487
      %v8515 = vadd.f32 %v8365, %v8490
      %v8516 = vadd.f32 %v8366, %v8493
      %v8517 = vadd.f32 %v8367, %v8496
      %v8518 = vadd.f32 %v8368, %v8499
      %v8519 = vadd.f32 %v8369, %v8502
      %v8521 = vperm.slane %v7202, 0
      %v8523 = vadd.f32 %v8504, %v8521
      %v8524 = vadd.f32 %v8505, %v8521
      %v8525 = vadd.f32 %v8506, %v8521
      %v8526 = vadd.f32 %v8507, %v8521
      %v8527 = vadd.f32 %v8508, %v8521
      %v8528 = vadd.f32 %v8509, %v8521
      %v8529 = vadd.f32 %v8510, %v8521
      %v8530 = vadd.f32 %v8511, %v8521
      %v8531 = vadd.f32 %v8512, %v8521
      %v8532 = vadd.f32 %v8513, %v8521
      %v8533 = vadd.f32 %v8514, %v8521
      %v8534 = vadd.f32 %v8515, %v8521
      %v8535 = vadd.f32 %v8516, %v8521
      %v8536 = vadd.f32 %v8517, %v8521
      %v8537 = vadd.f32 %v8518, %v8521
      %v8538 = vadd.f32 %v8519, %v8521
      %v8539 = vmax.f32 %v8523, 0.0
      %v8540 = vmax.f32 %v8524, 0.0
      %v8541 = vmax.f32 %v8525, 0.0
      %v8542 = vmax.f32 %v8526, 0.0
      %v8543 = vmax.f32 %v8527, 0.0
      %v8544 = vmax.f32 %v8528, 0.0
      %v8545 = vmax.f32 %v8529, 0.0
      %v8546 = vmax.f32 %v8530, 0.0
      %v8547 = vmax.f32 %v8531, 0.0
      %v8548 = vmax.f32 %v8532, 0.0
      %v8549 = vmax.f32 %v8533, 0.0
      %v8550 = vmax.f32 %v8534, 0.0
      %v8551 = vmax.f32 %v8535, 0.0
      %v8552 = vmax.f32 %v8536, 0.0
      %v8553 = vmax.f32 %v8537, 0.0
      %v8554 = vmax.f32 %v8538, 0.0
      %8555 = vst.msk [vmem:[%s332] sm:$0xff] %vm333, %v8539
      %8556 = vst.msk [vmem:[%s332 + $0x8] sm:$0xff] %vm333, %v8540
      %8557 = vst.msk [vmem:[%s332 + $0x10] sm:$0xff] %vm333, %v8541
      %8558 = vst.msk [vmem:[%s332 + $0x18] sm:$0xff] %vm333, %v8542
      %8559 = vst.msk [vmem:[%s332 + $0x20] sm:$0xff] %vm333, %v8543
      %8560 = vst.msk [vmem:[%s332 + $0x28] sm:$0xff] %vm333, %v8544
      %8561 = vst.msk [vmem:[%s332 + $0x30] sm:$0xff] %vm333, %v8545
      %8562 = vst.msk [vmem:[%s332 + $0x38] sm:$0xff] %vm333, %v8546
      %8563 = vst.msk [vmem:[%s332 + $0x40] sm:$0xff] %vm333, %v8547
      %8564 = vst.msk [vmem:[%s332 + $0x48] sm:$0xff] %vm333, %v8548
      %8565 = vst.msk [vmem:[%s332 + $0x50] sm:$0xff] %vm333, %v8549
      %8566 = vst.msk [vmem:[%s332 + $0x58] sm:$0xff] %vm333, %v8550
      %8567 = vst.msk [vmem:[%s332 + $0x60] sm:$0xff] %vm333, %v8551
      %8568 = vst.msk [vmem:[%s332 + $0x68] sm:$0xff] %vm333, %v8552
      %8569 = vst.msk [vmem:[%s332 + $0x70] sm:$0xff] %vm333, %v8553
      %8570 = vst.msk [vmem:[%s332 + $0x78] sm:$0xff] %vm333, %v8554
      %v8571 = vld [vmem:[#allocation2 + $0x80] sm:$0xff]
      %v8572 = vld [vmem:[#allocation2 + $0x88] sm:$0xff]
      %v8573 = vld [vmem:[%s7] sm:$0xff]
      %v8574 = vld [vmem:[%s7 + $0x8] sm:$0xff]
      %v8575 = vld [vmem:[%s7 + $0x10] sm:$0xff]
      %v8576 = vld [vmem:[%s7 + $0x18] sm:$0xff]
      %v8577 = vld [vmem:[#allocation2 + $0x81] sm:$0xff]
      %v8578 = vld [vmem:[#allocation2 + $0x89] sm:$0xff]
      %v8579 = vld [vmem:[%s7239] sm:$0xff]
      %v8580 = vld [vmem:[%s7239 + $0x8] sm:$0xff]
      %v8581 = vld [vmem:[%s7239 + $0x10] sm:$0xff]
      %v8582 = vld [vmem:[%s7239 + $0x18] sm:$0xff]
      %v8584 = vsel %vm333, %v8577, 0
      %v8587 = vsel %vm333, %v8578, 0
      %8589 = vmatpush.msra.mxu0 0.0
      %8590 = vmatpush.msra.mxu0 0.0
      %8591 = vmatpush.msra.mxu0 0.0
      %8592 = vmatpush.msra.mxu0 0.0
      %8593 = vmatpush.msra.mxu0 0.0
      %8594 = vmatpush.msra.mxu0 0.0
      %8595 = vmatpush.msra.mxu0 0.0
      %8596 = vmatpush.msra.mxu0 0.0
      %8597 = vmatpush.msra.mxu0 0.0
      %8598 = vmatpush.msra.mxu0 0.0
      %8599 = vmatpush.msra.mxu0 0.0
      %8600 = vmatpush.msra.mxu0 0.0
      %8601 = vmatpush.msra.mxu0 %v8582
      %8602 = vmatpush.msra.mxu0 %v8581
      %8603 = vmatpush.msra.mxu0 %v8580
      %8604 = vmatpush.msra.mxu0 %v8579
      %8605 = vmatmul.f32.gmra.mxu0 %v8584
      %v8606 = vpop.f32.mrf.mxu0
      %v8607 = vadd.f32 0.0, %v8606
      %8608 = vmatmul.f32.gmra.mxu0 %v8587
      %v8609 = vpop.f32.mrf.mxu0
      %v8610 = vadd.f32 0.0, %v8609
      %8611 = vdwg.mxu0
      %v8613 = vsel %vm333, %v8571, 0
      %v8616 = vsel %vm333, %v8572, 0
      %8618 = vmatpush.msra.mxu0 0.0
      %8619 = vmatpush.msra.mxu0 0.0
      %8620 = vmatpush.msra.mxu0 0.0
      %8621 = vmatpush.msra.mxu0 0.0
      %8622 = vmatpush.msra.mxu0 0.0
      %8623 = vmatpush.msra.mxu0 0.0
      %8624 = vmatpush.msra.mxu0 0.0
      %8625 = vmatpush.msra.mxu0 0.0
      %8626 = vmatpush.msra.mxu0 0.0
      %8627 = vmatpush.msra.mxu0 0.0
      %8628 = vmatpush.msra.mxu0 0.0
      %8629 = vmatpush.msra.mxu0 0.0
      %8630 = vmatpush.msra.mxu0 %v8576
      %8631 = vmatpush.msra.mxu0 %v8575
      %8632 = vmatpush.msra.mxu0 %v8574
      %8633 = vmatpush.msra.mxu0 %v8573
      %8634 = vmatmul.f32.gmra.mxu0 %v8613
      %v8635 = vpop.f32.mrf.mxu0
      %v8636 = vadd.f32 %v8607, %v8635
      %8637 = vmatmul.f32.gmra.mxu0 %v8616
      %v8638 = vpop.f32.mrf.mxu0
      %v8639 = vadd.f32 %v8610, %v8638
      %8640 = vdwg.mxu0
      %v8641 = vld [vmem:[#allocation2 + $0x82] sm:$0xff]
      %v8642 = vld [vmem:[#allocation2 + $0x8a] sm:$0xff]
      %v8643 = vld [vmem:[%s7486] sm:$0xff]
      %v8644 = vld [vmem:[%s7486 + $0x8] sm:$0xff]
      %v8645 = vld [vmem:[%s7486 + $0x10] sm:$0xff]
      %v8646 = vld [vmem:[%s7486 + $0x18] sm:$0xff]
      %v8648 = vsel %vm333, %v8641, 0
      %v8651 = vsel %vm333, %v8642, 0
      %8653 = vmatpush.msra.mxu0 0.0
      %8654 = vmatpush.msra.mxu0 0.0
      %8655 = vmatpush.msra.mxu0 0.0
      %8656 = vmatpush.msra.mxu0 0.0
      %8657 = vmatpush.msra.mxu0 0.0
      %8658 = vmatpush.msra.mxu0 0.0
      %8659 = vmatpush.msra.mxu0 0.0
      %8660 = vmatpush.msra.mxu0 0.0
      %8661 = vmatpush.msra.mxu0 0.0
      %8662 = vmatpush.msra.mxu0 0.0
      %8663 = vmatpush.msra.mxu0 0.0
      %8664 = vmatpush.msra.mxu0 0.0
      %8665 = vmatpush.msra.mxu0 %v8646
      %8666 = vmatpush.msra.mxu0 %v8645
      %8667 = vmatpush.msra.mxu0 %v8644
      %8668 = vmatpush.msra.mxu0 %v8643
      %8669 = vmatmul.f32.gmra.mxu0 %v8648
      %v8670 = vpop.f32.mrf.mxu0
      %v8671 = vadd.f32 0.0, %v8670
      %8672 = vmatmul.f32.gmra.mxu0 %v8651
      %v8673 = vpop.f32.mrf.mxu0
      %v8674 = vadd.f32 0.0, %v8673
      %8675 = vdwg.mxu0
      %v8676 = vadd.f32 %v8636, %v8671
      %v8677 = vadd.f32 %v8639, %v8674
      %v8678 = vld [vmem:[#allocation2 + $0x90] sm:$0xff]
      %v8679 = vld [vmem:[#allocation2 + $0x98] sm:$0xff]
      %v8680 = vld [vmem:[%s7636] sm:$0xff]
      %v8681 = vld [vmem:[%s7636 + $0x8] sm:$0xff]
      %v8682 = vld [vmem:[%s7636 + $0x10] sm:$0xff]
      %v8683 = vld [vmem:[%s7636 + $0x18] sm:$0xff]
      %v8685 = vsel %vm333, %v8678, 0
      %v8688 = vsel %vm333, %v8679, 0
      %8690 = vmatpush.msra.mxu0 0.0
      %8691 = vmatpush.msra.mxu0 0.0
      %8692 = vmatpush.msra.mxu0 0.0
      %8693 = vmatpush.msra.mxu0 0.0
      %8694 = vmatpush.msra.mxu0 0.0
      %8695 = vmatpush.msra.mxu0 0.0
      %8696 = vmatpush.msra.mxu0 0.0
      %8697 = vmatpush.msra.mxu0 0.0
      %8698 = vmatpush.msra.mxu0 0.0
      %8699 = vmatpush.msra.mxu0 0.0
      %8700 = vmatpush.msra.mxu0 0.0
      %8701 = vmatpush.msra.mxu0 0.0
      %8702 = vmatpush.msra.mxu0 %v8683
      %8703 = vmatpush.msra.mxu0 %v8682
      %8704 = vmatpush.msra.mxu0 %v8681
      %8705 = vmatpush.msra.mxu0 %v8680
      %8706 = vmatmul.f32.gmra.mxu0 %v8685
      %v8707 = vpop.f32.mrf.mxu0
      %v8708 = vadd.f32 0.0, %v8707
      %8709 = vmatmul.f32.gmra.mxu0 %v8688
      %v8710 = vpop.f32.mrf.mxu0
      %v8711 = vadd.f32 0.0, %v8710
      %8712 = vdwg.mxu0
      %v8713 = vadd.f32 %v8676, %v8708
      %v8714 = vadd.f32 %v8677, %v8711
      %v8715 = vld [vmem:[#allocation2 + $0x91] sm:$0xff]
      %v8716 = vld [vmem:[#allocation2 + $0x99] sm:$0xff]
      %v8717 = vld [vmem:[%s7786] sm:$0xff]
      %v8718 = vld [vmem:[%s7786 + $0x8] sm:$0xff]
      %v8719 = vld [vmem:[%s7786 + $0x10] sm:$0xff]
      %v8720 = vld [vmem:[%s7786 + $0x18] sm:$0xff]
      %v8722 = vsel %vm333, %v8715, 0
      %v8725 = vsel %vm333, %v8716, 0
      %8727 = vmatpush.msra.mxu0 0.0
      %8728 = vmatpush.msra.mxu0 0.0
      %8729 = vmatpush.msra.mxu0 0.0
      %8730 = vmatpush.msra.mxu0 0.0
      %8731 = vmatpush.msra.mxu0 0.0
      %8732 = vmatpush.msra.mxu0 0.0
      %8733 = vmatpush.msra.mxu0 0.0
      %8734 = vmatpush.msra.mxu0 0.0
      %8735 = vmatpush.msra.mxu0 0.0
      %8736 = vmatpush.msra.mxu0 0.0
      %8737 = vmatpush.msra.mxu0 0.0
      %8738 = vmatpush.msra.mxu0 0.0
      %8739 = vmatpush.msra.mxu0 %v8720
      %8740 = vmatpush.msra.mxu0 %v8719
      %8741 = vmatpush.msra.mxu0 %v8718
      %8742 = vmatpush.msra.mxu0 %v8717
      %8743 = vmatmul.f32.gmra.mxu0 %v8722
      %v8744 = vpop.f32.mrf.mxu0
      %v8745 = vadd.f32 0.0, %v8744
      %8746 = vmatmul.f32.gmra.mxu0 %v8725
      %v8747 = vpop.f32.mrf.mxu0
      %v8748 = vadd.f32 0.0, %v8747
      %8749 = vdwg.mxu0
      %v8750 = vadd.f32 %v8713, %v8745
      %v8751 = vadd.f32 %v8714, %v8748
      %v8752 = vld [vmem:[#allocation2 + $0x92] sm:$0xff]
      %v8753 = vld [vmem:[#allocation2 + $0x9a] sm:$0xff]
      %v8754 = vld [vmem:[%s7936] sm:$0xff]
      %v8755 = vld [vmem:[%s7936 + $0x8] sm:$0xff]
      %v8756 = vld [vmem:[%s7936 + $0x10] sm:$0xff]
      %v8757 = vld [vmem:[%s7936 + $0x18] sm:$0xff]
      %v8759 = vsel %vm333, %v8752, 0
      %v8762 = vsel %vm333, %v8753, 0
      %8764 = vmatpush.msra.mxu0 0.0
      %8765 = vmatpush.msra.mxu0 0.0
      %8766 = vmatpush.msra.mxu0 0.0
      %8767 = vmatpush.msra.mxu0 0.0
      %8768 = vmatpush.msra.mxu0 0.0
      %8769 = vmatpush.msra.mxu0 0.0
      %8770 = vmatpush.msra.mxu0 0.0
      %8771 = vmatpush.msra.mxu0 0.0
      %8772 = vmatpush.msra.mxu0 0.0
      %8773 = vmatpush.msra.mxu0 0.0
      %8774 = vmatpush.msra.mxu0 0.0
      %8775 = vmatpush.msra.mxu0 0.0
      %8776 = vmatpush.msra.mxu0 %v8757
      %8777 = vmatpush.msra.mxu0 %v8756
      %8778 = vmatpush.msra.mxu0 %v8755
      %8779 = vmatpush.msra.mxu0 %v8754
      %8780 = vmatmul.f32.gmra.mxu0 %v8759
      %v8781 = vpop.f32.mrf.mxu0
      %v8782 = vadd.f32 0.0, %v8781
      %8783 = vmatmul.f32.gmra.mxu0 %v8762
      %v8784 = vpop.f32.mrf.mxu0
      %v8785 = vadd.f32 0.0, %v8784
      %8786 = vdwg.mxu0
      %v8787 = vadd.f32 %v8750, %v8782
      %v8788 = vadd.f32 %v8751, %v8785
      %v8789 = vld [vmem:[#allocation2 + $0xa0] sm:$0xff]
      %v8790 = vld [vmem:[#allocation2 + $0xa8] sm:$0xff]
      %v8791 = vld [vmem:[%s8086] sm:$0xff]
      %v8792 = vld [vmem:[%s8086 + $0x8] sm:$0xff]
      %v8793 = vld [vmem:[%s8086 + $0x10] sm:$0xff]
      %v8794 = vld [vmem:[%s8086 + $0x18] sm:$0xff]
      %v8796 = vsel %vm333, %v8789, 0
      %v8799 = vsel %vm333, %v8790, 0
      %8801 = vmatpush.msra.mxu0 0.0
      %8802 = vmatpush.msra.mxu0 0.0
      %8803 = vmatpush.msra.mxu0 0.0
      %8804 = vmatpush.msra.mxu0 0.0
      %8805 = vmatpush.msra.mxu0 0.0
      %8806 = vmatpush.msra.mxu0 0.0
      %8807 = vmatpush.msra.mxu0 0.0
      %8808 = vmatpush.msra.mxu0 0.0
      %8809 = vmatpush.msra.mxu0 0.0
      %8810 = vmatpush.msra.mxu0 0.0
      %8811 = vmatpush.msra.mxu0 0.0
      %8812 = vmatpush.msra.mxu0 0.0
      %8813 = vmatpush.msra.mxu0 %v8794
      %8814 = vmatpush.msra.mxu0 %v8793
      %8815 = vmatpush.msra.mxu0 %v8792
      %8816 = vmatpush.msra.mxu0 %v8791
      %8817 = vmatmul.f32.gmra.mxu0 %v8796
      %v8818 = vpop.f32.mrf.mxu0
      %v8819 = vadd.f32 0.0, %v8818
      %8820 = vmatmul.f32.gmra.mxu0 %v8799
      %v8821 = vpop.f32.mrf.mxu0
      %v8822 = vadd.f32 0.0, %v8821
      %8823 = vdwg.mxu0
      %v8824 = vadd.f32 %v8787, %v8819
      %v8825 = vadd.f32 %v8788, %v8822
      %v8826 = vld [vmem:[#allocation2 + $0xa1] sm:$0xff]
      %v8827 = vld [vmem:[#allocation2 + $0xa9] sm:$0xff]
      %v8828 = vld [vmem:[%s8236] sm:$0xff]
      %v8829 = vld [vmem:[%s8236 + $0x8] sm:$0xff]
      %v8830 = vld [vmem:[%s8236 + $0x10] sm:$0xff]
      %v8831 = vld [vmem:[%s8236 + $0x18] sm:$0xff]
      %v8833 = vsel %vm333, %v8826, 0
      %v8836 = vsel %vm333, %v8827, 0
      %8838 = vmatpush.msra.mxu0 0.0
      %8839 = vmatpush.msra.mxu0 0.0
      %8840 = vmatpush.msra.mxu0 0.0
      %8841 = vmatpush.msra.mxu0 0.0
      %8842 = vmatpush.msra.mxu0 0.0
      %8843 = vmatpush.msra.mxu0 0.0
      %8844 = vmatpush.msra.mxu0 0.0
      %8845 = vmatpush.msra.mxu0 0.0
      %8846 = vmatpush.msra.mxu0 0.0
      %8847 = vmatpush.msra.mxu0 0.0
      %8848 = vmatpush.msra.mxu0 0.0
      %8849 = vmatpush.msra.mxu0 0.0
      %8850 = vmatpush.msra.mxu0 %v8831
      %8851 = vmatpush.msra.mxu0 %v8830
      %8852 = vmatpush.msra.mxu0 %v8829
      %8853 = vmatpush.msra.mxu0 %v8828
      %8854 = vmatmul.f32.gmra.mxu0 %v8833
      %v8855 = vpop.f32.mrf.mxu0
      %v8856 = vadd.f32 0.0, %v8855
      %8857 = vmatmul.f32.gmra.mxu0 %v8836
      %v8858 = vpop.f32.mrf.mxu0
      %v8859 = vadd.f32 0.0, %v8858
      %8860 = vdwg.mxu0
      %v8861 = vadd.f32 %v8824, %v8856
      %v8862 = vadd.f32 %v8825, %v8859
      %v8863 = vld [vmem:[#allocation2 + $0xa2] sm:$0xff]
      %v8864 = vld [vmem:[#allocation2 + $0xaa] sm:$0xff]
      %v8865 = vld [vmem:[%s8386] sm:$0xff]
      %v8866 = vld [vmem:[%s8386 + $0x8] sm:$0xff]
      %v8867 = vld [vmem:[%s8386 + $0x10] sm:$0xff]
      %v8868 = vld [vmem:[%s8386 + $0x18] sm:$0xff]
      %v8870 = vsel %vm333, %v8863, 0
      %v8873 = vsel %vm333, %v8864, 0
      %8875 = vmatpush.msra.mxu0 0.0
      %8876 = vmatpush.msra.mxu0 0.0
      %8877 = vmatpush.msra.mxu0 0.0
      %8878 = vmatpush.msra.mxu0 0.0
      %8879 = vmatpush.msra.mxu0 0.0
      %8880 = vmatpush.msra.mxu0 0.0
      %8881 = vmatpush.msra.mxu0 0.0
      %8882 = vmatpush.msra.mxu0 0.0
      %8883 = vmatpush.msra.mxu0 0.0
      %8884 = vmatpush.msra.mxu0 0.0
      %8885 = vmatpush.msra.mxu0 0.0
      %8886 = vmatpush.msra.mxu0 0.0
      %8887 = vmatpush.msra.mxu0 %v8868
      %8888 = vmatpush.msra.mxu0 %v8867
      %8889 = vmatpush.msra.mxu0 %v8866
      %8890 = vmatpush.msra.mxu0 %v8865
      %8891 = vmatmul.f32.gmra.mxu0 %v8870
      %v8892 = vpop.f32.mrf.mxu0
      %v8893 = vadd.f32 0.0, %v8892
      %8894 = vmatmul.f32.gmra.mxu0 %v8873
      %v8895 = vpop.f32.mrf.mxu0
      %v8896 = vadd.f32 0.0, %v8895
      %8897 = vdwg.mxu0
      %v8898 = vadd.f32 %v8861, %v8893
      %v8899 = vadd.f32 %v8862, %v8896
      %v8900 = vadd.f32 %v8898, %v8521
      %v8901 = vadd.f32 %v8899, %v8521
      %v8902 = vmax.f32 %v8900, 0.0
      %v8903 = vmax.f32 %v8901, 0.0
      %8904 = vst.msk [vmem:[%s332 + $0x80] sm:$0xff] %vm333, %v8902
      %8905 = vst.msk [vmem:[%s332 + $0x88] sm:$0xff] %vm333, %v8903
      %p8906 = scmp.lt.s32.totalorder %s20, 1
      %s8907 = scalar_select %p8906, %s20, 1
      %s8908 = smul.addr %s8907, 18
      %s8909 = smul.addr %s8908, 8
      %s8910 = scalar_lea.vmem %s9, %s8909
      // Predicated region
      $region57: #{encoder_forward.1} parent=55 // pred_check
        %p8911 = pneg %p232
      $region58: #{encoder_forward.1} parent=55 // pred_check_branch
        %8913 = sbr.rel (%p8911) target = $region60
      $region59: #{encoder_forward.1} parent=55 // pred_region
        _
      $region60: #{encoder_forward.1} parent=55 // pred_fallthru
        _
    $region56: #{encoder_forward.1} parent=5 // pred_fallthru
      _
    %p8914 = scmp.le.s32.totalorder 2, %s15
    // Predicated region
    $region61: #{encoder_forward.1} parent=5 // pred_check
      %p8915 = pneg %p8914
    $region62: #{encoder_forward.1} parent=5 // pred_check_branch
      %8917 = sbr.rel (%p8915) target = $region64
    $region63: #{encoder_forward.1} parent=5 // pred_region
      %s8918 = ssub.s32 %s15, 2
      // Predicated region
      $region65: #{encoder_forward.1} parent=63 // pred_check
        %p8919 = pneg %p238
      $region66: #{encoder_forward.1} parent=63 // pred_check_branch
        %8921 = sbr.rel (%p8919) target = $region68
      $region67: #{encoder_forward.1} parent=63 // pred_region
        %p8922 = scmp.lt.s32.totalorder %s21, 1
        %s8923 = scalar_select %p8922, %s21, 1
        %s8924 = smul.addr %s8923, 18
        %s8925 = smul.addr %s8924, 8
        %s8926 = scalar_lea.vmem %s9, %s8925
      $region68: #{encoder_forward.1} parent=63 // pred_fallthru
        _
    $region64: #{encoder_forward.1} parent=5 // pred_fallthru
      _
  $region6: #{encoder_forward.1} parent=0 // loop_footer
    %s19 = sadd.s32 1, %s15
  $region7: #{encoder_forward.1} parent=0 // loop_footer_branch
    %14 = sbr.rel target = $region3
  $region8: #{encoder_forward.1} parent=0 // loop_exit
    _

</llo_original>
